<compile_context>
chip_gen: v7x
topology: tpu7x:2x2x1
jax: 0.10.0
libtpu: 0.0.40
codegen_flags: <defaults>
</compile_context>

<pallas_src>
import functools

import numpy as np
import jax
import jax.numpy as jnp
from jax import lax
from jax.experimental import pallas as pl
from jax.experimental.pallas import tpu as pltpu


# ---------------------------------------------------------------------------
# Kernel helpers
# ---------------------------------------------------------------------------

def _layer_norm(x, w, b, eps=1e-5):
    mu = jnp.mean(x, axis=-1, keepdims=True)
    var = jnp.mean((x - mu) ** 2, axis=-1, keepdims=True)
    return (x - mu) * lax.rsqrt(var + eps) * w + b


# ---------------------------------------------------------------------------
# Pallas kernel: one grid step == (one batch block, one encoder layer)
# ---------------------------------------------------------------------------

def _fused_kernel(x_ref, pe_ref, wqkv_ref, bqkv_ref, wo_ref, bo_ref,
                  ln1w_ref, ln1b_ref, w1_ref, b1_ref, w2_ref, b2_ref,
                  ln2w_ref, ln2b_ref, wd_ref, bd_ref, o_ref, h_sc,
                  *, nhead, activation, gelu_approx, approx_recip):
    layer = pl.program_id(1)
    n_layers = pl.num_programs(1)
    TB, S, D = h_sc.shape
    hd = D // nhead
    dt = wqkv_ref.dtype            # MXU operand dtype (bf16 or f32)

    # ---- layer 0: positional encoding (+ eval-mode dropout == identity) ----
    @pl.when(layer == 0)
    def _():
        h_sc[...] = x_ref[...] + pe_ref[...]          # (TB,S,D) + (1,S,D)

    h2 = h_sc[...].reshape(TB * S, D)                 # f32, leading-dim reshape
    h2_dt = h2.astype(dt)                             # cast once, reused

    # ---- self-attention: fused QKV projection (q-scale folded into weights)
    qkv = jnp.dot(h2_dt, wqkv_ref[0],
                  preferred_element_type=jnp.float32) + bqkv_ref[0]  # (TB*S,3D)

    wo = wo_ref[0]                                    # (nhead, hd, D)
    attn_rows = []
    for b in range(TB):                               # small static loop
        qkv_b = qkv[b * S:(b + 1) * S, :]             # (S, 3D)
        acc = jnp.zeros((S, D), jnp.float32)
        for hh in range(nhead):                       # static loop over heads
            q = qkv_b[:, hh * hd:(hh + 1) * hd].astype(dt)
            k = qkv_b[:, D + hh * hd:D + (hh + 1) * hd].astype(dt)
            v = qkv_b[:, 2 * D + hh * hd:2 * D + (hh + 1) * hd].astype(dt)
            s = lax.dot_general(q, k, (((1,), (1,)), ((), ())),
                                preferred_element_type=jnp.float32)  # (S,S)
            s = s - jnp.max(s, axis=-1, keepdims=True)
            p = jnp.exp(s)
            denom = jnp.sum(p, axis=-1, keepdims=True)
            if approx_recip:                           # EUP slot (bf16 path)
                p = p * pl.reciprocal(denom, approx=True)
            else:                                      # exact (f32 parity path)
                p = p / denom
            oh = jnp.dot(p.astype(dt), v,
                         preferred_element_type=jnp.float32)         # (S,hd)
            # Fold Wo per head: concat(heads) @ Wo == sum_h head_h @ Wo[h]
            acc = acc + jnp.dot(oh.astype(dt), wo[hh],
                                preferred_element_type=jnp.float32)  # (S,D)
        attn_rows.append(acc)
    a = attn_rows[0] if TB == 1 else jnp.concatenate(attn_rows, axis=0)
    a = a + bo_ref[0]                                                # (TB*S,D)

    # ---- residual + LayerNorm 1 (post-norm, eps=1e-5) -----------------------
    h1 = _layer_norm(h2 + a, ln1w_ref[0], ln1b_ref[0])

    # ---- feed-forward -------------------------------------------------------
    f = jnp.dot(h1.astype(dt), w1_ref[0],
                preferred_element_type=jnp.float32) + b1_ref[0]
    if activation == "relu":
        f = jnp.maximum(f, 0.0)
    else:   # "gelu"; torch default is the exact erf form (gelu_approx=False)
        f = jax.nn.gelu(f, approximate=gelu_approx)
    f = jnp.dot(f.astype(dt), w2_ref[0],
                preferred_element_type=jnp.float32) + b2_ref[0]

    # ---- residual + LayerNorm 2 -> carried activation -----------------------
    hn = _layer_norm(h1 + f, ln2w_ref[0], ln2b_ref[0])               # (TB*S,D)
    h_sc[...] = hn.reshape(TB, S, D)

    # ---- last layer: mean over sequence + dense head (lane-dense slab) ------
    @pl.when(layer == n_layers - 1)
    def _():
        rows = []
        for b in range(TB):
            rows.append(jnp.mean(hn[b * S:(b + 1) * S, :],
                                 axis=0, keepdims=True))             # (1, D)
        m = rows[0] if TB == 1 else jnp.concatenate(rows, axis=0)    # (TB, D)
        out = jnp.dot(m.astype(dt), wd_ref[...],
                      preferred_element_type=jnp.float32) + bd_ref[...]
        o_ref[0] = out                                               # (TB, DP)


# ---------------------------------------------------------------------------
# Parameters (deterministic synthetic init — shapes follow the nn.Module)
# ---------------------------------------------------------------------------

def init_params(key, *, d_model, nhead, dim_feedforward, n_enc_layers,
                dense_len, n_length):
    D, F, L = d_model, dim_feedforward, n_enc_layers

    # PositionalEncoding buffer, computed exactly as in the PyTorch module.
    position = np.arange(n_length, dtype=np.float32)[:, None]
    div_term = np.exp(np.arange(0, D, 2, dtype=np.float32) * (-np.log(10000.0) / D))
    pe = np.zeros((n_length, D), dtype=np.float32)
    pe[:, 0::2] = np.sin(position * div_term)
    if div_term.shape[0] != D // 2:
        pe[:, 1::2] = np.cos(position * div_term[:-1])
    else:
        pe[:, 1::2] = np.cos(position * div_term)

    def nrm(k, shape, scale=0.1):
        return (scale * jax.random.normal(k, shape)).astype(jnp.float32)

    ks = jax.random.split(key, 12)
    return dict(
        pe=jnp.asarray(pe)[None],                             # (1, n_length, D)
        # fused QKV projection weights, stored as (D_in, 3*D_out): [q | k | v]
        wqkv=nrm(ks[0], (L, D, 3 * D)), bqkv=nrm(ks[1], (L, 1, 3 * D), 0.02),
        wo=nrm(ks[2], (L, D, D)),       bo=nrm(ks[3], (L, 1, D), 0.02),
        ln1w=1.0 + nrm(ks[4], (L, 1, D)), ln1b=nrm(ks[5], (L, 1, D), 0.02),
        w1=nrm(ks[6], (L, D, F)),       b1=jnp.zeros((L, 1, F), jnp.float32),
        w2=nrm(ks[7], (L, F, D)),       b2=jnp.zeros((L, 1, D), jnp.float32),
        ln2w=1.0 + nrm(ks[8], (L, 1, D)), ln2b=nrm(ks[9], (L, 1, D), 0.02),
        wd=nrm(ks[10], (D, dense_len)), bd=nrm(ks[11], (1, dense_len), 0.02),
    )


# ---------------------------------------------------------------------------
# Forward pass (single fused pallas_call)
# ---------------------------------------------------------------------------

def _pick_batch_block(B, S):
    """Largest divisor of B (capped at 16) pushing TB*S toward 128 MXU rows."""
    target = min(16, max(1, -(-128 // max(S, 1))))
    tb = 1
    for c in range(1, B + 1):
        if B % c == 0 and c <= target:
            tb = c
    return tb


def transformer1d_forward(x, params, *, nhead, activation,
                          mxu_dtype=jnp.bfloat16, batch_block=None,
                          gelu_approx=False):
    B, S, D = x.shape
    L, _, F = params["w1"].shape
    dense_len = params["wd"].shape[1]
    assert D % nhead == 0
    hd = D // nhead
    DP = ((dense_len + 127) // 128) * 128            # lane-dense output slab

    TB = batch_block or _pick_batch_block(B, S)
    assert B % TB == 0
    nb = B // TB

    f32 = jnp.float32
    approx_recip = (jnp.dtype(mxu_dtype) != jnp.dtype(jnp.float32))

    # ---- one-time weight prep (constant folds, outside the kernel) ----------
    scale = float(hd) ** -0.5
    wqkv = jnp.concatenate([params["wqkv"][..., :D] * scale,
                            params["wqkv"][..., D:]], axis=-1).astype(mxu_dtype)
    bqkv = jnp.concatenate([params["bqkv"][..., :D] * scale,
                            params["bqkv"][..., D:]], axis=-1).astype(f32)
    wo = params["wo"].reshape(L, nhead, hd, D).astype(mxu_dtype)   # per-head Wo
    w1 = params["w1"].astype(mxu_dtype)
    w2 = params["w2"].astype(mxu_dtype)
    wd = (jnp.zeros((D, DP), f32).at[:, :dense_len].set(params["wd"])
          .astype(mxu_dtype))
    bd = jnp.zeros((1, DP), f32).at[:, :dense_len].set(params["bd"])
    pe = params["pe"][:, :S, :].astype(f32)

    operands = (x.astype(f32), pe, wqkv, bqkv, wo, params["bo"],
                params["ln1w"], params["ln1b"], w1, params["b1"],
                w2, params["b2"], params["ln2w"], params["ln2b"], wd, bd)

    # ---- explicit VMEM budget (per-layer streamed weights double-buffered) --
    def nbytes(shape, dt):
        return int(np.prod(shape)) * jnp.dtype(dt).itemsize

    streamed = [((1, D, 3 * D), mxu_dtype), ((1, 1, 3 * D), f32),
                ((1, nhead, hd, D), mxu_dtype), ((1, 1, D), f32),
                ((1, 1, D), f32), ((1, 1, D), f32),
                ((1, D, F), mxu_dtype), ((1, 1, F), f32),
                ((1, F, D), mxu_dtype), ((1, 1, D), f32),
                ((1, 1, D), f32), ((1, 1, D), f32)]
    need = sum(2 * nbytes(s, d) for s, d in streamed)
    need += 2 * nbytes((TB, S, D), f32)                         # x block
    need += nbytes((1, S, D), f32)                              # pe
    need += nbytes((D, DP), mxu_dtype) + nbytes((1, DP), f32)   # dense head
    need += 2 * nbytes((1, TB, DP), f32)                        # output block
    need += nbytes((TB, S, D), f32)                             # h scratch
    need = int(need * 1.5) + (4 << 20)                          # headroom
    try:
        cap = int(getattr(pltpu.get_tpu_info(), "vmem_capacity_bytes",
                          64 << 20))
    except Exception:                 # no query available -> assume v7x-sized
        cap = 64 << 20
    ceiling = max(cap * 3 // 4, 32 << 20)
    vmem_limit = int(min(max(need, 32 << 20), ceiling))

    def const_spec(shape, single):
        nd = len(shape)
        idx = lambda b, l, _nd=nd: (0,) * _nd
        if single:    # never changes across the grid -> single buffer
            return pl.BlockSpec(shape, idx, pipeline_mode=pl.Buffered(1))
        return pl.BlockSpec(shape, idx)

    def layer_spec(shape):
        nd = len(shape)
        return pl.BlockSpec(shape, lambda b, l, _nd=nd: (l,) + (0,) * (_nd - 1))

    def run(single_buffer_consts):
        grid_spec = pltpu.PrefetchScalarGridSpec(
            num_scalar_prefetch=0,
            grid=(nb, L),                              # layer axis innermost
            in_specs=[
                pl.BlockSpec((TB, S, D), lambda b, l: (b, 0, 0)),   # x
                const_spec((1, S, D), single_buffer_consts),        # pe
                layer_spec((1, D, 3 * D)),                          # wqkv
                layer_spec((1, 1, 3 * D)),                          # bqkv
                layer_spec((1, nhead, hd, D)),                      # wo per-head
                layer_spec((1, 1, D)),                              # bo
                layer_spec((1, 1, D)), layer_spec((1, 1, D)),       # ln1 w, b
                layer_spec((1, D, F)), layer_spec((1, 1, F)),       # w1, b1
                layer_spec((1, F, D)), layer_spec((1, 1, D)),       # w2, b2
                layer_spec((1, 1, D)), layer_spec((1, 1, D)),       # ln2 w, b
                const_spec((D, DP), single_buffer_consts),          # wd
                const_spec((1, DP), single_buffer_consts),          # bd
            ],
            out_specs=pl.BlockSpec((1, TB, DP), lambda b, l: (b, 0, 0)),
            scratch_shapes=[pltpu.VMEM((TB, S, D), jnp.float32)],   # carried h
        )
        fn = pl.pallas_call(
            functools.partial(_fused_kernel, nhead=nhead, activation=activation,
                              gelu_approx=gelu_approx,
                              approx_recip=approx_recip),
            out_shape=jax.ShapeDtypeStruct((nb, TB, DP), jnp.float32),
            grid_spec=grid_spec,
            compiler_params=pltpu.CompilerParams(
                dimension_semantics=("parallel", "arbitrary"),
                vmem_limit_bytes=vmem_limit),
        )
        return fn(*operands)

    try:
        out = run(True)
        jax.block_until_ready(out)
    except Exception:
        # Fallback if pl.Buffered(1) is rejected by this jax version: default
        # (double) buffering of the tiny constant blocks — same semantics.
        out = run(False)

    return out.reshape(B, DP)[:, :dense_len]


# ---------------------------------------------------------------------------
# Pure-JAX reference (same math, f32) for verification
# ---------------------------------------------------------------------------

def _ln_ref(x, w, b, eps=1e-5):
    mu = jnp.mean(x, axis=-1, keepdims=True)
    var = jnp.mean((x - mu) ** 2, axis=-1, keepdims=True)
    return (x - mu) / jnp.sqrt(var + eps) * w + b


def ref_forward(x, params, *, nhead, activation):
    B, S, D = x.shape
    hd = D // nhead
    L = params["wqkv"].shape[0]
    h = x + params["pe"][:, :S, :]
    for l in range(L):
        x2 = h.reshape(B * S, D)
        qkv = x2 @ params["wqkv"][l] + params["bqkv"][l]
        q = qkv[:, :D].reshape(B, S, nhead, hd)
        k = qkv[:, D:2 * D].reshape(B, S, nhead, hd)
        v = qkv[:, 2 * D:].reshape(B, S, nhead, hd)
        q = jnp.transpose(q, (0, 2, 1, 3)) * (float(hd) ** -0.5)
        k = jnp.transpose(k, (0, 2, 1, 3))
        v = jnp.transpose(v, (0, 2, 1, 3))
        s = jnp.einsum("bhqd,bhkd->bhqk", q, k)
        p = jax.nn.softmax(s, axis=-1)
        a = jnp.einsum("bhqk,bhkd->bhqd", p, v)
        a = jnp.transpose(a, (0, 2, 1, 3)).reshape(B * S, D)
        a = a @ params["wo"][l] + params["bo"][l]
        h1 = _ln_ref(x2 + a, params["ln1w"][l], params["ln1b"][l])
        f = h1 @ params["w1"][l] + params["b1"][l]
        f = jnp.maximum(f, 0.0) if activation == "relu" else jax.nn.gelu(f, approximate=False)
        f = f @ params["w2"][l] + params["b2"][l]
        h = _ln_ref(h1 + f, params["ln2w"][l], params["ln2b"][l]).reshape(B, S, D)
    m = h.mean(axis=1)
    return m @ params["wd"] + params["bd"]


# ---------------------------------------------------------------------------

if __name__ == "__main__":
    # small shapes consistent with Transformer1d(n_classes, n_length, ...)
    B, S, D = 2, 8, 32          # batch, seq_len (= n_length), d_model
    nhead = 4
    dim_feedforward = 64
    n_enc_layers = 2
    dense_len = 5               # final nn.Linear(d_model, dense_len)
    activation = "relu"
    # NOTE: n_classes is stored but unused in the PyTorch forward; output is
    # (batch, dense_len).

    key = jax.random.PRNGKey(0)
    kx, kp = jax.random.split(key)
    x = jax.random.normal(kx, (B, S, D), dtype=jnp.float32)
    params = init_params(kp, d_model=D, nhead=nhead,
                         dim_feedforward=dim_feedforward,
                         n_enc_layers=n_enc_layers,
                         dense_len=dense_len, n_length=S)

    ref = ref_forward(x, params, nhead=nhead, activation=activation)

    # (1) strict parity path: f32 MXU operands, exact softmax reciprocal
    out_f32 = transformer1d_forward(x, params, nhead=nhead,
                                    activation=activation,
                                    mxu_dtype=jnp.float32)
    out_f32 = jax.block_until_ready(out_f32)
    np.testing.assert_allclose(np.asarray(out_f32), np.asarray(ref),
                               rtol=2e-3, atol=2e-4)

    # (2) fast path: bf16 MXU operands, f32 accumulation, EUP approx reciprocal
    out = transformer1d_forward(x, params, nhead=nhead,
                                activation=activation,
                                mxu_dtype=jnp.bfloat16)
    out = jax.block_until_ready(out)
    np.testing.assert_allclose(np.asarray(out), np.asarray(ref),
                               rtol=8e-2, atol=2.5e-2)

    assert out.shape == (B, dense_len)
    print("KERNEL_OK")
</pallas_src>

<mosaic_0001>
module attributes {stable_mosaic.version = 11 : i64} {
  func.func @_fused_kernel(%arg0: i32, %arg1: i32, %arg2: memref<2x8x32xf32, #tpu.memory_space<vmem>>, %arg3: memref<1x8x32xf32, #tpu.memory_space<vmem>>, %arg4: memref<1x32x96xf32, #tpu.memory_space<vmem>>, %arg5: memref<1x1x96xf32, #tpu.memory_space<vmem>>, %arg6: memref<1x4x8x32xf32, #tpu.memory_space<vmem>>, %arg7: memref<1x1x32xf32, #tpu.memory_space<vmem>>, %arg8: memref<1x1x32xf32, #tpu.memory_space<vmem>>, %arg9: memref<1x1x32xf32, #tpu.memory_space<vmem>>, %arg10: memref<1x32x64xf32, #tpu.memory_space<vmem>>, %arg11: memref<1x1x64xf32, #tpu.memory_space<vmem>>, %arg12: memref<1x64x32xf32, #tpu.memory_space<vmem>>, %arg13: memref<1x1x32xf32, #tpu.memory_space<vmem>>, %arg14: memref<1x1x32xf32, #tpu.memory_space<vmem>>, %arg15: memref<1x1x32xf32, #tpu.memory_space<vmem>>, %arg16: memref<32x128xf32, #tpu.memory_space<vmem>>, %arg17: memref<1x128xf32, #tpu.memory_space<vmem>>, %arg18: memref<1x2x128xf32, #tpu.memory_space<vmem>>, %arg19: memref<2x8x32xf32, #tpu.memory_space<vmem>>) attributes {dimension_semantics = [#tpu.dimension_semantics<parallel>, #tpu.dimension_semantics<arbitrary>], iteration_bounds = array<i64: 1, 2>, scalar_prefetch = 0 : i64, scratch_operands = 1 : i64, tpu.core_type = #tpu.core_type<tc>, window_params = [{transform_indices = @transform_0, window_bounds = array<i64: 2, 8, 32>}, {pipeline_mode = #tpu.pipeline_mode<synchronous>, transform_indices = @transform_1, window_bounds = array<i64: 1, 8, 32>}, {transform_indices = @transform_2, window_bounds = array<i64: 1, 32, 96>}, {transform_indices = @transform_3, window_bounds = array<i64: 1, 1, 96>}, {transform_indices = @transform_4, window_bounds = array<i64: 1, 4, 8, 32>}, {transform_indices = @transform_5, window_bounds = array<i64: 1, 1, 32>}, {transform_indices = @transform_6, window_bounds = array<i64: 1, 1, 32>}, {transform_indices = @transform_7, window_bounds = array<i64: 1, 1, 32>}, {transform_indices = @transform_8, window_bounds = array<i64: 1, 32, 64>}, {transform_indices = @transform_9, window_bounds = array<i64: 1, 1, 64>}, {transform_indices = @transform_10, window_bounds = array<i64: 1, 64, 32>}, {transform_indices = @transform_11, window_bounds = array<i64: 1, 1, 32>}, {transform_indices = @transform_12, window_bounds = array<i64: 1, 1, 32>}, {transform_indices = @transform_13, window_bounds = array<i64: 1, 1, 32>}, {pipeline_mode = #tpu.pipeline_mode<synchronous>, transform_indices = @transform_14, window_bounds = array<i64: 32, 128>}, {pipeline_mode = #tpu.pipeline_mode<synchronous>, transform_indices = @transform_15, window_bounds = array<i64: 1, 128>}, {transform_indices = @transform_16, window_bounds = array<i64: 1, 2, 128>}]} {
    %c0_i32 = arith.constant 0 : i32
    %0 = arith.cmpi eq, %arg1, %c0_i32 : i32
    %1 = arith.extui %0 : i1 to i32
    %c0_i32_0 = arith.constant 0 : i32
    %2 = arith.cmpi ne, %1, %c0_i32_0 : i32
    scf.if %2 {
      %c0_99 = arith.constant 0 : index
      %c0_100 = arith.constant 0 : index
      %c0_101 = arith.constant 0 : index
      %242 = vector.load %arg2[%c0_99, %c0_100, %c0_101] : memref<2x8x32xf32, #tpu.memory_space<vmem>>, vector<2x8x32xf32>
      %c0_102 = arith.constant 0 : index
      %c0_103 = arith.constant 0 : index
      %c0_104 = arith.constant 0 : index
      %243 = vector.load %arg3[%c0_102, %c0_103, %c0_104] : memref<1x8x32xf32, #tpu.memory_space<vmem>>, vector<1x8x32xf32>
      %244 = vector.broadcast %243 : vector<1x8x32xf32> to vector<2x8x32xf32>
      %245 = arith.addf %242, %244 : vector<2x8x32xf32>
      %c0_105 = arith.constant 0 : index
      %c0_106 = arith.constant 0 : index
      %c0_107 = arith.constant 0 : index
      %246 = vector.load %arg19[%c0_105, %c0_106, %c0_107] : memref<2x8x32xf32, #tpu.memory_space<vmem>>, vector<2x8x32xf32>
      tpu.vector_store %arg19[%c0_105, %c0_106, %c0_107], %245 {strides = array<i32>} : memref<2x8x32xf32, #tpu.memory_space<vmem>>, vector<2x8x32xf32>,
    } else {
    }
    %c0 = arith.constant 0 : index
    %c0_1 = arith.constant 0 : index
    %c0_2 = arith.constant 0 : index
    %3 = vector.load %arg19[%c0, %c0_1, %c0_2] : memref<2x8x32xf32, #tpu.memory_space<vmem>>, vector<2x8x32xf32>
    %4 = vector.shape_cast %3 : vector<2x8x32xf32> to vector<16x32xf32>
    %c0_3 = arith.constant 0 : index
    %c0_4 = arith.constant 0 : index
    %c0_5 = arith.constant 0 : index
    %5 = vector.load %arg4[%c0_3, %c0_4, %c0_5] : memref<1x32x96xf32, #tpu.memory_space<vmem>>, vector<1x32x96xf32>
    %6 = vector.shape_cast %5 : vector<1x32x96xf32> to vector<32x96xf32>
    %cst = arith.constant dense<0.000000e+00> : vector<16x96xf32>
    %7 = tpu.matmul %4, %6, %cst {dimension_numbers = #tpu.dot_dimension_numbers<[1], [0], [0], [1], [0, 0, 1, 1], [], []>} : vector<16x32xf32>, vector<32x96xf32>, vector<16x96xf32> -> vector<16x96xf32>
    %c0_6 = arith.constant 0 : index
    %c0_7 = arith.constant 0 : index
    %c0_8 = arith.constant 0 : index
    %8 = vector.load %arg5[%c0_6, %c0_7, %c0_8] : memref<1x1x96xf32, #tpu.memory_space<vmem>>, vector<1x1x96xf32>
    %9 = vector.shape_cast %8 : vector<1x1x96xf32> to vector<1x96xf32>
    %10 = vector.broadcast %9 : vector<1x96xf32> to vector<16x96xf32>
    %11 = arith.addf %7, %10 : vector<16x96xf32>
    %c0_9 = arith.constant 0 : index
    %c0_10 = arith.constant 0 : index
    %c0_11 = arith.constant 0 : index
    %c0_12 = arith.constant 0 : index
    %12 = vector.load %arg6[%c0_9, %c0_10, %c0_11, %c0_12] : memref<1x4x8x32xf32, #tpu.memory_space<vmem>>, vector<1x4x8x32xf32>
    %13 = vector.shape_cast %12 : vector<1x4x8x32xf32> to vector<4x8x32xf32>
    %14 = vector.extract_strided_slice %11 {offsets = [0, 0], sizes = [8, 96], strides = [1, 1]} : vector<16x96xf32> to vector<8x96xf32>
    %cst_13 = arith.constant 0.000000e+00 : f32
    %15 = vector.broadcast %cst_13 : f32 to vector<8x32xf32>
    %16 = vector.extract_strided_slice %14 {offsets = [0, 0], sizes = [8, 8], strides = [1, 1]} : vector<8x96xf32> to vector<8x8xf32>
    %17 = vector.extract_strided_slice %14 {offsets = [0, 32], sizes = [8, 8], strides = [1, 1]} : vector<8x96xf32> to vector<8x8xf32>
    %18 = vector.extract_strided_slice %14 {offsets = [0, 64], sizes = [8, 8], strides = [1, 1]} : vector<8x96xf32> to vector<8x8xf32>
    %cst_14 = arith.constant dense<0.000000e+00> : vector<8x8xf32>
    %19 = tpu.matmul %16, %17, %cst_14 {dimension_numbers = #tpu.dot_dimension_numbers<[1], [1], [0], [0], [0, 0, 1, 0], [], []>} : vector<8x8xf32>, vector<8x8xf32>, vector<8x8xf32> -> vector<8x8xf32>
    %cst_15 = arith.constant dense<0xFF800000> : vector<8xf32>
    %20 = vector.multi_reduction <maximumf>, %19, %cst_15 [1] : vector<8x8xf32> to vector<8xf32>
    %21 = vector.shape_cast %20 : vector<8xf32> to vector<8x1xf32>
    %22 = vector.broadcast %21 : vector<8x1xf32> to vector<8x8xf32>
    %23 = arith.subf %19, %22 : vector<8x8xf32>
    %24 = math.exp %23 : vector<8x8xf32>
    %cst_16 = arith.constant dense<0.000000e+00> : vector<8xf32>
    %25 = vector.multi_reduction <add>, %24, %cst_16 [1] : vector<8x8xf32> to vector<8xf32>
    %26 = vector.shape_cast %25 : vector<8xf32> to vector<8x1xf32>
    %27 = vector.broadcast %26 : vector<8x1xf32> to vector<8x8xf32>
    %28 = arith.divf %24, %27 : vector<8x8xf32>
    %cst_17 = arith.constant dense<0.000000e+00> : vector<8x8xf32>
    %29 = tpu.matmul %28, %18, %cst_17 {dimension_numbers = #tpu.dot_dimension_numbers<[1], [0], [0], [1], [0, 0, 1, 1], [], []>} : vector<8x8xf32>, vector<8x8xf32>, vector<8x8xf32> -> vector<8x8xf32>
    %30 = vector.extract_strided_slice %13 {offsets = [0, 0, 0], sizes = [1, 8, 32], strides = [1, 1, 1]} : vector<4x8x32xf32> to vector<1x8x32xf32>
    %31 = vector.shape_cast %30 : vector<1x8x32xf32> to vector<8x32xf32>
    %cst_18 = arith.constant dense<0.000000e+00> : vector<8x32xf32>
    %32 = tpu.matmul %29, %31, %cst_18 {dimension_numbers = #tpu.dot_dimension_numbers<[1], [0], [0], [1], [0, 0, 1, 1], [], []>} : vector<8x8xf32>, vector<8x32xf32>, vector<8x32xf32> -> vector<8x32xf32>
    %33 = arith.addf %15, %32 : vector<8x32xf32>
    %34 = vector.extract_strided_slice %14 {offsets = [0, 8], sizes = [8, 8], strides = [1, 1]} : vector<8x96xf32> to vector<8x8xf32>
    %35 = vector.extract_strided_slice %14 {offsets = [0, 40], sizes = [8, 8], strides = [1, 1]} : vector<8x96xf32> to vector<8x8xf32>
    %36 = vector.extract_strided_slice %14 {offsets = [0, 72], sizes = [8, 8], strides = [1, 1]} : vector<8x96xf32> to vector<8x8xf32>
    %cst_19 = arith.constant dense<0.000000e+00> : vector<8x8xf32>
    %37 = tpu.matmul %34, %35, %cst_19 {dimension_numbers = #tpu.dot_dimension_numbers<[1], [1], [0], [0], [0, 0, 1, 0], [], []>} : vector<8x8xf32>, vector<8x8xf32>, vector<8x8xf32> -> vector<8x8xf32>
    %cst_20 = arith.constant dense<0xFF800000> : vector<8xf32>
    %38 = vector.multi_reduction <maximumf>, %37, %cst_20 [1] : vector<8x8xf32> to vector<8xf32>
    %39 = vector.shape_cast %38 : vector<8xf32> to vector<8x1xf32>
    %40 = vector.broadcast %39 : vector<8x1xf32> to vector<8x8xf32>
    %41 = arith.subf %37, %40 : vector<8x8xf32>
    %42 = math.exp %41 : vector<8x8xf32>
    %cst_21 = arith.constant dense<0.000000e+00> : vector<8xf32>
    %43 = vector.multi_reduction <add>, %42, %cst_21 [1] : vector<8x8xf32> to vector<8xf32>
    %44 = vector.shape_cast %43 : vector<8xf32> to vector<8x1xf32>
    %45 = vector.broadcast %44 : vector<8x1xf32> to vector<8x8xf32>
    %46 = arith.divf %42, %45 : vector<8x8xf32>
    %cst_22 = arith.constant dense<0.000000e+00> : vector<8x8xf32>
    %47 = tpu.matmul %46, %36, %cst_22 {dimension_numbers = #tpu.dot_dimension_numbers<[1], [0], [0], [1], [0, 0, 1, 1], [], []>} : vector<8x8xf32>, vector<8x8xf32>, vector<8x8xf32> -> vector<8x8xf32>
    %48 = vector.extract_strided_slice %13 {offsets = [1, 0, 0], sizes = [1, 8, 32], strides = [1, 1, 1]} : vector<4x8x32xf32> to vector<1x8x32xf32>
    %49 = vector.shape_cast %48 : vector<1x8x32xf32> to vector<8x32xf32>
    %cst_23 = arith.constant dense<0.000000e+00> : vector<8x32xf32>
    %50 = tpu.matmul %47, %49, %cst_23 {dimension_numbers = #tpu.dot_dimension_numbers<[1], [0], [0], [1], [0, 0, 1, 1], [], []>} : vector<8x8xf32>, vector<8x32xf32>, vector<8x32xf32> -> vector<8x32xf32>
    %51 = arith.addf %33, %50 : vector<8x32xf32>
    %52 = vector.extract_strided_slice %14 {offsets = [0, 16], sizes = [8, 8], strides = [1, 1]} : vector<8x96xf32> to vector<8x8xf32>
    %53 = vector.extract_strided_slice %14 {offsets = [0, 48], sizes = [8, 8], strides = [1, 1]} : vector<8x96xf32> to vector<8x8xf32>
    %54 = vector.extract_strided_slice %14 {offsets = [0, 80], sizes = [8, 8], strides = [1, 1]} : vector<8x96xf32> to vector<8x8xf32>
    %cst_24 = arith.constant dense<0.000000e+00> : vector<8x8xf32>
    %55 = tpu.matmul %52, %53, %cst_24 {dimension_numbers = #tpu.dot_dimension_numbers<[1], [1], [0], [0], [0, 0, 1, 0], [], []>} : vector<8x8xf32>, vector<8x8xf32>, vector<8x8xf32> -> vector<8x8xf32>
    %cst_25 = arith.constant dense<0xFF800000> : vector<8xf32>
    %56 = vector.multi_reduction <maximumf>, %55, %cst_25 [1] : vector<8x8xf32> to vector<8xf32>
    %57 = vector.shape_cast %56 : vector<8xf32> to vector<8x1xf32>
    %58 = vector.broadcast %57 : vector<8x1xf32> to vector<8x8xf32>
    %59 = arith.subf %55, %58 : vector<8x8xf32>
    %60 = math.exp %59 : vector<8x8xf32>
    %cst_26 = arith.constant dense<0.000000e+00> : vector<8xf32>
    %61 = vector.multi_reduction <add>, %60, %cst_26 [1] : vector<8x8xf32> to vector<8xf32>
    %62 = vector.shape_cast %61 : vector<8xf32> to vector<8x1xf32>
    %63 = vector.broadcast %62 : vector<8x1xf32> to vector<8x8xf32>
    %64 = arith.divf %60, %63 : vector<8x8xf32>
    %cst_27 = arith.constant dense<0.000000e+00> : vector<8x8xf32>
    %65 = tpu.matmul %64, %54, %cst_27 {dimension_numbers = #tpu.dot_dimension_numbers<[1], [0], [0], [1], [0, 0, 1, 1], [], []>} : vector<8x8xf32>, vector<8x8xf32>, vector<8x8xf32> -> vector<8x8xf32>
    %66 = vector.extract_strided_slice %13 {offsets = [2, 0, 0], sizes = [1, 8, 32], strides = [1, 1, 1]} : vector<4x8x32xf32> to vector<1x8x32xf32>
    %67 = vector.shape_cast %66 : vector<1x8x32xf32> to vector<8x32xf32>
    %cst_28 = arith.constant dense<0.000000e+00> : vector<8x32xf32>
    %68 = tpu.matmul %65, %67, %cst_28 {dimension_numbers = #tpu.dot_dimension_numbers<[1], [0], [0], [1], [0, 0, 1, 1], [], []>} : vector<8x8xf32>, vector<8x32xf32>, vector<8x32xf32> -> vector<8x32xf32>
    %69 = arith.addf %51, %68 : vector<8x32xf32>
    %70 = vector.extract_strided_slice %14 {offsets = [0, 24], sizes = [8, 8], strides = [1, 1]} : vector<8x96xf32> to vector<8x8xf32>
    %71 = vector.extract_strided_slice %14 {offsets = [0, 56], sizes = [8, 8], strides = [1, 1]} : vector<8x96xf32> to vector<8x8xf32>
    %72 = vector.extract_strided_slice %14 {offsets = [0, 88], sizes = [8, 8], strides = [1, 1]} : vector<8x96xf32> to vector<8x8xf32>
    %cst_29 = arith.constant dense<0.000000e+00> : vector<8x8xf32>
    %73 = tpu.matmul %70, %71, %cst_29 {dimension_numbers = #tpu.dot_dimension_numbers<[1], [1], [0], [0], [0, 0, 1, 0], [], []>} : vector<8x8xf32>, vector<8x8xf32>, vector<8x8xf32> -> vector<8x8xf32>
    %cst_30 = arith.constant dense<0xFF800000> : vector<8xf32>
    %74 = vector.multi_reduction <maximumf>, %73, %cst_30 [1] : vector<8x8xf32> to vector<8xf32>
    %75 = vector.shape_cast %74 : vector<8xf32> to vector<8x1xf32>
    %76 = vector.broadcast %75 : vector<8x1xf32> to vector<8x8xf32>
    %77 = arith.subf %73, %76 : vector<8x8xf32>
    %78 = math.exp %77 : vector<8x8xf32>
    %cst_31 = arith.constant dense<0.000000e+00> : vector<8xf32>
    %79 = vector.multi_reduction <add>, %78, %cst_31 [1] : vector<8x8xf32> to vector<8xf32>
    %80 = vector.shape_cast %79 : vector<8xf32> to vector<8x1xf32>
    %81 = vector.broadcast %80 : vector<8x1xf32> to vector<8x8xf32>
    %82 = arith.divf %78, %81 : vector<8x8xf32>
    %cst_32 = arith.constant dense<0.000000e+00> : vector<8x8xf32>
    %83 = tpu.matmul %82, %72, %cst_32 {dimension_numbers = #tpu.dot_dimension_numbers<[1], [0], [0], [1], [0, 0, 1, 1], [], []>} : vector<8x8xf32>, vector<8x8xf32>, vector<8x8xf32> -> vector<8x8xf32>
    %84 = vector.extract_strided_slice %13 {offsets = [3, 0, 0], sizes = [1, 8, 32], strides = [1, 1, 1]} : vector<4x8x32xf32> to vector<1x8x32xf32>
    %85 = vector.shape_cast %84 : vector<1x8x32xf32> to vector<8x32xf32>
    %cst_33 = arith.constant dense<0.000000e+00> : vector<8x32xf32>
    %86 = tpu.matmul %83, %85, %cst_33 {dimension_numbers = #tpu.dot_dimension_numbers<[1], [0], [0], [1], [0, 0, 1, 1], [], []>} : vector<8x8xf32>, vector<8x32xf32>, vector<8x32xf32> -> vector<8x32xf32>
    %87 = arith.addf %69, %86 : vector<8x32xf32>
    %88 = vector.extract_strided_slice %11 {offsets = [8, 0], sizes = [8, 96], strides = [1, 1]} : vector<16x96xf32> to vector<8x96xf32>
    %cst_34 = arith.constant 0.000000e+00 : f32
    %89 = vector.broadcast %cst_34 : f32 to vector<8x32xf32>
    %90 = vector.extract_strided_slice %88 {offsets = [0, 0], sizes = [8, 8], strides = [1, 1]} : vector<8x96xf32> to vector<8x8xf32>
    %91 = vector.extract_strided_slice %88 {offsets = [0, 32], sizes = [8, 8], strides = [1, 1]} : vector<8x96xf32> to vector<8x8xf32>
    %92 = vector.extract_strided_slice %88 {offsets = [0, 64], sizes = [8, 8], strides = [1, 1]} : vector<8x96xf32> to vector<8x8xf32>
    %cst_35 = arith.constant dense<0.000000e+00> : vector<8x8xf32>
    %93 = tpu.matmul %90, %91, %cst_35 {dimension_numbers = #tpu.dot_dimension_numbers<[1], [1], [0], [0], [0, 0, 1, 0], [], []>} : vector<8x8xf32>, vector<8x8xf32>, vector<8x8xf32> -> vector<8x8xf32>
    %cst_36 = arith.constant dense<0xFF800000> : vector<8xf32>
    %94 = vector.multi_reduction <maximumf>, %93, %cst_36 [1] : vector<8x8xf32> to vector<8xf32>
    %95 = vector.shape_cast %94 : vector<8xf32> to vector<8x1xf32>
    %96 = vector.broadcast %95 : vector<8x1xf32> to vector<8x8xf32>
    %97 = arith.subf %93, %96 : vector<8x8xf32>
    %98 = math.exp %97 : vector<8x8xf32>
    %cst_37 = arith.constant dense<0.000000e+00> : vector<8xf32>
    %99 = vector.multi_reduction <add>, %98, %cst_37 [1] : vector<8x8xf32> to vector<8xf32>
    %100 = vector.shape_cast %99 : vector<8xf32> to vector<8x1xf32>
    %101 = vector.broadcast %100 : vector<8x1xf32> to vector<8x8xf32>
    %102 = arith.divf %98, %101 : vector<8x8xf32>
    %cst_38 = arith.constant dense<0.000000e+00> : vector<8x8xf32>
    %103 = tpu.matmul %102, %92, %cst_38 {dimension_numbers = #tpu.dot_dimension_numbers<[1], [0], [0], [1], [0, 0, 1, 1], [], []>} : vector<8x8xf32>, vector<8x8xf32>, vector<8x8xf32> -> vector<8x8xf32>
    %104 = vector.extract_strided_slice %13 {offsets = [0, 0, 0], sizes = [1, 8, 32], strides = [1, 1, 1]} : vector<4x8x32xf32> to vector<1x8x32xf32>
    %105 = vector.shape_cast %104 : vector<1x8x32xf32> to vector<8x32xf32>
    %cst_39 = arith.constant dense<0.000000e+00> : vector<8x32xf32>
    %106 = tpu.matmul %103, %105, %cst_39 {dimension_numbers = #tpu.dot_dimension_numbers<[1], [0], [0], [1], [0, 0, 1, 1], [], []>} : vector<8x8xf32>, vector<8x32xf32>, vector<8x32xf32> -> vector<8x32xf32>
    %107 = arith.addf %89, %106 : vector<8x32xf32>
    %108 = vector.extract_strided_slice %88 {offsets = [0, 8], sizes = [8, 8], strides = [1, 1]} : vector<8x96xf32> to vector<8x8xf32>
    %109 = vector.extract_strided_slice %88 {offsets = [0, 40], sizes = [8, 8], strides = [1, 1]} : vector<8x96xf32> to vector<8x8xf32>
    %110 = vector.extract_strided_slice %88 {offsets = [0, 72], sizes = [8, 8], strides = [1, 1]} : vector<8x96xf32> to vector<8x8xf32>
    %cst_40 = arith.constant dense<0.000000e+00> : vector<8x8xf32>
    %111 = tpu.matmul %108, %109, %cst_40 {dimension_numbers = #tpu.dot_dimension_numbers<[1], [1], [0], [0], [0, 0, 1, 0], [], []>} : vector<8x8xf32>, vector<8x8xf32>, vector<8x8xf32> -> vector<8x8xf32>
    %cst_41 = arith.constant dense<0xFF800000> : vector<8xf32>
    %112 = vector.multi_reduction <maximumf>, %111, %cst_41 [1] : vector<8x8xf32> to vector<8xf32>
    %113 = vector.shape_cast %112 : vector<8xf32> to vector<8x1xf32>
    %114 = vector.broadcast %113 : vector<8x1xf32> to vector<8x8xf32>
    %115 = arith.subf %111, %114 : vector<8x8xf32>
    %116 = math.exp %115 : vector<8x8xf32>
    %cst_42 = arith.constant dense<0.000000e+00> : vector<8xf32>
    %117 = vector.multi_reduction <add>, %116, %cst_42 [1] : vector<8x8xf32> to vector<8xf32>
    %118 = vector.shape_cast %117 : vector<8xf32> to vector<8x1xf32>
    %119 = vector.broadcast %118 : vector<8x1xf32> to vector<8x8xf32>
    %120 = arith.divf %116, %119 : vector<8x8xf32>
    %cst_43 = arith.constant dense<0.000000e+00> : vector<8x8xf32>
    %121 = tpu.matmul %120, %110, %cst_43 {dimension_numbers = #tpu.dot_dimension_numbers<[1], [0], [0], [1], [0, 0, 1, 1], [], []>} : vector<8x8xf32>, vector<8x8xf32>, vector<8x8xf32> -> vector<8x8xf32>
    %122 = vector.extract_strided_slice %13 {offsets = [1, 0, 0], sizes = [1, 8, 32], strides = [1, 1, 1]} : vector<4x8x32xf32> to vector<1x8x32xf32>
    %123 = vector.shape_cast %122 : vector<1x8x32xf32> to vector<8x32xf32>
    %cst_44 = arith.constant dense<0.000000e+00> : vector<8x32xf32>
    %124 = tpu.matmul %121, %123, %cst_44 {dimension_numbers = #tpu.dot_dimension_numbers<[1], [0], [0], [1], [0, 0, 1, 1], [], []>} : vector<8x8xf32>, vector<8x32xf32>, vector<8x32xf32> -> vector<8x32xf32>
    %125 = arith.addf %107, %124 : vector<8x32xf32>
    %126 = vector.extract_strided_slice %88 {offsets = [0, 16], sizes = [8, 8], strides = [1, 1]} : vector<8x96xf32> to vector<8x8xf32>
    %127 = vector.extract_strided_slice %88 {offsets = [0, 48], sizes = [8, 8], strides = [1, 1]} : vector<8x96xf32> to vector<8x8xf32>
    %128 = vector.extract_strided_slice %88 {offsets = [0, 80], sizes = [8, 8], strides = [1, 1]} : vector<8x96xf32> to vector<8x8xf32>
    %cst_45 = arith.constant dense<0.000000e+00> : vector<8x8xf32>
    %129 = tpu.matmul %126, %127, %cst_45 {dimension_numbers = #tpu.dot_dimension_numbers<[1], [1], [0], [0], [0, 0, 1, 0], [], []>} : vector<8x8xf32>, vector<8x8xf32>, vector<8x8xf32> -> vector<8x8xf32>
    %cst_46 = arith.constant dense<0xFF800000> : vector<8xf32>
    %130 = vector.multi_reduction <maximumf>, %129, %cst_46 [1] : vector<8x8xf32> to vector<8xf32>
    %131 = vector.shape_cast %130 : vector<8xf32> to vector<8x1xf32>
    %132 = vector.broadcast %131 : vector<8x1xf32> to vector<8x8xf32>
    %133 = arith.subf %129, %132 : vector<8x8xf32>
    %134 = math.exp %133 : vector<8x8xf32>
    %cst_47 = arith.constant dense<0.000000e+00> : vector<8xf32>
    %135 = vector.multi_reduction <add>, %134, %cst_47 [1] : vector<8x8xf32> to vector<8xf32>
    %136 = vector.shape_cast %135 : vector<8xf32> to vector<8x1xf32>
    %137 = vector.broadcast %136 : vector<8x1xf32> to vector<8x8xf32>
    %138 = arith.divf %134, %137 : vector<8x8xf32>
    %cst_48 = arith.constant dense<0.000000e+00> : vector<8x8xf32>
    %139 = tpu.matmul %138, %128, %cst_48 {dimension_numbers = #tpu.dot_dimension_numbers<[1], [0], [0], [1], [0, 0, 1, 1], [], []>} : vector<8x8xf32>, vector<8x8xf32>, vector<8x8xf32> -> vector<8x8xf32>
    %140 = vector.extract_strided_slice %13 {offsets = [2, 0, 0], sizes = [1, 8, 32], strides = [1, 1, 1]} : vector<4x8x32xf32> to vector<1x8x32xf32>
    %141 = vector.shape_cast %140 : vector<1x8x32xf32> to vector<8x32xf32>
    %cst_49 = arith.constant dense<0.000000e+00> : vector<8x32xf32>
    %142 = tpu.matmul %139, %141, %cst_49 {dimension_numbers = #tpu.dot_dimension_numbers<[1], [0], [0], [1], [0, 0, 1, 1], [], []>} : vector<8x8xf32>, vector<8x32xf32>, vector<8x32xf32> -> vector<8x32xf32>
    %143 = arith.addf %125, %142 : vector<8x32xf32>
    %144 = vector.extract_strided_slice %88 {offsets = [0, 24], sizes = [8, 8], strides = [1, 1]} : vector<8x96xf32> to vector<8x8xf32>
    %145 = vector.extract_strided_slice %88 {offsets = [0, 56], sizes = [8, 8], strides = [1, 1]} : vector<8x96xf32> to vector<8x8xf32>
    %146 = vector.extract_strided_slice %88 {offsets = [0, 88], sizes = [8, 8], strides = [1, 1]} : vector<8x96xf32> to vector<8x8xf32>
    %cst_50 = arith.constant dense<0.000000e+00> : vector<8x8xf32>
    %147 = tpu.matmul %144, %145, %cst_50 {dimension_numbers = #tpu.dot_dimension_numbers<[1], [1], [0], [0], [0, 0, 1, 0], [], []>} : vector<8x8xf32>, vector<8x8xf32>, vector<8x8xf32> -> vector<8x8xf32>
    %cst_51 = arith.constant dense<0xFF800000> : vector<8xf32>
    %148 = vector.multi_reduction <maximumf>, %147, %cst_51 [1] : vector<8x8xf32> to vector<8xf32>
    %149 = vector.shape_cast %148 : vector<8xf32> to vector<8x1xf32>
    %150 = vector.broadcast %149 : vector<8x1xf32> to vector<8x8xf32>
    %151 = arith.subf %147, %150 : vector<8x8xf32>
    %152 = math.exp %151 : vector<8x8xf32>
    %cst_52 = arith.constant dense<0.000000e+00> : vector<8xf32>
    %153 = vector.multi_reduction <add>, %152, %cst_52 [1] : vector<8x8xf32> to vector<8xf32>
    %154 = vector.shape_cast %153 : vector<8xf32> to vector<8x1xf32>
    %155 = vector.broadcast %154 : vector<8x1xf32> to vector<8x8xf32>
    %156 = arith.divf %152, %155 : vector<8x8xf32>
    %cst_53 = arith.constant dense<0.000000e+00> : vector<8x8xf32>
    %157 = tpu.matmul %156, %146, %cst_53 {dimension_numbers = #tpu.dot_dimension_numbers<[1], [0], [0], [1], [0, 0, 1, 1], [], []>} : vector<8x8xf32>, vector<8x8xf32>, vector<8x8xf32> -> vector<8x8xf32>
    %158 = vector.extract_strided_slice %13 {offsets = [3, 0, 0], sizes = [1, 8, 32], strides = [1, 1, 1]} : vector<4x8x32xf32> to vector<1x8x32xf32>
    %159 = vector.shape_cast %158 : vector<1x8x32xf32> to vector<8x32xf32>
    %cst_54 = arith.constant dense<0.000000e+00> : vector<8x32xf32>
    %160 = tpu.matmul %157, %159, %cst_54 {dimension_numbers = #tpu.dot_dimension_numbers<[1], [0], [0], [1], [0, 0, 1, 1], [], []>} : vector<8x8xf32>, vector<8x32xf32>, vector<8x32xf32> -> vector<8x32xf32>
    %161 = arith.addf %143, %160 : vector<8x32xf32>
    %162 = tpu.concatenate %87, %161 in 0 : vector<8x32xf32>, vector<8x32xf32> -> vector<16x32xf32>
    %c0_55 = arith.constant 0 : index
    %c0_56 = arith.constant 0 : index
    %c0_57 = arith.constant 0 : index
    %163 = vector.load %arg7[%c0_55, %c0_56, %c0_57] : memref<1x1x32xf32, #tpu.memory_space<vmem>>, vector<1x1x32xf32>
    %164 = vector.shape_cast %163 : vector<1x1x32xf32> to vector<1x32xf32>
    %165 = vector.broadcast %164 : vector<1x32xf32> to vector<16x32xf32>
    %166 = arith.addf %162, %165 : vector<16x32xf32>
    %167 = arith.addf %4, %166 : vector<16x32xf32>
    %c0_58 = arith.constant 0 : index
    %c0_59 = arith.constant 0 : index
    %c0_60 = arith.constant 0 : index
    %168 = vector.load %arg8[%c0_58, %c0_59, %c0_60] : memref<1x1x32xf32, #tpu.memory_space<vmem>>, vector<1x1x32xf32>
    %169 = vector.shape_cast %168 : vector<1x1x32xf32> to vector<1x32xf32>
    %c0_61 = arith.constant 0 : index
    %c0_62 = arith.constant 0 : index
    %c0_63 = arith.constant 0 : index
    %170 = vector.load %arg9[%c0_61, %c0_62, %c0_63] : memref<1x1x32xf32, #tpu.memory_space<vmem>>, vector<1x1x32xf32>
    %171 = vector.shape_cast %170 : vector<1x1x32xf32> to vector<1x32xf32>
    %cst_64 = arith.constant dense<0.000000e+00> : vector<16xf32>
    %172 = vector.multi_reduction <add>, %167, %cst_64 [1] : vector<16x32xf32> to vector<16xf32>
    %173 = vector.shape_cast %172 : vector<16xf32> to vector<16x1xf32>
    %cst_65 = arith.constant 3.200000e+01 : f32
    %174 = vector.broadcast %cst_65 : f32 to vector<16x1xf32>
    %175 = arith.divf %173, %174 : vector<16x1xf32>
    %176 = vector.broadcast %175 : vector<16x1xf32> to vector<16x32xf32>
    %177 = arith.subf %167, %176 : vector<16x32xf32>
    %178 = arith.mulf %177, %177 : vector<16x32xf32>
    %cst_66 = arith.constant dense<0.000000e+00> : vector<16xf32>
    %179 = vector.multi_reduction <add>, %178, %cst_66 [1] : vector<16x32xf32> to vector<16xf32>
    %180 = vector.shape_cast %179 : vector<16xf32> to vector<16x1xf32>
    %cst_67 = arith.constant 3.200000e+01 : f32
    %181 = vector.broadcast %cst_67 : f32 to vector<16x1xf32>
    %182 = arith.divf %180, %181 : vector<16x1xf32>
    %183 = vector.broadcast %175 : vector<16x1xf32> to vector<16x32xf32>
    %184 = arith.subf %167, %183 : vector<16x32xf32>
    %cst_68 = arith.constant 9.99999974E-6 : f32
    %185 = vector.broadcast %cst_68 : f32 to vector<16x1xf32>
    %186 = arith.addf %182, %185 : vector<16x1xf32>
    %187 = math.rsqrt %186 : vector<16x1xf32>
    %188 = vector.broadcast %187 : vector<16x1xf32> to vector<16x32xf32>
    %189 = arith.mulf %184, %188 : vector<16x32xf32>
    %190 = vector.broadcast %169 : vector<1x32xf32> to vector<16x32xf32>
    %191 = arith.mulf %189, %190 : vector<16x32xf32>
    %192 = vector.broadcast %171 : vector<1x32xf32> to vector<16x32xf32>
    %193 = arith.addf %191, %192 : vector<16x32xf32>
    %c0_69 = arith.constant 0 : index
    %c0_70 = arith.constant 0 : index
    %c0_71 = arith.constant 0 : index
    %194 = vector.load %arg10[%c0_69, %c0_70, %c0_71] : memref<1x32x64xf32, #tpu.memory_space<vmem>>, vector<1x32x64xf32>
    %195 = vector.shape_cast %194 : vector<1x32x64xf32> to vector<32x64xf32>
    %cst_72 = arith.constant dense<0.000000e+00> : vector<16x64xf32>
    %196 = tpu.matmul %193, %195, %cst_72 {dimension_numbers = #tpu.dot_dimension_numbers<[1], [0], [0], [1], [0, 0, 1, 1], [], []>} : vector<16x32xf32>, vector<32x64xf32>, vector<16x64xf32> -> vector<16x64xf32>
    %c0_73 = arith.constant 0 : index
    %c0_74 = arith.constant 0 : index
    %c0_75 = arith.constant 0 : index
    %197 = vector.load %arg11[%c0_73, %c0_74, %c0_75] : memref<1x1x64xf32, #tpu.memory_space<vmem>>, vector<1x1x64xf32>
    %198 = vector.shape_cast %197 : vector<1x1x64xf32> to vector<1x64xf32>
    %199 = vector.broadcast %198 : vector<1x64xf32> to vector<16x64xf32>
    %200 = arith.addf %196, %199 : vector<16x64xf32>
    %cst_76 = arith.constant 0.000000e+00 : f32
    %201 = vector.broadcast %cst_76 : f32 to vector<16x64xf32>
    %202 = arith.maximumf %200, %201 : vector<16x64xf32>
    %c0_77 = arith.constant 0 : index
    %c0_78 = arith.constant 0 : index
    %c0_79 = arith.constant 0 : index
    %203 = vector.load %arg12[%c0_77, %c0_78, %c0_79] : memref<1x64x32xf32, #tpu.memory_space<vmem>>, vector<1x64x32xf32>
    %204 = vector.shape_cast %203 : vector<1x64x32xf32> to vector<64x32xf32>
    %cst_80 = arith.constant dense<0.000000e+00> : vector<16x32xf32>
    %205 = tpu.matmul %202, %204, %cst_80 {dimension_numbers = #tpu.dot_dimension_numbers<[1], [0], [0], [1], [0, 0, 1, 1], [], []>} : vector<16x64xf32>, vector<64x32xf32>, vector<16x32xf32> -> vector<16x32xf32>
    %c0_81 = arith.constant 0 : index
    %c0_82 = arith.constant 0 : index
    %c0_83 = arith.constant 0 : index
    %206 = vector.load %arg13[%c0_81, %c0_82, %c0_83] : memref<1x1x32xf32, #tpu.memory_space<vmem>>, vector<1x1x32xf32>
    %207 = vector.shape_cast %206 : vector<1x1x32xf32> to vector<1x32xf32>
    %208 = vector.broadcast %207 : vector<1x32xf32> to vector<16x32xf32>
    %209 = arith.addf %205, %208 : vector<16x32xf32>
    %210 = arith.addf %193, %209 : vector<16x32xf32>
    %c0_84 = arith.constant 0 : index
    %c0_85 = arith.constant 0 : index
    %c0_86 = arith.constant 0 : index
    %211 = vector.load %arg14[%c0_84, %c0_85, %c0_86] : memref<1x1x32xf32, #tpu.memory_space<vmem>>, vector<1x1x32xf32>
    %212 = vector.shape_cast %211 : vector<1x1x32xf32> to vector<1x32xf32>
    %c0_87 = arith.constant 0 : index
    %c0_88 = arith.constant 0 : index
    %c0_89 = arith.constant 0 : index
    %213 = vector.load %arg15[%c0_87, %c0_88, %c0_89] : memref<1x1x32xf32, #tpu.memory_space<vmem>>, vector<1x1x32xf32>
    %214 = vector.shape_cast %213 : vector<1x1x32xf32> to vector<1x32xf32>
    %cst_90 = arith.constant dense<0.000000e+00> : vector<16xf32>
    %215 = vector.multi_reduction <add>, %210, %cst_90 [1] : vector<16x32xf32> to vector<16xf32>
    %216 = vector.shape_cast %215 : vector<16xf32> to vector<16x1xf32>
    %cst_91 = arith.constant 3.200000e+01 : f32
    %217 = vector.broadcast %cst_91 : f32 to vector<16x1xf32>
    %218 = arith.divf %216, %217 : vector<16x1xf32>
    %219 = vector.broadcast %218 : vector<16x1xf32> to vector<16x32xf32>
    %220 = arith.subf %210, %219 : vector<16x32xf32>
    %221 = arith.mulf %220, %220 : vector<16x32xf32>
    %cst_92 = arith.constant dense<0.000000e+00> : vector<16xf32>
    %222 = vector.multi_reduction <add>, %221, %cst_92 [1] : vector<16x32xf32> to vector<16xf32>
    %223 = vector.shape_cast %222 : vector<16xf32> to vector<16x1xf32>
    %cst_93 = arith.constant 3.200000e+01 : f32
    %224 = vector.broadcast %cst_93 : f32 to vector<16x1xf32>
    %225 = arith.divf %223, %224 : vector<16x1xf32>
    %226 = vector.broadcast %218 : vector<16x1xf32> to vector<16x32xf32>
    %227 = arith.subf %210, %226 : vector<16x32xf32>
    %cst_94 = arith.constant 9.99999974E-6 : f32
    %228 = vector.broadcast %cst_94 : f32 to vector<16x1xf32>
    %229 = arith.addf %225, %228 : vector<16x1xf32>
    %230 = math.rsqrt %229 : vector<16x1xf32>
    %231 = vector.broadcast %230 : vector<16x1xf32> to vector<16x32xf32>
    %232 = arith.mulf %227, %231 : vector<16x32xf32>
    %233 = vector.broadcast %212 : vector<1x32xf32> to vector<16x32xf32>
    %234 = arith.mulf %232, %233 : vector<16x32xf32>
    %235 = vector.broadcast %214 : vector<1x32xf32> to vector<16x32xf32>
    %236 = arith.addf %234, %235 : vector<16x32xf32>
    %237 = vector.shape_cast %236 : vector<16x32xf32> to vector<2x8x32xf32>
    %c0_95 = arith.constant 0 : index
    %c0_96 = arith.constant 0 : index
    %c0_97 = arith.constant 0 : index
    %238 = vector.load %arg19[%c0_95, %c0_96, %c0_97] : memref<2x8x32xf32, #tpu.memory_space<vmem>>, vector<2x8x32xf32>
    tpu.vector_store %arg19[%c0_95, %c0_96, %c0_97], %237 {strides = array<i32>} : memref<2x8x32xf32, #tpu.memory_space<vmem>>, vector<2x8x32xf32>,
    %c1_i32 = arith.constant 1 : i32
    %239 = arith.cmpi eq, %arg1, %c1_i32 : i32
    %240 = arith.extui %239 : i1 to i32
    %c0_i32_98 = arith.constant 0 : i32
    %241 = arith.cmpi ne, %240, %c0_i32_98 : i32
    scf.if %241 {
      %242 = vector.extract_strided_slice %236 {offsets = [0, 0], sizes = [8, 32], strides = [1, 1]} : vector<16x32xf32> to vector<8x32xf32>
      %cst_99 = arith.constant dense<0.000000e+00> : vector<32xf32>
      %243 = vector.multi_reduction <add>, %242, %cst_99 [0] : vector<8x32xf32> to vector<32xf32>
      %244 = vector.shape_cast %243 : vector<32xf32> to vector<1x32xf32>
      %cst_100 = arith.constant 8.000000e+00 : f32
      %245 = vector.broadcast %cst_100 : f32 to vector<1x32xf32>
      %246 = arith.divf %244, %245 : vector<1x32xf32>
      %247 = vector.extract_strided_slice %236 {offsets = [8, 0], sizes = [8, 32], strides = [1, 1]} : vector<16x32xf32> to vector<8x32xf32>
      %cst_101 = arith.constant dense<0.000000e+00> : vector<32xf32>
      %248 = vector.multi_reduction <add>, %247, %cst_101 [0] : vector<8x32xf32> to vector<32xf32>
      %249 = vector.shape_cast %248 : vector<32xf32> to vector<1x32xf32>
      %cst_102 = arith.constant 8.000000e+00 : f32
      %250 = vector.broadcast %cst_102 : f32 to vector<1x32xf32>
      %251 = arith.divf %249, %250 : vector<1x32xf32>
      %252 = tpu.concatenate %246, %251 in 0 : vector<1x32xf32>, vector<1x32xf32> -> vector<2x32xf32>
      %c0_103 = arith.constant 0 : index
      %c0_104 = arith.constant 0 : index
      %253 = vector.load %arg16[%c0_103, %c0_104] : memref<32x128xf32, #tpu.memory_space<vmem>>, vector<32x128xf32>
      %cst_105 = arith.constant dense<0.000000e+00> : vector<2x128xf32>
      %254 = tpu.matmul %252, %253, %cst_105 {dimension_numbers = #tpu.dot_dimension_numbers<[1], [0], [0], [1], [0, 0, 1, 1], [], []>} : vector<2x32xf32>, vector<32x128xf32>, vector<2x128xf32> -> vector<2x128xf32>
      %c0_106 = arith.constant 0 : index
      %c0_107 = arith.constant 0 : index
      %255 = vector.load %arg17[%c0_106, %c0_107] : memref<1x128xf32, #tpu.memory_space<vmem>>, vector<1x128xf32>
      %256 = vector.broadcast %255 : vector<1x128xf32> to vector<2x128xf32>
      %257 = arith.addf %254, %256 : vector<2x128xf32>
      %c0_108 = arith.constant 0 : index
      %c0_109 = arith.constant 0 : index
      %c0_110 = arith.constant 0 : index
      %258 = vector.load %arg18[%c0_108, %c0_109, %c0_110] : memref<1x2x128xf32, #tpu.memory_space<vmem>>, vector<1x2x128xf32>
      %259 = vector.shape_cast %258 : vector<1x2x128xf32> to vector<2x128xf32>
      %260 = vector.shape_cast %257 : vector<2x128xf32> to vector<1x2x128xf32>
      tpu.vector_store %arg18[%c0_108, %c0_109, %c0_110], %260 {strides = array<i32>} : memref<1x2x128xf32, #tpu.memory_space<vmem>>, vector<1x2x128xf32>,
    } else {
    }
    return
  }
  func.func @transform_0(%arg0: i32, %arg1: i32) -> (i32, i32, i32) {
    %c0_i32 = arith.constant 0 : i32
    %c0_i32_0 = arith.constant 0 : i32
    %c0_i32_1 = arith.constant 0 : i32
    return %arg0, %c0_i32, %c0_i32_0 : i32, i32, i32
  }
  func.func @transform_1(%arg0: i32, %arg1: i32) -> (i32, i32, i32) {
    %c0_i32 = arith.constant 0 : i32
    %c0_i32_0 = arith.constant 0 : i32
    %c0_i32_1 = arith.constant 0 : i32
    %c0_i32_2 = arith.constant 0 : i32
    return %c0_i32, %c0_i32_0, %c0_i32_1 : i32, i32, i32
  }
  func.func @transform_2(%arg0: i32, %arg1: i32) -> (i32, i32, i32) {
    %c0_i32 = arith.constant 0 : i32
    %c0_i32_0 = arith.constant 0 : i32
    %c0_i32_1 = arith.constant 0 : i32
    return %arg1, %c0_i32, %c0_i32_0 : i32, i32, i32
  }
  func.func @transform_3(%arg0: i32, %arg1: i32) -> (i32, i32, i32) {
    %c0_i32 = arith.constant 0 : i32
    %c0_i32_0 = arith.constant 0 : i32
    %c0_i32_1 = arith.constant 0 : i32
    return %arg1, %c0_i32, %c0_i32_0 : i32, i32, i32
  }
  func.func @transform_4(%arg0: i32, %arg1: i32) -> (i32, i32, i32, i32) {
    %c0_i32 = arith.constant 0 : i32
    %c0_i32_0 = arith.constant 0 : i32
    %c0_i32_1 = arith.constant 0 : i32
    %c0_i32_2 = arith.constant 0 : i32
    return %arg1, %c0_i32, %c0_i32_0, %c0_i32_1 : i32, i32, i32, i32
  }
  func.func @transform_5(%arg0: i32, %arg1: i32) -> (i32, i32, i32) {
    %c0_i32 = arith.constant 0 : i32
    %c0_i32_0 = arith.constant 0 : i32
    %c0_i32_1 = arith.constant 0 : i32
    return %arg1, %c0_i32, %c0_i32_0 : i32, i32, i32
  }
  func.func @transform_6(%arg0: i32, %arg1: i32) -> (i32, i32, i32) {
    %c0_i32 = arith.constant 0 : i32
    %c0_i32_0 = arith.constant 0 : i32
    %c0_i32_1 = arith.constant 0 : i32
    return %arg1, %c0_i32, %c0_i32_0 : i32, i32, i32
  }
  func.func @transform_7(%arg0: i32, %arg1: i32) -> (i32, i32, i32) {
    %c0_i32 = arith.constant 0 : i32
    %c0_i32_0 = arith.constant 0 : i32
    %c0_i32_1 = arith.constant 0 : i32
    return %arg1, %c0_i32, %c0_i32_0 : i32, i32, i32
  }
  func.func @transform_8(%arg0: i32, %arg1: i32) -> (i32, i32, i32) {
    %c0_i32 = arith.constant 0 : i32
    %c0_i32_0 = arith.constant 0 : i32
    %c0_i32_1 = arith.constant 0 : i32
    return %arg1, %c0_i32, %c0_i32_0 : i32, i32, i32
  }
  func.func @transform_9(%arg0: i32, %arg1: i32) -> (i32, i32, i32) {
    %c0_i32 = arith.constant 0 : i32
    %c0_i32_0 = arith.constant 0 : i32
    %c0_i32_1 = arith.constant 0 : i32
    return %arg1, %c0_i32, %c0_i32_0 : i32, i32, i32
  }
  func.func @transform_10(%arg0: i32, %arg1: i32) -> (i32, i32, i32) {
    %c0_i32 = arith.constant 0 : i32
    %c0_i32_0 = arith.constant 0 : i32
    %c0_i32_1 = arith.constant 0 : i32
    return %arg1, %c0_i32, %c0_i32_0 : i32, i32, i32
  }
  func.func @transform_11(%arg0: i32, %arg1: i32) -> (i32, i32, i32) {
    %c0_i32 = arith.constant 0 : i32
    %c0_i32_0 = arith.constant 0 : i32
    %c0_i32_1 = arith.constant 0 : i32
    return %arg1, %c0_i32, %c0_i32_0 : i32, i32, i32
  }
  func.func @transform_12(%arg0: i32, %arg1: i32) -> (i32, i32, i32) {
    %c0_i32 = arith.constant 0 : i32
    %c0_i32_0 = arith.constant 0 : i32
    %c0_i32_1 = arith.constant 0 : i32
    return %arg1, %c0_i32, %c0_i32_0 : i32, i32, i32
  }
  func.func @transform_13(%arg0: i32, %arg1: i32) -> (i32, i32, i32) {
    %c0_i32 = arith.constant 0 : i32
    %c0_i32_0 = arith.constant 0 : i32
    %c0_i32_1 = arith.constant 0 : i32
    return %arg1, %c0_i32, %c0_i32_0 : i32, i32, i32
  }
  func.func @transform_14(%arg0: i32, %arg1: i32) -> (i32, i32) {
    %c0_i32 = arith.constant 0 : i32
    %c0_i32_0 = arith.constant 0 : i32
    %c0_i32_1 = arith.constant 0 : i32
    return %c0_i32, %c0_i32_0 : i32, i32
  }
  func.func @transform_15(%arg0: i32, %arg1: i32) -> (i32, i32) {
    %c0_i32 = arith.constant 0 : i32
    %c0_i32_0 = arith.constant 0 : i32
    %c0_i32_1 = arith.constant 0 : i32
    return %c0_i32, %c0_i32_0 : i32, i32
  }
  func.func @transform_16(%arg0: i32, %arg1: i32) -> (i32, i32, i32) {
    %c0_i32 = arith.constant 0 : i32
    %c0_i32_0 = arith.constant 0 : i32
    %c0_i32_1 = arith.constant 0 : i32
    return %arg0, %c0_i32, %c0_i32_0 : i32, i32, i32
  }
}

module attributes {stable_mosaic.version = 11 : i64} {
  func.func @_fused_kernel(%arg0: i32, %arg1: i32, %arg2: memref<2x8x32xf32, #tpu.memory_space<vmem>>, %arg3: memref<1x8x32xf32, #tpu.memory_space<vmem>>, %arg4: memref<1x32x96xf32, #tpu.memory_space<vmem>>, %arg5: memref<1x1x96xf32, #tpu.memory_space<vmem>>, %arg6: memref<1x4x8x32xf32, #tpu.memory_space<vmem>>, %arg7: memref<1x1x32xf32, #tpu.memory_space<vmem>>, %arg8: memref<1x1x32xf32, #tpu.memory_space<vmem>>, %arg9: memref<1x1x32xf32, #tpu.memory_space<vmem>>, %arg10: memref<1x32x64xf32, #tpu.memory_space<vmem>>, %arg11: memref<1x1x64xf32, #tpu.memory_space<vmem>>, %arg12: memref<1x64x32xf32, #tpu.memory_space<vmem>>, %arg13: memref<1x1x32xf32, #tpu.memory_space<vmem>>, %arg14: memref<1x1x32xf32, #tpu.memory_space<vmem>>, %arg15: memref<1x1x32xf32, #tpu.memory_space<vmem>>, %arg16: memref<32x128xf32, #tpu.memory_space<vmem>>, %arg17: memref<1x128xf32, #tpu.memory_space<vmem>>, %arg18: memref<1x2x128xf32, #tpu.memory_space<vmem>>, %arg19: memref<2x8x32xf32, #tpu.memory_space<vmem>>) attributes {dimension_semantics = [#tpu.dimension_semantics<parallel>, #tpu.dimension_semantics<arbitrary>], iteration_bounds = array<i64: 1, 2>, scalar_prefetch = 0 : i64, scratch_operands = 1 : i64, tpu.core_type = #tpu.core_type<tc>, window_params = [{transform_indices = @transform_0, window_bounds = array<i64: 2, 8, 32>}, {pipeline_mode = #tpu.pipeline_mode<synchronous>, transform_indices = @transform_1, window_bounds = array<i64: 1, 8, 32>}, {transform_indices = @transform_2, window_bounds = array<i64: 1, 32, 96>}, {transform_indices = @transform_3, window_bounds = array<i64: 1, 1, 96>}, {transform_indices = @transform_4, window_bounds = array<i64: 1, 4, 8, 32>}, {transform_indices = @transform_5, window_bounds = array<i64: 1, 1, 32>}, {transform_indices = @transform_6, window_bounds = array<i64: 1, 1, 32>}, {transform_indices = @transform_7, window_bounds = array<i64: 1, 1, 32>}, {transform_indices = @transform_8, window_bounds = array<i64: 1, 32, 64>}, {transform_indices = @transform_9, window_bounds = array<i64: 1, 1, 64>}, {transform_indices = @transform_10, window_bounds = array<i64: 1, 64, 32>}, {transform_indices = @transform_11, window_bounds = array<i64: 1, 1, 32>}, {transform_indices = @transform_12, window_bounds = array<i64: 1, 1, 32>}, {transform_indices = @transform_13, window_bounds = array<i64: 1, 1, 32>}, {pipeline_mode = #tpu.pipeline_mode<synchronous>, transform_indices = @transform_14, window_bounds = array<i64: 32, 128>}, {pipeline_mode = #tpu.pipeline_mode<synchronous>, transform_indices = @transform_15, window_bounds = array<i64: 1, 128>}, {transform_indices = @transform_16, window_bounds = array<i64: 1, 2, 128>}]} {
    %c0_i32 = arith.constant 0 : i32
    %0 = arith.cmpi eq, %arg1, %c0_i32 : i32
    %1 = arith.extui %0 : i1 to i32
    %c0_i32_0 = arith.constant 0 : i32
    %2 = arith.cmpi ne, %1, %c0_i32_0 : i32
    scf.if %2 {
      %c0_99 = arith.constant 0 : index
      %c0_100 = arith.constant 0 : index
      %c0_101 = arith.constant 0 : index
      %242 = vector.load %arg2[%c0_99, %c0_100, %c0_101] : memref<2x8x32xf32, #tpu.memory_space<vmem>>, vector<2x8x32xf32>
      %c0_102 = arith.constant 0 : index
      %c0_103 = arith.constant 0 : index
      %c0_104 = arith.constant 0 : index
      %243 = vector.load %arg3[%c0_102, %c0_103, %c0_104] : memref<1x8x32xf32, #tpu.memory_space<vmem>>, vector<1x8x32xf32>
      %244 = vector.broadcast %243 : vector<1x8x32xf32> to vector<2x8x32xf32>
      %245 = arith.addf %242, %244 : vector<2x8x32xf32>
      %c0_105 = arith.constant 0 : index
      %c0_106 = arith.constant 0 : index
      %c0_107 = arith.constant 0 : index
      %246 = vector.load %arg19[%c0_105, %c0_106, %c0_107] : memref<2x8x32xf32, #tpu.memory_space<vmem>>, vector<2x8x32xf32>
      tpu.vector_store %arg19[%c0_105, %c0_106, %c0_107], %245 {strides = array<i32>} : memref<2x8x32xf32, #tpu.memory_space<vmem>>, vector<2x8x32xf32>,
    } else {
    }
    %c0 = arith.constant 0 : index
    %c0_1 = arith.constant 0 : index
    %c0_2 = arith.constant 0 : index
    %3 = vector.load %arg19[%c0, %c0_1, %c0_2] : memref<2x8x32xf32, #tpu.memory_space<vmem>>, vector<2x8x32xf32>
    %4 = vector.shape_cast %3 : vector<2x8x32xf32> to vector<16x32xf32>
    %c0_3 = arith.constant 0 : index
    %c0_4 = arith.constant 0 : index
    %c0_5 = arith.constant 0 : index
    %5 = vector.load %arg4[%c0_3, %c0_4, %c0_5] : memref<1x32x96xf32, #tpu.memory_space<vmem>>, vector<1x32x96xf32>
    %6 = vector.shape_cast %5 : vector<1x32x96xf32> to vector<32x96xf32>
    %cst = arith.constant dense<0.000000e+00> : vector<16x96xf32>
    %7 = tpu.matmul %4, %6, %cst {dimension_numbers = #tpu.dot_dimension_numbers<[1], [0], [0], [1], [0, 0, 1, 1], [], []>} : vector<16x32xf32>, vector<32x96xf32>, vector<16x96xf32> -> vector<16x96xf32>
    %c0_6 = arith.constant 0 : index
    %c0_7 = arith.constant 0 : index
    %c0_8 = arith.constant 0 : index
    %8 = vector.load %arg5[%c0_6, %c0_7, %c0_8] : memref<1x1x96xf32, #tpu.memory_space<vmem>>, vector<1x1x96xf32>
    %9 = vector.shape_cast %8 : vector<1x1x96xf32> to vector<1x96xf32>
    %10 = vector.broadcast %9 : vector<1x96xf32> to vector<16x96xf32>
    %11 = arith.addf %7, %10 : vector<16x96xf32>
    %c0_9 = arith.constant 0 : index
    %c0_10 = arith.constant 0 : index
    %c0_11 = arith.constant 0 : index
    %c0_12 = arith.constant 0 : index
    %12 = vector.load %arg6[%c0_9, %c0_10, %c0_11, %c0_12] : memref<1x4x8x32xf32, #tpu.memory_space<vmem>>, vector<1x4x8x32xf32>
    %13 = vector.shape_cast %12 : vector<1x4x8x32xf32> to vector<4x8x32xf32>
    %14 = vector.extract_strided_slice %11 {offsets = [0, 0], sizes = [8, 96], strides = [1, 1]} : vector<16x96xf32> to vector<8x96xf32>
    %cst_13 = arith.constant 0.000000e+00 : f32
    %15 = vector.broadcast %cst_13 : f32 to vector<8x32xf32>
    %16 = vector.extract_strided_slice %14 {offsets = [0, 0], sizes = [8, 8], strides = [1, 1]} : vector<8x96xf32> to vector<8x8xf32>
    %17 = vector.extract_strided_slice %14 {offsets = [0, 32], sizes = [8, 8], strides = [1, 1]} : vector<8x96xf32> to vector<8x8xf32>
    %18 = vector.extract_strided_slice %14 {offsets = [0, 64], sizes = [8, 8], strides = [1, 1]} : vector<8x96xf32> to vector<8x8xf32>
    %cst_14 = arith.constant dense<0.000000e+00> : vector<8x8xf32>
    %19 = tpu.matmul %16, %17, %cst_14 {dimension_numbers = #tpu.dot_dimension_numbers<[1], [1], [0], [0], [0, 0, 1, 0], [], []>} : vector<8x8xf32>, vector<8x8xf32>, vector<8x8xf32> -> vector<8x8xf32>
    %cst_15 = arith.constant dense<0xFF800000> : vector<8xf32>
    %20 = vector.multi_reduction <maximumf>, %19, %cst_15 [1] : vector<8x8xf32> to vector<8xf32>
    %21 = vector.shape_cast %20 : vector<8xf32> to vector<8x1xf32>
    %22 = vector.broadcast %21 : vector<8x1xf32> to vector<8x8xf32>
    %23 = arith.subf %19, %22 : vector<8x8xf32>
    %24 = math.exp %23 : vector<8x8xf32>
    %cst_16 = arith.constant dense<0.000000e+00> : vector<8xf32>
    %25 = vector.multi_reduction <add>, %24, %cst_16 [1] : vector<8x8xf32> to vector<8xf32>
    %26 = vector.shape_cast %25 : vector<8xf32> to vector<8x1xf32>
    %27 = vector.broadcast %26 : vector<8x1xf32> to vector<8x8xf32>
    %28 = arith.divf %24, %27 : vector<8x8xf32>
    %cst_17 = arith.constant dense<0.000000e+00> : vector<8x8xf32>
    %29 = tpu.matmul %28, %18, %cst_17 {dimension_numbers = #tpu.dot_dimension_numbers<[1], [0], [0], [1], [0, 0, 1, 1], [], []>} : vector<8x8xf32>, vector<8x8xf32>, vector<8x8xf32> -> vector<8x8xf32>
    %30 = vector.extract_strided_slice %13 {offsets = [0, 0, 0], sizes = [1, 8, 32], strides = [1, 1, 1]} : vector<4x8x32xf32> to vector<1x8x32xf32>
    %31 = vector.shape_cast %30 : vector<1x8x32xf32> to vector<8x32xf32>
    %cst_18 = arith.constant dense<0.000000e+00> : vector<8x32xf32>
    %32 = tpu.matmul %29, %31, %cst_18 {dimension_numbers = #tpu.dot_dimension_numbers<[1], [0], [0], [1], [0, 0, 1, 1], [], []>} : vector<8x8xf32>, vector<8x32xf32>, vector<8x32xf32> -> vector<8x32xf32>
    %33 = arith.addf %15, %32 : vector<8x32xf32>
    %34 = vector.extract_strided_slice %14 {offsets = [0, 8], sizes = [8, 8], strides = [1, 1]} : vector<8x96xf32> to vector<8x8xf32>
    %35 = vector.extract_strided_slice %14 {offsets = [0, 40], sizes = [8, 8], strides = [1, 1]} : vector<8x96xf32> to vector<8x8xf32>
    %36 = vector.extract_strided_slice %14 {offsets = [0, 72], sizes = [8, 8], strides = [1, 1]} : vector<8x96xf32> to vector<8x8xf32>
    %cst_19 = arith.constant dense<0.000000e+00> : vector<8x8xf32>
    %37 = tpu.matmul %34, %35, %cst_19 {dimension_numbers = #tpu.dot_dimension_numbers<[1], [1], [0], [0], [0, 0, 1, 0], [], []>} : vector<8x8xf32>, vector<8x8xf32>, vector<8x8xf32> -> vector<8x8xf32>
    %cst_20 = arith.constant dense<0xFF800000> : vector<8xf32>
    %38 = vector.multi_reduction <maximumf>, %37, %cst_20 [1] : vector<8x8xf32> to vector<8xf32>
    %39 = vector.shape_cast %38 : vector<8xf32> to vector<8x1xf32>
    %40 = vector.broadcast %39 : vector<8x1xf32> to vector<8x8xf32>
    %41 = arith.subf %37, %40 : vector<8x8xf32>
    %42 = math.exp %41 : vector<8x8xf32>
    %cst_21 = arith.constant dense<0.000000e+00> : vector<8xf32>
    %43 = vector.multi_reduction <add>, %42, %cst_21 [1] : vector<8x8xf32> to vector<8xf32>
    %44 = vector.shape_cast %43 : vector<8xf32> to vector<8x1xf32>
    %45 = vector.broadcast %44 : vector<8x1xf32> to vector<8x8xf32>
    %46 = arith.divf %42, %45 : vector<8x8xf32>
    %cst_22 = arith.constant dense<0.000000e+00> : vector<8x8xf32>
    %47 = tpu.matmul %46, %36, %cst_22 {dimension_numbers = #tpu.dot_dimension_numbers<[1], [0], [0], [1], [0, 0, 1, 1], [], []>} : vector<8x8xf32>, vector<8x8xf32>, vector<8x8xf32> -> vector<8x8xf32>
    %48 = vector.extract_strided_slice %13 {offsets = [1, 0, 0], sizes = [1, 8, 32], strides = [1, 1, 1]} : vector<4x8x32xf32> to vector<1x8x32xf32>
    %49 = vector.shape_cast %48 : vector<1x8x32xf32> to vector<8x32xf32>
    %cst_23 = arith.constant dense<0.000000e+00> : vector<8x32xf32>
    %50 = tpu.matmul %47, %49, %cst_23 {dimension_numbers = #tpu.dot_dimension_numbers<[1], [0], [0], [1], [0, 0, 1, 1], [], []>} : vector<8x8xf32>, vector<8x32xf32>, vector<8x32xf32> -> vector<8x32xf32>
    %51 = arith.addf %33, %50 : vector<8x32xf32>
    %52 = vector.extract_strided_slice %14 {offsets = [0, 16], sizes = [8, 8], strides = [1, 1]} : vector<8x96xf32> to vector<8x8xf32>
    %53 = vector.extract_strided_slice %14 {offsets = [0, 48], sizes = [8, 8], strides = [1, 1]} : vector<8x96xf32> to vector<8x8xf32>
    %54 = vector.extract_strided_slice %14 {offsets = [0, 80], sizes = [8, 8], strides = [1, 1]} : vector<8x96xf32> to vector<8x8xf32>
    %cst_24 = arith.constant dense<0.000000e+00> : vector<8x8xf32>
    %55 = tpu.matmul %52, %53, %cst_24 {dimension_numbers = #tpu.dot_dimension_numbers<[1], [1], [0], [0], [0, 0, 1, 0], [], []>} : vector<8x8xf32>, vector<8x8xf32>, vector<8x8xf32> -> vector<8x8xf32>
    %cst_25 = arith.constant dense<0xFF800000> : vector<8xf32>
    %56 = vector.multi_reduction <maximumf>, %55, %cst_25 [1] : vector<8x8xf32> to vector<8xf32>
    %57 = vector.shape_cast %56 : vector<8xf32> to vector<8x1xf32>
    %58 = vector.broadcast %57 : vector<8x1xf32> to vector<8x8xf32>
    %59 = arith.subf %55, %58 : vector<8x8xf32>
    %60 = math.exp %59 : vector<8x8xf32>
    %cst_26 = arith.constant dense<0.000000e+00> : vector<8xf32>
    %61 = vector.multi_reduction <add>, %60, %cst_26 [1] : vector<8x8xf32> to vector<8xf32>
    %62 = vector.shape_cast %61 : vector<8xf32> to vector<8x1xf32>
    %63 = vector.broadcast %62 : vector<8x1xf32> to vector<8x8xf32>
    %64 = arith.divf %60, %63 : vector<8x8xf32>
    %cst_27 = arith.constant dense<0.000000e+00> : vector<8x8xf32>
    %65 = tpu.matmul %64, %54, %cst_27 {dimension_numbers = #tpu.dot_dimension_numbers<[1], [0], [0], [1], [0, 0, 1, 1], [], []>} : vector<8x8xf32>, vector<8x8xf32>, vector<8x8xf32> -> vector<8x8xf32>
    %66 = vector.extract_strided_slice %13 {offsets = [2, 0, 0], sizes = [1, 8, 32], strides = [1, 1, 1]} : vector<4x8x32xf32> to vector<1x8x32xf32>
    %67 = vector.shape_cast %66 : vector<1x8x32xf32> to vector<8x32xf32>
    %cst_28 = arith.constant dense<0.000000e+00> : vector<8x32xf32>
    %68 = tpu.matmul %65, %67, %cst_28 {dimension_numbers = #tpu.dot_dimension_numbers<[1], [0], [0], [1], [0, 0, 1, 1], [], []>} : vector<8x8xf32>, vector<8x32xf32>, vector<8x32xf32> -> vector<8x32xf32>
    %69 = arith.addf %51, %68 : vector<8x32xf32>
    %70 = vector.extract_strided_slice %14 {offsets = [0, 24], sizes = [8, 8], strides = [1, 1]} : vector<8x96xf32> to vector<8x8xf32>
    %71 = vector.extract_strided_slice %14 {offsets = [0, 56], sizes = [8, 8], strides = [1, 1]} : vector<8x96xf32> to vector<8x8xf32>
    %72 = vector.extract_strided_slice %14 {offsets = [0, 88], sizes = [8, 8], strides = [1, 1]} : vector<8x96xf32> to vector<8x8xf32>
    %cst_29 = arith.constant dense<0.000000e+00> : vector<8x8xf32>
    %73 = tpu.matmul %70, %71, %cst_29 {dimension_numbers = #tpu.dot_dimension_numbers<[1], [1], [0], [0], [0, 0, 1, 0], [], []>} : vector<8x8xf32>, vector<8x8xf32>, vector<8x8xf32> -> vector<8x8xf32>
    %cst_30 = arith.constant dense<0xFF800000> : vector<8xf32>
    %74 = vector.multi_reduction <maximumf>, %73, %cst_30 [1] : vector<8x8xf32> to vector<8xf32>
    %75 = vector.shape_cast %74 : vector<8xf32> to vector<8x1xf32>
    %76 = vector.broadcast %75 : vector<8x1xf32> to vector<8x8xf32>
    %77 = arith.subf %73, %76 : vector<8x8xf32>
    %78 = math.exp %77 : vector<8x8xf32>
    %cst_31 = arith.constant dense<0.000000e+00> : vector<8xf32>
    %79 = vector.multi_reduction <add>, %78, %cst_31 [1] : vector<8x8xf32> to vector<8xf32>
    %80 = vector.shape_cast %79 : vector<8xf32> to vector<8x1xf32>
    %81 = vector.broadcast %80 : vector<8x1xf32> to vector<8x8xf32>
    %82 = arith.divf %78, %81 : vector<8x8xf32>
    %cst_32 = arith.constant dense<0.000000e+00> : vector<8x8xf32>
    %83 = tpu.matmul %82, %72, %cst_32 {dimension_numbers = #tpu.dot_dimension_numbers<[1], [0], [0], [1], [0, 0, 1, 1], [], []>} : vector<8x8xf32>, vector<8x8xf32>, vector<8x8xf32> -> vector<8x8xf32>
    %84 = vector.extract_strided_slice %13 {offsets = [3, 0, 0], sizes = [1, 8, 32], strides = [1, 1, 1]} : vector<4x8x32xf32> to vector<1x8x32xf32>
    %85 = vector.shape_cast %84 : vector<1x8x32xf32> to vector<8x32xf32>
    %cst_33 = arith.constant dense<0.000000e+00> : vector<8x32xf32>
    %86 = tpu.matmul %83, %85, %cst_33 {dimension_numbers = #tpu.dot_dimension_numbers<[1], [0], [0], [1], [0, 0, 1, 1], [], []>} : vector<8x8xf32>, vector<8x32xf32>, vector<8x32xf32> -> vector<8x32xf32>
    %87 = arith.addf %69, %86 : vector<8x32xf32>
    %88 = vector.extract_strided_slice %11 {offsets = [8, 0], sizes = [8, 96], strides = [1, 1]} : vector<16x96xf32> to vector<8x96xf32>
    %cst_34 = arith.constant 0.000000e+00 : f32
    %89 = vector.broadcast %cst_34 : f32 to vector<8x32xf32>
    %90 = vector.extract_strided_slice %88 {offsets = [0, 0], sizes = [8, 8], strides = [1, 1]} : vector<8x96xf32> to vector<8x8xf32>
    %91 = vector.extract_strided_slice %88 {offsets = [0, 32], sizes = [8, 8], strides = [1, 1]} : vector<8x96xf32> to vector<8x8xf32>
    %92 = vector.extract_strided_slice %88 {offsets = [0, 64], sizes = [8, 8], strides = [1, 1]} : vector<8x96xf32> to vector<8x8xf32>
    %cst_35 = arith.constant dense<0.000000e+00> : vector<8x8xf32>
    %93 = tpu.matmul %90, %91, %cst_35 {dimension_numbers = #tpu.dot_dimension_numbers<[1], [1], [0], [0], [0, 0, 1, 0], [], []>} : vector<8x8xf32>, vector<8x8xf32>, vector<8x8xf32> -> vector<8x8xf32>
    %cst_36 = arith.constant dense<0xFF800000> : vector<8xf32>
    %94 = vector.multi_reduction <maximumf>, %93, %cst_36 [1] : vector<8x8xf32> to vector<8xf32>
    %95 = vector.shape_cast %94 : vector<8xf32> to vector<8x1xf32>
    %96 = vector.broadcast %95 : vector<8x1xf32> to vector<8x8xf32>
    %97 = arith.subf %93, %96 : vector<8x8xf32>
    %98 = math.exp %97 : vector<8x8xf32>
    %cst_37 = arith.constant dense<0.000000e+00> : vector<8xf32>
    %99 = vector.multi_reduction <add>, %98, %cst_37 [1] : vector<8x8xf32> to vector<8xf32>
    %100 = vector.shape_cast %99 : vector<8xf32> to vector<8x1xf32>
    %101 = vector.broadcast %100 : vector<8x1xf32> to vector<8x8xf32>
    %102 = arith.divf %98, %101 : vector<8x8xf32>
    %cst_38 = arith.constant dense<0.000000e+00> : vector<8x8xf32>
    %103 = tpu.matmul %102, %92, %cst_38 {dimension_numbers = #tpu.dot_dimension_numbers<[1], [0], [0], [1], [0, 0, 1, 1], [], []>} : vector<8x8xf32>, vector<8x8xf32>, vector<8x8xf32> -> vector<8x8xf32>
    %104 = vector.extract_strided_slice %13 {offsets = [0, 0, 0], sizes = [1, 8, 32], strides = [1, 1, 1]} : vector<4x8x32xf32> to vector<1x8x32xf32>
    %105 = vector.shape_cast %104 : vector<1x8x32xf32> to vector<8x32xf32>
    %cst_39 = arith.constant dense<0.000000e+00> : vector<8x32xf32>
    %106 = tpu.matmul %103, %105, %cst_39 {dimension_numbers = #tpu.dot_dimension_numbers<[1], [0], [0], [1], [0, 0, 1, 1], [], []>} : vector<8x8xf32>, vector<8x32xf32>, vector<8x32xf32> -> vector<8x32xf32>
    %107 = arith.addf %89, %106 : vector<8x32xf32>
    %108 = vector.extract_strided_slice %88 {offsets = [0, 8], sizes = [8, 8], strides = [1, 1]} : vector<8x96xf32> to vector<8x8xf32>
    %109 = vector.extract_strided_slice %88 {offsets = [0, 40], sizes = [8, 8], strides = [1, 1]} : vector<8x96xf32> to vector<8x8xf32>
    %110 = vector.extract_strided_slice %88 {offsets = [0, 72], sizes = [8, 8], strides = [1, 1]} : vector<8x96xf32> to vector<8x8xf32>
    %cst_40 = arith.constant dense<0.000000e+00> : vector<8x8xf32>
    %111 = tpu.matmul %108, %109, %cst_40 {dimension_numbers = #tpu.dot_dimension_numbers<[1], [1], [0], [0], [0, 0, 1, 0], [], []>} : vector<8x8xf32>, vector<8x8xf32>, vector<8x8xf32> -> vector<8x8xf32>
    %cst_41 = arith.constant dense<0xFF800000> : vector<8xf32>
    %112 = vector.multi_reduction <maximumf>, %111, %cst_41 [1] : vector<8x8xf32> to vector<8xf32>
    %113 = vector.shape_cast %112 : vector<8xf32> to vector<8x1xf32>
    %114 = vector.broadcast %113 : vector<8x1xf32> to vector<8x8xf32>
    %115 = arith.subf %111, %114 : vector<8x8xf32>
    %116 = math.exp %115 : vector<8x8xf32>
    %cst_42 = arith.constant dense<0.000000e+00> : vector<8xf32>
    %117 = vector.multi_reduction <add>, %116, %cst_42 [1] : vector<8x8xf32> to vector<8xf32>
    %118 = vector.shape_cast %117 : vector<8xf32> to vector<8x1xf32>
    %119 = vector.broadcast %118 : vector<8x1xf32> to vector<8x8xf32>
    %120 = arith.divf %116, %119 : vector<8x8xf32>
    %cst_43 = arith.constant dense<0.000000e+00> : vector<8x8xf32>
    %121 = tpu.matmul %120, %110, %cst_43 {dimension_numbers = #tpu.dot_dimension_numbers<[1], [0], [0], [1], [0, 0, 1, 1], [], []>} : vector<8x8xf32>, vector<8x8xf32>, vector<8x8xf32> -> vector<8x8xf32>
    %122 = vector.extract_strided_slice %13 {offsets = [1, 0, 0], sizes = [1, 8, 32], strides = [1, 1, 1]} : vector<4x8x32xf32> to vector<1x8x32xf32>
    %123 = vector.shape_cast %122 : vector<1x8x32xf32> to vector<8x32xf32>
    %cst_44 = arith.constant dense<0.000000e+00> : vector<8x32xf32>
    %124 = tpu.matmul %121, %123, %cst_44 {dimension_numbers = #tpu.dot_dimension_numbers<[1], [0], [0], [1], [0, 0, 1, 1], [], []>} : vector<8x8xf32>, vector<8x32xf32>, vector<8x32xf32> -> vector<8x32xf32>
    %125 = arith.addf %107, %124 : vector<8x32xf32>
    %126 = vector.extract_strided_slice %88 {offsets = [0, 16], sizes = [8, 8], strides = [1, 1]} : vector<8x96xf32> to vector<8x8xf32>
    %127 = vector.extract_strided_slice %88 {offsets = [0, 48], sizes = [8, 8], strides = [1, 1]} : vector<8x96xf32> to vector<8x8xf32>
    %128 = vector.extract_strided_slice %88 {offsets = [0, 80], sizes = [8, 8], strides = [1, 1]} : vector<8x96xf32> to vector<8x8xf32>
    %cst_45 = arith.constant dense<0.000000e+00> : vector<8x8xf32>
    %129 = tpu.matmul %126, %127, %cst_45 {dimension_numbers = #tpu.dot_dimension_numbers<[1], [1], [0], [0], [0, 0, 1, 0], [], []>} : vector<8x8xf32>, vector<8x8xf32>, vector<8x8xf32> -> vector<8x8xf32>
    %cst_46 = arith.constant dense<0xFF800000> : vector<8xf32>
    %130 = vector.multi_reduction <maximumf>, %129, %cst_46 [1] : vector<8x8xf32> to vector<8xf32>
    %131 = vector.shape_cast %130 : vector<8xf32> to vector<8x1xf32>
    %132 = vector.broadcast %131 : vector<8x1xf32> to vector<8x8xf32>
    %133 = arith.subf %129, %132 : vector<8x8xf32>
    %134 = math.exp %133 : vector<8x8xf32>
    %cst_47 = arith.constant dense<0.000000e+00> : vector<8xf32>
    %135 = vector.multi_reduction <add>, %134, %cst_47 [1] : vector<8x8xf32> to vector<8xf32>
    %136 = vector.shape_cast %135 : vector<8xf32> to vector<8x1xf32>
    %137 = vector.broadcast %136 : vector<8x1xf32> to vector<8x8xf32>
    %138 = arith.divf %134, %137 : vector<8x8xf32>
    %cst_48 = arith.constant dense<0.000000e+00> : vector<8x8xf32>
    %139 = tpu.matmul %138, %128, %cst_48 {dimension_numbers = #tpu.dot_dimension_numbers<[1], [0], [0], [1], [0, 0, 1, 1], [], []>} : vector<8x8xf32>, vector<8x8xf32>, vector<8x8xf32> -> vector<8x8xf32>
    %140 = vector.extract_strided_slice %13 {offsets = [2, 0, 0], sizes = [1, 8, 32], strides = [1, 1, 1]} : vector<4x8x32xf32> to vector<1x8x32xf32>
    %141 = vector.shape_cast %140 : vector<1x8x32xf32> to vector<8x32xf32>
    %cst_49 = arith.constant dense<0.000000e+00> : vector<8x32xf32>
    %142 = tpu.matmul %139, %141, %cst_49 {dimension_numbers = #tpu.dot_dimension_numbers<[1], [0], [0], [1], [0, 0, 1, 1], [], []>} : vector<8x8xf32>, vector<8x32xf32>, vector<8x32xf32> -> vector<8x32xf32>
    %143 = arith.addf %125, %142 : vector<8x32xf32>
    %144 = vector.extract_strided_slice %88 {offsets = [0, 24], sizes = [8, 8], strides = [1, 1]} : vector<8x96xf32> to vector<8x8xf32>
    %145 = vector.extract_strided_slice %88 {offsets = [0, 56], sizes = [8, 8], strides = [1, 1]} : vector<8x96xf32> to vector<8x8xf32>
    %146 = vector.extract_strided_slice %88 {offsets = [0, 88], sizes = [8, 8], strides = [1, 1]} : vector<8x96xf32> to vector<8x8xf32>
    %cst_50 = arith.constant dense<0.000000e+00> : vector<8x8xf32>
    %147 = tpu.matmul %144, %145, %cst_50 {dimension_numbers = #tpu.dot_dimension_numbers<[1], [1], [0], [0], [0, 0, 1, 0], [], []>} : vector<8x8xf32>, vector<8x8xf32>, vector<8x8xf32> -> vector<8x8xf32>
    %cst_51 = arith.constant dense<0xFF800000> : vector<8xf32>
    %148 = vector.multi_reduction <maximumf>, %147, %cst_51 [1] : vector<8x8xf32> to vector<8xf32>
    %149 = vector.shape_cast %148 : vector<8xf32> to vector<8x1xf32>
    %150 = vector.broadcast %149 : vector<8x1xf32> to vector<8x8xf32>
    %151 = arith.subf %147, %150 : vector<8x8xf32>
    %152 = math.exp %151 : vector<8x8xf32>
    %cst_52 = arith.constant dense<0.000000e+00> : vector<8xf32>
    %153 = vector.multi_reduction <add>, %152, %cst_52 [1] : vector<8x8xf32> to vector<8xf32>
    %154 = vector.shape_cast %153 : vector<8xf32> to vector<8x1xf32>
    %155 = vector.broadcast %154 : vector<8x1xf32> to vector<8x8xf32>
    %156 = arith.divf %152, %155 : vector<8x8xf32>
    %cst_53 = arith.constant dense<0.000000e+00> : vector<8x8xf32>
    %157 = tpu.matmul %156, %146, %cst_53 {dimension_numbers = #tpu.dot_dimension_numbers<[1], [0], [0], [1], [0, 0, 1, 1], [], []>} : vector<8x8xf32>, vector<8x8xf32>, vector<8x8xf32> -> vector<8x8xf32>
    %158 = vector.extract_strided_slice %13 {offsets = [3, 0, 0], sizes = [1, 8, 32], strides = [1, 1, 1]} : vector<4x8x32xf32> to vector<1x8x32xf32>
    %159 = vector.shape_cast %158 : vector<1x8x32xf32> to vector<8x32xf32>
    %cst_54 = arith.constant dense<0.000000e+00> : vector<8x32xf32>
    %160 = tpu.matmul %157, %159, %cst_54 {dimension_numbers = #tpu.dot_dimension_numbers<[1], [0], [0], [1], [0, 0, 1, 1], [], []>} : vector<8x8xf32>, vector<8x32xf32>, vector<8x32xf32> -> vector<8x32xf32>
    %161 = arith.addf %143, %160 : vector<8x32xf32>
    %162 = tpu.concatenate %87, %161 in 0 : vector<8x32xf32>, vector<8x32xf32> -> vector<16x32xf32>
    %c0_55 = arith.constant 0 : index
    %c0_56 = arith.constant 0 : index
    %c0_57 = arith.constant 0 : index
    %163 = vector.load %arg7[%c0_55, %c0_56, %c0_57] : memref<1x1x32xf32, #tpu.memory_space<vmem>>, vector<1x1x32xf32>
    %164 = vector.shape_cast %163 : vector<1x1x32xf32> to vector<1x32xf32>
    %165 = vector.broadcast %164 : vector<1x32xf32> to vector<16x32xf32>
    %166 = arith.addf %162, %165 : vector<16x32xf32>
    %167 = arith.addf %4, %166 : vector<16x32xf32>
    %c0_58 = arith.constant 0 : index
    %c0_59 = arith.constant 0 : index
    %c0_60 = arith.constant 0 : index
    %168 = vector.load %arg8[%c0_58, %c0_59, %c0_60] : memref<1x1x32xf32, #tpu.memory_space<vmem>>, vector<1x1x32xf32>
    %169 = vector.shape_cast %168 : vector<1x1x32xf32> to vector<1x32xf32>
    %c0_61 = arith.constant 0 : index
    %c0_62 = arith.constant 0 : index
    %c0_63 = arith.constant 0 : index
    %170 = vector.load %arg9[%c0_61, %c0_62, %c0_63] : memref<1x1x32xf32, #tpu.memory_space<vmem>>, vector<1x1x32xf32>
    %171 = vector.shape_cast %170 : vector<1x1x32xf32> to vector<1x32xf32>
    %cst_64 = arith.constant dense<0.000000e+00> : vector<16xf32>
    %172 = vector.multi_reduction <add>, %167, %cst_64 [1] : vector<16x32xf32> to vector<16xf32>
    %173 = vector.shape_cast %172 : vector<16xf32> to vector<16x1xf32>
    %cst_65 = arith.constant 3.200000e+01 : f32
    %174 = vector.broadcast %cst_65 : f32 to vector<16x1xf32>
    %175 = arith.divf %173, %174 : vector<16x1xf32>
    %176 = vector.broadcast %175 : vector<16x1xf32> to vector<16x32xf32>
    %177 = arith.subf %167, %176 : vector<16x32xf32>
    %178 = arith.mulf %177, %177 : vector<16x32xf32>
    %cst_66 = arith.constant dense<0.000000e+00> : vector<16xf32>
    %179 = vector.multi_reduction <add>, %178, %cst_66 [1] : vector<16x32xf32> to vector<16xf32>
    %180 = vector.shape_cast %179 : vector<16xf32> to vector<16x1xf32>
    %cst_67 = arith.constant 3.200000e+01 : f32
    %181 = vector.broadcast %cst_67 : f32 to vector<16x1xf32>
    %182 = arith.divf %180, %181 : vector<16x1xf32>
    %183 = vector.broadcast %175 : vector<16x1xf32> to vector<16x32xf32>
    %184 = arith.subf %167, %183 : vector<16x32xf32>
    %cst_68 = arith.constant 9.99999974E-6 : f32
    %185 = vector.broadcast %cst_68 : f32 to vector<16x1xf32>
    %186 = arith.addf %182, %185 : vector<16x1xf32>
    %187 = math.rsqrt %186 : vector<16x1xf32>
    %188 = vector.broadcast %187 : vector<16x1xf32> to vector<16x32xf32>
    %189 = arith.mulf %184, %188 : vector<16x32xf32>
    %190 = vector.broadcast %169 : vector<1x32xf32> to vector<16x32xf32>
    %191 = arith.mulf %189, %190 : vector<16x32xf32>
    %192 = vector.broadcast %171 : vector<1x32xf32> to vector<16x32xf32>
    %193 = arith.addf %191, %192 : vector<16x32xf32>
    %c0_69 = arith.constant 0 : index
    %c0_70 = arith.constant 0 : index
    %c0_71 = arith.constant 0 : index
    %194 = vector.load %arg10[%c0_69, %c0_70, %c0_71] : memref<1x32x64xf32, #tpu.memory_space<vmem>>, vector<1x32x64xf32>
    %195 = vector.shape_cast %194 : vector<1x32x64xf32> to vector<32x64xf32>
    %cst_72 = arith.constant dense<0.000000e+00> : vector<16x64xf32>
    %196 = tpu.matmul %193, %195, %cst_72 {dimension_numbers = #tpu.dot_dimension_numbers<[1], [0], [0], [1], [0, 0, 1, 1], [], []>} : vector<16x32xf32>, vector<32x64xf32>, vector<16x64xf32> -> vector<16x64xf32>
    %c0_73 = arith.constant 0 : index
    %c0_74 = arith.constant 0 : index
    %c0_75 = arith.constant 0 : index
    %197 = vector.load %arg11[%c0_73, %c0_74, %c0_75] : memref<1x1x64xf32, #tpu.memory_space<vmem>>, vector<1x1x64xf32>
    %198 = vector.shape_cast %197 : vector<1x1x64xf32> to vector<1x64xf32>
    %199 = vector.broadcast %198 : vector<1x64xf32> to vector<16x64xf32>
    %200 = arith.addf %196, %199 : vector<16x64xf32>
    %cst_76 = arith.constant 0.000000e+00 : f32
    %201 = vector.broadcast %cst_76 : f32 to vector<16x64xf32>
    %202 = arith.maximumf %200, %201 : vector<16x64xf32>
    %c0_77 = arith.constant 0 : index
    %c0_78 = arith.constant 0 : index
    %c0_79 = arith.constant 0 : index
    %203 = vector.load %arg12[%c0_77, %c0_78, %c0_79] : memref<1x64x32xf32, #tpu.memory_space<vmem>>, vector<1x64x32xf32>
    %204 = vector.shape_cast %203 : vector<1x64x32xf32> to vector<64x32xf32>
    %cst_80 = arith.constant dense<0.000000e+00> : vector<16x32xf32>
    %205 = tpu.matmul %202, %204, %cst_80 {dimension_numbers = #tpu.dot_dimension_numbers<[1], [0], [0], [1], [0, 0, 1, 1], [], []>} : vector<16x64xf32>, vector<64x32xf32>, vector<16x32xf32> -> vector<16x32xf32>
    %c0_81 = arith.constant 0 : index
    %c0_82 = arith.constant 0 : index
    %c0_83 = arith.constant 0 : index
    %206 = vector.load %arg13[%c0_81, %c0_82, %c0_83] : memref<1x1x32xf32, #tpu.memory_space<vmem>>, vector<1x1x32xf32>
    %207 = vector.shape_cast %206 : vector<1x1x32xf32> to vector<1x32xf32>
    %208 = vector.broadcast %207 : vector<1x32xf32> to vector<16x32xf32>
    %209 = arith.addf %205, %208 : vector<16x32xf32>
    %210 = arith.addf %193, %209 : vector<16x32xf32>
    %c0_84 = arith.constant 0 : index
    %c0_85 = arith.constant 0 : index
    %c0_86 = arith.constant 0 : index
    %211 = vector.load %arg14[%c0_84, %c0_85, %c0_86] : memref<1x1x32xf32, #tpu.memory_space<vmem>>, vector<1x1x32xf32>
    %212 = vector.shape_cast %211 : vector<1x1x32xf32> to vector<1x32xf32>
    %c0_87 = arith.constant 0 : index
    %c0_88 = arith.constant 0 : index
    %c0_89 = arith.constant 0 : index
    %213 = vector.load %arg15[%c0_87, %c0_88, %c0_89] : memref<1x1x32xf32, #tpu.memory_space<vmem>>, vector<1x1x32xf32>
    %214 = vector.shape_cast %213 : vector<1x1x32xf32> to vector<1x32xf32>
    %cst_90 = arith.constant dense<0.000000e+00> : vector<16xf32>
    %215 = vector.multi_reduction <add>, %210, %cst_90 [1] : vector<16x32xf32> to vector<16xf32>
    %216 = vector.shape_cast %215 : vector<16xf32> to vector<16x1xf32>
    %cst_91 = arith.constant 3.200000e+01 : f32
    %217 = vector.broadcast %cst_91 : f32 to vector<16x1xf32>
    %218 = arith.divf %216, %217 : vector<16x1xf32>
    %219 = vector.broadcast %218 : vector<16x1xf32> to vector<16x32xf32>
    %220 = arith.subf %210, %219 : vector<16x32xf32>
    %221 = arith.mulf %220, %220 : vector<16x32xf32>
    %cst_92 = arith.constant dense<0.000000e+00> : vector<16xf32>
    %222 = vector.multi_reduction <add>, %221, %cst_92 [1] : vector<16x32xf32> to vector<16xf32>
    %223 = vector.shape_cast %222 : vector<16xf32> to vector<16x1xf32>
    %cst_93 = arith.constant 3.200000e+01 : f32
    %224 = vector.broadcast %cst_93 : f32 to vector<16x1xf32>
    %225 = arith.divf %223, %224 : vector<16x1xf32>
    %226 = vector.broadcast %218 : vector<16x1xf32> to vector<16x32xf32>
    %227 = arith.subf %210, %226 : vector<16x32xf32>
    %cst_94 = arith.constant 9.99999974E-6 : f32
    %228 = vector.broadcast %cst_94 : f32 to vector<16x1xf32>
    %229 = arith.addf %225, %228 : vector<16x1xf32>
    %230 = math.rsqrt %229 : vector<16x1xf32>
    %231 = vector.broadcast %230 : vector<16x1xf32> to vector<16x32xf32>
    %232 = arith.mulf %227, %231 : vector<16x32xf32>
    %233 = vector.broadcast %212 : vector<1x32xf32> to vector<16x32xf32>
    %234 = arith.mulf %232, %233 : vector<16x32xf32>
    %235 = vector.broadcast %214 : vector<1x32xf32> to vector<16x32xf32>
    %236 = arith.addf %234, %235 : vector<16x32xf32>
    %237 = vector.shape_cast %236 : vector<16x32xf32> to vector<2x8x32xf32>
    %c0_95 = arith.constant 0 : index
    %c0_96 = arith.constant 0 : index
    %c0_97 = arith.constant 0 : index
    %238 = vector.load %arg19[%c0_95, %c0_96, %c0_97] : memref<2x8x32xf32, #tpu.memory_space<vmem>>, vector<2x8x32xf32>
    tpu.vector_store %arg19[%c0_95, %c0_96, %c0_97], %237 {strides = array<i32>} : memref<2x8x32xf32, #tpu.memory_space<vmem>>, vector<2x8x32xf32>,
    %c1_i32 = arith.constant 1 : i32
    %239 = arith.cmpi eq, %arg1, %c1_i32 : i32
    %240 = arith.extui %239 : i1 to i32
    %c0_i32_98 = arith.constant 0 : i32
    %241 = arith.cmpi ne, %240, %c0_i32_98 : i32
    scf.if %241 {
      %242 = vector.extract_strided_slice %236 {offsets = [0, 0], sizes = [8, 32], strides = [1, 1]} : vector<16x32xf32> to vector<8x32xf32>
      %cst_99 = arith.constant dense<0.000000e+00> : vector<32xf32>
      %243 = vector.multi_reduction <add>, %242, %cst_99 [0] : vector<8x32xf32> to vector<32xf32>
      %244 = vector.shape_cast %243 : vector<32xf32> to vector<1x32xf32>
      %cst_100 = arith.constant 8.000000e+00 : f32
      %245 = vector.broadcast %cst_100 : f32 to vector<1x32xf32>
      %246 = arith.divf %244, %245 : vector<1x32xf32>
      %247 = vector.extract_strided_slice %236 {offsets = [8, 0], sizes = [8, 32], strides = [1, 1]} : vector<16x32xf32> to vector<8x32xf32>
      %cst_101 = arith.constant dense<0.000000e+00> : vector<32xf32>
      %248 = vector.multi_reduction <add>, %247, %cst_101 [0] : vector<8x32xf32> to vector<32xf32>
      %249 = vector.shape_cast %248 : vector<32xf32> to vector<1x32xf32>
      %cst_102 = arith.constant 8.000000e+00 : f32
      %250 = vector.broadcast %cst_102 : f32 to vector<1x32xf32>
      %251 = arith.divf %249, %250 : vector<1x32xf32>
      %252 = tpu.concatenate %246, %251 in 0 : vector<1x32xf32>, vector<1x32xf32> -> vector<2x32xf32>
      %c0_103 = arith.constant 0 : index
      %c0_104 = arith.constant 0 : index
      %253 = vector.load %arg16[%c0_103, %c0_104] : memref<32x128xf32, #tpu.memory_space<vmem>>, vector<32x128xf32>
      %cst_105 = arith.constant dense<0.000000e+00> : vector<2x128xf32>
      %254 = tpu.matmul %252, %253, %cst_105 {dimension_numbers = #tpu.dot_dimension_numbers<[1], [0], [0], [1], [0, 0, 1, 1], [], []>} : vector<2x32xf32>, vector<32x128xf32>, vector<2x128xf32> -> vector<2x128xf32>
      %c0_106 = arith.constant 0 : index
      %c0_107 = arith.constant 0 : index
      %255 = vector.load %arg17[%c0_106, %c0_107] : memref<1x128xf32, #tpu.memory_space<vmem>>, vector<1x128xf32>
      %256 = vector.broadcast %255 : vector<1x128xf32> to vector<2x128xf32>
      %257 = arith.addf %254, %256 : vector<2x128xf32>
      %c0_108 = arith.constant 0 : index
      %c0_109 = arith.constant 0 : index
      %c0_110 = arith.constant 0 : index
      %258 = vector.load %arg18[%c0_108, %c0_109, %c0_110] : memref<1x2x128xf32, #tpu.memory_space<vmem>>, vector<1x2x128xf32>
      %259 = vector.shape_cast %258 : vector<1x2x128xf32> to vector<2x128xf32>
      %260 = vector.shape_cast %257 : vector<2x128xf32> to vector<1x2x128xf32>
      tpu.vector_store %arg18[%c0_108, %c0_109, %c0_110], %260 {strides = array<i32>} : memref<1x2x128xf32, #tpu.memory_space<vmem>>, vector<1x2x128xf32>,
    } else {
    }
    return
  }
  func.func @transform_0(%arg0: i32, %arg1: i32) -> (i32, i32, i32) {
    %c0_i32 = arith.constant 0 : i32
    %c0_i32_0 = arith.constant 0 : i32
    %c0_i32_1 = arith.constant 0 : i32
    return %arg0, %c0_i32, %c0_i32_0 : i32, i32, i32
  }
  func.func @transform_1(%arg0: i32, %arg1: i32) -> (i32, i32, i32) {
    %c0_i32 = arith.constant 0 : i32
    %c0_i32_0 = arith.constant 0 : i32
    %c0_i32_1 = arith.constant 0 : i32
    %c0_i32_2 = arith.constant 0 : i32
    return %c0_i32, %c0_i32_0, %c0_i32_1 : i32, i32, i32
  }
  func.func @transform_2(%arg0: i32, %arg1: i32) -> (i32, i32, i32) {
    %c0_i32 = arith.constant 0 : i32
    %c0_i32_0 = arith.constant 0 : i32
    %c0_i32_1 = arith.constant 0 : i32
    return %arg1, %c0_i32, %c0_i32_0 : i32, i32, i32
  }
  func.func @transform_3(%arg0: i32, %arg1: i32) -> (i32, i32, i32) {
    %c0_i32 = arith.constant 0 : i32
    %c0_i32_0 = arith.constant 0 : i32
    %c0_i32_1 = arith.constant 0 : i32
    return %arg1, %c0_i32, %c0_i32_0 : i32, i32, i32
  }
  func.func @transform_4(%arg0: i32, %arg1: i32) -> (i32, i32, i32, i32) {
    %c0_i32 = arith.constant 0 : i32
    %c0_i32_0 = arith.constant 0 : i32
    %c0_i32_1 = arith.constant 0 : i32
    %c0_i32_2 = arith.constant 0 : i32
    return %arg1, %c0_i32, %c0_i32_0, %c0_i32_1 : i32, i32, i32, i32
  }
  func.func @transform_5(%arg0: i32, %arg1: i32) -> (i32, i32, i32) {
    %c0_i32 = arith.constant 0 : i32
    %c0_i32_0 = arith.constant 0 : i32
    %c0_i32_1 = arith.constant 0 : i32
    return %arg1, %c0_i32, %c0_i32_0 : i32, i32, i32
  }
  func.func @transform_6(%arg0: i32, %arg1: i32) -> (i32, i32, i32) {
    %c0_i32 = arith.constant 0 : i32
    %c0_i32_0 = arith.constant 0 : i32
    %c0_i32_1 = arith.constant 0 : i32
    return %arg1, %c0_i32, %c0_i32_0 : i32, i32, i32
  }
  func.func @transform_7(%arg0: i32, %arg1: i32) -> (i32, i32, i32) {
    %c0_i32 = arith.constant 0 : i32
    %c0_i32_0 = arith.constant 0 : i32
    %c0_i32_1 = arith.constant 0 : i32
    return %arg1, %c0_i32, %c0_i32_0 : i32, i32, i32
  }
  func.func @transform_8(%arg0: i32, %arg1: i32) -> (i32, i32, i32) {
    %c0_i32 = arith.constant 0 : i32
    %c0_i32_0 = arith.constant 0 : i32
    %c0_i32_1 = arith.constant 0 : i32
    return %arg1, %c0_i32, %c0_i32_0 : i32, i32, i32
  }
  func.func @transform_9(%arg0: i32, %arg1: i32) -> (i32, i32, i32) {
    %c0_i32 = arith.constant 0 : i32
    %c0_i32_0 = arith.constant 0 : i32
    %c0_i32_1 = arith.constant 0 : i32
    return %arg1, %c0_i32, %c0_i32_0 : i32, i32, i32
  }
  func.func @transform_10(%arg0: i32, %arg1: i32) -> (i32, i32, i32) {
    %c0_i32 = arith.constant 0 : i32
    %c0_i32_0 = arith.constant 0 : i32
    %c0_i32_1 = arith.constant 0 : i32
    return %arg1, %c0_i32, %c0_i32_0 : i32, i32, i32
  }
  func.func @transform_11(%arg0: i32, %arg1: i32) -> (i32, i32, i32) {
    %c0_i32 = arith.constant 0 : i32
    %c0_i32_0 = arith.constant 0 : i32
    %c0_i32_1 = arith.constant 0 : i32
    return %arg1, %c0_i32, %c0_i32_0 : i32, i32, i32
  }
  func.func @transform_12(%arg0: i32, %arg1: i32) -> (i32, i32, i32) {
    %c0_i32 = arith.constant 0 : i32
    %c0_i32_0 = arith.constant 0 : i32
    %c0_i32_1 = arith.constant 0 : i32
    return %arg1, %c0_i32, %c0_i32_0 : i32, i32, i32
  }
  func.func @transform_13(%arg0: i32, %arg1: i32) -> (i32, i32, i32) {
    %c0_i32 = arith.constant 0 : i32
    %c0_i32_0 = arith.constant 0 : i32
    %c0_i32_1 = arith.constant 0 : i32
    return %arg1, %c0_i32, %c0_i32_0 : i32, i32, i32
  }
  func.func @transform_14(%arg0: i32, %arg1: i32) -> (i32, i32) {
    %c0_i32 = arith.constant 0 : i32
    %c0_i32_0 = arith.constant 0 : i32
    %c0_i32_1 = arith.constant 0 : i32
    return %c0_i32, %c0_i32_0 : i32, i32
  }
  func.func @transform_15(%arg0: i32, %arg1: i32) -> (i32, i32) {
    %c0_i32 = arith.constant 0 : i32
    %c0_i32_0 = arith.constant 0 : i32
    %c0_i32_1 = arith.constant 0 : i32
    return %c0_i32, %c0_i32_0 : i32, i32
  }
  func.func @transform_16(%arg0: i32, %arg1: i32) -> (i32, i32, i32) {
    %c0_i32 = arith.constant 0 : i32
    %c0_i32_0 = arith.constant 0 : i32
    %c0_i32_1 = arith.constant 0 : i32
    return %arg0, %c0_i32, %c0_i32_0 : i32, i32, i32
  }
}

</mosaic_0001>

<llo_original>
// kernel: tpu_custom_call.1
$region0: #{tpu_custom_call.1}
  #allocation0 [shape = 'u32[]', space=smem, size = 0x4, offset = 0x4, fixed_abs, tag = 'smem constant byte address 0x4 - core index']
  #allocation1 [shape = 'u32[144,128]{1,0:T(1,128)}', space=vmem, size = 0x12000, scoped, tag = 'internal scratch']
  #allocation2 [shape = 'f32[2,8,32]{2,1,0:T(8,128)}', space=vmem, size = 0x2000, scoped, tag = 'scratch operand']
  %s0 = inlined_call_operand.hbm [shape: f32[2,8,32], index: 0, kind: input, shape index: {}]
  %s1 = inlined_call_operand.hbm [shape: f32[1,8,32], index: 1, kind: input, shape index: {}]
  %s2 = inlined_call_operand.vmem [shape: f32[2,32,96], index: 2, kind: input, shape index: {}]
  %s3 = inlined_call_operand.vmem [shape: f32[2,1,96], index: 3, kind: input, shape index: {}]
  %s4 = inlined_call_operand.vmem [shape: f32[2,4,8,32], index: 4, kind: input, shape index: {}]
  %s5 = inlined_call_operand.hbm [shape: f32[2,1,32], index: 5, kind: input, shape index: {}]
  %s6 = inlined_call_operand.hbm [shape: f32[2,1,32], index: 6, kind: input, shape index: {}]
  %s7 = inlined_call_operand.hbm [shape: f32[2,1,32], index: 7, kind: input, shape index: {}]
  %s8 = inlined_call_operand.vmem [shape: f32[2,32,64], index: 8, kind: input, shape index: {}]
  %s9 = inlined_call_operand.hbm [shape: f32[2,1,64], index: 9, kind: input, shape index: {}]
  %s10 = inlined_call_operand.vmem [shape: f32[2,64,32], index: 10, kind: input, shape index: {}]
  %s11 = inlined_call_operand.vmem [shape: f32[2,1,32], index: 11, kind: input, shape index: {}]
  %s12 = inlined_call_operand.vmem [shape: f32[2,1,32], index: 12, kind: input, shape index: {}]
  %s13 = inlined_call_operand.vmem [shape: f32[2,1,32], index: 13, kind: input, shape index: {}]
  %s14 = inlined_call_operand.vmem [shape: f32[32,128], index: 14, kind: input, shape index: {}]
  %s15 = inlined_call_operand.vmem [shape: f32[1,128], index: 15, kind: input, shape index: {}]
  %s16 = inlined_call_operand.hbm [shape: f32[1,2,128], index: 16, kind: output, shape index: {}]
  %s17 = sld [smem:[#allocation0]]
  $region129: #{tpu_custom_call.1} parent=0
    _
  %s19 = ssub.s32 1, %s17
  %s20 = scalar_select 0, %s19, %s17
  $region1: #{tpu_custom_call.1} parent=0
    #allocation3 [shape = 'u8[8192]{0}', space=vmem, size = 0x2000, scoped, tag = 'input window, operand 0, single buffered']
    #allocation4 [shape = 's32[2]{0}', space=sflag, size = 0x8, scoped, tag = 'scoped memory for tpu_custom_call.1']
    #allocation5 [shape = 's32[2]{0}', space=sflag, size = 0x8, scoped, tag = 'scoped memory for tpu_custom_call.1']
    #allocation6 [shape = 'u8[4096]{0}', space=vmem, size = 0x1000, scoped, tag = 'input window, operand 1, single buffered']
    #allocation7 [shape = 's32[1]{0}', space=sflag, size = 0x4, scoped, tag = 'scoped memory for tpu_custom_call.1']
    #allocation8 [shape = 'u8[1024]{0}', space=vmem, size = 0x400, scoped, tag = 'input window, operand 5']
    #allocation9 [shape = 'u8[1024]{0}', space=vmem, size = 0x400, scoped, tag = 'input window, operand 6']
    #allocation10 [shape = 'u8[1024]{0}', space=vmem, size = 0x400, scoped, tag = 'input window, operand 7']
    #allocation11 [shape = 'u8[1024]{0}', space=vmem, size = 0x400, scoped, tag = 'input window, operand 9']
    #allocation12 [shape = 'u8[1024]{0}', space=vmem, size = 0x400, scoped, tag = 'output window, operand 0, single buffered']
    %21 = vsyncpa [#allocation4], 0
    %22 = vsyncpa [#allocation7], 0
    %23 = vsyncpa [#allocation5], 0
    loop: start=0, step=1, limit=4
    $region2: #{tpu_custom_call.1} parent=1 // loop_pre_header
      _
    $region3: #{tpu_custom_call.1} parent=1 // loop_header
      %s25 = sphi 0, %s29
      %p26 = scmp.ge.s32.totalorder %s25, 4
      %s32 = sphi 0, %s44
      %s33 = sphi 0, %s40
      %s34 = sphi 0, %s32
      %s35 = sphi 0, %s33
      %s36 = sphi 0, %s34
      %s37 = sphi 0, %s35
      %s47 = sphi 0, %s49
      %s50 = sphi 0, %s47
      %s51 = sphi 0, %s50
      %s67 = sphi 0, %s51
      %s71 = sphi 0, %s71
      %s73 = sphi 0, %s71
      %s74 = sphi 0, %s73
      %s88 = sphi 0, %s74
      %s94 = sphi 0, %s96
      %s97 = sphi 0, %s94
      %s98 = sphi 0, %s97
      %s114 = sphi 0, %s98
      %s120 = sphi 0, %s122
      %s123 = sphi 0, %s120
      %s124 = sphi 0, %s123
      %s140 = sphi 0, %s124
      %s146 = sphi 0, %s148
      %s149 = sphi 0, %s146
      %s150 = sphi 0, %s149
      %s166 = sphi 0, %s150
      %s172 = sphi 0, %s174
      %s175 = sphi 0, %s172
      %s176 = sphi 0, %s175
      %s192 = sphi 0, %s176
      %s198 = sphi 0, %s200
      %s201 = sphi 0, %s198
      %s202 = sphi 0, %s201
      %s218 = sphi 0, %s202
      %s224 = sphi 0, %s226
      %s227 = sphi 0, %s224
      %s228 = sphi 0, %s227
      %s244 = sphi 0, %s228
      %s250 = sphi 0, %s252
      %s253 = sphi 0, %s250
      %s254 = sphi 0, %s253
      %s270 = sphi 0, %s254
      %s276 = sphi 0, %s278
      %s279 = sphi 0, %s276
      %s280 = sphi 0, %s279
      %s296 = sphi 0, %s280
      %s302 = sphi 0, %s304
      %s305 = sphi 0, %s302
      %s306 = sphi 0, %s305
      %s322 = sphi 0, %s306
      %s328 = sphi 0, %s330
      %s331 = sphi 0, %s328
      %s332 = sphi 0, %s331
      %s348 = sphi 0, %s332
      %s354 = sphi 0, %s356
      %s357 = sphi 0, %s354
      %s358 = sphi 0, %s357
      %s374 = sphi 0, %s358
      %s380 = sphi 0, %s382
      %s383 = sphi 0, %s380
      %s384 = sphi 0, %s383
      %s400 = sphi 0, %s384
      %s404 = sphi 0, %s404
      %s406 = sphi 0, %s404
      %s407 = sphi 0, %s406
      %s421 = sphi 0, %s407
      %s425 = sphi 0, %s425
      %s427 = sphi 0, %s425
      %s428 = sphi 0, %s427
      %s442 = sphi 0, %s428
      %s448 = sphi 0, %s450
      %s451 = sphi 0, %s448
      %s452 = sphi 0, %s451
      %s468 = sphi 0, %s452
    $region4: #{tpu_custom_call.1} parent=1 // loop_header_branch
      %28 = sbr.rel (%p26) target = $region8
    $region5: #{tpu_custom_call.1} parent=1 // loop_body
      %s30 = ssub.s32 %s25, 1
      %s31 = ssub.s32 %s25, 2
      %s38 = sadd.s32 1, %s33
      %p39 = scmp.ge.s32.totalorder %s38, 2
      %s40 = scalar_select %p39, 0, %s38
      %s41 = sadd.s32 1, %s32
      %s42 = scalar_select %p39, %s41, %s32
      %p43 = scmp.ge.s32.totalorder %s42, 1
      %s44 = scalar_select %p43, 0, %s42
      %s45 = ssub.s32 %s32, %s44
      %p46 = scmp.eq.s32.totalorder %s45, 0
      %s48 = sadd.s32 %s47, 1
      %s49 = scalar_select %p46, %s47, %s48
      %p52 = pneg %p46
      %p53 = scmp.eq.s32.totalorder %s25, 1
      %p54 = por %p52, %p53
      %p55 = scmp.ne.s32.totalorder %s47, %s50
      %p56 = scmp.eq.s32.totalorder %s25, 0
      %p57 = por %p55, %p56
      %p58 = scmp.ne.s32.totalorder %s47, %s50
      %p59 = scmp.eq.s32.totalorder %s30, 1
      %p60 = por %p58, %p59
      %p61 = scmp.ne.s32.totalorder %s50, %s51
      %p62 = scmp.eq.s32.totalorder %s30, 0
      %p63 = por %p61, %p62
      %p64 = scmp.ne.s32.totalorder %s50, %s51
      %p65 = scmp.eq.s32.totalorder %s31, 1
      %p66 = por %p64, %p65
      %p68 = scmp.ne.s32.totalorder %s51, %s67
      %p69 = scmp.eq.s32.totalorder %s31, 0
      %p70 = por %p68, %p69
      %s72 = sadd.s32 %s71, 1
      %p75 = scmp.eq.s32.totalorder %s25, 1
      %p76 = scmp.ne.s32.totalorder %s71, %s73
      %p77 = scmp.eq.s32.totalorder %s25, 0
      %p78 = por %p76, %p77
      %p79 = scmp.ne.s32.totalorder %s71, %s73
      %p80 = scmp.eq.s32.totalorder %s30, 1
      %p81 = por %p79, %p80
      %p82 = scmp.ne.s32.totalorder %s73, %s74
      %p83 = scmp.eq.s32.totalorder %s30, 0
      %p84 = por %p82, %p83
      %p85 = scmp.ne.s32.totalorder %s73, %s74
      %p86 = scmp.eq.s32.totalorder %s31, 1
      %p87 = por %p85, %p86
      %p89 = scmp.ne.s32.totalorder %s74, %s88
      %p90 = scmp.eq.s32.totalorder %s31, 0
      %p91 = por %p89, %p90
      %s92 = ssub.s32 %s33, %s40
      %p93 = scmp.eq.s32.totalorder %s92, 0
      %s95 = sadd.s32 %s94, 1
      %s96 = scalar_select %p93, %s94, %s95
      %p99 = pneg %p93
      %p100 = scmp.eq.s32.totalorder %s25, 1
      %p101 = por %p99, %p100
      %p102 = scmp.ne.s32.totalorder %s94, %s97
      %p103 = scmp.eq.s32.totalorder %s25, 0
      %p104 = por %p102, %p103
      %p105 = scmp.ne.s32.totalorder %s94, %s97
      %p106 = scmp.eq.s32.totalorder %s30, 1
      %p107 = por %p105, %p106
      %p108 = scmp.ne.s32.totalorder %s97, %s98
      %p109 = scmp.eq.s32.totalorder %s30, 0
      %p110 = por %p108, %p109
      %p111 = scmp.ne.s32.totalorder %s97, %s98
      %p112 = scmp.eq.s32.totalorder %s31, 1
      %p113 = por %p111, %p112
      %p115 = scmp.ne.s32.totalorder %s98, %s114
      %p116 = scmp.eq.s32.totalorder %s31, 0
      %p117 = por %p115, %p116
      %s118 = ssub.s32 %s33, %s40
      %p119 = scmp.eq.s32.totalorder %s118, 0
      %s121 = sadd.s32 %s120, 1
      %s122 = scalar_select %p119, %s120, %s121
      %p125 = pneg %p119
      %p126 = scmp.eq.s32.totalorder %s25, 1
      %p127 = por %p125, %p126
      %p128 = scmp.ne.s32.totalorder %s120, %s123
      %p129 = scmp.eq.s32.totalorder %s25, 0
      %p130 = por %p128, %p129
      %p131 = scmp.ne.s32.totalorder %s120, %s123
      %p132 = scmp.eq.s32.totalorder %s30, 1
      %p133 = por %p131, %p132
      %p134 = scmp.ne.s32.totalorder %s123, %s124
      %p135 = scmp.eq.s32.totalorder %s30, 0
      %p136 = por %p134, %p135
      %p137 = scmp.ne.s32.totalorder %s123, %s124
      %p138 = scmp.eq.s32.totalorder %s31, 1
      %p139 = por %p137, %p138
      %p141 = scmp.ne.s32.totalorder %s124, %s140
      %p142 = scmp.eq.s32.totalorder %s31, 0
      %p143 = por %p141, %p142
      %s144 = ssub.s32 %s33, %s40
      %p145 = scmp.eq.s32.totalorder %s144, 0
      %s147 = sadd.s32 %s146, 1
      %s148 = scalar_select %p145, %s146, %s147
      %p151 = pneg %p145
      %p152 = scmp.eq.s32.totalorder %s25, 1
      %p153 = por %p151, %p152
      %p154 = scmp.ne.s32.totalorder %s146, %s149
      %p155 = scmp.eq.s32.totalorder %s25, 0
      %p156 = por %p154, %p155
      %p157 = scmp.ne.s32.totalorder %s146, %s149
      %p158 = scmp.eq.s32.totalorder %s30, 1
      %p159 = por %p157, %p158
      %p160 = scmp.ne.s32.totalorder %s149, %s150
      %p161 = scmp.eq.s32.totalorder %s30, 0
      %p162 = por %p160, %p161
      %p163 = scmp.ne.s32.totalorder %s149, %s150
      %p164 = scmp.eq.s32.totalorder %s31, 1
      %p165 = por %p163, %p164
      %p167 = scmp.ne.s32.totalorder %s150, %s166
      %p168 = scmp.eq.s32.totalorder %s31, 0
      %p169 = por %p167, %p168
      %s170 = ssub.s32 %s33, %s40
      %p171 = scmp.eq.s32.totalorder %s170, 0
      %s173 = sadd.s32 %s172, 1
      %s174 = scalar_select %p171, %s172, %s173
      %p177 = pneg %p171
      %p178 = scmp.eq.s32.totalorder %s25, 1
      %p179 = por %p177, %p178
      %p180 = scmp.ne.s32.totalorder %s172, %s175
      %p181 = scmp.eq.s32.totalorder %s25, 0
      %p182 = por %p180, %p181
      %p183 = scmp.ne.s32.totalorder %s172, %s175
      %p184 = scmp.eq.s32.totalorder %s30, 1
      %p185 = por %p183, %p184
      %p186 = scmp.ne.s32.totalorder %s175, %s176
      %p187 = scmp.eq.s32.totalorder %s30, 0
      %p188 = por %p186, %p187
      %p189 = scmp.ne.s32.totalorder %s175, %s176
      %p190 = scmp.eq.s32.totalorder %s31, 1
      %p191 = por %p189, %p190
      %p193 = scmp.ne.s32.totalorder %s176, %s192
      %p194 = scmp.eq.s32.totalorder %s31, 0
      %p195 = por %p193, %p194
      %s196 = ssub.s32 %s33, %s40
      %p197 = scmp.eq.s32.totalorder %s196, 0
      %s199 = sadd.s32 %s198, 1
      %s200 = scalar_select %p197, %s198, %s199
      %p203 = pneg %p197
      %p204 = scmp.eq.s32.totalorder %s25, 1
      %p205 = por %p203, %p204
      %p206 = scmp.ne.s32.totalorder %s198, %s201
      %p207 = scmp.eq.s32.totalorder %s25, 0
      %p208 = por %p206, %p207
      %p209 = scmp.ne.s32.totalorder %s198, %s201
      %p210 = scmp.eq.s32.totalorder %s30, 1
      %p211 = por %p209, %p210
      %p212 = scmp.ne.s32.totalorder %s201, %s202
      %p213 = scmp.eq.s32.totalorder %s30, 0
      %p214 = por %p212, %p213
      %p215 = scmp.ne.s32.totalorder %s201, %s202
      %p216 = scmp.eq.s32.totalorder %s31, 1
      %p217 = por %p215, %p216
      %p219 = scmp.ne.s32.totalorder %s202, %s218
      %p220 = scmp.eq.s32.totalorder %s31, 0
      %p221 = por %p219, %p220
      %s222 = ssub.s32 %s33, %s40
      %p223 = scmp.eq.s32.totalorder %s222, 0
      %s225 = sadd.s32 %s224, 1
      %s226 = scalar_select %p223, %s224, %s225
      %p229 = pneg %p223
      %p230 = scmp.eq.s32.totalorder %s25, 1
      %p231 = por %p229, %p230
      %p232 = scmp.ne.s32.totalorder %s224, %s227
      %p233 = scmp.eq.s32.totalorder %s25, 0
      %p234 = por %p232, %p233
      %p235 = scmp.ne.s32.totalorder %s224, %s227
      %p236 = scmp.eq.s32.totalorder %s30, 1
      %p237 = por %p235, %p236
      %p238 = scmp.ne.s32.totalorder %s227, %s228
      %p239 = scmp.eq.s32.totalorder %s30, 0
      %p240 = por %p238, %p239
      %p241 = scmp.ne.s32.totalorder %s227, %s228
      %p242 = scmp.eq.s32.totalorder %s31, 1
      %p243 = por %p241, %p242
      %p245 = scmp.ne.s32.totalorder %s228, %s244
      %p246 = scmp.eq.s32.totalorder %s31, 0
      %p247 = por %p245, %p246
      %s248 = ssub.s32 %s33, %s40
      %p249 = scmp.eq.s32.totalorder %s248, 0
      %s251 = sadd.s32 %s250, 1
      %s252 = scalar_select %p249, %s250, %s251
      %p255 = pneg %p249
      %p256 = scmp.eq.s32.totalorder %s25, 1
      %p257 = por %p255, %p256
      %p258 = scmp.ne.s32.totalorder %s250, %s253
      %p259 = scmp.eq.s32.totalorder %s25, 0
      %p260 = por %p258, %p259
      %p261 = scmp.ne.s32.totalorder %s250, %s253
      %p262 = scmp.eq.s32.totalorder %s30, 1
      %p263 = por %p261, %p262
      %p264 = scmp.ne.s32.totalorder %s253, %s254
      %p265 = scmp.eq.s32.totalorder %s30, 0
      %p266 = por %p264, %p265
      %p267 = scmp.ne.s32.totalorder %s253, %s254
      %p268 = scmp.eq.s32.totalorder %s31, 1
      %p269 = por %p267, %p268
      %p271 = scmp.ne.s32.totalorder %s254, %s270
      %p272 = scmp.eq.s32.totalorder %s31, 0
      %p273 = por %p271, %p272
      %s274 = ssub.s32 %s33, %s40
      %p275 = scmp.eq.s32.totalorder %s274, 0
      %s277 = sadd.s32 %s276, 1
      %s278 = scalar_select %p275, %s276, %s277
      %p281 = pneg %p275
      %p282 = scmp.eq.s32.totalorder %s25, 1
      %p283 = por %p281, %p282
      %p284 = scmp.ne.s32.totalorder %s276, %s279
      %p285 = scmp.eq.s32.totalorder %s25, 0
      %p286 = por %p284, %p285
      %p287 = scmp.ne.s32.totalorder %s276, %s279
      %p288 = scmp.eq.s32.totalorder %s30, 1
      %p289 = por %p287, %p288
      %p290 = scmp.ne.s32.totalorder %s279, %s280
      %p291 = scmp.eq.s32.totalorder %s30, 0
      %p292 = por %p290, %p291
      %p293 = scmp.ne.s32.totalorder %s279, %s280
      %p294 = scmp.eq.s32.totalorder %s31, 1
      %p295 = por %p293, %p294
      %p297 = scmp.ne.s32.totalorder %s280, %s296
      %p298 = scmp.eq.s32.totalorder %s31, 0
      %p299 = por %p297, %p298
      %s300 = ssub.s32 %s33, %s40
      %p301 = scmp.eq.s32.totalorder %s300, 0
      %s303 = sadd.s32 %s302, 1
      %s304 = scalar_select %p301, %s302, %s303
      %p307 = pneg %p301
      %p308 = scmp.eq.s32.totalorder %s25, 1
      %p309 = por %p307, %p308
      %p310 = scmp.ne.s32.totalorder %s302, %s305
      %p311 = scmp.eq.s32.totalorder %s25, 0
      %p312 = por %p310, %p311
      %p313 = scmp.ne.s32.totalorder %s302, %s305
      %p314 = scmp.eq.s32.totalorder %s30, 1
      %p315 = por %p313, %p314
      %p316 = scmp.ne.s32.totalorder %s305, %s306
      %p317 = scmp.eq.s32.totalorder %s30, 0
      %p318 = por %p316, %p317
      %p319 = scmp.ne.s32.totalorder %s305, %s306
      %p320 = scmp.eq.s32.totalorder %s31, 1
      %p321 = por %p319, %p320
      %p323 = scmp.ne.s32.totalorder %s306, %s322
      %p324 = scmp.eq.s32.totalorder %s31, 0
      %p325 = por %p323, %p324
      %s326 = ssub.s32 %s33, %s40
      %p327 = scmp.eq.s32.totalorder %s326, 0
      %s329 = sadd.s32 %s328, 1
      %s330 = scalar_select %p327, %s328, %s329
      %p333 = pneg %p327
      %p334 = scmp.eq.s32.totalorder %s25, 1
      %p335 = por %p333, %p334
      %p336 = scmp.ne.s32.totalorder %s328, %s331
      %p337 = scmp.eq.s32.totalorder %s25, 0
      %p338 = por %p336, %p337
      %p339 = scmp.ne.s32.totalorder %s328, %s331
      %p340 = scmp.eq.s32.totalorder %s30, 1
      %p341 = por %p339, %p340
      %p342 = scmp.ne.s32.totalorder %s331, %s332
      %p343 = scmp.eq.s32.totalorder %s30, 0
      %p344 = por %p342, %p343
      %p345 = scmp.ne.s32.totalorder %s331, %s332
      %p346 = scmp.eq.s32.totalorder %s31, 1
      %p347 = por %p345, %p346
      %p349 = scmp.ne.s32.totalorder %s332, %s348
      %p350 = scmp.eq.s32.totalorder %s31, 0
      %p351 = por %p349, %p350
      %s352 = ssub.s32 %s33, %s40
      %p353 = scmp.eq.s32.totalorder %s352, 0
      %s355 = sadd.s32 %s354, 1
      %s356 = scalar_select %p353, %s354, %s355
      %p359 = pneg %p353
      %p360 = scmp.eq.s32.totalorder %s25, 1
      %p361 = por %p359, %p360
      %p362 = scmp.ne.s32.totalorder %s354, %s357
      %p363 = scmp.eq.s32.totalorder %s25, 0
      %p364 = por %p362, %p363
      %p365 = scmp.ne.s32.totalorder %s354, %s357
      %p366 = scmp.eq.s32.totalorder %s30, 1
      %p367 = por %p365, %p366
      %p368 = scmp.ne.s32.totalorder %s357, %s358
      %p369 = scmp.eq.s32.totalorder %s30, 0
      %p370 = por %p368, %p369
      %p371 = scmp.ne.s32.totalorder %s357, %s358
      %p372 = scmp.eq.s32.totalorder %s31, 1
      %p373 = por %p371, %p372
      %p375 = scmp.ne.s32.totalorder %s358, %s374
      %p376 = scmp.eq.s32.totalorder %s31, 0
      %p377 = por %p375, %p376
      %s378 = ssub.s32 %s33, %s40
      %p379 = scmp.eq.s32.totalorder %s378, 0
      %s381 = sadd.s32 %s380, 1
      %s382 = scalar_select %p379, %s380, %s381
      %p385 = pneg %p379
      %p386 = scmp.eq.s32.totalorder %s25, 1
      %p387 = por %p385, %p386
      %p388 = scmp.ne.s32.totalorder %s380, %s383
      %p389 = scmp.eq.s32.totalorder %s25, 0
      %p390 = por %p388, %p389
      %p391 = scmp.ne.s32.totalorder %s380, %s383
      %p392 = scmp.eq.s32.totalorder %s30, 1
      %p393 = por %p391, %p392
      %p394 = scmp.ne.s32.totalorder %s383, %s384
      %p395 = scmp.eq.s32.totalorder %s30, 0
      %p396 = por %p394, %p395
      %p397 = scmp.ne.s32.totalorder %s383, %s384
      %p398 = scmp.eq.s32.totalorder %s31, 1
      %p399 = por %p397, %p398
      %p401 = scmp.ne.s32.totalorder %s384, %s400
      %p402 = scmp.eq.s32.totalorder %s31, 0
      %p403 = por %p401, %p402
      %s405 = sadd.s32 %s404, 1
      %p408 = scmp.eq.s32.totalorder %s25, 1
      %p409 = scmp.ne.s32.totalorder %s404, %s406
      %p410 = scmp.eq.s32.totalorder %s25, 0
      %p411 = por %p409, %p410
      %p412 = scmp.ne.s32.totalorder %s404, %s406
      %p413 = scmp.eq.s32.totalorder %s30, 1
      %p414 = por %p412, %p413
      %p415 = scmp.ne.s32.totalorder %s406, %s407
      %p416 = scmp.eq.s32.totalorder %s30, 0
      %p417 = por %p415, %p416
      %p418 = scmp.ne.s32.totalorder %s406, %s407
      %p419 = scmp.eq.s32.totalorder %s31, 1
      %p420 = por %p418, %p419
      %p422 = scmp.ne.s32.totalorder %s407, %s421
      %p423 = scmp.eq.s32.totalorder %s31, 0
      %p424 = por %p422, %p423
      %s426 = sadd.s32 %s425, 1
      %p429 = scmp.eq.s32.totalorder %s25, 1
      %p430 = scmp.ne.s32.totalorder %s425, %s427
      %p431 = scmp.eq.s32.totalorder %s25, 0
      %p432 = por %p430, %p431
      %p433 = scmp.ne.s32.totalorder %s425, %s427
      %p434 = scmp.eq.s32.totalorder %s30, 1
      %p435 = por %p433, %p434
      %p436 = scmp.ne.s32.totalorder %s427, %s428
      %p437 = scmp.eq.s32.totalorder %s30, 0
      %p438 = por %p436, %p437
      %p439 = scmp.ne.s32.totalorder %s427, %s428
      %p440 = scmp.eq.s32.totalorder %s31, 1
      %p441 = por %p439, %p440
      %p443 = scmp.ne.s32.totalorder %s428, %s442
      %p444 = scmp.eq.s32.totalorder %s31, 0
      %p445 = por %p443, %p444
      %s446 = ssub.s32 %s32, %s44
      %p447 = scmp.eq.s32.totalorder %s446, 0
      %s449 = sadd.s32 %s448, 1
      %s450 = scalar_select %p447, %s448, %s449
      %p453 = pneg %p447
      %p454 = scmp.eq.s32.totalorder %s25, 1
      %p455 = por %p453, %p454
      %p456 = scmp.ne.s32.totalorder %s448, %s451
      %p457 = scmp.eq.s32.totalorder %s25, 0
      %p458 = por %p456, %p457
      %p459 = scmp.ne.s32.totalorder %s448, %s451
      %p460 = scmp.eq.s32.totalorder %s30, 1
      %p461 = por %p459, %p460
      %p462 = scmp.ne.s32.totalorder %s451, %s452
      %p463 = scmp.eq.s32.totalorder %s30, 0
      %p464 = por %p462, %p463
      %p465 = scmp.ne.s32.totalorder %s451, %s452
      %p466 = scmp.eq.s32.totalorder %s31, 1
      %p467 = por %p465, %p466
      %p469 = scmp.ne.s32.totalorder %s452, %s468
      %p470 = scmp.eq.s32.totalorder %s31, 0
      %p471 = por %p469, %p470
      %p472 = scmp.le.s32.totalorder 1, %s25
      %p473 = scmp.lt.s32.totalorder %s25, 3
      %p474 = pnand %p472, %p473
      %p475 = pneg %p474
      // Predicated region
      $region9: #{tpu_custom_call.1} parent=5 // pred_check
        _
      $region10: #{tpu_custom_call.1} parent=5 // pred_check_branch
        %477 = sbr.rel (%p474) target = $region12
      $region11: #{tpu_custom_call.1} parent=5 // pred_region
        %s478 = ssub.s32 %s25, 1
        // Predicated region
        $region13: #{tpu_custom_call.1} parent=11 // pred_check
          %p479 = pneg %p63
        $region14: #{tpu_custom_call.1} parent=11 // pred_check_branch
          %481 = sbr.rel (%p479) target = $region16
        $region15: #{tpu_custom_call.1} parent=11 // pred_region
          %s482 = smul.u32 2, %s34
          %s484 = ssub.s32 256, 256
          %485 = vsyncadd [#allocation4], %s484
          %s486 = smul.addr %s482, 128
          %s487 = scalar_lea.hbm %s0, %s486
          %s488 = sshll.u32 [#allocation3], 4
          %s489 = int_to_ptr.vmem [resolvable:$true] %s488
          %494 = dma.hbm_to_vmem [thread:$0]  %s487, 256, %s489, [#allocation4], 128, 128, 8
        $region16: #{tpu_custom_call.1} parent=11 // pred_fallthru
          _
        // Predicated region
        $region17: #{tpu_custom_call.1} parent=11 // pred_check
          %p495 = pneg %p84
        $region18: #{tpu_custom_call.1} parent=11 // pred_check_branch
          %497 = sbr.rel (%p495) target = $region20
        $region19: #{tpu_custom_call.1} parent=11 // pred_region
          %s499 = ssub.s32 128, 128
          %500 = vsyncadd [#allocation7], %s499
          %s502 = sshll.u32 [#allocation6], 4
          %s503 = int_to_ptr.vmem [resolvable:$true] %s502
          %505 = dma.hbm_to_vmem [thread:$0]  %s1, 128, %s503, [#allocation7]
        $region20: #{tpu_custom_call.1} parent=11 // pred_fallthru
          _
        // Predicated region
        $region21: #{tpu_custom_call.1} parent=11 // pred_check
          %p506 = pneg %p417
        $region22: #{tpu_custom_call.1} parent=11 // pred_check_branch
          %508 = sbr.rel (%p506) target = $region24
        $region23: #{tpu_custom_call.1} parent=11 // pred_region
          _
        $region24: #{tpu_custom_call.1} parent=11 // pred_fallthru
          _
        // Predicated region
        $region25: #{tpu_custom_call.1} parent=11 // pred_check
          %p509 = pneg %p438
        $region26: #{tpu_custom_call.1} parent=11 // pred_check_branch
          %511 = sbr.rel (%p509) target = $region28
        $region27: #{tpu_custom_call.1} parent=11 // pred_region
          _
        $region28: #{tpu_custom_call.1} parent=11 // pred_fallthru
          _
      $region12: #{tpu_custom_call.1} parent=5 // pred_fallthru
        _
      %p512 = scmp.lt.s32.totalorder %s25, 2
      // Predicated region
      $region29: #{tpu_custom_call.1} parent=5 // pred_check
        %p513 = pneg %p512
      $region30: #{tpu_custom_call.1} parent=5 // pred_check_branch
        %515 = sbr.rel (%p513) target = $region32
      $region31: #{tpu_custom_call.1} parent=5 // pred_region
        // Predicated region
        $region33: #{tpu_custom_call.1} parent=31 // pred_check
          %p516 = pneg %p104
        $region34: #{tpu_custom_call.1} parent=31 // pred_check_branch
          %518 = sbr.rel (%p516) target = $region36
        $region35: #{tpu_custom_call.1} parent=31 // pred_region
          %p519 = scmp.lt.s32.totalorder %s33, 1
          %s520 = scalar_select %p519, %s33, 1
          %s521 = smul.addr %s520, 4
          %s522 = smul.addr %s521, 8
          %s523 = scalar_lea.vmem %s2, %s522
        $region36: #{tpu_custom_call.1} parent=31 // pred_fallthru
          _
        // Predicated region
        $region37: #{tpu_custom_call.1} parent=31 // pred_check
          %p524 = pneg %p130
        $region38: #{tpu_custom_call.1} parent=31 // pred_check_branch
          %526 = sbr.rel (%p524) target = $region40
        $region39: #{tpu_custom_call.1} parent=31 // pred_region
          %p527 = scmp.lt.s32.totalorder %s33, 1
          %s528 = scalar_select %p527, %s33, 1
          %s529 = scalar_lea.vmem %s3, %s528
        $region40: #{tpu_custom_call.1} parent=31 // pred_fallthru
          _
        // Predicated region
        $region41: #{tpu_custom_call.1} parent=31 // pred_check
          %p530 = pneg %p156
        $region42: #{tpu_custom_call.1} parent=31 // pred_check_branch
          %532 = sbr.rel (%p530) target = $region44
        $region43: #{tpu_custom_call.1} parent=31 // pred_region
          %p533 = scmp.lt.s32.totalorder %s33, 1
          %s534 = scalar_select %p533, %s33, 1
          %s535 = smul.addr %s534, 4
          %s536 = smul.addr %s535, 8
          %s537 = scalar_lea.vmem %s4, %s536
        $region44: #{tpu_custom_call.1} parent=31 // pred_fallthru
          _
        // Predicated region
        $region45: #{tpu_custom_call.1} parent=31 // pred_check
          %p538 = pneg %p182
        $region46: #{tpu_custom_call.1} parent=31 // pred_check_branch
          %540 = sbr.rel (%p538) target = $region48
        $region47: #{tpu_custom_call.1} parent=31 // pred_region
          %s541 = sand.u32 %s25, 1
          %s542 = scalar_lea.sflag [#allocation4], %s541
          %s543 = sand.u32 %s172, 1
          %s544 = scalar_lea.vmem [#allocation8], %s543
          %s546 = ssub.s32 16, 16
          %547 = vsyncadd %s542, %s546
          %s548 = smul.addr %s33, 16
          %s549 = scalar_lea.hbm %s5, %s548
          %s551 = sshll.u32 %s544, 4
          %s552 = int_to_ptr.vmem [resolvable:$true] %s551
          %554 = dma.hbm_to_vmem [thread:$0]  %s549, 16, %s552, %s542
        $region48: #{tpu_custom_call.1} parent=31 // pred_fallthru
          _
        // Predicated region
        $region49: #{tpu_custom_call.1} parent=31 // pred_check
          %p555 = pneg %p208
        $region50: #{tpu_custom_call.1} parent=31 // pred_check_branch
          %557 = sbr.rel (%p555) target = $region52
        $region51: #{tpu_custom_call.1} parent=31 // pred_region
          %s558 = sand.u32 %s25, 1
          %s559 = scalar_lea.sflag [#allocation4], %s558
          %s560 = sand.u32 %s198, 1
          %s561 = scalar_lea.vmem [#allocation9], %s560
          %s563 = ssub.s32 16, 16
          %564 = vsyncadd %s559, %s563
          %s565 = smul.addr %s33, 16
          %s566 = scalar_lea.hbm %s6, %s565
          %s568 = sshll.u32 %s561, 4
          %s569 = int_to_ptr.vmem [resolvable:$true] %s568
          %571 = dma.hbm_to_vmem [thread:$0]  %s566, 16, %s569, %s559
        $region52: #{tpu_custom_call.1} parent=31 // pred_fallthru
          _
        // Predicated region
        $region53: #{tpu_custom_call.1} parent=31 // pred_check
          %p572 = pneg %p234
        $region54: #{tpu_custom_call.1} parent=31 // pred_check_branch
          %574 = sbr.rel (%p572) target = $region56
        $region55: #{tpu_custom_call.1} parent=31 // pred_region
          %s575 = sand.u32 %s25, 1
          %s576 = scalar_lea.sflag [#allocation4], %s575
          %s577 = sand.u32 %s224, 1
          %s578 = scalar_lea.vmem [#allocation10], %s577
          %s580 = ssub.s32 16, 16
          %581 = vsyncadd %s576, %s580
          %s582 = smul.addr %s33, 16
          %s583 = scalar_lea.hbm %s7, %s582
          %s585 = sshll.u32 %s578, 4
          %s586 = int_to_ptr.vmem [resolvable:$true] %s585
          %588 = dma.hbm_to_vmem [thread:$0]  %s583, 16, %s586, %s576
        $region56: #{tpu_custom_call.1} parent=31 // pred_fallthru
          _
        // Predicated region
        $region57: #{tpu_custom_call.1} parent=31 // pred_check
          %p589 = pneg %p260
        $region58: #{tpu_custom_call.1} parent=31 // pred_check_branch
          %591 = sbr.rel (%p589) target = $region60
        $region59: #{tpu_custom_call.1} parent=31 // pred_region
          %p592 = scmp.lt.s32.totalorder %s33, 1
          %s593 = scalar_select %p592, %s33, 1
          %s594 = smul.addr %s593, 4
          %s595 = smul.addr %s594, 8
          %s596 = scalar_lea.vmem %s8, %s595
        $region60: #{tpu_custom_call.1} parent=31 // pred_fallthru
          _
        // Predicated region
        $region61: #{tpu_custom_call.1} parent=31 // pred_check
          %p597 = pneg %p286
        $region62: #{tpu_custom_call.1} parent=31 // pred_check_branch
          %599 = sbr.rel (%p597) target = $region64
        $region63: #{tpu_custom_call.1} parent=31 // pred_region
          %s600 = sand.u32 %s25, 1
          %s601 = scalar_lea.sflag [#allocation4], %s600
          %s602 = sand.u32 %s276, 1
          %s603 = scalar_lea.vmem [#allocation11], %s602
          %s605 = ssub.s32 16, 16
          %606 = vsyncadd %s601, %s605
          %s607 = smul.addr %s33, 16
          %s608 = scalar_lea.hbm %s9, %s607
          %s610 = sshll.u32 %s603, 4
          %s611 = int_to_ptr.vmem [resolvable:$true] %s610
          %613 = dma.hbm_to_vmem [thread:$0]  %s608, 16, %s611, %s601
        $region64: #{tpu_custom_call.1} parent=31 // pred_fallthru
          _
        // Predicated region
        $region65: #{tpu_custom_call.1} parent=31 // pred_check
          %p614 = pneg %p312
        $region66: #{tpu_custom_call.1} parent=31 // pred_check_branch
          %616 = sbr.rel (%p614) target = $region68
        $region67: #{tpu_custom_call.1} parent=31 // pred_region
          %p617 = scmp.lt.s32.totalorder %s33, 1
          %s618 = scalar_select %p617, %s33, 1
          %s619 = smul.addr %s618, 8
          %s620 = smul.addr %s619, 8
          %s621 = scalar_lea.vmem %s10, %s620
        $region68: #{tpu_custom_call.1} parent=31 // pred_fallthru
          _
        // Predicated region
        $region69: #{tpu_custom_call.1} parent=31 // pred_check
          %p622 = pneg %p338
        $region70: #{tpu_custom_call.1} parent=31 // pred_check_branch
          %624 = sbr.rel (%p622) target = $region72
        $region71: #{tpu_custom_call.1} parent=31 // pred_region
          %p625 = scmp.lt.s32.totalorder %s33, 1
          %s626 = scalar_select %p625, %s33, 1
          %s627 = scalar_lea.vmem %s11, %s626
        $region72: #{tpu_custom_call.1} parent=31 // pred_fallthru
          _
        // Predicated region
        $region73: #{tpu_custom_call.1} parent=31 // pred_check
          %p628 = pneg %p364
        $region74: #{tpu_custom_call.1} parent=31 // pred_check_branch
          %630 = sbr.rel (%p628) target = $region76
        $region75: #{tpu_custom_call.1} parent=31 // pred_region
          %p631 = scmp.lt.s32.totalorder %s33, 1
          %s632 = scalar_select %p631, %s33, 1
          %s633 = scalar_lea.vmem %s12, %s632
        $region76: #{tpu_custom_call.1} parent=31 // pred_fallthru
          _
        // Predicated region
        $region77: #{tpu_custom_call.1} parent=31 // pred_check
          %p634 = pneg %p390
        $region78: #{tpu_custom_call.1} parent=31 // pred_check_branch
          %636 = sbr.rel (%p634) target = $region80
        $region79: #{tpu_custom_call.1} parent=31 // pred_region
          %p637 = scmp.lt.s32.totalorder %s33, 1
          %s638 = scalar_select %p637, %s33, 1
          %s639 = scalar_lea.vmem %s13, %s638
        $region80: #{tpu_custom_call.1} parent=31 // pred_fallthru
          _
      $region32: #{tpu_custom_call.1} parent=5 // pred_fallthru
        _
      %p640 = scmp.le.s32.totalorder 1, %s25
      %p641 = scmp.lt.s32.totalorder %s25, 3
      %p642 = pnand %p640, %p641
      %p643 = pneg %p642
      // Predicated region
      $region81: #{tpu_custom_call.1} parent=5 // pred_check
        _
      $region82: #{tpu_custom_call.1} parent=5 // pred_check_branch
        %645 = sbr.rel (%p642) target = $region84
      $region83: #{tpu_custom_call.1} parent=5 // pred_region
        %s646 = ssub.s32 %s25, 1
        // Predicated region
        $region85: #{tpu_custom_call.1} parent=83 // pred_check
          %p647 = pneg %p63
        $region86: #{tpu_custom_call.1} parent=83 // pred_check_branch
          %649 = sbr.rel (%p647) target = $region88
        $region87: #{tpu_custom_call.1} parent=83 // pred_region
          %650 = dma.done [#allocation4], 256
        $region88: #{tpu_custom_call.1} parent=83 // pred_fallthru
          _
        // Predicated region
        $region89: #{tpu_custom_call.1} parent=83 // pred_check
          %p651 = pneg %p84
        $region90: #{tpu_custom_call.1} parent=83 // pred_check_branch
          %653 = sbr.rel (%p651) target = $region92
        $region91: #{tpu_custom_call.1} parent=83 // pred_region
          %654 = dma.done [#allocation7], 128
        $region92: #{tpu_custom_call.1} parent=83 // pred_fallthru
          _
        %s655 = sand.u32 %s30, 1
        %s656 = scalar_lea.sflag [#allocation4], %s655
        %s657 = sand.u32 %s175, 1
        %s658 = scalar_lea.vmem [#allocation8], %s657
        // Predicated region
        $region93: #{tpu_custom_call.1} parent=83 // pred_check
          %p659 = pneg %p188
        $region94: #{tpu_custom_call.1} parent=83 // pred_check_branch
          %661 = sbr.rel (%p659) target = $region96
        $region95: #{tpu_custom_call.1} parent=83 // pred_region
          %662 = dma.done %s656, 16
        $region96: #{tpu_custom_call.1} parent=83 // pred_fallthru
          _
        %s663 = sand.u32 %s30, 1
        %s664 = scalar_lea.sflag [#allocation4], %s663
        %s665 = sand.u32 %s201, 1
        %s666 = scalar_lea.vmem [#allocation9], %s665
        // Predicated region
        $region97: #{tpu_custom_call.1} parent=83 // pred_check
          %p667 = pneg %p214
        $region98: #{tpu_custom_call.1} parent=83 // pred_check_branch
          %669 = sbr.rel (%p667) target = $region100
        $region99: #{tpu_custom_call.1} parent=83 // pred_region
          %670 = dma.done %s664, 16
        $region100: #{tpu_custom_call.1} parent=83 // pred_fallthru
          _
        %s671 = sand.u32 %s30, 1
        %s672 = scalar_lea.sflag [#allocation4], %s671
        %s673 = sand.u32 %s227, 1
        %s674 = scalar_lea.vmem [#allocation10], %s673
        // Predicated region
        $region101: #{tpu_custom_call.1} parent=83 // pred_check
          %p675 = pneg %p240
        $region102: #{tpu_custom_call.1} parent=83 // pred_check_branch
          %677 = sbr.rel (%p675) target = $region104
        $region103: #{tpu_custom_call.1} parent=83 // pred_region
          %678 = dma.done %s672, 16
        $region104: #{tpu_custom_call.1} parent=83 // pred_fallthru
          _
        %s679 = sand.u32 %s30, 1
        %s680 = scalar_lea.sflag [#allocation4], %s679
        %s681 = sand.u32 %s279, 1
        %s682 = scalar_lea.vmem [#allocation11], %s681
        // Predicated region
        $region105: #{tpu_custom_call.1} parent=83 // pred_check
          %p683 = pneg %p292
        $region106: #{tpu_custom_call.1} parent=83 // pred_check_branch
          %685 = sbr.rel (%p683) target = $region108
        $region107: #{tpu_custom_call.1} parent=83 // pred_region
          %686 = dma.done %s680, 16
        $region108: #{tpu_custom_call.1} parent=83 // pred_fallthru
          _
        %p687 = pneg %p63
        %p688 = pneg %p60
        %p689 = pneg %p84
        %p690 = pneg %p81
        %p691 = scmp.lt.s32.totalorder %s35, 1
        %s692 = scalar_select %p691, %s35, 1
        %s693 = smul.addr %s692, 4
        %s694 = smul.addr %s693, 8
        %s695 = scalar_lea.vmem %s2, %s694
        %p696 = pneg %p110
        %p697 = pneg %p107
        %p698 = scmp.lt.s32.totalorder %s35, 1
        %s699 = scalar_select %p698, %s35, 1
        %s700 = scalar_lea.vmem %s3, %s699
        %p701 = pneg %p136
        %p702 = pneg %p133
        %p703 = scmp.lt.s32.totalorder %s35, 1
        %s704 = scalar_select %p703, %s35, 1
        %s705 = smul.addr %s704, 4
        %s706 = smul.addr %s705, 8
        %s707 = scalar_lea.vmem %s4, %s706
        %p708 = pneg %p162
        %p709 = pneg %p159
        %s710 = sand.u32 %s30, 1
        %s711 = scalar_lea.sflag [#allocation4], %s710
        %s712 = sand.u32 %s175, 1
        %s713 = scalar_lea.vmem [#allocation8], %s712
        %p714 = pneg %p188
        %p715 = pneg %p185
        %s716 = sand.u32 %s30, 1
        %s717 = scalar_lea.sflag [#allocation4], %s716
        %s718 = sand.u32 %s201, 1
        %s719 = scalar_lea.vmem [#allocation9], %s718
        %p720 = pneg %p214
        %p721 = pneg %p211
        %s722 = sand.u32 %s30, 1
        %s723 = scalar_lea.sflag [#allocation4], %s722
        %s724 = sand.u32 %s227, 1
        %s725 = scalar_lea.vmem [#allocation10], %s724
        %p726 = pneg %p240
        %p727 = pneg %p237
        %p728 = scmp.lt.s32.totalorder %s35, 1
        %s729 = scalar_select %p728, %s35, 1
        %s730 = smul.addr %s729, 4
        %s731 = smul.addr %s730, 8
        %s732 = scalar_lea.vmem %s8, %s731
        %p733 = pneg %p266
        %p734 = pneg %p263
        %s735 = sand.u32 %s30, 1
        %s736 = scalar_lea.sflag [#allocation4], %s735
        %s737 = sand.u32 %s279, 1
        %s738 = scalar_lea.vmem [#allocation11], %s737
        %p739 = pneg %p292
        %p740 = pneg %p289
        %p741 = scmp.lt.s32.totalorder %s35, 1
        %s742 = scalar_select %p741, %s35, 1
        %s743 = smul.addr %s742, 8
        %s744 = smul.addr %s743, 8
        %s745 = scalar_lea.vmem %s10, %s744
        %p746 = pneg %p318
        %p747 = pneg %p315
        %p748 = scmp.lt.s32.totalorder %s35, 1
        %s749 = scalar_select %p748, %s35, 1
        %s750 = scalar_lea.vmem %s11, %s749
        %p751 = pneg %p344
        %p752 = pneg %p341
        %p753 = scmp.lt.s32.totalorder %s35, 1
        %s754 = scalar_select %p753, %s35, 1
        %s755 = scalar_lea.vmem %s12, %s754
        %p756 = pneg %p370
        %p757 = pneg %p367
        %p758 = scmp.lt.s32.totalorder %s35, 1
        %s759 = scalar_select %p758, %s35, 1
        %s760 = scalar_lea.vmem %s13, %s759
        %p761 = pneg %p396
        %p762 = pneg %p393
        %p763 = pneg %p417
        %p764 = pneg %p414
        %p765 = pneg %p438
        %p766 = pneg %p435
        %p767 = pneg %p464
        %p768 = pneg %p461
        %s769 = smul.u32 2, %s34
        %p770 = scmp.lt.s32.totalorder %s35, 1
        %s771 = scalar_select %p770, %s35, 1
        %s772 = smul.addr %s771, 4
        %s773 = smul.addr %s772, 8
        %s774 = scalar_lea.vmem %s2, %s773
        %p775 = scmp.lt.s32.totalorder %s35, 1
        %s776 = scalar_select %p775, %s35, 1
        %s777 = scalar_lea.vmem %s3, %s776
        %p778 = scmp.lt.s32.totalorder %s35, 1
        %s779 = scalar_select %p778, %s35, 1
        %s780 = smul.addr %s779, 4
        %s781 = smul.addr %s780, 8
        %s782 = scalar_lea.vmem %s4, %s781
        %p783 = scmp.lt.s32.totalorder %s35, 1
        %s784 = scalar_select %p783, %s35, 1
        %s785 = smul.addr %s784, 4
        %s786 = smul.addr %s785, 8
        %s787 = scalar_lea.vmem %s8, %s786
        %p788 = scmp.lt.s32.totalorder %s35, 1
        %s789 = scalar_select %p788, %s35, 1
        %s790 = smul.addr %s789, 8
        %s791 = smul.addr %s790, 8
        %s792 = scalar_lea.vmem %s10, %s791
        %p793 = scmp.lt.s32.totalorder %s35, 1
        %s794 = scalar_select %p793, %s35, 1
        %s795 = scalar_lea.vmem %s11, %s794
        %p796 = scmp.lt.s32.totalorder %s35, 1
        %s797 = scalar_select %p796, %s35, 1
        %s798 = scalar_lea.vmem %s12, %s797
        %p799 = scmp.lt.s32.totalorder %s35, 1
        %s800 = scalar_select %p799, %s35, 1
        %s801 = scalar_lea.vmem %s13, %s800
        %p802 = scmp.eq.s32.totalorder %s35, 0
        // Predicated region
        $region109: #{tpu_custom_call.1} parent=83 // pred_check
          %p803 = pneg %p802
        $region110: #{tpu_custom_call.1} parent=83 // pred_check_branch
          %805 = sbr.rel (%p803) target = $region112
        $region111: #{tpu_custom_call.1} parent=83 // pred_region
          %v806 = vld [vmem:[#allocation3] sm:$0xff]
          %v807 = vld [vmem:[#allocation3 + $0x8] sm:$0xff]
          %v808 = vld [vmem:[#allocation6] sm:$0xff]
          %v809 = vadd.f32 %v806, %v808
          %v810 = vadd.f32 %v807, %v808
          %vm811 = vcmask 261120
          %812 = vst.msk [vmem:[#allocation2] sm:$0xff] %vm811, %v809
          %813 = vst.msk [vmem:[#allocation2 + $0x8] sm:$0xff] %vm811, %v810
        $region112: #{tpu_custom_call.1} parent=83 // pred_fallthru
          _
        %v814 = vld [vmem:[#allocation2] sm:$0xff]
        %v815 = vld [vmem:[#allocation2 + $0x8] sm:$0xff]
        %v816 = vld [vmem:[%s774] sm:$0xff]
        %v817 = vld [vmem:[%s774 + $0x8] sm:$0xff]
        %v818 = vld [vmem:[%s774 + $0x10] sm:$0xff]
        %v819 = vld [vmem:[%s774 + $0x18] sm:$0xff]
        %v820 = vld [vmem:[%s777] sm:$0x1]
        %v822 = vlaneseq
        %v823 = vshrl.u32 %v822, 7
        %v824 = vsub.s32 0, %v823
        %v825 = vrot.slane %v820, %v824
        %vm827 = vcmask 261120
        %v829 = vsel %vm827, %v814, 0
        %v832 = vsel %vm827, %v815, 0
        %834 = vmatprep.subr.mxu0 0.0
        %835 = vmatpush1.msra.mxu0 %v816
        %836 = vmatprep.subr.mxu0 0.0
        %837 = vmatpush1.msra.mxu0 %v817
        %838 = vmatprep.subr.mxu0 0.0
        %839 = vmatpush1.msra.mxu0 %v818
        %840 = vmatprep.subr.mxu0 0.0
        %841 = vmatpush1.msra.mxu0 %v819
        %842 = vmatprep.subr.mxu0 0.0
        %843 = vmatpush1.msra.mxu0 0.0
        %844 = vmatprep.subr.mxu0 0.0
        %845 = vmatpush1.msra.mxu0 0.0
        %846 = vmatprep.subr.mxu0 0.0
        %847 = vmatpush1.msra.mxu0 0.0
        %848 = vmatprep.subr.mxu0 0.0
        %849 = vmatpush1.msra.mxu0 0.0
        %850 = vmatprep.subr.mxu0 0.0
        %851 = vmatpush1.msra.mxu0 0.0
        %852 = vmatprep.subr.mxu0 0.0
        %853 = vmatpush1.msra.mxu0 0.0
        %854 = vmatprep.subr.mxu0 0.0
        %855 = vmatpush1.msra.mxu0 0.0
        %856 = vmatprep.subr.mxu0 0.0
        %857 = vmatpush1.msra.mxu0 0.0
        %858 = vmatprep.subr.mxu0 0.0
        %859 = vmatpush1.msra.mxu0 0.0
        %860 = vmatprep.subr.mxu0 0.0
        %861 = vmatpush1.msra.mxu0 0.0
        %862 = vmatprep.subr.mxu0 0.0
        %863 = vmatpush1.msra.mxu0 0.0
        %864 = vmatprep.subr.mxu0 0.0
        %865 = vmatpush1.msra.mxu0 0.0
        %866 = vmatprep.subr.mxu0 0.0
        %867 = vmatpush1.msra.mxu0 0.0
        %868 = vmatprep.subr.mxu0 0.0
        %869 = vmatpush1.msra.mxu0 0.0
        %870 = vmatprep.subr.mxu0 0.0
        %871 = vmatpush1.msra.mxu0 0.0
        %872 = vmatprep.subr.mxu0 0.0
        %873 = vmatpush1.msra.mxu0 0.0
        %874 = vmatprep.subr.mxu0 0.0
        %875 = vmatpush1.msra.mxu0 0.0
        %876 = vmatprep.subr.mxu0 0.0
        %877 = vmatpush1.msra.mxu0 0.0
        %878 = vmatprep.subr.mxu0 0.0
        %879 = vmatpush1.msra.mxu0 0.0
        %880 = vmatprep.subr.mxu0 0.0
        %881 = vmatpush1.msra.mxu0 0.0
        %882 = vmatprep.subr.mxu0 0.0
        %883 = vmatpush1.msra.mxu0 0.0
        %884 = vmatprep.subr.mxu0 0.0
        %885 = vmatpush1.msra.mxu0 0.0
        %886 = vmatprep.subr.mxu0 0.0
        %887 = vmatpush1.msra.mxu0 0.0
        %888 = vmatprep.subr.mxu0 0.0
        %889 = vmatpush1.msra.mxu0 0.0
        %890 = vmatprep.subr.mxu0 0.0
        %891 = vmatpush1.msra.mxu0 0.0
        %892 = vmatprep.subr.mxu0 0.0
        %893 = vmatpush1.msra.mxu0 0.0
        %894 = vmatprep.subr.mxu0 0.0
        %895 = vmatpush1.msra.mxu0 0.0
        %896 = vmatprep.subr.mxu0 0.0
        %897 = vmatpush1.msra.mxu0 0.0
        %898 = vmatprep.mubr.f32.mxu0 0.0
        %899 = vmatmul.mubr.f32.gmra.mrb[0].mxu0 %v829
        %v900 = vpop.f32.mrb[0].mxu0
        %v901 = vadd.f32 %v825, %v900
        %v902 = vpop.f32.mrb[0].mxu0
        %903 = vmatprep.mubr.f32.mxu0 0.0
        %904 = vmatmul.mubr.f32.gmra.mrb[0].mxu0 %v832
        %v905 = vpop.f32.mrb[0].mxu0
        %v906 = vadd.f32 %v825, %v905
        %v907 = vpop.f32.mrb[0].mxu0
        %908 = vdwg.mxu0
        %v909 = vld [vmem:[%s782] sm:$0xff]
        %v910 = vld [vmem:[%s782 + $0x8] sm:$0xff]
        %v911 = vld [vmem:[%s782 + $0x10] sm:$0xff]
        %v912 = vld [vmem:[%s782 + $0x18] sm:$0xff]
        %914 = vrot.lane.b32.xlu0 %v901, 96
        %v915 = vpop.permute.xlu0 %914
        %vm916 = vcmask 64512
        %v917 = vsel %vm916, %v901, 0
        %v919 = vsel %vm916, %v915, 0
        %921 = vmatprep.subr.mxu0 0.0
        %922 = vmatpush1.xpose.msra.mxu0 %v919
        %923 = vmatprep.subr.mxu0 0.0
        %924 = vmatpush1.xpose.msra.mxu0 0.0
        %925 = vmatprep.subr.mxu0 0.0
        %926 = vmatpush1.xpose.msra.mxu0 0.0
        %927 = vmatprep.subr.mxu0 0.0
        %928 = vmatpush1.xpose.msra.mxu0 0.0
        %929 = vmatprep.subr.mxu0 0.0
        %930 = vmatpush1.xpose.msra.mxu0 0.0
        %931 = vmatprep.subr.mxu0 0.0
        %932 = vmatpush1.xpose.msra.mxu0 0.0
        %933 = vmatprep.subr.mxu0 0.0
        %934 = vmatpush1.xpose.msra.mxu0 0.0
        %935 = vmatprep.subr.mxu0 0.0
        %936 = vmatpush1.xpose.msra.mxu0 0.0
        %937 = vmatprep.subr.mxu0 0.0
        %938 = vmatpush1.xpose.msra.mxu0 0.0
        %939 = vmatprep.subr.mxu0 0.0
        %940 = vmatpush1.xpose.msra.mxu0 0.0
        %941 = vmatprep.subr.mxu0 0.0
        %942 = vmatpush1.xpose.msra.mxu0 0.0
        %943 = vmatprep.subr.mxu0 0.0
        %944 = vmatpush1.xpose.msra.mxu0 0.0
        %945 = vmatprep.subr.mxu0 0.0
        %946 = vmatpush1.xpose.msra.mxu0 0.0
        %947 = vmatprep.subr.mxu0 0.0
        %948 = vmatpush1.xpose.msra.mxu0 0.0
        %949 = vmatprep.subr.mxu0 0.0
        %950 = vmatpush1.xpose.msra.mxu0 0.0
        %951 = vmatprep.subr.mxu0 0.0
        %952 = vmatpush1.xpose.msra.mxu0 0.0
        %953 = vmatprep.subr.mxu0 0.0
        %954 = vmatpush1.xpose.msra.mxu0 0.0
        %955 = vmatprep.subr.mxu0 0.0
        %956 = vmatpush1.xpose.msra.mxu0 0.0
        %957 = vmatprep.subr.mxu0 0.0
        %958 = vmatpush1.xpose.msra.mxu0 0.0
        %959 = vmatprep.subr.mxu0 0.0
        %960 = vmatpush1.xpose.msra.mxu0 0.0
        %961 = vmatprep.subr.mxu0 0.0
        %962 = vmatpush1.xpose.msra.mxu0 0.0
        %963 = vmatprep.subr.mxu0 0.0
        %964 = vmatpush1.xpose.msra.mxu0 0.0
        %965 = vmatprep.subr.mxu0 0.0
        %966 = vmatpush1.xpose.msra.mxu0 0.0
        %967 = vmatprep.subr.mxu0 0.0
        %968 = vmatpush1.xpose.msra.mxu0 0.0
        %969 = vmatprep.subr.mxu0 0.0
        %970 = vmatpush1.xpose.msra.mxu0 0.0
        %971 = vmatprep.subr.mxu0 0.0
        %972 = vmatpush1.xpose.msra.mxu0 0.0
        %973 = vmatprep.subr.mxu0 0.0
        %974 = vmatpush1.xpose.msra.mxu0 0.0
        %975 = vmatprep.subr.mxu0 0.0
        %976 = vmatpush1.xpose.msra.mxu0 0.0
        %977 = vmatprep.subr.mxu0 0.0
        %978 = vmatpush1.xpose.msra.mxu0 0.0
        %979 = vmatprep.subr.mxu0 0.0
        %980 = vmatpush1.xpose.msra.mxu0 0.0
        %981 = vmatprep.subr.mxu0 0.0
        %982 = vmatpush1.xpose.msra.mxu0 0.0
        %983 = vmatprep.subr.mxu0 0.0
        %984 = vmatpush1.xpose.msra.mxu0 0.0
        %985 = vmatprep.mubr.f32.mxu0 0.0
        %986 = vmatmul.mubr.f32.gmra.mrb[0].mxu0 %v917
        %v987 = vpop.f32.mrb[0].mxu0
        %v988 = vadd.f32 0.0, %v987
        %v989 = vpop.f32.mrb[0].mxu0
        %990 = vdwg.mxu0
        %v991 = vsel %vm916, %v988, -inf
        %992 = vmax.xlane.f32.xlu0 %v991
        %v993 = vpop.xlane.xlu0 %992
        %v994 = vsub.f32 %v988, %v993
        %v995 = vmul.f32 %v994, 1.442695
        %v996 = vpow.pop %v995
        %v997 = vsel %vm916, %v996, 0.0
        %998 = vadd.xlane.f32.xlu0 %v997
        %v999 = vpop.xlane.xlu0 %998
        %v1000 = vrcp.pop %v999
        %v1001 = vmul.f32 %v996, %v1000
        %1002 = vrot.lane.b32.xlu0 %v901, 64
        %v1003 = vpop.permute.xlu0 %1002
        %v1006 = vsel %vm916, %v1001, 0
        %1008 = vmatprep.subr.mxu0 0.0
        %1009 = vmatpush1.msra.mxu0 %v1003
        %1010 = vmatprep.subr.mxu0 0.0
        %1011 = vmatpush1.msra.mxu0 0.0
        %1012 = vmatprep.subr.mxu0 0.0
        %1013 = vmatpush1.msra.mxu0 0.0
        %1014 = vmatprep.subr.mxu0 0.0
        %1015 = vmatpush1.msra.mxu0 0.0
        %1016 = vmatprep.subr.mxu0 0.0
        %1017 = vmatpush1.msra.mxu0 0.0
        %1018 = vmatprep.subr.mxu0 0.0
        %1019 = vmatpush1.msra.mxu0 0.0
        %1020 = vmatprep.subr.mxu0 0.0
        %1021 = vmatpush1.msra.mxu0 0.0
        %1022 = vmatprep.subr.mxu0 0.0
        %1023 = vmatpush1.msra.mxu0 0.0
        %1024 = vmatprep.subr.mxu0 0.0
        %1025 = vmatpush1.msra.mxu0 0.0
        %1026 = vmatprep.subr.mxu0 0.0
        %1027 = vmatpush1.msra.mxu0 0.0
        %1028 = vmatprep.subr.mxu0 0.0
        %1029 = vmatpush1.msra.mxu0 0.0
        %1030 = vmatprep.subr.mxu0 0.0
        %1031 = vmatpush1.msra.mxu0 0.0
        %1032 = vmatprep.subr.mxu0 0.0
        %1033 = vmatpush1.msra.mxu0 0.0
        %1034 = vmatprep.subr.mxu0 0.0
        %1035 = vmatpush1.msra.mxu0 0.0
        %1036 = vmatprep.subr.mxu0 0.0
        %1037 = vmatpush1.msra.mxu0 0.0
        %1038 = vmatprep.subr.mxu0 0.0
        %1039 = vmatpush1.msra.mxu0 0.0
        %1040 = vmatprep.subr.mxu0 0.0
        %1041 = vmatpush1.msra.mxu0 0.0
        %1042 = vmatprep.subr.mxu0 0.0
        %1043 = vmatpush1.msra.mxu0 0.0
        %1044 = vmatprep.subr.mxu0 0.0
        %1045 = vmatpush1.msra.mxu0 0.0
        %1046 = vmatprep.subr.mxu0 0.0
        %1047 = vmatpush1.msra.mxu0 0.0
        %1048 = vmatprep.subr.mxu0 0.0
        %1049 = vmatpush1.msra.mxu0 0.0
        %1050 = vmatprep.subr.mxu0 0.0
        %1051 = vmatpush1.msra.mxu0 0.0
        %1052 = vmatprep.subr.mxu0 0.0
        %1053 = vmatpush1.msra.mxu0 0.0
        %1054 = vmatprep.subr.mxu0 0.0
        %1055 = vmatpush1.msra.mxu0 0.0
        %1056 = vmatprep.subr.mxu0 0.0
        %1057 = vmatpush1.msra.mxu0 0.0
        %1058 = vmatprep.subr.mxu0 0.0
        %1059 = vmatpush1.msra.mxu0 0.0
        %1060 = vmatprep.subr.mxu0 0.0
        %1061 = vmatpush1.msra.mxu0 0.0
        %1062 = vmatprep.subr.mxu0 0.0
        %1063 = vmatpush1.msra.mxu0 0.0
        %1064 = vmatprep.subr.mxu0 0.0
        %1065 = vmatpush1.msra.mxu0 0.0
        %1066 = vmatprep.subr.mxu0 0.0
        %1067 = vmatpush1.msra.mxu0 0.0
        %1068 = vmatprep.subr.mxu0 0.0
        %1069 = vmatpush1.msra.mxu0 0.0
        %1070 = vmatprep.subr.mxu0 0.0
        %1071 = vmatpush1.msra.mxu0 0.0
        %1072 = vmatprep.mubr.f32.mxu0 0.0
        %1073 = vmatmul.mubr.f32.gmra.mrb[0].mxu0 %v1006
        %v1074 = vpop.f32.mrb[0].mxu0
        %v1075 = vadd.f32 0.0, %v1074
        %v1076 = vpop.f32.mrb[0].mxu0
        %1077 = vdwg.mxu0
        %1078 = vrot.lane.b32.xlu0 %v901, 120
        %v1079 = vpop.permute.xlu0 %1078
        %1080 = vrot.lane.b32.xlu0 %v901, 88
        %v1081 = vpop.permute.xlu0 %1080
        %v1082 = vsel %vm916, %v1079, 0
        %v1084 = vsel %vm916, %v1081, 0
        %1086 = vmatprep.subr.mxu0 0.0
        %1087 = vmatpush1.xpose.msra.mxu0 %v1084
        %1088 = vmatprep.subr.mxu0 0.0
        %1089 = vmatpush1.xpose.msra.mxu0 0.0
        %1090 = vmatprep.subr.mxu0 0.0
        %1091 = vmatpush1.xpose.msra.mxu0 0.0
        %1092 = vmatprep.subr.mxu0 0.0
        %1093 = vmatpush1.xpose.msra.mxu0 0.0
        %1094 = vmatprep.subr.mxu0 0.0
        %1095 = vmatpush1.xpose.msra.mxu0 0.0
        %1096 = vmatprep.subr.mxu0 0.0
        %1097 = vmatpush1.xpose.msra.mxu0 0.0
        %1098 = vmatprep.subr.mxu0 0.0
        %1099 = vmatpush1.xpose.msra.mxu0 0.0
        %1100 = vmatprep.subr.mxu0 0.0
        %1101 = vmatpush1.xpose.msra.mxu0 0.0
        %1102 = vmatprep.subr.mxu0 0.0
        %1103 = vmatpush1.xpose.msra.mxu0 0.0
        %1104 = vmatprep.subr.mxu0 0.0
        %1105 = vmatpush1.xpose.msra.mxu0 0.0
        %1106 = vmatprep.subr.mxu0 0.0
        %1107 = vmatpush1.xpose.msra.mxu0 0.0
        %1108 = vmatprep.subr.mxu0 0.0
        %1109 = vmatpush1.xpose.msra.mxu0 0.0
        %1110 = vmatprep.subr.mxu0 0.0
        %1111 = vmatpush1.xpose.msra.mxu0 0.0
        %1112 = vmatprep.subr.mxu0 0.0
        %1113 = vmatpush1.xpose.msra.mxu0 0.0
        %1114 = vmatprep.subr.mxu0 0.0
        %1115 = vmatpush1.xpose.msra.mxu0 0.0
        %1116 = vmatprep.subr.mxu0 0.0
        %1117 = vmatpush1.xpose.msra.mxu0 0.0
        %1118 = vmatprep.subr.mxu0 0.0
        %1119 = vmatpush1.xpose.msra.mxu0 0.0
        %1120 = vmatprep.subr.mxu0 0.0
        %1121 = vmatpush1.xpose.msra.mxu0 0.0
        %1122 = vmatprep.subr.mxu0 0.0
        %1123 = vmatpush1.xpose.msra.mxu0 0.0
        %1124 = vmatprep.subr.mxu0 0.0
        %1125 = vmatpush1.xpose.msra.mxu0 0.0
        %1126 = vmatprep.subr.mxu0 0.0
        %1127 = vmatpush1.xpose.msra.mxu0 0.0
        %1128 = vmatprep.subr.mxu0 0.0
        %1129 = vmatpush1.xpose.msra.mxu0 0.0
        %1130 = vmatprep.subr.mxu0 0.0
        %1131 = vmatpush1.xpose.msra.mxu0 0.0
        %1132 = vmatprep.subr.mxu0 0.0
        %1133 = vmatpush1.xpose.msra.mxu0 0.0
        %1134 = vmatprep.subr.mxu0 0.0
        %1135 = vmatpush1.xpose.msra.mxu0 0.0
        %1136 = vmatprep.subr.mxu0 0.0
        %1137 = vmatpush1.xpose.msra.mxu0 0.0
        %1138 = vmatprep.subr.mxu0 0.0
        %1139 = vmatpush1.xpose.msra.mxu0 0.0
        %1140 = vmatprep.subr.mxu0 0.0
        %1141 = vmatpush1.xpose.msra.mxu0 0.0
        %1142 = vmatprep.subr.mxu0 0.0
        %1143 = vmatpush1.xpose.msra.mxu0 0.0
        %1144 = vmatprep.subr.mxu0 0.0
        %1145 = vmatpush1.xpose.msra.mxu0 0.0
        %1146 = vmatprep.subr.mxu0 0.0
        %1147 = vmatpush1.xpose.msra.mxu0 0.0
        %1148 = vmatprep.subr.mxu0 0.0
        %1149 = vmatpush1.xpose.msra.mxu0 0.0
        %1150 = vmatprep.mubr.f32.mxu0 0.0
        %1151 = vmatmul.mubr.f32.gmra.mrb[0].mxu0 %v1082
        %v1152 = vpop.f32.mrb[0].mxu0
        %v1153 = vadd.f32 0.0, %v1152
        %v1154 = vpop.f32.mrb[0].mxu0
        %1155 = vdwg.mxu0
        %v1156 = vsel %vm916, %v1153, -inf
        %1157 = vmax.xlane.f32.xlu0 %v1156
        %v1158 = vpop.xlane.xlu0 %1157
        %v1159 = vsub.f32 %v1153, %v1158
        %v1160 = vmul.f32 %v1159, 1.442695
        %v1161 = vpow.pop %v1160
        %v1162 = vsel %vm916, %v1161, 0.0
        %1163 = vadd.xlane.f32.xlu0 %v1162
        %v1164 = vpop.xlane.xlu0 %1163
        %v1165 = vrcp.pop %v1164
        %v1166 = vmul.f32 %v1161, %v1165
        %1167 = vrot.lane.b32.xlu0 %v901, 56
        %v1168 = vpop.permute.xlu0 %1167
        %v1171 = vsel %vm916, %v1166, 0
        %1173 = vmatprep.subr.mxu0 0.0
        %1174 = vmatpush1.msra.mxu0 %v1168
        %1175 = vmatprep.subr.mxu0 0.0
        %1176 = vmatpush1.msra.mxu0 0.0
        %1177 = vmatprep.subr.mxu0 0.0
        %1178 = vmatpush1.msra.mxu0 0.0
        %1179 = vmatprep.subr.mxu0 0.0
        %1180 = vmatpush1.msra.mxu0 0.0
        %1181 = vmatprep.subr.mxu0 0.0
        %1182 = vmatpush1.msra.mxu0 0.0
        %1183 = vmatprep.subr.mxu0 0.0
        %1184 = vmatpush1.msra.mxu0 0.0
        %1185 = vmatprep.subr.mxu0 0.0
        %1186 = vmatpush1.msra.mxu0 0.0
        %1187 = vmatprep.subr.mxu0 0.0
        %1188 = vmatpush1.msra.mxu0 0.0
        %1189 = vmatprep.subr.mxu0 0.0
        %1190 = vmatpush1.msra.mxu0 0.0
        %1191 = vmatprep.subr.mxu0 0.0
        %1192 = vmatpush1.msra.mxu0 0.0
        %1193 = vmatprep.subr.mxu0 0.0
        %1194 = vmatpush1.msra.mxu0 0.0
        %1195 = vmatprep.subr.mxu0 0.0
        %1196 = vmatpush1.msra.mxu0 0.0
        %1197 = vmatprep.subr.mxu0 0.0
        %1198 = vmatpush1.msra.mxu0 0.0
        %1199 = vmatprep.subr.mxu0 0.0
        %1200 = vmatpush1.msra.mxu0 0.0
        %1201 = vmatprep.subr.mxu0 0.0
        %1202 = vmatpush1.msra.mxu0 0.0
        %1203 = vmatprep.subr.mxu0 0.0
        %1204 = vmatpush1.msra.mxu0 0.0
        %1205 = vmatprep.subr.mxu0 0.0
        %1206 = vmatpush1.msra.mxu0 0.0
        %1207 = vmatprep.subr.mxu0 0.0
        %1208 = vmatpush1.msra.mxu0 0.0
        %1209 = vmatprep.subr.mxu0 0.0
        %1210 = vmatpush1.msra.mxu0 0.0
        %1211 = vmatprep.subr.mxu0 0.0
        %1212 = vmatpush1.msra.mxu0 0.0
        %1213 = vmatprep.subr.mxu0 0.0
        %1214 = vmatpush1.msra.mxu0 0.0
        %1215 = vmatprep.subr.mxu0 0.0
        %1216 = vmatpush1.msra.mxu0 0.0
        %1217 = vmatprep.subr.mxu0 0.0
        %1218 = vmatpush1.msra.mxu0 0.0
        %1219 = vmatprep.subr.mxu0 0.0
        %1220 = vmatpush1.msra.mxu0 0.0
        %1221 = vmatprep.subr.mxu0 0.0
        %1222 = vmatpush1.msra.mxu0 0.0
        %1223 = vmatprep.subr.mxu0 0.0
        %1224 = vmatpush1.msra.mxu0 0.0
        %1225 = vmatprep.subr.mxu0 0.0
        %1226 = vmatpush1.msra.mxu0 0.0
        %1227 = vmatprep.subr.mxu0 0.0
        %1228 = vmatpush1.msra.mxu0 0.0
        %1229 = vmatprep.subr.mxu0 0.0
        %1230 = vmatpush1.msra.mxu0 0.0
        %1231 = vmatprep.subr.mxu0 0.0
        %1232 = vmatpush1.msra.mxu0 0.0
        %1233 = vmatprep.subr.mxu0 0.0
        %1234 = vmatpush1.msra.mxu0 0.0
        %1235 = vmatprep.subr.mxu0 0.0
        %1236 = vmatpush1.msra.mxu0 0.0
        %1237 = vmatprep.mubr.f32.mxu0 0.0
        %1238 = vmatmul.mubr.f32.gmra.mrb[0].mxu0 %v1171
        %v1239 = vpop.f32.mrb[0].mxu0
        %v1240 = vadd.f32 0.0, %v1239
        %v1241 = vpop.f32.mrb[0].mxu0
        %1242 = vdwg.mxu0
        %v1244 = vsel %vm916, %v1240, 0
        %1246 = vmatprep.subr.mxu0 0.0
        %1247 = vmatpush1.msra.mxu0 %v910
        %1248 = vmatprep.subr.mxu0 0.0
        %1249 = vmatpush1.msra.mxu0 0.0
        %1250 = vmatprep.subr.mxu0 0.0
        %1251 = vmatpush1.msra.mxu0 0.0
        %1252 = vmatprep.subr.mxu0 0.0
        %1253 = vmatpush1.msra.mxu0 0.0
        %1254 = vmatprep.subr.mxu0 0.0
        %1255 = vmatpush1.msra.mxu0 0.0
        %1256 = vmatprep.subr.mxu0 0.0
        %1257 = vmatpush1.msra.mxu0 0.0
        %1258 = vmatprep.subr.mxu0 0.0
        %1259 = vmatpush1.msra.mxu0 0.0
        %1260 = vmatprep.subr.mxu0 0.0
        %1261 = vmatpush1.msra.mxu0 0.0
        %1262 = vmatprep.subr.mxu0 0.0
        %1263 = vmatpush1.msra.mxu0 0.0
        %1264 = vmatprep.subr.mxu0 0.0
        %1265 = vmatpush1.msra.mxu0 0.0
        %1266 = vmatprep.subr.mxu0 0.0
        %1267 = vmatpush1.msra.mxu0 0.0
        %1268 = vmatprep.subr.mxu0 0.0
        %1269 = vmatpush1.msra.mxu0 0.0
        %1270 = vmatprep.subr.mxu0 0.0
        %1271 = vmatpush1.msra.mxu0 0.0
        %1272 = vmatprep.subr.mxu0 0.0
        %1273 = vmatpush1.msra.mxu0 0.0
        %1274 = vmatprep.subr.mxu0 0.0
        %1275 = vmatpush1.msra.mxu0 0.0
        %1276 = vmatprep.subr.mxu0 0.0
        %1277 = vmatpush1.msra.mxu0 0.0
        %1278 = vmatprep.subr.mxu0 0.0
        %1279 = vmatpush1.msra.mxu0 0.0
        %1280 = vmatprep.subr.mxu0 0.0
        %1281 = vmatpush1.msra.mxu0 0.0
        %1282 = vmatprep.subr.mxu0 0.0
        %1283 = vmatpush1.msra.mxu0 0.0
        %1284 = vmatprep.subr.mxu0 0.0
        %1285 = vmatpush1.msra.mxu0 0.0
        %1286 = vmatprep.subr.mxu0 0.0
        %1287 = vmatpush1.msra.mxu0 0.0
        %1288 = vmatprep.subr.mxu0 0.0
        %1289 = vmatpush1.msra.mxu0 0.0
        %1290 = vmatprep.subr.mxu0 0.0
        %1291 = vmatpush1.msra.mxu0 0.0
        %1292 = vmatprep.subr.mxu0 0.0
        %1293 = vmatpush1.msra.mxu0 0.0
        %1294 = vmatprep.subr.mxu0 0.0
        %1295 = vmatpush1.msra.mxu0 0.0
        %1296 = vmatprep.subr.mxu0 0.0
        %1297 = vmatpush1.msra.mxu0 0.0
        %1298 = vmatprep.subr.mxu0 0.0
        %1299 = vmatpush1.msra.mxu0 0.0
        %1300 = vmatprep.subr.mxu0 0.0
        %1301 = vmatpush1.msra.mxu0 0.0
        %1302 = vmatprep.subr.mxu0 0.0
        %1303 = vmatpush1.msra.mxu0 0.0
        %1304 = vmatprep.subr.mxu0 0.0
        %1305 = vmatpush1.msra.mxu0 0.0
        %1306 = vmatprep.subr.mxu0 0.0
        %1307 = vmatpush1.msra.mxu0 0.0
        %1308 = vmatprep.subr.mxu0 0.0
        %1309 = vmatpush1.msra.mxu0 0.0
        %1310 = vmatprep.mubr.f32.mxu0 0.0
        %1311 = vmatmul.mubr.f32.gmra.mrb[0].mxu0 %v1244
        %v1312 = vpop.f32.mrb[0].mxu0
        %v1313 = vadd.f32 0.0, %v1312
        %v1314 = vpop.f32.mrb[0].mxu0
        %1315 = vdwg.mxu0
        %v1317 = vsel %vm916, %v1075, 0
        %1319 = vmatprep.subr.mxu0 0.0
        %1320 = vmatpush1.msra.mxu0 %v909
        %1321 = vmatprep.subr.mxu0 0.0
        %1322 = vmatpush1.msra.mxu0 0.0
        %1323 = vmatprep.subr.mxu0 0.0
        %1324 = vmatpush1.msra.mxu0 0.0
        %1325 = vmatprep.subr.mxu0 0.0
        %1326 = vmatpush1.msra.mxu0 0.0
        %1327 = vmatprep.subr.mxu0 0.0
        %1328 = vmatpush1.msra.mxu0 0.0
        %1329 = vmatprep.subr.mxu0 0.0
        %1330 = vmatpush1.msra.mxu0 0.0
        %1331 = vmatprep.subr.mxu0 0.0
        %1332 = vmatpush1.msra.mxu0 0.0
        %1333 = vmatprep.subr.mxu0 0.0
        %1334 = vmatpush1.msra.mxu0 0.0
        %1335 = vmatprep.subr.mxu0 0.0
        %1336 = vmatpush1.msra.mxu0 0.0
        %1337 = vmatprep.subr.mxu0 0.0
        %1338 = vmatpush1.msra.mxu0 0.0
        %1339 = vmatprep.subr.mxu0 0.0
        %1340 = vmatpush1.msra.mxu0 0.0
        %1341 = vmatprep.subr.mxu0 0.0
        %1342 = vmatpush1.msra.mxu0 0.0
        %1343 = vmatprep.subr.mxu0 0.0
        %1344 = vmatpush1.msra.mxu0 0.0
        %1345 = vmatprep.subr.mxu0 0.0
        %1346 = vmatpush1.msra.mxu0 0.0
        %1347 = vmatprep.subr.mxu0 0.0
        %1348 = vmatpush1.msra.mxu0 0.0
        %1349 = vmatprep.subr.mxu0 0.0
        %1350 = vmatpush1.msra.mxu0 0.0
        %1351 = vmatprep.subr.mxu0 0.0
        %1352 = vmatpush1.msra.mxu0 0.0
        %1353 = vmatprep.subr.mxu0 0.0
        %1354 = vmatpush1.msra.mxu0 0.0
        %1355 = vmatprep.subr.mxu0 0.0
        %1356 = vmatpush1.msra.mxu0 0.0
        %1357 = vmatprep.subr.mxu0 0.0
        %1358 = vmatpush1.msra.mxu0 0.0
        %1359 = vmatprep.subr.mxu0 0.0
        %1360 = vmatpush1.msra.mxu0 0.0
        %1361 = vmatprep.subr.mxu0 0.0
        %1362 = vmatpush1.msra.mxu0 0.0
        %1363 = vmatprep.subr.mxu0 0.0
        %1364 = vmatpush1.msra.mxu0 0.0
        %1365 = vmatprep.subr.mxu0 0.0
        %1366 = vmatpush1.msra.mxu0 0.0
        %1367 = vmatprep.subr.mxu0 0.0
        %1368 = vmatpush1.msra.mxu0 0.0
        %1369 = vmatprep.subr.mxu0 0.0
        %1370 = vmatpush1.msra.mxu0 0.0
        %1371 = vmatprep.subr.mxu0 0.0
        %1372 = vmatpush1.msra.mxu0 0.0
        %1373 = vmatprep.subr.mxu0 0.0
        %1374 = vmatpush1.msra.mxu0 0.0
        %1375 = vmatprep.subr.mxu0 0.0
        %1376 = vmatpush1.msra.mxu0 0.0
        %1377 = vmatprep.subr.mxu0 0.0
        %1378 = vmatpush1.msra.mxu0 0.0
        %1379 = vmatprep.subr.mxu0 0.0
        %1380 = vmatpush1.msra.mxu0 0.0
        %1381 = vmatprep.subr.mxu0 0.0
        %1382 = vmatpush1.msra.mxu0 0.0
        %1383 = vmatprep.mubr.f32.mxu0 0.0
        %1384 = vmatmul.mubr.f32.gmra.mrb[0].mxu0 %v1317
        %v1385 = vpop.f32.mrb[0].mxu0
        %v1386 = vadd.f32 %v1313, %v1385
        %v1387 = vpop.f32.mrb[0].mxu0
        %1388 = vdwg.mxu0
        %1389 = vrot.lane.b32.xlu0 %v901, 112
        %v1390 = vpop.permute.xlu0 %1389
        %1391 = vrot.lane.b32.xlu0 %v901, 80
        %v1392 = vpop.permute.xlu0 %1391
        %v1393 = vsel %vm916, %v1390, 0
        %v1395 = vsel %vm916, %v1392, 0
        %1397 = vmatprep.subr.mxu0 0.0
        %1398 = vmatpush1.xpose.msra.mxu0 %v1395
        %1399 = vmatprep.subr.mxu0 0.0
        %1400 = vmatpush1.xpose.msra.mxu0 0.0
        %1401 = vmatprep.subr.mxu0 0.0
        %1402 = vmatpush1.xpose.msra.mxu0 0.0
        %1403 = vmatprep.subr.mxu0 0.0
        %1404 = vmatpush1.xpose.msra.mxu0 0.0
        %1405 = vmatprep.subr.mxu0 0.0
        %1406 = vmatpush1.xpose.msra.mxu0 0.0
        %1407 = vmatprep.subr.mxu0 0.0
        %1408 = vmatpush1.xpose.msra.mxu0 0.0
        %1409 = vmatprep.subr.mxu0 0.0
        %1410 = vmatpush1.xpose.msra.mxu0 0.0
        %1411 = vmatprep.subr.mxu0 0.0
        %1412 = vmatpush1.xpose.msra.mxu0 0.0
        %1413 = vmatprep.subr.mxu0 0.0
        %1414 = vmatpush1.xpose.msra.mxu0 0.0
        %1415 = vmatprep.subr.mxu0 0.0
        %1416 = vmatpush1.xpose.msra.mxu0 0.0
        %1417 = vmatprep.subr.mxu0 0.0
        %1418 = vmatpush1.xpose.msra.mxu0 0.0
        %1419 = vmatprep.subr.mxu0 0.0
        %1420 = vmatpush1.xpose.msra.mxu0 0.0
        %1421 = vmatprep.subr.mxu0 0.0
        %1422 = vmatpush1.xpose.msra.mxu0 0.0
        %1423 = vmatprep.subr.mxu0 0.0
        %1424 = vmatpush1.xpose.msra.mxu0 0.0
        %1425 = vmatprep.subr.mxu0 0.0
        %1426 = vmatpush1.xpose.msra.mxu0 0.0
        %1427 = vmatprep.subr.mxu0 0.0
        %1428 = vmatpush1.xpose.msra.mxu0 0.0
        %1429 = vmatprep.subr.mxu0 0.0
        %1430 = vmatpush1.xpose.msra.mxu0 0.0
        %1431 = vmatprep.subr.mxu0 0.0
        %1432 = vmatpush1.xpose.msra.mxu0 0.0
        %1433 = vmatprep.subr.mxu0 0.0
        %1434 = vmatpush1.xpose.msra.mxu0 0.0
        %1435 = vmatprep.subr.mxu0 0.0
        %1436 = vmatpush1.xpose.msra.mxu0 0.0
        %1437 = vmatprep.subr.mxu0 0.0
        %1438 = vmatpush1.xpose.msra.mxu0 0.0
        %1439 = vmatprep.subr.mxu0 0.0
        %1440 = vmatpush1.xpose.msra.mxu0 0.0
        %1441 = vmatprep.subr.mxu0 0.0
        %1442 = vmatpush1.xpose.msra.mxu0 0.0
        %1443 = vmatprep.subr.mxu0 0.0
        %1444 = vmatpush1.xpose.msra.mxu0 0.0
        %1445 = vmatprep.subr.mxu0 0.0
        %1446 = vmatpush1.xpose.msra.mxu0 0.0
        %1447 = vmatprep.subr.mxu0 0.0
        %1448 = vmatpush1.xpose.msra.mxu0 0.0
        %1449 = vmatprep.subr.mxu0 0.0
        %1450 = vmatpush1.xpose.msra.mxu0 0.0
        %1451 = vmatprep.subr.mxu0 0.0
        %1452 = vmatpush1.xpose.msra.mxu0 0.0
        %1453 = vmatprep.subr.mxu0 0.0
        %1454 = vmatpush1.xpose.msra.mxu0 0.0
        %1455 = vmatprep.subr.mxu0 0.0
        %1456 = vmatpush1.xpose.msra.mxu0 0.0
        %1457 = vmatprep.subr.mxu0 0.0
        %1458 = vmatpush1.xpose.msra.mxu0 0.0
        %1459 = vmatprep.subr.mxu0 0.0
        %1460 = vmatpush1.xpose.msra.mxu0 0.0
        %1461 = vmatprep.mubr.f32.mxu0 0.0
        %1462 = vmatmul.mubr.f32.gmra.mrb[0].mxu0 %v1393
        %v1463 = vpop.f32.mrb[0].mxu0
        %v1464 = vadd.f32 0.0, %v1463
        %v1465 = vpop.f32.mrb[0].mxu0
        %1466 = vdwg.mxu0
        %v1467 = vsel %vm916, %v1464, -inf
        %1468 = vmax.xlane.f32.xlu0 %v1467
        %v1469 = vpop.xlane.xlu0 %1468
        %v1470 = vsub.f32 %v1464, %v1469
        %v1471 = vmul.f32 %v1470, 1.442695
        %v1472 = vpow.pop %v1471
        %v1473 = vsel %vm916, %v1472, 0.0
        %1474 = vadd.xlane.f32.xlu0 %v1473
        %v1475 = vpop.xlane.xlu0 %1474
        %v1476 = vrcp.pop %v1475
        %v1477 = vmul.f32 %v1472, %v1476
        %1478 = vrot.lane.b32.xlu0 %v901, 48
        %v1479 = vpop.permute.xlu0 %1478
        %v1482 = vsel %vm916, %v1477, 0
        %1484 = vmatprep.subr.mxu0 0.0
        %1485 = vmatpush1.msra.mxu0 %v1479
        %1486 = vmatprep.subr.mxu0 0.0
        %1487 = vmatpush1.msra.mxu0 0.0
        %1488 = vmatprep.subr.mxu0 0.0
        %1489 = vmatpush1.msra.mxu0 0.0
        %1490 = vmatprep.subr.mxu0 0.0
        %1491 = vmatpush1.msra.mxu0 0.0
        %1492 = vmatprep.subr.mxu0 0.0
        %1493 = vmatpush1.msra.mxu0 0.0
        %1494 = vmatprep.subr.mxu0 0.0
        %1495 = vmatpush1.msra.mxu0 0.0
        %1496 = vmatprep.subr.mxu0 0.0
        %1497 = vmatpush1.msra.mxu0 0.0
        %1498 = vmatprep.subr.mxu0 0.0
        %1499 = vmatpush1.msra.mxu0 0.0
        %1500 = vmatprep.subr.mxu0 0.0
        %1501 = vmatpush1.msra.mxu0 0.0
        %1502 = vmatprep.subr.mxu0 0.0
        %1503 = vmatpush1.msra.mxu0 0.0
        %1504 = vmatprep.subr.mxu0 0.0
        %1505 = vmatpush1.msra.mxu0 0.0
        %1506 = vmatprep.subr.mxu0 0.0
        %1507 = vmatpush1.msra.mxu0 0.0
        %1508 = vmatprep.subr.mxu0 0.0
        %1509 = vmatpush1.msra.mxu0 0.0
        %1510 = vmatprep.subr.mxu0 0.0
        %1511 = vmatpush1.msra.mxu0 0.0
        %1512 = vmatprep.subr.mxu0 0.0
        %1513 = vmatpush1.msra.mxu0 0.0
        %1514 = vmatprep.subr.mxu0 0.0
        %1515 = vmatpush1.msra.mxu0 0.0
        %1516 = vmatprep.subr.mxu0 0.0
        %1517 = vmatpush1.msra.mxu0 0.0
        %1518 = vmatprep.subr.mxu0 0.0
        %1519 = vmatpush1.msra.mxu0 0.0
        %1520 = vmatprep.subr.mxu0 0.0
        %1521 = vmatpush1.msra.mxu0 0.0
        %1522 = vmatprep.subr.mxu0 0.0
        %1523 = vmatpush1.msra.mxu0 0.0
        %1524 = vmatprep.subr.mxu0 0.0
        %1525 = vmatpush1.msra.mxu0 0.0
        %1526 = vmatprep.subr.mxu0 0.0
        %1527 = vmatpush1.msra.mxu0 0.0
        %1528 = vmatprep.subr.mxu0 0.0
        %1529 = vmatpush1.msra.mxu0 0.0
        %1530 = vmatprep.subr.mxu0 0.0
        %1531 = vmatpush1.msra.mxu0 0.0
        %1532 = vmatprep.subr.mxu0 0.0
        %1533 = vmatpush1.msra.mxu0 0.0
        %1534 = vmatprep.subr.mxu0 0.0
        %1535 = vmatpush1.msra.mxu0 0.0
        %1536 = vmatprep.subr.mxu0 0.0
        %1537 = vmatpush1.msra.mxu0 0.0
        %1538 = vmatprep.subr.mxu0 0.0
        %1539 = vmatpush1.msra.mxu0 0.0
        %1540 = vmatprep.subr.mxu0 0.0
        %1541 = vmatpush1.msra.mxu0 0.0
        %1542 = vmatprep.subr.mxu0 0.0
        %1543 = vmatpush1.msra.mxu0 0.0
        %1544 = vmatprep.subr.mxu0 0.0
        %1545 = vmatpush1.msra.mxu0 0.0
        %1546 = vmatprep.subr.mxu0 0.0
        %1547 = vmatpush1.msra.mxu0 0.0
        %1548 = vmatprep.mubr.f32.mxu0 0.0
        %1549 = vmatmul.mubr.f32.gmra.mrb[0].mxu0 %v1482
        %v1550 = vpop.f32.mrb[0].mxu0
        %v1551 = vadd.f32 0.0, %v1550
        %v1552 = vpop.f32.mrb[0].mxu0
        %1553 = vdwg.mxu0
        %v1555 = vsel %vm916, %v1551, 0
        %1557 = vmatprep.subr.mxu0 0.0
        %1558 = vmatpush1.msra.mxu0 %v911
        %1559 = vmatprep.subr.mxu0 0.0
        %1560 = vmatpush1.msra.mxu0 0.0
        %1561 = vmatprep.subr.mxu0 0.0
        %1562 = vmatpush1.msra.mxu0 0.0
        %1563 = vmatprep.subr.mxu0 0.0
        %1564 = vmatpush1.msra.mxu0 0.0
        %1565 = vmatprep.subr.mxu0 0.0
        %1566 = vmatpush1.msra.mxu0 0.0
        %1567 = vmatprep.subr.mxu0 0.0
        %1568 = vmatpush1.msra.mxu0 0.0
        %1569 = vmatprep.subr.mxu0 0.0
        %1570 = vmatpush1.msra.mxu0 0.0
        %1571 = vmatprep.subr.mxu0 0.0
        %1572 = vmatpush1.msra.mxu0 0.0
        %1573 = vmatprep.subr.mxu0 0.0
        %1574 = vmatpush1.msra.mxu0 0.0
        %1575 = vmatprep.subr.mxu0 0.0
        %1576 = vmatpush1.msra.mxu0 0.0
        %1577 = vmatprep.subr.mxu0 0.0
        %1578 = vmatpush1.msra.mxu0 0.0
        %1579 = vmatprep.subr.mxu0 0.0
        %1580 = vmatpush1.msra.mxu0 0.0
        %1581 = vmatprep.subr.mxu0 0.0
        %1582 = vmatpush1.msra.mxu0 0.0
        %1583 = vmatprep.subr.mxu0 0.0
        %1584 = vmatpush1.msra.mxu0 0.0
        %1585 = vmatprep.subr.mxu0 0.0
        %1586 = vmatpush1.msra.mxu0 0.0
        %1587 = vmatprep.subr.mxu0 0.0
        %1588 = vmatpush1.msra.mxu0 0.0
        %1589 = vmatprep.subr.mxu0 0.0
        %1590 = vmatpush1.msra.mxu0 0.0
        %1591 = vmatprep.subr.mxu0 0.0
        %1592 = vmatpush1.msra.mxu0 0.0
        %1593 = vmatprep.subr.mxu0 0.0
        %1594 = vmatpush1.msra.mxu0 0.0
        %1595 = vmatprep.subr.mxu0 0.0
        %1596 = vmatpush1.msra.mxu0 0.0
        %1597 = vmatprep.subr.mxu0 0.0
        %1598 = vmatpush1.msra.mxu0 0.0
        %1599 = vmatprep.subr.mxu0 0.0
        %1600 = vmatpush1.msra.mxu0 0.0
        %1601 = vmatprep.subr.mxu0 0.0
        %1602 = vmatpush1.msra.mxu0 0.0
        %1603 = vmatprep.subr.mxu0 0.0
        %1604 = vmatpush1.msra.mxu0 0.0
        %1605 = vmatprep.subr.mxu0 0.0
        %1606 = vmatpush1.msra.mxu0 0.0
        %1607 = vmatprep.subr.mxu0 0.0
        %1608 = vmatpush1.msra.mxu0 0.0
        %1609 = vmatprep.subr.mxu0 0.0
        %1610 = vmatpush1.msra.mxu0 0.0
        %1611 = vmatprep.subr.mxu0 0.0
        %1612 = vmatpush1.msra.mxu0 0.0
        %1613 = vmatprep.subr.mxu0 0.0
        %1614 = vmatpush1.msra.mxu0 0.0
        %1615 = vmatprep.subr.mxu0 0.0
        %1616 = vmatpush1.msra.mxu0 0.0
        %1617 = vmatprep.subr.mxu0 0.0
        %1618 = vmatpush1.msra.mxu0 0.0
        %1619 = vmatprep.subr.mxu0 0.0
        %1620 = vmatpush1.msra.mxu0 0.0
        %1621 = vmatprep.mubr.f32.mxu0 0.0
        %1622 = vmatmul.mubr.f32.gmra.mrb[0].mxu0 %v1555
        %v1623 = vpop.f32.mrb[0].mxu0
        %v1624 = vadd.f32 0.0, %v1623
        %v1625 = vpop.f32.mrb[0].mxu0
        %1626 = vdwg.mxu0
        %v1627 = vadd.f32 %v1386, %v1624
        %1628 = vrot.lane.b32.xlu0 %v901, 104
        %v1629 = vpop.permute.xlu0 %1628
        %1630 = vrot.lane.b32.xlu0 %v901, 72
        %v1631 = vpop.permute.xlu0 %1630
        %v1632 = vsel %vm916, %v1629, 0
        %v1634 = vsel %vm916, %v1631, 0
        %1636 = vmatprep.subr.mxu0 0.0
        %1637 = vmatpush1.xpose.msra.mxu0 %v1634
        %1638 = vmatprep.subr.mxu0 0.0
        %1639 = vmatpush1.xpose.msra.mxu0 0.0
        %1640 = vmatprep.subr.mxu0 0.0
        %1641 = vmatpush1.xpose.msra.mxu0 0.0
        %1642 = vmatprep.subr.mxu0 0.0
        %1643 = vmatpush1.xpose.msra.mxu0 0.0
        %1644 = vmatprep.subr.mxu0 0.0
        %1645 = vmatpush1.xpose.msra.mxu0 0.0
        %1646 = vmatprep.subr.mxu0 0.0
        %1647 = vmatpush1.xpose.msra.mxu0 0.0
        %1648 = vmatprep.subr.mxu0 0.0
        %1649 = vmatpush1.xpose.msra.mxu0 0.0
        %1650 = vmatprep.subr.mxu0 0.0
        %1651 = vmatpush1.xpose.msra.mxu0 0.0
        %1652 = vmatprep.subr.mxu0 0.0
        %1653 = vmatpush1.xpose.msra.mxu0 0.0
        %1654 = vmatprep.subr.mxu0 0.0
        %1655 = vmatpush1.xpose.msra.mxu0 0.0
        %1656 = vmatprep.subr.mxu0 0.0
        %1657 = vmatpush1.xpose.msra.mxu0 0.0
        %1658 = vmatprep.subr.mxu0 0.0
        %1659 = vmatpush1.xpose.msra.mxu0 0.0
        %1660 = vmatprep.subr.mxu0 0.0
        %1661 = vmatpush1.xpose.msra.mxu0 0.0
        %1662 = vmatprep.subr.mxu0 0.0
        %1663 = vmatpush1.xpose.msra.mxu0 0.0
        %1664 = vmatprep.subr.mxu0 0.0
        %1665 = vmatpush1.xpose.msra.mxu0 0.0
        %1666 = vmatprep.subr.mxu0 0.0
        %1667 = vmatpush1.xpose.msra.mxu0 0.0
        %1668 = vmatprep.subr.mxu0 0.0
        %1669 = vmatpush1.xpose.msra.mxu0 0.0
        %1670 = vmatprep.subr.mxu0 0.0
        %1671 = vmatpush1.xpose.msra.mxu0 0.0
        %1672 = vmatprep.subr.mxu0 0.0
        %1673 = vmatpush1.xpose.msra.mxu0 0.0
        %1674 = vmatprep.subr.mxu0 0.0
        %1675 = vmatpush1.xpose.msra.mxu0 0.0
        %1676 = vmatprep.subr.mxu0 0.0
        %1677 = vmatpush1.xpose.msra.mxu0 0.0
        %1678 = vmatprep.subr.mxu0 0.0
        %1679 = vmatpush1.xpose.msra.mxu0 0.0
        %1680 = vmatprep.subr.mxu0 0.0
        %1681 = vmatpush1.xpose.msra.mxu0 0.0
        %1682 = vmatprep.subr.mxu0 0.0
        %1683 = vmatpush1.xpose.msra.mxu0 0.0
        %1684 = vmatprep.subr.mxu0 0.0
        %1685 = vmatpush1.xpose.msra.mxu0 0.0
        %1686 = vmatprep.subr.mxu0 0.0
        %1687 = vmatpush1.xpose.msra.mxu0 0.0
        %1688 = vmatprep.subr.mxu0 0.0
        %1689 = vmatpush1.xpose.msra.mxu0 0.0
        %1690 = vmatprep.subr.mxu0 0.0
        %1691 = vmatpush1.xpose.msra.mxu0 0.0
        %1692 = vmatprep.subr.mxu0 0.0
        %1693 = vmatpush1.xpose.msra.mxu0 0.0
        %1694 = vmatprep.subr.mxu0 0.0
        %1695 = vmatpush1.xpose.msra.mxu0 0.0
        %1696 = vmatprep.subr.mxu0 0.0
        %1697 = vmatpush1.xpose.msra.mxu0 0.0
        %1698 = vmatprep.subr.mxu0 0.0
        %1699 = vmatpush1.xpose.msra.mxu0 0.0
        %1700 = vmatprep.mubr.f32.mxu0 0.0
        %1701 = vmatmul.mubr.f32.gmra.mrb[0].mxu0 %v1632
        %v1702 = vpop.f32.mrb[0].mxu0
        %v1703 = vadd.f32 0.0, %v1702
        %v1704 = vpop.f32.mrb[0].mxu0
        %1705 = vdwg.mxu0
        %v1706 = vsel %vm916, %v1703, -inf
        %1707 = vmax.xlane.f32.xlu0 %v1706
        %v1708 = vpop.xlane.xlu0 %1707
        %v1709 = vsub.f32 %v1703, %v1708
        %v1710 = vmul.f32 %v1709, 1.442695
        %v1711 = vpow.pop %v1710
        %v1712 = vsel %vm916, %v1711, 0.0
        %1713 = vadd.xlane.f32.xlu0 %v1712
        %v1714 = vpop.xlane.xlu0 %1713
        %v1715 = vrcp.pop %v1714
        %v1716 = vmul.f32 %v1711, %v1715
        %1717 = vrot.lane.b32.xlu0 %v901, 40
        %v1718 = vpop.permute.xlu0 %1717
        %v1721 = vsel %vm916, %v1716, 0
        %1723 = vmatprep.subr.mxu0 0.0
        %1724 = vmatpush1.msra.mxu0 %v1718
        %1725 = vmatprep.subr.mxu0 0.0
        %1726 = vmatpush1.msra.mxu0 0.0
        %1727 = vmatprep.subr.mxu0 0.0
        %1728 = vmatpush1.msra.mxu0 0.0
        %1729 = vmatprep.subr.mxu0 0.0
        %1730 = vmatpush1.msra.mxu0 0.0
        %1731 = vmatprep.subr.mxu0 0.0
        %1732 = vmatpush1.msra.mxu0 0.0
        %1733 = vmatprep.subr.mxu0 0.0
        %1734 = vmatpush1.msra.mxu0 0.0
        %1735 = vmatprep.subr.mxu0 0.0
        %1736 = vmatpush1.msra.mxu0 0.0
        %1737 = vmatprep.subr.mxu0 0.0
        %1738 = vmatpush1.msra.mxu0 0.0
        %1739 = vmatprep.subr.mxu0 0.0
        %1740 = vmatpush1.msra.mxu0 0.0
        %1741 = vmatprep.subr.mxu0 0.0
        %1742 = vmatpush1.msra.mxu0 0.0
        %1743 = vmatprep.subr.mxu0 0.0
        %1744 = vmatpush1.msra.mxu0 0.0
        %1745 = vmatprep.subr.mxu0 0.0
        %1746 = vmatpush1.msra.mxu0 0.0
        %1747 = vmatprep.subr.mxu0 0.0
        %1748 = vmatpush1.msra.mxu0 0.0
        %1749 = vmatprep.subr.mxu0 0.0
        %1750 = vmatpush1.msra.mxu0 0.0
        %1751 = vmatprep.subr.mxu0 0.0
        %1752 = vmatpush1.msra.mxu0 0.0
        %1753 = vmatprep.subr.mxu0 0.0
        %1754 = vmatpush1.msra.mxu0 0.0
        %1755 = vmatprep.subr.mxu0 0.0
        %1756 = vmatpush1.msra.mxu0 0.0
        %1757 = vmatprep.subr.mxu0 0.0
        %1758 = vmatpush1.msra.mxu0 0.0
        %1759 = vmatprep.subr.mxu0 0.0
        %1760 = vmatpush1.msra.mxu0 0.0
        %1761 = vmatprep.subr.mxu0 0.0
        %1762 = vmatpush1.msra.mxu0 0.0
        %1763 = vmatprep.subr.mxu0 0.0
        %1764 = vmatpush1.msra.mxu0 0.0
        %1765 = vmatprep.subr.mxu0 0.0
        %1766 = vmatpush1.msra.mxu0 0.0
        %1767 = vmatprep.subr.mxu0 0.0
        %1768 = vmatpush1.msra.mxu0 0.0
        %1769 = vmatprep.subr.mxu0 0.0
        %1770 = vmatpush1.msra.mxu0 0.0
        %1771 = vmatprep.subr.mxu0 0.0
        %1772 = vmatpush1.msra.mxu0 0.0
        %1773 = vmatprep.subr.mxu0 0.0
        %1774 = vmatpush1.msra.mxu0 0.0
        %1775 = vmatprep.subr.mxu0 0.0
        %1776 = vmatpush1.msra.mxu0 0.0
        %1777 = vmatprep.subr.mxu0 0.0
        %1778 = vmatpush1.msra.mxu0 0.0
        %1779 = vmatprep.subr.mxu0 0.0
        %1780 = vmatpush1.msra.mxu0 0.0
        %1781 = vmatprep.subr.mxu0 0.0
        %1782 = vmatpush1.msra.mxu0 0.0
        %1783 = vmatprep.subr.mxu0 0.0
        %1784 = vmatpush1.msra.mxu0 0.0
        %1785 = vmatprep.subr.mxu0 0.0
        %1786 = vmatpush1.msra.mxu0 0.0
        %1787 = vmatprep.mubr.f32.mxu0 0.0
        %1788 = vmatmul.mubr.f32.gmra.mrb[0].mxu0 %v1721
        %v1789 = vpop.f32.mrb[0].mxu0
        %v1790 = vadd.f32 0.0, %v1789
        %v1791 = vpop.f32.mrb[0].mxu0
        %1792 = vdwg.mxu0
        %v1794 = vsel %vm916, %v1790, 0
        %1796 = vmatprep.subr.mxu0 0.0
        %1797 = vmatpush1.msra.mxu0 %v912
        %1798 = vmatprep.subr.mxu0 0.0
        %1799 = vmatpush1.msra.mxu0 0.0
        %1800 = vmatprep.subr.mxu0 0.0
        %1801 = vmatpush1.msra.mxu0 0.0
        %1802 = vmatprep.subr.mxu0 0.0
        %1803 = vmatpush1.msra.mxu0 0.0
        %1804 = vmatprep.subr.mxu0 0.0
        %1805 = vmatpush1.msra.mxu0 0.0
        %1806 = vmatprep.subr.mxu0 0.0
        %1807 = vmatpush1.msra.mxu0 0.0
        %1808 = vmatprep.subr.mxu0 0.0
        %1809 = vmatpush1.msra.mxu0 0.0
        %1810 = vmatprep.subr.mxu0 0.0
        %1811 = vmatpush1.msra.mxu0 0.0
        %1812 = vmatprep.subr.mxu0 0.0
        %1813 = vmatpush1.msra.mxu0 0.0
        %1814 = vmatprep.subr.mxu0 0.0
        %1815 = vmatpush1.msra.mxu0 0.0
        %1816 = vmatprep.subr.mxu0 0.0
        %1817 = vmatpush1.msra.mxu0 0.0
        %1818 = vmatprep.subr.mxu0 0.0
        %1819 = vmatpush1.msra.mxu0 0.0
        %1820 = vmatprep.subr.mxu0 0.0
        %1821 = vmatpush1.msra.mxu0 0.0
        %1822 = vmatprep.subr.mxu0 0.0
        %1823 = vmatpush1.msra.mxu0 0.0
        %1824 = vmatprep.subr.mxu0 0.0
        %1825 = vmatpush1.msra.mxu0 0.0
        %1826 = vmatprep.subr.mxu0 0.0
        %1827 = vmatpush1.msra.mxu0 0.0
        %1828 = vmatprep.subr.mxu0 0.0
        %1829 = vmatpush1.msra.mxu0 0.0
        %1830 = vmatprep.subr.mxu0 0.0
        %1831 = vmatpush1.msra.mxu0 0.0
        %1832 = vmatprep.subr.mxu0 0.0
        %1833 = vmatpush1.msra.mxu0 0.0
        %1834 = vmatprep.subr.mxu0 0.0
        %1835 = vmatpush1.msra.mxu0 0.0
        %1836 = vmatprep.subr.mxu0 0.0
        %1837 = vmatpush1.msra.mxu0 0.0
        %1838 = vmatprep.subr.mxu0 0.0
        %1839 = vmatpush1.msra.mxu0 0.0
        %1840 = vmatprep.subr.mxu0 0.0
        %1841 = vmatpush1.msra.mxu0 0.0
        %1842 = vmatprep.subr.mxu0 0.0
        %1843 = vmatpush1.msra.mxu0 0.0
        %1844 = vmatprep.subr.mxu0 0.0
        %1845 = vmatpush1.msra.mxu0 0.0
        %1846 = vmatprep.subr.mxu0 0.0
        %1847 = vmatpush1.msra.mxu0 0.0
        %1848 = vmatprep.subr.mxu0 0.0
        %1849 = vmatpush1.msra.mxu0 0.0
        %1850 = vmatprep.subr.mxu0 0.0
        %1851 = vmatpush1.msra.mxu0 0.0
        %1852 = vmatprep.subr.mxu0 0.0
        %1853 = vmatpush1.msra.mxu0 0.0
        %1854 = vmatprep.subr.mxu0 0.0
        %1855 = vmatpush1.msra.mxu0 0.0
        %1856 = vmatprep.subr.mxu0 0.0
        %1857 = vmatpush1.msra.mxu0 0.0
        %1858 = vmatprep.subr.mxu0 0.0
        %1859 = vmatpush1.msra.mxu0 0.0
        %1860 = vmatprep.mubr.f32.mxu0 0.0
        %1861 = vmatmul.mubr.f32.gmra.mrb[0].mxu0 %v1794
        %v1862 = vpop.f32.mrb[0].mxu0
        %v1863 = vadd.f32 0.0, %v1862
        %v1864 = vpop.f32.mrb[0].mxu0
        %1865 = vdwg.mxu0
        %v1866 = vadd.f32 %v1627, %v1863
        %1868 = vrot.lane.b32.xlu0 %v906, 96
        %v1869 = vpop.permute.xlu0 %1868
        %v1870 = vsel %vm916, %v906, 0
        %v1872 = vsel %vm916, %v1869, 0
        %1874 = vmatprep.subr.mxu0 0.0
        %1875 = vmatpush1.xpose.msra.mxu0 %v1872
        %1876 = vmatprep.subr.mxu0 0.0
        %1877 = vmatpush1.xpose.msra.mxu0 0.0
        %1878 = vmatprep.subr.mxu0 0.0
        %1879 = vmatpush1.xpose.msra.mxu0 0.0
        %1880 = vmatprep.subr.mxu0 0.0
        %1881 = vmatpush1.xpose.msra.mxu0 0.0
        %1882 = vmatprep.subr.mxu0 0.0
        %1883 = vmatpush1.xpose.msra.mxu0 0.0
        %1884 = vmatprep.subr.mxu0 0.0
        %1885 = vmatpush1.xpose.msra.mxu0 0.0
        %1886 = vmatprep.subr.mxu0 0.0
        %1887 = vmatpush1.xpose.msra.mxu0 0.0
        %1888 = vmatprep.subr.mxu0 0.0
        %1889 = vmatpush1.xpose.msra.mxu0 0.0
        %1890 = vmatprep.subr.mxu0 0.0
        %1891 = vmatpush1.xpose.msra.mxu0 0.0
        %1892 = vmatprep.subr.mxu0 0.0
        %1893 = vmatpush1.xpose.msra.mxu0 0.0
        %1894 = vmatprep.subr.mxu0 0.0
        %1895 = vmatpush1.xpose.msra.mxu0 0.0
        %1896 = vmatprep.subr.mxu0 0.0
        %1897 = vmatpush1.xpose.msra.mxu0 0.0
        %1898 = vmatprep.subr.mxu0 0.0
        %1899 = vmatpush1.xpose.msra.mxu0 0.0
        %1900 = vmatprep.subr.mxu0 0.0
        %1901 = vmatpush1.xpose.msra.mxu0 0.0
        %1902 = vmatprep.subr.mxu0 0.0
        %1903 = vmatpush1.xpose.msra.mxu0 0.0
        %1904 = vmatprep.subr.mxu0 0.0
        %1905 = vmatpush1.xpose.msra.mxu0 0.0
        %1906 = vmatprep.subr.mxu0 0.0
        %1907 = vmatpush1.xpose.msra.mxu0 0.0
        %1908 = vmatprep.subr.mxu0 0.0
        %1909 = vmatpush1.xpose.msra.mxu0 0.0
        %1910 = vmatprep.subr.mxu0 0.0
        %1911 = vmatpush1.xpose.msra.mxu0 0.0
        %1912 = vmatprep.subr.mxu0 0.0
        %1913 = vmatpush1.xpose.msra.mxu0 0.0
        %1914 = vmatprep.subr.mxu0 0.0
        %1915 = vmatpush1.xpose.msra.mxu0 0.0
        %1916 = vmatprep.subr.mxu0 0.0
        %1917 = vmatpush1.xpose.msra.mxu0 0.0
        %1918 = vmatprep.subr.mxu0 0.0
        %1919 = vmatpush1.xpose.msra.mxu0 0.0
        %1920 = vmatprep.subr.mxu0 0.0
        %1921 = vmatpush1.xpose.msra.mxu0 0.0
        %1922 = vmatprep.subr.mxu0 0.0
        %1923 = vmatpush1.xpose.msra.mxu0 0.0
        %1924 = vmatprep.subr.mxu0 0.0
        %1925 = vmatpush1.xpose.msra.mxu0 0.0
        %1926 = vmatprep.subr.mxu0 0.0
        %1927 = vmatpush1.xpose.msra.mxu0 0.0
        %1928 = vmatprep.subr.mxu0 0.0
        %1929 = vmatpush1.xpose.msra.mxu0 0.0
        %1930 = vmatprep.subr.mxu0 0.0
        %1931 = vmatpush1.xpose.msra.mxu0 0.0
        %1932 = vmatprep.subr.mxu0 0.0
        %1933 = vmatpush1.xpose.msra.mxu0 0.0
        %1934 = vmatprep.subr.mxu0 0.0
        %1935 = vmatpush1.xpose.msra.mxu0 0.0
        %1936 = vmatprep.subr.mxu0 0.0
        %1937 = vmatpush1.xpose.msra.mxu0 0.0
        %1938 = vmatprep.mubr.f32.mxu0 0.0
        %1939 = vmatmul.mubr.f32.gmra.mrb[0].mxu0 %v1870
        %v1940 = vpop.f32.mrb[0].mxu0
        %v1941 = vadd.f32 0.0, %v1940
        %v1942 = vpop.f32.mrb[0].mxu0
        %1943 = vdwg.mxu0
        %v1944 = vsel %vm916, %v1941, -inf
        %1945 = vmax.xlane.f32.xlu0 %v1944
        %v1946 = vpop.xlane.xlu0 %1945
        %v1947 = vsub.f32 %v1941, %v1946
        %v1948 = vmul.f32 %v1947, 1.442695
        %v1949 = vpow.pop %v1948
        %v1950 = vsel %vm916, %v1949, 0.0
        %1951 = vadd.xlane.f32.xlu0 %v1950
        %v1952 = vpop.xlane.xlu0 %1951
        %v1953 = vrcp.pop %v1952
        %v1954 = vmul.f32 %v1949, %v1953
        %1955 = vrot.lane.b32.xlu0 %v906, 64
        %v1956 = vpop.permute.xlu0 %1955
        %v1959 = vsel %vm916, %v1954, 0
        %1961 = vmatprep.subr.mxu0 0.0
        %1962 = vmatpush1.msra.mxu0 %v1956
        %1963 = vmatprep.subr.mxu0 0.0
        %1964 = vmatpush1.msra.mxu0 0.0
        %1965 = vmatprep.subr.mxu0 0.0
        %1966 = vmatpush1.msra.mxu0 0.0
        %1967 = vmatprep.subr.mxu0 0.0
        %1968 = vmatpush1.msra.mxu0 0.0
        %1969 = vmatprep.subr.mxu0 0.0
        %1970 = vmatpush1.msra.mxu0 0.0
        %1971 = vmatprep.subr.mxu0 0.0
        %1972 = vmatpush1.msra.mxu0 0.0
        %1973 = vmatprep.subr.mxu0 0.0
        %1974 = vmatpush1.msra.mxu0 0.0
        %1975 = vmatprep.subr.mxu0 0.0
        %1976 = vmatpush1.msra.mxu0 0.0
        %1977 = vmatprep.subr.mxu0 0.0
        %1978 = vmatpush1.msra.mxu0 0.0
        %1979 = vmatprep.subr.mxu0 0.0
        %1980 = vmatpush1.msra.mxu0 0.0
        %1981 = vmatprep.subr.mxu0 0.0
        %1982 = vmatpush1.msra.mxu0 0.0
        %1983 = vmatprep.subr.mxu0 0.0
        %1984 = vmatpush1.msra.mxu0 0.0
        %1985 = vmatprep.subr.mxu0 0.0
        %1986 = vmatpush1.msra.mxu0 0.0
        %1987 = vmatprep.subr.mxu0 0.0
        %1988 = vmatpush1.msra.mxu0 0.0
        %1989 = vmatprep.subr.mxu0 0.0
        %1990 = vmatpush1.msra.mxu0 0.0
        %1991 = vmatprep.subr.mxu0 0.0
        %1992 = vmatpush1.msra.mxu0 0.0
        %1993 = vmatprep.subr.mxu0 0.0
        %1994 = vmatpush1.msra.mxu0 0.0
        %1995 = vmatprep.subr.mxu0 0.0
        %1996 = vmatpush1.msra.mxu0 0.0
        %1997 = vmatprep.subr.mxu0 0.0
        %1998 = vmatpush1.msra.mxu0 0.0
        %1999 = vmatprep.subr.mxu0 0.0
        %2000 = vmatpush1.msra.mxu0 0.0
        %2001 = vmatprep.subr.mxu0 0.0
        %2002 = vmatpush1.msra.mxu0 0.0
        %2003 = vmatprep.subr.mxu0 0.0
        %2004 = vmatpush1.msra.mxu0 0.0
        %2005 = vmatprep.subr.mxu0 0.0
        %2006 = vmatpush1.msra.mxu0 0.0
        %2007 = vmatprep.subr.mxu0 0.0
        %2008 = vmatpush1.msra.mxu0 0.0
        %2009 = vmatprep.subr.mxu0 0.0
        %2010 = vmatpush1.msra.mxu0 0.0
        %2011 = vmatprep.subr.mxu0 0.0
        %2012 = vmatpush1.msra.mxu0 0.0
        %2013 = vmatprep.subr.mxu0 0.0
        %2014 = vmatpush1.msra.mxu0 0.0
        %2015 = vmatprep.subr.mxu0 0.0
        %2016 = vmatpush1.msra.mxu0 0.0
        %2017 = vmatprep.subr.mxu0 0.0
        %2018 = vmatpush1.msra.mxu0 0.0
        %2019 = vmatprep.subr.mxu0 0.0
        %2020 = vmatpush1.msra.mxu0 0.0
        %2021 = vmatprep.subr.mxu0 0.0
        %2022 = vmatpush1.msra.mxu0 0.0
        %2023 = vmatprep.subr.mxu0 0.0
        %2024 = vmatpush1.msra.mxu0 0.0
        %2025 = vmatprep.mubr.f32.mxu0 0.0
        %2026 = vmatmul.mubr.f32.gmra.mrb[0].mxu0 %v1959
        %v2027 = vpop.f32.mrb[0].mxu0
        %v2028 = vadd.f32 0.0, %v2027
        %v2029 = vpop.f32.mrb[0].mxu0
        %2030 = vdwg.mxu0
        %2031 = vrot.lane.b32.xlu0 %v906, 120
        %v2032 = vpop.permute.xlu0 %2031
        %2033 = vrot.lane.b32.xlu0 %v906, 88
        %v2034 = vpop.permute.xlu0 %2033
        %v2035 = vsel %vm916, %v2032, 0
        %v2037 = vsel %vm916, %v2034, 0
        %2039 = vmatprep.subr.mxu0 0.0
        %2040 = vmatpush1.xpose.msra.mxu0 %v2037
        %2041 = vmatprep.subr.mxu0 0.0
        %2042 = vmatpush1.xpose.msra.mxu0 0.0
        %2043 = vmatprep.subr.mxu0 0.0
        %2044 = vmatpush1.xpose.msra.mxu0 0.0
        %2045 = vmatprep.subr.mxu0 0.0
        %2046 = vmatpush1.xpose.msra.mxu0 0.0
        %2047 = vmatprep.subr.mxu0 0.0
        %2048 = vmatpush1.xpose.msra.mxu0 0.0
        %2049 = vmatprep.subr.mxu0 0.0
        %2050 = vmatpush1.xpose.msra.mxu0 0.0
        %2051 = vmatprep.subr.mxu0 0.0
        %2052 = vmatpush1.xpose.msra.mxu0 0.0
        %2053 = vmatprep.subr.mxu0 0.0
        %2054 = vmatpush1.xpose.msra.mxu0 0.0
        %2055 = vmatprep.subr.mxu0 0.0
        %2056 = vmatpush1.xpose.msra.mxu0 0.0
        %2057 = vmatprep.subr.mxu0 0.0
        %2058 = vmatpush1.xpose.msra.mxu0 0.0
        %2059 = vmatprep.subr.mxu0 0.0
        %2060 = vmatpush1.xpose.msra.mxu0 0.0
        %2061 = vmatprep.subr.mxu0 0.0
        %2062 = vmatpush1.xpose.msra.mxu0 0.0
        %2063 = vmatprep.subr.mxu0 0.0
        %2064 = vmatpush1.xpose.msra.mxu0 0.0
        %2065 = vmatprep.subr.mxu0 0.0
        %2066 = vmatpush1.xpose.msra.mxu0 0.0
        %2067 = vmatprep.subr.mxu0 0.0
        %2068 = vmatpush1.xpose.msra.mxu0 0.0
        %2069 = vmatprep.subr.mxu0 0.0
        %2070 = vmatpush1.xpose.msra.mxu0 0.0
        %2071 = vmatprep.subr.mxu0 0.0
        %2072 = vmatpush1.xpose.msra.mxu0 0.0
        %2073 = vmatprep.subr.mxu0 0.0
        %2074 = vmatpush1.xpose.msra.mxu0 0.0
        %2075 = vmatprep.subr.mxu0 0.0
        %2076 = vmatpush1.xpose.msra.mxu0 0.0
        %2077 = vmatprep.subr.mxu0 0.0
        %2078 = vmatpush1.xpose.msra.mxu0 0.0
        %2079 = vmatprep.subr.mxu0 0.0
        %2080 = vmatpush1.xpose.msra.mxu0 0.0
        %2081 = vmatprep.subr.mxu0 0.0
        %2082 = vmatpush1.xpose.msra.mxu0 0.0
        %2083 = vmatprep.subr.mxu0 0.0
        %2084 = vmatpush1.xpose.msra.mxu0 0.0
        %2085 = vmatprep.subr.mxu0 0.0
        %2086 = vmatpush1.xpose.msra.mxu0 0.0
        %2087 = vmatprep.subr.mxu0 0.0
        %2088 = vmatpush1.xpose.msra.mxu0 0.0
        %2089 = vmatprep.subr.mxu0 0.0
        %2090 = vmatpush1.xpose.msra.mxu0 0.0
        %2091 = vmatprep.subr.mxu0 0.0
        %2092 = vmatpush1.xpose.msra.mxu0 0.0
        %2093 = vmatprep.subr.mxu0 0.0
        %2094 = vmatpush1.xpose.msra.mxu0 0.0
        %2095 = vmatprep.subr.mxu0 0.0
        %2096 = vmatpush1.xpose.msra.mxu0 0.0
        %2097 = vmatprep.subr.mxu0 0.0
        %2098 = vmatpush1.xpose.msra.mxu0 0.0
        %2099 = vmatprep.subr.mxu0 0.0
        %2100 = vmatpush1.xpose.msra.mxu0 0.0
        %2101 = vmatprep.subr.mxu0 0.0
        %2102 = vmatpush1.xpose.msra.mxu0 0.0
        %2103 = vmatprep.mubr.f32.mxu0 0.0
        %2104 = vmatmul.mubr.f32.gmra.mrb[0].mxu0 %v2035
        %v2105 = vpop.f32.mrb[0].mxu0
        %v2106 = vadd.f32 0.0, %v2105
        %v2107 = vpop.f32.mrb[0].mxu0
        %2108 = vdwg.mxu0
        %v2109 = vsel %vm916, %v2106, -inf
        %2110 = vmax.xlane.f32.xlu0 %v2109
        %v2111 = vpop.xlane.xlu0 %2110
        %v2112 = vsub.f32 %v2106, %v2111
        %v2113 = vmul.f32 %v2112, 1.442695
        %v2114 = vpow.pop %v2113
        %v2115 = vsel %vm916, %v2114, 0.0
        %2116 = vadd.xlane.f32.xlu0 %v2115
        %v2117 = vpop.xlane.xlu0 %2116
        %v2118 = vrcp.pop %v2117
        %v2119 = vmul.f32 %v2114, %v2118
        %2120 = vrot.lane.b32.xlu0 %v906, 56
        %v2121 = vpop.permute.xlu0 %2120
        %v2124 = vsel %vm916, %v2119, 0
        %2126 = vmatprep.subr.mxu0 0.0
        %2127 = vmatpush1.msra.mxu0 %v2121
        %2128 = vmatprep.subr.mxu0 0.0
        %2129 = vmatpush1.msra.mxu0 0.0
        %2130 = vmatprep.subr.mxu0 0.0
        %2131 = vmatpush1.msra.mxu0 0.0
        %2132 = vmatprep.subr.mxu0 0.0
        %2133 = vmatpush1.msra.mxu0 0.0
        %2134 = vmatprep.subr.mxu0 0.0
        %2135 = vmatpush1.msra.mxu0 0.0
        %2136 = vmatprep.subr.mxu0 0.0
        %2137 = vmatpush1.msra.mxu0 0.0
        %2138 = vmatprep.subr.mxu0 0.0
        %2139 = vmatpush1.msra.mxu0 0.0
        %2140 = vmatprep.subr.mxu0 0.0
        %2141 = vmatpush1.msra.mxu0 0.0
        %2142 = vmatprep.subr.mxu0 0.0
        %2143 = vmatpush1.msra.mxu0 0.0
        %2144 = vmatprep.subr.mxu0 0.0
        %2145 = vmatpush1.msra.mxu0 0.0
        %2146 = vmatprep.subr.mxu0 0.0
        %2147 = vmatpush1.msra.mxu0 0.0
        %2148 = vmatprep.subr.mxu0 0.0
        %2149 = vmatpush1.msra.mxu0 0.0
        %2150 = vmatprep.subr.mxu0 0.0
        %2151 = vmatpush1.msra.mxu0 0.0
        %2152 = vmatprep.subr.mxu0 0.0
        %2153 = vmatpush1.msra.mxu0 0.0
        %2154 = vmatprep.subr.mxu0 0.0
        %2155 = vmatpush1.msra.mxu0 0.0
        %2156 = vmatprep.subr.mxu0 0.0
        %2157 = vmatpush1.msra.mxu0 0.0
        %2158 = vmatprep.subr.mxu0 0.0
        %2159 = vmatpush1.msra.mxu0 0.0
        %2160 = vmatprep.subr.mxu0 0.0
        %2161 = vmatpush1.msra.mxu0 0.0
        %2162 = vmatprep.subr.mxu0 0.0
        %2163 = vmatpush1.msra.mxu0 0.0
        %2164 = vmatprep.subr.mxu0 0.0
        %2165 = vmatpush1.msra.mxu0 0.0
        %2166 = vmatprep.subr.mxu0 0.0
        %2167 = vmatpush1.msra.mxu0 0.0
        %2168 = vmatprep.subr.mxu0 0.0
        %2169 = vmatpush1.msra.mxu0 0.0
        %2170 = vmatprep.subr.mxu0 0.0
        %2171 = vmatpush1.msra.mxu0 0.0
        %2172 = vmatprep.subr.mxu0 0.0
        %2173 = vmatpush1.msra.mxu0 0.0
        %2174 = vmatprep.subr.mxu0 0.0
        %2175 = vmatpush1.msra.mxu0 0.0
        %2176 = vmatprep.subr.mxu0 0.0
        %2177 = vmatpush1.msra.mxu0 0.0
        %2178 = vmatprep.subr.mxu0 0.0
        %2179 = vmatpush1.msra.mxu0 0.0
        %2180 = vmatprep.subr.mxu0 0.0
        %2181 = vmatpush1.msra.mxu0 0.0
        %2182 = vmatprep.subr.mxu0 0.0
        %2183 = vmatpush1.msra.mxu0 0.0
        %2184 = vmatprep.subr.mxu0 0.0
        %2185 = vmatpush1.msra.mxu0 0.0
        %2186 = vmatprep.subr.mxu0 0.0
        %2187 = vmatpush1.msra.mxu0 0.0
        %2188 = vmatprep.subr.mxu0 0.0
        %2189 = vmatpush1.msra.mxu0 0.0
        %2190 = vmatprep.mubr.f32.mxu0 0.0
        %2191 = vmatmul.mubr.f32.gmra.mrb[0].mxu0 %v2124
        %v2192 = vpop.f32.mrb[0].mxu0
        %v2193 = vadd.f32 0.0, %v2192
        %v2194 = vpop.f32.mrb[0].mxu0
        %2195 = vdwg.mxu0
        %v2197 = vsel %vm916, %v2193, 0
        %2199 = vmatprep.subr.mxu0 0.0
        %2200 = vmatpush1.msra.mxu0 %v910
        %2201 = vmatprep.subr.mxu0 0.0
        %2202 = vmatpush1.msra.mxu0 0.0
        %2203 = vmatprep.subr.mxu0 0.0
        %2204 = vmatpush1.msra.mxu0 0.0
        %2205 = vmatprep.subr.mxu0 0.0
        %2206 = vmatpush1.msra.mxu0 0.0
        %2207 = vmatprep.subr.mxu0 0.0
        %2208 = vmatpush1.msra.mxu0 0.0
        %2209 = vmatprep.subr.mxu0 0.0
        %2210 = vmatpush1.msra.mxu0 0.0
        %2211 = vmatprep.subr.mxu0 0.0
        %2212 = vmatpush1.msra.mxu0 0.0
        %2213 = vmatprep.subr.mxu0 0.0
        %2214 = vmatpush1.msra.mxu0 0.0
        %2215 = vmatprep.subr.mxu0 0.0
        %2216 = vmatpush1.msra.mxu0 0.0
        %2217 = vmatprep.subr.mxu0 0.0
        %2218 = vmatpush1.msra.mxu0 0.0
        %2219 = vmatprep.subr.mxu0 0.0
        %2220 = vmatpush1.msra.mxu0 0.0
        %2221 = vmatprep.subr.mxu0 0.0
        %2222 = vmatpush1.msra.mxu0 0.0
        %2223 = vmatprep.subr.mxu0 0.0
        %2224 = vmatpush1.msra.mxu0 0.0
        %2225 = vmatprep.subr.mxu0 0.0
        %2226 = vmatpush1.msra.mxu0 0.0
        %2227 = vmatprep.subr.mxu0 0.0
        %2228 = vmatpush1.msra.mxu0 0.0
        %2229 = vmatprep.subr.mxu0 0.0
        %2230 = vmatpush1.msra.mxu0 0.0
        %2231 = vmatprep.subr.mxu0 0.0
        %2232 = vmatpush1.msra.mxu0 0.0
        %2233 = vmatprep.subr.mxu0 0.0
        %2234 = vmatpush1.msra.mxu0 0.0
        %2235 = vmatprep.subr.mxu0 0.0
        %2236 = vmatpush1.msra.mxu0 0.0
        %2237 = vmatprep.subr.mxu0 0.0
        %2238 = vmatpush1.msra.mxu0 0.0
        %2239 = vmatprep.subr.mxu0 0.0
        %2240 = vmatpush1.msra.mxu0 0.0
        %2241 = vmatprep.subr.mxu0 0.0
        %2242 = vmatpush1.msra.mxu0 0.0
        %2243 = vmatprep.subr.mxu0 0.0
        %2244 = vmatpush1.msra.mxu0 0.0
        %2245 = vmatprep.subr.mxu0 0.0
        %2246 = vmatpush1.msra.mxu0 0.0
        %2247 = vmatprep.subr.mxu0 0.0
        %2248 = vmatpush1.msra.mxu0 0.0
        %2249 = vmatprep.subr.mxu0 0.0
        %2250 = vmatpush1.msra.mxu0 0.0
        %2251 = vmatprep.subr.mxu0 0.0
        %2252 = vmatpush1.msra.mxu0 0.0
        %2253 = vmatprep.subr.mxu0 0.0
        %2254 = vmatpush1.msra.mxu0 0.0
        %2255 = vmatprep.subr.mxu0 0.0
        %2256 = vmatpush1.msra.mxu0 0.0
        %2257 = vmatprep.subr.mxu0 0.0
        %2258 = vmatpush1.msra.mxu0 0.0
        %2259 = vmatprep.subr.mxu0 0.0
        %2260 = vmatpush1.msra.mxu0 0.0
        %2261 = vmatprep.subr.mxu0 0.0
        %2262 = vmatpush1.msra.mxu0 0.0
        %2263 = vmatprep.mubr.f32.mxu0 0.0
        %2264 = vmatmul.mubr.f32.gmra.mrb[0].mxu0 %v2197
        %v2265 = vpop.f32.mrb[0].mxu0
        %v2266 = vadd.f32 0.0, %v2265
        %v2267 = vpop.f32.mrb[0].mxu0
        %2268 = vdwg.mxu0
        %v2270 = vsel %vm916, %v2028, 0
        %2272 = vmatprep.subr.mxu0 0.0
        %2273 = vmatpush1.msra.mxu0 %v909
        %2274 = vmatprep.subr.mxu0 0.0
        %2275 = vmatpush1.msra.mxu0 0.0
        %2276 = vmatprep.subr.mxu0 0.0
        %2277 = vmatpush1.msra.mxu0 0.0
        %2278 = vmatprep.subr.mxu0 0.0
        %2279 = vmatpush1.msra.mxu0 0.0
        %2280 = vmatprep.subr.mxu0 0.0
        %2281 = vmatpush1.msra.mxu0 0.0
        %2282 = vmatprep.subr.mxu0 0.0
        %2283 = vmatpush1.msra.mxu0 0.0
        %2284 = vmatprep.subr.mxu0 0.0
        %2285 = vmatpush1.msra.mxu0 0.0
        %2286 = vmatprep.subr.mxu0 0.0
        %2287 = vmatpush1.msra.mxu0 0.0
        %2288 = vmatprep.subr.mxu0 0.0
        %2289 = vmatpush1.msra.mxu0 0.0
        %2290 = vmatprep.subr.mxu0 0.0
        %2291 = vmatpush1.msra.mxu0 0.0
        %2292 = vmatprep.subr.mxu0 0.0
        %2293 = vmatpush1.msra.mxu0 0.0
        %2294 = vmatprep.subr.mxu0 0.0
        %2295 = vmatpush1.msra.mxu0 0.0
        %2296 = vmatprep.subr.mxu0 0.0
        %2297 = vmatpush1.msra.mxu0 0.0
        %2298 = vmatprep.subr.mxu0 0.0
        %2299 = vmatpush1.msra.mxu0 0.0
        %2300 = vmatprep.subr.mxu0 0.0
        %2301 = vmatpush1.msra.mxu0 0.0
        %2302 = vmatprep.subr.mxu0 0.0
        %2303 = vmatpush1.msra.mxu0 0.0
        %2304 = vmatprep.subr.mxu0 0.0
        %2305 = vmatpush1.msra.mxu0 0.0
        %2306 = vmatprep.subr.mxu0 0.0
        %2307 = vmatpush1.msra.mxu0 0.0
        %2308 = vmatprep.subr.mxu0 0.0
        %2309 = vmatpush1.msra.mxu0 0.0
        %2310 = vmatprep.subr.mxu0 0.0
        %2311 = vmatpush1.msra.mxu0 0.0
        %2312 = vmatprep.subr.mxu0 0.0
        %2313 = vmatpush1.msra.mxu0 0.0
        %2314 = vmatprep.subr.mxu0 0.0
        %2315 = vmatpush1.msra.mxu0 0.0
        %2316 = vmatprep.subr.mxu0 0.0
        %2317 = vmatpush1.msra.mxu0 0.0
        %2318 = vmatprep.subr.mxu0 0.0
        %2319 = vmatpush1.msra.mxu0 0.0
        %2320 = vmatprep.subr.mxu0 0.0
        %2321 = vmatpush1.msra.mxu0 0.0
        %2322 = vmatprep.subr.mxu0 0.0
        %2323 = vmatpush1.msra.mxu0 0.0
        %2324 = vmatprep.subr.mxu0 0.0
        %2325 = vmatpush1.msra.mxu0 0.0
        %2326 = vmatprep.subr.mxu0 0.0
        %2327 = vmatpush1.msra.mxu0 0.0
        %2328 = vmatprep.subr.mxu0 0.0
        %2329 = vmatpush1.msra.mxu0 0.0
        %2330 = vmatprep.subr.mxu0 0.0
        %2331 = vmatpush1.msra.mxu0 0.0
        %2332 = vmatprep.subr.mxu0 0.0
        %2333 = vmatpush1.msra.mxu0 0.0
        %2334 = vmatprep.subr.mxu0 0.0
        %2335 = vmatpush1.msra.mxu0 0.0
        %2336 = vmatprep.mubr.f32.mxu0 0.0
        %2337 = vmatmul.mubr.f32.gmra.mrb[0].mxu0 %v2270
        %v2338 = vpop.f32.mrb[0].mxu0
        %v2339 = vadd.f32 %v2266, %v2338
        %v2340 = vpop.f32.mrb[0].mxu0
        %2341 = vdwg.mxu0
        %2342 = vrot.lane.b32.xlu0 %v906, 112
        %v2343 = vpop.permute.xlu0 %2342
        %2344 = vrot.lane.b32.xlu0 %v906, 80
        %v2345 = vpop.permute.xlu0 %2344
        %v2346 = vsel %vm916, %v2343, 0
        %v2348 = vsel %vm916, %v2345, 0
        %2350 = vmatprep.subr.mxu0 0.0
        %2351 = vmatpush1.xpose.msra.mxu0 %v2348
        %2352 = vmatprep.subr.mxu0 0.0
        %2353 = vmatpush1.xpose.msra.mxu0 0.0
        %2354 = vmatprep.subr.mxu0 0.0
        %2355 = vmatpush1.xpose.msra.mxu0 0.0
        %2356 = vmatprep.subr.mxu0 0.0
        %2357 = vmatpush1.xpose.msra.mxu0 0.0
        %2358 = vmatprep.subr.mxu0 0.0
        %2359 = vmatpush1.xpose.msra.mxu0 0.0
        %2360 = vmatprep.subr.mxu0 0.0
        %2361 = vmatpush1.xpose.msra.mxu0 0.0
        %2362 = vmatprep.subr.mxu0 0.0
        %2363 = vmatpush1.xpose.msra.mxu0 0.0
        %2364 = vmatprep.subr.mxu0 0.0
        %2365 = vmatpush1.xpose.msra.mxu0 0.0
        %2366 = vmatprep.subr.mxu0 0.0
        %2367 = vmatpush1.xpose.msra.mxu0 0.0
        %2368 = vmatprep.subr.mxu0 0.0
        %2369 = vmatpush1.xpose.msra.mxu0 0.0
        %2370 = vmatprep.subr.mxu0 0.0
        %2371 = vmatpush1.xpose.msra.mxu0 0.0
        %2372 = vmatprep.subr.mxu0 0.0
        %2373 = vmatpush1.xpose.msra.mxu0 0.0
        %2374 = vmatprep.subr.mxu0 0.0
        %2375 = vmatpush1.xpose.msra.mxu0 0.0
        %2376 = vmatprep.subr.mxu0 0.0
        %2377 = vmatpush1.xpose.msra.mxu0 0.0
        %2378 = vmatprep.subr.mxu0 0.0
        %2379 = vmatpush1.xpose.msra.mxu0 0.0
        %2380 = vmatprep.subr.mxu0 0.0
        %2381 = vmatpush1.xpose.msra.mxu0 0.0
        %2382 = vmatprep.subr.mxu0 0.0
        %2383 = vmatpush1.xpose.msra.mxu0 0.0
        %2384 = vmatprep.subr.mxu0 0.0
        %2385 = vmatpush1.xpose.msra.mxu0 0.0
        %2386 = vmatprep.subr.mxu0 0.0
        %2387 = vmatpush1.xpose.msra.mxu0 0.0
        %2388 = vmatprep.subr.mxu0 0.0
        %2389 = vmatpush1.xpose.msra.mxu0 0.0
        %2390 = vmatprep.subr.mxu0 0.0
        %2391 = vmatpush1.xpose.msra.mxu0 0.0
        %2392 = vmatprep.subr.mxu0 0.0
        %2393 = vmatpush1.xpose.msra.mxu0 0.0
        %2394 = vmatprep.subr.mxu0 0.0
        %2395 = vmatpush1.xpose.msra.mxu0 0.0
        %2396 = vmatprep.subr.mxu0 0.0
        %2397 = vmatpush1.xpose.msra.mxu0 0.0
        %2398 = vmatprep.subr.mxu0 0.0
        %2399 = vmatpush1.xpose.msra.mxu0 0.0
        %2400 = vmatprep.subr.mxu0 0.0
        %2401 = vmatpush1.xpose.msra.mxu0 0.0
        %2402 = vmatprep.subr.mxu0 0.0
        %2403 = vmatpush1.xpose.msra.mxu0 0.0
        %2404 = vmatprep.subr.mxu0 0.0
        %2405 = vmatpush1.xpose.msra.mxu0 0.0
        %2406 = vmatprep.subr.mxu0 0.0
        %2407 = vmatpush1.xpose.msra.mxu0 0.0
        %2408 = vmatprep.subr.mxu0 0.0
        %2409 = vmatpush1.xpose.msra.mxu0 0.0
        %2410 = vmatprep.subr.mxu0 0.0
        %2411 = vmatpush1.xpose.msra.mxu0 0.0
        %2412 = vmatprep.subr.mxu0 0.0
        %2413 = vmatpush1.xpose.msra.mxu0 0.0
        %2414 = vmatprep.mubr.f32.mxu0 0.0
        %2415 = vmatmul.mubr.f32.gmra.mrb[0].mxu0 %v2346
        %v2416 = vpop.f32.mrb[0].mxu0
        %v2417 = vadd.f32 0.0, %v2416
        %v2418 = vpop.f32.mrb[0].mxu0
        %2419 = vdwg.mxu0
        %v2420 = vsel %vm916, %v2417, -inf
        %2421 = vmax.xlane.f32.xlu0 %v2420
        %v2422 = vpop.xlane.xlu0 %2421
        %v2423 = vsub.f32 %v2417, %v2422
        %v2424 = vmul.f32 %v2423, 1.442695
        %v2425 = vpow.pop %v2424
        %v2426 = vsel %vm916, %v2425, 0.0
        %2427 = vadd.xlane.f32.xlu0 %v2426
        %v2428 = vpop.xlane.xlu0 %2427
        %v2429 = vrcp.pop %v2428
        %v2430 = vmul.f32 %v2425, %v2429
        %2431 = vrot.lane.b32.xlu0 %v906, 48
        %v2432 = vpop.permute.xlu0 %2431
        %v2435 = vsel %vm916, %v2430, 0
        %2437 = vmatprep.subr.mxu0 0.0
        %2438 = vmatpush1.msra.mxu0 %v2432
        %2439 = vmatprep.subr.mxu0 0.0
        %2440 = vmatpush1.msra.mxu0 0.0
        %2441 = vmatprep.subr.mxu0 0.0
        %2442 = vmatpush1.msra.mxu0 0.0
        %2443 = vmatprep.subr.mxu0 0.0
        %2444 = vmatpush1.msra.mxu0 0.0
        %2445 = vmatprep.subr.mxu0 0.0
        %2446 = vmatpush1.msra.mxu0 0.0
        %2447 = vmatprep.subr.mxu0 0.0
        %2448 = vmatpush1.msra.mxu0 0.0
        %2449 = vmatprep.subr.mxu0 0.0
        %2450 = vmatpush1.msra.mxu0 0.0
        %2451 = vmatprep.subr.mxu0 0.0
        %2452 = vmatpush1.msra.mxu0 0.0
        %2453 = vmatprep.subr.mxu0 0.0
        %2454 = vmatpush1.msra.mxu0 0.0
        %2455 = vmatprep.subr.mxu0 0.0
        %2456 = vmatpush1.msra.mxu0 0.0
        %2457 = vmatprep.subr.mxu0 0.0
        %2458 = vmatpush1.msra.mxu0 0.0
        %2459 = vmatprep.subr.mxu0 0.0
        %2460 = vmatpush1.msra.mxu0 0.0
        %2461 = vmatprep.subr.mxu0 0.0
        %2462 = vmatpush1.msra.mxu0 0.0
        %2463 = vmatprep.subr.mxu0 0.0
        %2464 = vmatpush1.msra.mxu0 0.0
        %2465 = vmatprep.subr.mxu0 0.0
        %2466 = vmatpush1.msra.mxu0 0.0
        %2467 = vmatprep.subr.mxu0 0.0
        %2468 = vmatpush1.msra.mxu0 0.0
        %2469 = vmatprep.subr.mxu0 0.0
        %2470 = vmatpush1.msra.mxu0 0.0
        %2471 = vmatprep.subr.mxu0 0.0
        %2472 = vmatpush1.msra.mxu0 0.0
        %2473 = vmatprep.subr.mxu0 0.0
        %2474 = vmatpush1.msra.mxu0 0.0
        %2475 = vmatprep.subr.mxu0 0.0
        %2476 = vmatpush1.msra.mxu0 0.0
        %2477 = vmatprep.subr.mxu0 0.0
        %2478 = vmatpush1.msra.mxu0 0.0
        %2479 = vmatprep.subr.mxu0 0.0
        %2480 = vmatpush1.msra.mxu0 0.0
        %2481 = vmatprep.subr.mxu0 0.0
        %2482 = vmatpush1.msra.mxu0 0.0
        %2483 = vmatprep.subr.mxu0 0.0
        %2484 = vmatpush1.msra.mxu0 0.0
        %2485 = vmatprep.subr.mxu0 0.0
        %2486 = vmatpush1.msra.mxu0 0.0
        %2487 = vmatprep.subr.mxu0 0.0
        %2488 = vmatpush1.msra.mxu0 0.0
        %2489 = vmatprep.subr.mxu0 0.0
        %2490 = vmatpush1.msra.mxu0 0.0
        %2491 = vmatprep.subr.mxu0 0.0
        %2492 = vmatpush1.msra.mxu0 0.0
        %2493 = vmatprep.subr.mxu0 0.0
        %2494 = vmatpush1.msra.mxu0 0.0
        %2495 = vmatprep.subr.mxu0 0.0
        %2496 = vmatpush1.msra.mxu0 0.0
        %2497 = vmatprep.subr.mxu0 0.0
        %2498 = vmatpush1.msra.mxu0 0.0
        %2499 = vmatprep.subr.mxu0 0.0
        %2500 = vmatpush1.msra.mxu0 0.0
        %2501 = vmatprep.mubr.f32.mxu0 0.0
        %2502 = vmatmul.mubr.f32.gmra.mrb[0].mxu0 %v2435
        %v2503 = vpop.f32.mrb[0].mxu0
        %v2504 = vadd.f32 0.0, %v2503
        %v2505 = vpop.f32.mrb[0].mxu0
        %2506 = vdwg.mxu0
        %v2508 = vsel %vm916, %v2504, 0
        %2510 = vmatprep.subr.mxu0 0.0
        %2511 = vmatpush1.msra.mxu0 %v911
        %2512 = vmatprep.subr.mxu0 0.0
        %2513 = vmatpush1.msra.mxu0 0.0
        %2514 = vmatprep.subr.mxu0 0.0
        %2515 = vmatpush1.msra.mxu0 0.0
        %2516 = vmatprep.subr.mxu0 0.0
        %2517 = vmatpush1.msra.mxu0 0.0
        %2518 = vmatprep.subr.mxu0 0.0
        %2519 = vmatpush1.msra.mxu0 0.0
        %2520 = vmatprep.subr.mxu0 0.0
        %2521 = vmatpush1.msra.mxu0 0.0
        %2522 = vmatprep.subr.mxu0 0.0
        %2523 = vmatpush1.msra.mxu0 0.0
        %2524 = vmatprep.subr.mxu0 0.0
        %2525 = vmatpush1.msra.mxu0 0.0
        %2526 = vmatprep.subr.mxu0 0.0
        %2527 = vmatpush1.msra.mxu0 0.0
        %2528 = vmatprep.subr.mxu0 0.0
        %2529 = vmatpush1.msra.mxu0 0.0
        %2530 = vmatprep.subr.mxu0 0.0
        %2531 = vmatpush1.msra.mxu0 0.0
        %2532 = vmatprep.subr.mxu0 0.0
        %2533 = vmatpush1.msra.mxu0 0.0
        %2534 = vmatprep.subr.mxu0 0.0
        %2535 = vmatpush1.msra.mxu0 0.0
        %2536 = vmatprep.subr.mxu0 0.0
        %2537 = vmatpush1.msra.mxu0 0.0
        %2538 = vmatprep.subr.mxu0 0.0
        %2539 = vmatpush1.msra.mxu0 0.0
        %2540 = vmatprep.subr.mxu0 0.0
        %2541 = vmatpush1.msra.mxu0 0.0
        %2542 = vmatprep.subr.mxu0 0.0
        %2543 = vmatpush1.msra.mxu0 0.0
        %2544 = vmatprep.subr.mxu0 0.0
        %2545 = vmatpush1.msra.mxu0 0.0
        %2546 = vmatprep.subr.mxu0 0.0
        %2547 = vmatpush1.msra.mxu0 0.0
        %2548 = vmatprep.subr.mxu0 0.0
        %2549 = vmatpush1.msra.mxu0 0.0
        %2550 = vmatprep.subr.mxu0 0.0
        %2551 = vmatpush1.msra.mxu0 0.0
        %2552 = vmatprep.subr.mxu0 0.0
        %2553 = vmatpush1.msra.mxu0 0.0
        %2554 = vmatprep.subr.mxu0 0.0
        %2555 = vmatpush1.msra.mxu0 0.0
        %2556 = vmatprep.subr.mxu0 0.0
        %2557 = vmatpush1.msra.mxu0 0.0
        %2558 = vmatprep.subr.mxu0 0.0
        %2559 = vmatpush1.msra.mxu0 0.0
        %2560 = vmatprep.subr.mxu0 0.0
        %2561 = vmatpush1.msra.mxu0 0.0
        %2562 = vmatprep.subr.mxu0 0.0
        %2563 = vmatpush1.msra.mxu0 0.0
        %2564 = vmatprep.subr.mxu0 0.0
        %2565 = vmatpush1.msra.mxu0 0.0
        %2566 = vmatprep.subr.mxu0 0.0
        %2567 = vmatpush1.msra.mxu0 0.0
        %2568 = vmatprep.subr.mxu0 0.0
        %2569 = vmatpush1.msra.mxu0 0.0
        %2570 = vmatprep.subr.mxu0 0.0
        %2571 = vmatpush1.msra.mxu0 0.0
        %2572 = vmatprep.subr.mxu0 0.0
        %2573 = vmatpush1.msra.mxu0 0.0
        %2574 = vmatprep.mubr.f32.mxu0 0.0
        %2575 = vmatmul.mubr.f32.gmra.mrb[0].mxu0 %v2508
        %v2576 = vpop.f32.mrb[0].mxu0
        %v2577 = vadd.f32 0.0, %v2576
        %v2578 = vpop.f32.mrb[0].mxu0
        %2579 = vdwg.mxu0
        %v2580 = vadd.f32 %v2339, %v2577
        %2581 = vrot.lane.b32.xlu0 %v906, 104
        %v2582 = vpop.permute.xlu0 %2581
        %2583 = vrot.lane.b32.xlu0 %v906, 72
        %v2584 = vpop.permute.xlu0 %2583
        %v2585 = vsel %vm916, %v2582, 0
        %v2587 = vsel %vm916, %v2584, 0
        %2589 = vmatprep.subr.mxu0 0.0
        %2590 = vmatpush1.xpose.msra.mxu0 %v2587
        %2591 = vmatprep.subr.mxu0 0.0
        %2592 = vmatpush1.xpose.msra.mxu0 0.0
        %2593 = vmatprep.subr.mxu0 0.0
        %2594 = vmatpush1.xpose.msra.mxu0 0.0
        %2595 = vmatprep.subr.mxu0 0.0
        %2596 = vmatpush1.xpose.msra.mxu0 0.0
        %2597 = vmatprep.subr.mxu0 0.0
        %2598 = vmatpush1.xpose.msra.mxu0 0.0
        %2599 = vmatprep.subr.mxu0 0.0
        %2600 = vmatpush1.xpose.msra.mxu0 0.0
        %2601 = vmatprep.subr.mxu0 0.0
        %2602 = vmatpush1.xpose.msra.mxu0 0.0
        %2603 = vmatprep.subr.mxu0 0.0
        %2604 = vmatpush1.xpose.msra.mxu0 0.0
        %2605 = vmatprep.subr.mxu0 0.0
        %2606 = vmatpush1.xpose.msra.mxu0 0.0
        %2607 = vmatprep.subr.mxu0 0.0
        %2608 = vmatpush1.xpose.msra.mxu0 0.0
        %2609 = vmatprep.subr.mxu0 0.0
        %2610 = vmatpush1.xpose.msra.mxu0 0.0
        %2611 = vmatprep.subr.mxu0 0.0
        %2612 = vmatpush1.xpose.msra.mxu0 0.0
        %2613 = vmatprep.subr.mxu0 0.0
        %2614 = vmatpush1.xpose.msra.mxu0 0.0
        %2615 = vmatprep.subr.mxu0 0.0
        %2616 = vmatpush1.xpose.msra.mxu0 0.0
        %2617 = vmatprep.subr.mxu0 0.0
        %2618 = vmatpush1.xpose.msra.mxu0 0.0
        %2619 = vmatprep.subr.mxu0 0.0
        %2620 = vmatpush1.xpose.msra.mxu0 0.0
        %2621 = vmatprep.subr.mxu0 0.0
        %2622 = vmatpush1.xpose.msra.mxu0 0.0
        %2623 = vmatprep.subr.mxu0 0.0
        %2624 = vmatpush1.xpose.msra.mxu0 0.0
        %2625 = vmatprep.subr.mxu0 0.0
        %2626 = vmatpush1.xpose.msra.mxu0 0.0
        %2627 = vmatprep.subr.mxu0 0.0
        %2628 = vmatpush1.xpose.msra.mxu0 0.0
        %2629 = vmatprep.subr.mxu0 0.0
        %2630 = vmatpush1.xpose.msra.mxu0 0.0
        %2631 = vmatprep.subr.mxu0 0.0
        %2632 = vmatpush1.xpose.msra.mxu0 0.0
        %2633 = vmatprep.subr.mxu0 0.0
        %2634 = vmatpush1.xpose.msra.mxu0 0.0
        %2635 = vmatprep.subr.mxu0 0.0
        %2636 = vmatpush1.xpose.msra.mxu0 0.0
        %2637 = vmatprep.subr.mxu0 0.0
        %2638 = vmatpush1.xpose.msra.mxu0 0.0
        %2639 = vmatprep.subr.mxu0 0.0
        %2640 = vmatpush1.xpose.msra.mxu0 0.0
        %2641 = vmatprep.subr.mxu0 0.0
        %2642 = vmatpush1.xpose.msra.mxu0 0.0
        %2643 = vmatprep.subr.mxu0 0.0
        %2644 = vmatpush1.xpose.msra.mxu0 0.0
        %2645 = vmatprep.subr.mxu0 0.0
        %2646 = vmatpush1.xpose.msra.mxu0 0.0
        %2647 = vmatprep.subr.mxu0 0.0
        %2648 = vmatpush1.xpose.msra.mxu0 0.0
        %2649 = vmatprep.subr.mxu0 0.0
        %2650 = vmatpush1.xpose.msra.mxu0 0.0
        %2651 = vmatprep.subr.mxu0 0.0
        %2652 = vmatpush1.xpose.msra.mxu0 0.0
        %2653 = vmatprep.mubr.f32.mxu0 0.0
        %2654 = vmatmul.mubr.f32.gmra.mrb[0].mxu0 %v2585
        %v2655 = vpop.f32.mrb[0].mxu0
        %v2656 = vadd.f32 0.0, %v2655
        %v2657 = vpop.f32.mrb[0].mxu0
        %2658 = vdwg.mxu0
        %v2659 = vsel %vm916, %v2656, -inf
        %2660 = vmax.xlane.f32.xlu0 %v2659
        %v2661 = vpop.xlane.xlu0 %2660
        %v2662 = vsub.f32 %v2656, %v2661
        %v2663 = vmul.f32 %v2662, 1.442695
        %v2664 = vpow.pop %v2663
        %v2665 = vsel %vm916, %v2664, 0.0
        %2666 = vadd.xlane.f32.xlu0 %v2665
        %v2667 = vpop.xlane.xlu0 %2666
        %v2668 = vrcp.pop %v2667
        %v2669 = vmul.f32 %v2664, %v2668
        %2670 = vrot.lane.b32.xlu0 %v906, 40
        %v2671 = vpop.permute.xlu0 %2670
        %v2674 = vsel %vm916, %v2669, 0
        %2676 = vmatprep.subr.mxu0 0.0
        %2677 = vmatpush1.msra.mxu0 %v2671
        %2678 = vmatprep.subr.mxu0 0.0
        %2679 = vmatpush1.msra.mxu0 0.0
        %2680 = vmatprep.subr.mxu0 0.0
        %2681 = vmatpush1.msra.mxu0 0.0
        %2682 = vmatprep.subr.mxu0 0.0
        %2683 = vmatpush1.msra.mxu0 0.0
        %2684 = vmatprep.subr.mxu0 0.0
        %2685 = vmatpush1.msra.mxu0 0.0
        %2686 = vmatprep.subr.mxu0 0.0
        %2687 = vmatpush1.msra.mxu0 0.0
        %2688 = vmatprep.subr.mxu0 0.0
        %2689 = vmatpush1.msra.mxu0 0.0
        %2690 = vmatprep.subr.mxu0 0.0
        %2691 = vmatpush1.msra.mxu0 0.0
        %2692 = vmatprep.subr.mxu0 0.0
        %2693 = vmatpush1.msra.mxu0 0.0
        %2694 = vmatprep.subr.mxu0 0.0
        %2695 = vmatpush1.msra.mxu0 0.0
        %2696 = vmatprep.subr.mxu0 0.0
        %2697 = vmatpush1.msra.mxu0 0.0
        %2698 = vmatprep.subr.mxu0 0.0
        %2699 = vmatpush1.msra.mxu0 0.0
        %2700 = vmatprep.subr.mxu0 0.0
        %2701 = vmatpush1.msra.mxu0 0.0
        %2702 = vmatprep.subr.mxu0 0.0
        %2703 = vmatpush1.msra.mxu0 0.0
        %2704 = vmatprep.subr.mxu0 0.0
        %2705 = vmatpush1.msra.mxu0 0.0
        %2706 = vmatprep.subr.mxu0 0.0
        %2707 = vmatpush1.msra.mxu0 0.0
        %2708 = vmatprep.subr.mxu0 0.0
        %2709 = vmatpush1.msra.mxu0 0.0
        %2710 = vmatprep.subr.mxu0 0.0
        %2711 = vmatpush1.msra.mxu0 0.0
        %2712 = vmatprep.subr.mxu0 0.0
        %2713 = vmatpush1.msra.mxu0 0.0
        %2714 = vmatprep.subr.mxu0 0.0
        %2715 = vmatpush1.msra.mxu0 0.0
        %2716 = vmatprep.subr.mxu0 0.0
        %2717 = vmatpush1.msra.mxu0 0.0
        %2718 = vmatprep.subr.mxu0 0.0
        %2719 = vmatpush1.msra.mxu0 0.0
        %2720 = vmatprep.subr.mxu0 0.0
        %2721 = vmatpush1.msra.mxu0 0.0
        %2722 = vmatprep.subr.mxu0 0.0
        %2723 = vmatpush1.msra.mxu0 0.0
        %2724 = vmatprep.subr.mxu0 0.0
        %2725 = vmatpush1.msra.mxu0 0.0
        %2726 = vmatprep.subr.mxu0 0.0
        %2727 = vmatpush1.msra.mxu0 0.0
        %2728 = vmatprep.subr.mxu0 0.0
        %2729 = vmatpush1.msra.mxu0 0.0
        %2730 = vmatprep.subr.mxu0 0.0
        %2731 = vmatpush1.msra.mxu0 0.0
        %2732 = vmatprep.subr.mxu0 0.0
        %2733 = vmatpush1.msra.mxu0 0.0
        %2734 = vmatprep.subr.mxu0 0.0
        %2735 = vmatpush1.msra.mxu0 0.0
        %2736 = vmatprep.subr.mxu0 0.0
        %2737 = vmatpush1.msra.mxu0 0.0
        %2738 = vmatprep.subr.mxu0 0.0
        %2739 = vmatpush1.msra.mxu0 0.0
        %2740 = vmatprep.mubr.f32.mxu0 0.0
        %2741 = vmatmul.mubr.f32.gmra.mrb[0].mxu0 %v2674
        %v2742 = vpop.f32.mrb[0].mxu0
        %v2743 = vadd.f32 0.0, %v2742
        %v2744 = vpop.f32.mrb[0].mxu0
        %2745 = vdwg.mxu0
        %v2747 = vsel %vm916, %v2743, 0
        %2749 = vmatprep.subr.mxu0 0.0
        %2750 = vmatpush1.msra.mxu0 %v912
        %2751 = vmatprep.subr.mxu0 0.0
        %2752 = vmatpush1.msra.mxu0 0.0
        %2753 = vmatprep.subr.mxu0 0.0
        %2754 = vmatpush1.msra.mxu0 0.0
        %2755 = vmatprep.subr.mxu0 0.0
        %2756 = vmatpush1.msra.mxu0 0.0
        %2757 = vmatprep.subr.mxu0 0.0
        %2758 = vmatpush1.msra.mxu0 0.0
        %2759 = vmatprep.subr.mxu0 0.0
        %2760 = vmatpush1.msra.mxu0 0.0
        %2761 = vmatprep.subr.mxu0 0.0
        %2762 = vmatpush1.msra.mxu0 0.0
        %2763 = vmatprep.subr.mxu0 0.0
        %2764 = vmatpush1.msra.mxu0 0.0
        %2765 = vmatprep.subr.mxu0 0.0
        %2766 = vmatpush1.msra.mxu0 0.0
        %2767 = vmatprep.subr.mxu0 0.0
        %2768 = vmatpush1.msra.mxu0 0.0
        %2769 = vmatprep.subr.mxu0 0.0
        %2770 = vmatpush1.msra.mxu0 0.0
        %2771 = vmatprep.subr.mxu0 0.0
        %2772 = vmatpush1.msra.mxu0 0.0
        %2773 = vmatprep.subr.mxu0 0.0
        %2774 = vmatpush1.msra.mxu0 0.0
        %2775 = vmatprep.subr.mxu0 0.0
        %2776 = vmatpush1.msra.mxu0 0.0
        %2777 = vmatprep.subr.mxu0 0.0
        %2778 = vmatpush1.msra.mxu0 0.0
        %2779 = vmatprep.subr.mxu0 0.0
        %2780 = vmatpush1.msra.mxu0 0.0
        %2781 = vmatprep.subr.mxu0 0.0
        %2782 = vmatpush1.msra.mxu0 0.0
        %2783 = vmatprep.subr.mxu0 0.0
        %2784 = vmatpush1.msra.mxu0 0.0
        %2785 = vmatprep.subr.mxu0 0.0
        %2786 = vmatpush1.msra.mxu0 0.0
        %2787 = vmatprep.subr.mxu0 0.0
        %2788 = vmatpush1.msra.mxu0 0.0
        %2789 = vmatprep.subr.mxu0 0.0
        %2790 = vmatpush1.msra.mxu0 0.0
        %2791 = vmatprep.subr.mxu0 0.0
        %2792 = vmatpush1.msra.mxu0 0.0
        %2793 = vmatprep.subr.mxu0 0.0
        %2794 = vmatpush1.msra.mxu0 0.0
        %2795 = vmatprep.subr.mxu0 0.0
        %2796 = vmatpush1.msra.mxu0 0.0
        %2797 = vmatprep.subr.mxu0 0.0
        %2798 = vmatpush1.msra.mxu0 0.0
        %2799 = vmatprep.subr.mxu0 0.0
        %2800 = vmatpush1.msra.mxu0 0.0
        %2801 = vmatprep.subr.mxu0 0.0
        %2802 = vmatpush1.msra.mxu0 0.0
        %2803 = vmatprep.subr.mxu0 0.0
        %2804 = vmatpush1.msra.mxu0 0.0
        %2805 = vmatprep.subr.mxu0 0.0
        %2806 = vmatpush1.msra.mxu0 0.0
        %2807 = vmatprep.subr.mxu0 0.0
        %2808 = vmatpush1.msra.mxu0 0.0
        %2809 = vmatprep.subr.mxu0 0.0
        %2810 = vmatpush1.msra.mxu0 0.0
        %2811 = vmatprep.subr.mxu0 0.0
        %2812 = vmatpush1.msra.mxu0 0.0
        %2813 = vmatprep.mubr.f32.mxu0 0.0
        %2814 = vmatmul.mubr.f32.gmra.mrb[0].mxu0 %v2747
        %v2815 = vpop.f32.mrb[0].mxu0
        %v2816 = vadd.f32 0.0, %v2815
        %v2817 = vpop.f32.mrb[0].mxu0
        %2818 = vdwg.mxu0
        %v2819 = vadd.f32 %v2580, %v2816
        %v2820 = vld [vmem:[%s658] sm:$0x1]
        %v2822 = vlaneseq
        %v2823 = vshrl.u32 %v2822, 7
        %v2824 = vsub.s32 0, %v2823
        %v2825 = vrot.slane %v2820, %v2824
        %v2827 = vadd.f32 %v1866, %v2825
        %v2828 = vadd.f32 %v2819, %v2825
        %v2829 = vadd.f32 %v814, %v2827
        %v2830 = vadd.f32 %v815, %v2828
        %v2831 = vld [vmem:[%s666] sm:$0x1]
        %v2832 = vld [vmem:[%s674] sm:$0x1]
        %v2833 = vsel %vm827, %v2829, 0.0
        %2834 = vadd.xlane.f32.xlu0 %v2833
        %v2835 = vpop.xlane.xlu0 %2834
        %v2836 = vsel %vm827, %v2830, 0.0
        %2837 = vadd.xlane.f32.xlu0 %v2836
        %v2838 = vpop.xlane.xlu0 %2837
        %v2839 = vrcp.pop 32.0
        %v2840 = vmul.f32 %v2835, %v2839
        %v2841 = vmul.f32 %v2838, %v2839
        %v2842 = vsub.f32 %v2829, %v2840
        %v2843 = vsub.f32 %v2830, %v2841
        %v2844 = vmul.f32 %v2842, %v2842
        %v2845 = vmul.f32 %v2843, %v2843
        %v2846 = vsel %vm827, %v2844, 0.0
        %2847 = vadd.xlane.f32.xlu0 %v2846
        %v2848 = vpop.xlane.xlu0 %2847
        %v2849 = vsel %vm827, %v2845, 0.0
        %2850 = vadd.xlane.f32.xlu0 %v2849
        %v2851 = vpop.xlane.xlu0 %2850
        %v2852 = vmul.f32 %v2848, %v2839
        %v2853 = vmul.f32 %v2851, %v2839
        %v2854 = vadd.f32 %v2852, 1e-05
        %v2855 = vadd.f32 %v2853, 1e-05
        %v2856 = vrsqrt.pop %v2854
        %v2857 = vrsqrt.pop %v2855
        %v2858 = vmul.f32 %v2842, %v2856
        %v2859 = vmul.f32 %v2843, %v2857
        %v2861 = vlaneseq
        %v2862 = vshrl.u32 %v2861, 7
        %v2863 = vsub.s32 0, %v2862
        %v2864 = vrot.slane %v2831, %v2863
        %v2866 = vmul.f32 %v2858, %v2864
        %v2867 = vmul.f32 %v2859, %v2864
        %v2869 = vlaneseq
        %v2870 = vshrl.u32 %v2869, 7
        %v2871 = vsub.s32 0, %v2870
        %v2872 = vrot.slane %v2832, %v2871
        %v2874 = vadd.f32 %v2866, %v2872
        %v2875 = vadd.f32 %v2867, %v2872
        %v2876 = vld [vmem:[%s787] sm:$0xff]
        %v2877 = vld [vmem:[%s787 + $0x8] sm:$0xff]
        %v2878 = vld [vmem:[%s787 + $0x10] sm:$0xff]
        %v2879 = vld [vmem:[%s787 + $0x18] sm:$0xff]
        %v2880 = vld [vmem:[%s682] sm:$0x1]
        %v2882 = vlaneseq
        %v2883 = vshrl.u32 %v2882, 7
        %v2884 = vsub.s32 0, %v2883
        %v2885 = vrot.slane %v2880, %v2884
        %v2888 = vsel %vm827, %v2874, 0
        %v2891 = vsel %vm827, %v2875, 0
        %2893 = vmatprep.subr.mxu0 0.0
        %2894 = vmatpush1.msra.mxu0 %v2876
        %2895 = vmatprep.subr.mxu0 0.0
        %2896 = vmatpush1.msra.mxu0 %v2877
        %2897 = vmatprep.subr.mxu0 0.0
        %2898 = vmatpush1.msra.mxu0 %v2878
        %2899 = vmatprep.subr.mxu0 0.0
        %2900 = vmatpush1.msra.mxu0 %v2879
        %2901 = vmatprep.subr.mxu0 0.0
        %2902 = vmatpush1.msra.mxu0 0.0
        %2903 = vmatprep.subr.mxu0 0.0
        %2904 = vmatpush1.msra.mxu0 0.0
        %2905 = vmatprep.subr.mxu0 0.0
        %2906 = vmatpush1.msra.mxu0 0.0
        %2907 = vmatprep.subr.mxu0 0.0
        %2908 = vmatpush1.msra.mxu0 0.0
        %2909 = vmatprep.subr.mxu0 0.0
        %2910 = vmatpush1.msra.mxu0 0.0
        %2911 = vmatprep.subr.mxu0 0.0
        %2912 = vmatpush1.msra.mxu0 0.0
        %2913 = vmatprep.subr.mxu0 0.0
        %2914 = vmatpush1.msra.mxu0 0.0
        %2915 = vmatprep.subr.mxu0 0.0
        %2916 = vmatpush1.msra.mxu0 0.0
        %2917 = vmatprep.subr.mxu0 0.0
        %2918 = vmatpush1.msra.mxu0 0.0
        %2919 = vmatprep.subr.mxu0 0.0
        %2920 = vmatpush1.msra.mxu0 0.0
        %2921 = vmatprep.subr.mxu0 0.0
        %2922 = vmatpush1.msra.mxu0 0.0
        %2923 = vmatprep.subr.mxu0 0.0
        %2924 = vmatpush1.msra.mxu0 0.0
        %2925 = vmatprep.subr.mxu0 0.0
        %2926 = vmatpush1.msra.mxu0 0.0
        %2927 = vmatprep.subr.mxu0 0.0
        %2928 = vmatpush1.msra.mxu0 0.0
        %2929 = vmatprep.subr.mxu0 0.0
        %2930 = vmatpush1.msra.mxu0 0.0
        %2931 = vmatprep.subr.mxu0 0.0
        %2932 = vmatpush1.msra.mxu0 0.0
        %2933 = vmatprep.subr.mxu0 0.0
        %2934 = vmatpush1.msra.mxu0 0.0
        %2935 = vmatprep.subr.mxu0 0.0
        %2936 = vmatpush1.msra.mxu0 0.0
        %2937 = vmatprep.subr.mxu0 0.0
        %2938 = vmatpush1.msra.mxu0 0.0
        %2939 = vmatprep.subr.mxu0 0.0
        %2940 = vmatpush1.msra.mxu0 0.0
        %2941 = vmatprep.subr.mxu0 0.0
        %2942 = vmatpush1.msra.mxu0 0.0
        %2943 = vmatprep.subr.mxu0 0.0
        %2944 = vmatpush1.msra.mxu0 0.0
        %2945 = vmatprep.subr.mxu0 0.0
        %2946 = vmatpush1.msra.mxu0 0.0
        %2947 = vmatprep.subr.mxu0 0.0
        %2948 = vmatpush1.msra.mxu0 0.0
        %2949 = vmatprep.subr.mxu0 0.0
        %2950 = vmatpush1.msra.mxu0 0.0
        %2951 = vmatprep.subr.mxu0 0.0
        %2952 = vmatpush1.msra.mxu0 0.0
        %2953 = vmatprep.subr.mxu0 0.0
        %2954 = vmatpush1.msra.mxu0 0.0
        %2955 = vmatprep.subr.mxu0 0.0
        %2956 = vmatpush1.msra.mxu0 0.0
        %2957 = vmatprep.mubr.f32.mxu0 0.0
        %2958 = vmatmul.mubr.f32.gmra.mrb[0].mxu0 %v2888
        %v2959 = vpop.f32.mrb[0].mxu0
        %v2960 = vadd.f32 %v2885, %v2959
        %v2961 = vpop.f32.mrb[0].mxu0
        %2962 = vmatprep.mubr.f32.mxu0 0.0
        %2963 = vmatmul.mubr.f32.gmra.mrb[0].mxu0 %v2891
        %v2964 = vpop.f32.mrb[0].mxu0
        %v2965 = vadd.f32 %v2885, %v2964
        %v2966 = vpop.f32.mrb[0].mxu0
        %2967 = vdwg.mxu0
        %v2968 = vmax.f32 %v2960, 0.0
        %v2969 = vmax.f32 %v2965, 0.0
        %v2970 = vld [vmem:[%s792] sm:$0xff]
        %v2971 = vld [vmem:[%s792 + $0x8] sm:$0xff]
        %v2972 = vld [vmem:[%s792 + $0x10] sm:$0xff]
        %v2973 = vld [vmem:[%s792 + $0x18] sm:$0xff]
        %v2974 = vld [vmem:[%s792 + $0x20] sm:$0xff]
        %v2975 = vld [vmem:[%s792 + $0x28] sm:$0xff]
        %v2976 = vld [vmem:[%s792 + $0x30] sm:$0xff]
        %v2977 = vld [vmem:[%s792 + $0x38] sm:$0xff]
        %v2978 = vld [vmem:[%s795] sm:$0x1]
        %v2980 = vlaneseq
        %v2981 = vshrl.u32 %v2980, 7
        %v2982 = vsub.s32 0, %v2981
        %v2983 = vrot.slane %v2978, %v2982
        %vm2985 = vcmask 523264
        %v2987 = vsel %vm2985, %v2968, 0
        %v2990 = vsel %vm2985, %v2969, 0
        %2992 = vmatprep.subr.mxu0 0.0
        %2993 = vmatpush1.msra.mxu0 %v2970
        %2994 = vmatprep.subr.mxu0 0.0
        %2995 = vmatpush1.msra.mxu0 %v2971
        %2996 = vmatprep.subr.mxu0 0.0
        %2997 = vmatpush1.msra.mxu0 %v2972
        %2998 = vmatprep.subr.mxu0 0.0
        %2999 = vmatpush1.msra.mxu0 %v2973
        %3000 = vmatprep.subr.mxu0 0.0
        %3001 = vmatpush1.msra.mxu0 %v2974
        %3002 = vmatprep.subr.mxu0 0.0
        %3003 = vmatpush1.msra.mxu0 %v2975
        %3004 = vmatprep.subr.mxu0 0.0
        %3005 = vmatpush1.msra.mxu0 %v2976
        %3006 = vmatprep.subr.mxu0 0.0
        %3007 = vmatpush1.msra.mxu0 %v2977
        %3008 = vmatprep.subr.mxu0 0.0
        %3009 = vmatpush1.msra.mxu0 0.0
        %3010 = vmatprep.subr.mxu0 0.0
        %3011 = vmatpush1.msra.mxu0 0.0
        %3012 = vmatprep.subr.mxu0 0.0
        %3013 = vmatpush1.msra.mxu0 0.0
        %3014 = vmatprep.subr.mxu0 0.0
        %3015 = vmatpush1.msra.mxu0 0.0
        %3016 = vmatprep.subr.mxu0 0.0
        %3017 = vmatpush1.msra.mxu0 0.0
        %3018 = vmatprep.subr.mxu0 0.0
        %3019 = vmatpush1.msra.mxu0 0.0
        %3020 = vmatprep.subr.mxu0 0.0
        %3021 = vmatpush1.msra.mxu0 0.0
        %3022 = vmatprep.subr.mxu0 0.0
        %3023 = vmatpush1.msra.mxu0 0.0
        %3024 = vmatprep.subr.mxu0 0.0
        %3025 = vmatpush1.msra.mxu0 0.0
        %3026 = vmatprep.subr.mxu0 0.0
        %3027 = vmatpush1.msra.mxu0 0.0
        %3028 = vmatprep.subr.mxu0 0.0
        %3029 = vmatpush1.msra.mxu0 0.0
        %3030 = vmatprep.subr.mxu0 0.0
        %3031 = vmatpush1.msra.mxu0 0.0
        %3032 = vmatprep.subr.mxu0 0.0
        %3033 = vmatpush1.msra.mxu0 0.0
        %3034 = vmatprep.subr.mxu0 0.0
        %3035 = vmatpush1.msra.mxu0 0.0
        %3036 = vmatprep.subr.mxu0 0.0
        %3037 = vmatpush1.msra.mxu0 0.0
        %3038 = vmatprep.subr.mxu0 0.0
        %3039 = vmatpush1.msra.mxu0 0.0
        %3040 = vmatprep.subr.mxu0 0.0
        %3041 = vmatpush1.msra.mxu0 0.0
        %3042 = vmatprep.subr.mxu0 0.0
        %3043 = vmatpush1.msra.mxu0 0.0
        %3044 = vmatprep.subr.mxu0 0.0
        %3045 = vmatpush1.msra.mxu0 0.0
        %3046 = vmatprep.subr.mxu0 0.0
        %3047 = vmatpush1.msra.mxu0 0.0
        %3048 = vmatprep.subr.mxu0 0.0
        %3049 = vmatpush1.msra.mxu0 0.0
        %3050 = vmatprep.subr.mxu0 0.0
        %3051 = vmatpush1.msra.mxu0 0.0
        %3052 = vmatprep.subr.mxu0 0.0
        %3053 = vmatpush1.msra.mxu0 0.0
        %3054 = vmatprep.subr.mxu0 0.0
        %3055 = vmatpush1.msra.mxu0 0.0
        %3056 = vmatprep.mubr.f32.mxu0 0.0
        %3057 = vmatmul.mubr.f32.gmra.mrb[0].mxu0 %v2987
        %v3058 = vpop.f32.mrb[0].mxu0
        %v3059 = vadd.f32 %v2983, %v3058
        %v3060 = vpop.f32.mrb[0].mxu0
        %3061 = vmatprep.mubr.f32.mxu0 0.0
        %3062 = vmatmul.mubr.f32.gmra.mrb[0].mxu0 %v2990
        %v3063 = vpop.f32.mrb[0].mxu0
        %v3064 = vadd.f32 %v2983, %v3063
        %v3065 = vpop.f32.mrb[0].mxu0
        %3066 = vdwg.mxu0
        %v3067 = vadd.f32 %v2874, %v3059
        %v3068 = vadd.f32 %v2875, %v3064
        %v3069 = vld [vmem:[%s798] sm:$0x1]
        %v3070 = vld [vmem:[%s801] sm:$0x1]
        %v3071 = vsel %vm827, %v3067, 0.0
        %3072 = vadd.xlane.f32.xlu0 %v3071
        %v3073 = vpop.xlane.xlu0 %3072
        %v3074 = vsel %vm827, %v3068, 0.0
        %3075 = vadd.xlane.f32.xlu0 %v3074
        %v3076 = vpop.xlane.xlu0 %3075
        %v3077 = vmul.f32 %v3073, %v2839
        %v3078 = vmul.f32 %v3076, %v2839
        %v3079 = vsub.f32 %v3067, %v3077
        %v3080 = vsub.f32 %v3068, %v3078
        %v3081 = vmul.f32 %v3079, %v3079
        %v3082 = vmul.f32 %v3080, %v3080
        %v3083 = vsel %vm827, %v3081, 0.0
        %3084 = vadd.xlane.f32.xlu0 %v3083
        %v3085 = vpop.xlane.xlu0 %3084
        %v3086 = vsel %vm827, %v3082, 0.0
        %3087 = vadd.xlane.f32.xlu0 %v3086
        %v3088 = vpop.xlane.xlu0 %3087
        %v3089 = vmul.f32 %v3085, %v2839
        %v3090 = vmul.f32 %v3088, %v2839
        %v3091 = vadd.f32 %v3089, 1e-05
        %v3092 = vadd.f32 %v3090, 1e-05
        %v3093 = vrsqrt.pop %v3091
        %v3094 = vrsqrt.pop %v3092
        %v3095 = vmul.f32 %v3079, %v3093
        %v3096 = vmul.f32 %v3080, %v3094
        %v3098 = vlaneseq
        %v3099 = vshrl.u32 %v3098, 7
        %v3100 = vsub.s32 0, %v3099
        %v3101 = vrot.slane %v3069, %v3100
        %v3103 = vmul.f32 %v3095, %v3101
        %v3104 = vmul.f32 %v3096, %v3101
        %v3106 = vlaneseq
        %v3107 = vshrl.u32 %v3106, 7
        %v3108 = vsub.s32 0, %v3107
        %v3109 = vrot.slane %v3070, %v3108
        %v3111 = vadd.f32 %v3103, %v3109
        %v3112 = vadd.f32 %v3104, %v3109
        %3113 = vst.msk [vmem:[#allocation2] sm:$0xff] %vm827, %v3111
        %3114 = vst.msk [vmem:[#allocation2 + $0x8] sm:$0xff] %vm827, %v3112
        %p3115 = scmp.eq.s32.totalorder %s35, 1
        // Predicated region
        $region113: #{tpu_custom_call.1} parent=83 // pred_check
          %p3116 = pneg %p3115
        $region114: #{tpu_custom_call.1} parent=83 // pred_check_branch
          %3118 = sbr.rel (%p3116) target = $region116
        $region115: #{tpu_custom_call.1} parent=83 // pred_region
          %v3119 = vsel %vm827, %v3111, 0.0
          %v3120 = vrot.slane %v3119, 4
          %v3121 = vadd.f32 %v3119, %v3120
          %v3122 = vrot.slane %v3121, 2
          %v3123 = vadd.f32 %v3121, %v3122
          %v3124 = vrot.slane %v3123, 1
          %v3125 = vadd.f32 %v3123, %v3124
          %v3126 = vrcp.pop 8.0
          %v3127 = vmul.f32 %v3125, %v3126
          %v3128 = vsel %vm827, %v3112, 0.0
          %v3129 = vrot.slane %v3128, 4
          %v3130 = vadd.f32 %v3128, %v3129
          %v3131 = vrot.slane %v3130, 2
          %v3132 = vadd.f32 %v3130, %v3131
          %v3133 = vrot.slane %v3132, 1
          %v3134 = vadd.f32 %v3132, %v3133
          %v3135 = vmul.f32 %v3134, %v3126
          %vm3136 = vcmask 1040384
          %v3137 = vsel %vm3136, %v3127, %v3135
          %v3138 = vld [vmem:[%s14] sm:$0xff]
          %v3139 = vld [vmem:[%s14 + $0x8] sm:$0xff]
          %v3140 = vld [vmem:[%s14 + $0x10] sm:$0xff]
          %v3141 = vld [vmem:[%s14 + $0x18] sm:$0xff]
          %v3142 = vld [vmem:[%s15] sm:$0x1]
          %v3144 = vlaneseq
          %v3145 = vshrl.u32 %v3144, 7
          %v3146 = vsub.s32 0, %v3145
          %v3147 = vrot.slane %v3142, %v3146
          %v3150 = vsel %vm827, %v3137, 0
          %3152 = vmatprep.subr.mxu0 0.0
          %3153 = vmatpush1.msra.mxu0 %v3138
          %3154 = vmatprep.subr.mxu0 0.0
          %3155 = vmatpush1.msra.mxu0 %v3139
          %3156 = vmatprep.subr.mxu0 0.0
          %3157 = vmatpush1.msra.mxu0 %v3140
          %3158 = vmatprep.subr.mxu0 0.0
          %3159 = vmatpush1.msra.mxu0 %v3141
          %3160 = vmatprep.subr.mxu0 0.0
          %3161 = vmatpush1.msra.mxu0 0.0
          %3162 = vmatprep.subr.mxu0 0.0
          %3163 = vmatpush1.msra.mxu0 0.0
          %3164 = vmatprep.subr.mxu0 0.0
          %3165 = vmatpush1.msra.mxu0 0.0
          %3166 = vmatprep.subr.mxu0 0.0
          %3167 = vmatpush1.msra.mxu0 0.0
          %3168 = vmatprep.subr.mxu0 0.0
          %3169 = vmatpush1.msra.mxu0 0.0
          %3170 = vmatprep.subr.mxu0 0.0
          %3171 = vmatpush1.msra.mxu0 0.0
          %3172 = vmatprep.subr.mxu0 0.0
          %3173 = vmatpush1.msra.mxu0 0.0
          %3174 = vmatprep.subr.mxu0 0.0
          %3175 = vmatpush1.msra.mxu0 0.0
          %3176 = vmatprep.subr.mxu0 0.0
          %3177 = vmatpush1.msra.mxu0 0.0
          %3178 = vmatprep.subr.mxu0 0.0
          %3179 = vmatpush1.msra.mxu0 0.0
          %3180 = vmatprep.subr.mxu0 0.0
          %3181 = vmatpush1.msra.mxu0 0.0
          %3182 = vmatprep.subr.mxu0 0.0
          %3183 = vmatpush1.msra.mxu0 0.0
          %3184 = vmatprep.subr.mxu0 0.0
          %3185 = vmatpush1.msra.mxu0 0.0
          %3186 = vmatprep.subr.mxu0 0.0
          %3187 = vmatpush1.msra.mxu0 0.0
          %3188 = vmatprep.subr.mxu0 0.0
          %3189 = vmatpush1.msra.mxu0 0.0
          %3190 = vmatprep.subr.mxu0 0.0
          %3191 = vmatpush1.msra.mxu0 0.0
          %3192 = vmatprep.subr.mxu0 0.0
          %3193 = vmatpush1.msra.mxu0 0.0
          %3194 = vmatprep.subr.mxu0 0.0
          %3195 = vmatpush1.msra.mxu0 0.0
          %3196 = vmatprep.subr.mxu0 0.0
          %3197 = vmatpush1.msra.mxu0 0.0
          %3198 = vmatprep.subr.mxu0 0.0
          %3199 = vmatpush1.msra.mxu0 0.0
          %3200 = vmatprep.subr.mxu0 0.0
          %3201 = vmatpush1.msra.mxu0 0.0
          %3202 = vmatprep.subr.mxu0 0.0
          %3203 = vmatpush1.msra.mxu0 0.0
          %3204 = vmatprep.subr.mxu0 0.0
          %3205 = vmatpush1.msra.mxu0 0.0
          %3206 = vmatprep.subr.mxu0 0.0
          %3207 = vmatpush1.msra.mxu0 0.0
          %3208 = vmatprep.subr.mxu0 0.0
          %3209 = vmatpush1.msra.mxu0 0.0
          %3210 = vmatprep.subr.mxu0 0.0
          %3211 = vmatpush1.msra.mxu0 0.0
          %3212 = vmatprep.subr.mxu0 0.0
          %3213 = vmatpush1.msra.mxu0 0.0
          %3214 = vmatprep.subr.mxu0 0.0
          %3215 = vmatpush1.msra.mxu0 0.0
          %3216 = vmatprep.mubr.f32.mxu0 0.0
          %3217 = vmatmul.mubr.f32.gmra.mrb[0].mxu0 %v3150
          %v3218 = vpop.f32.mrb[0].mxu0
          %v3219 = vadd.f32 %v3147, %v3218
          %v3220 = vpop.f32.mrb[0].mxu0
          %3221 = vdwg.mxu0
          %3222 = vst [vmem:[#allocation12] sm:$0x3] %v3219
        $region116: #{tpu_custom_call.1} parent=83 // pred_fallthru
          _
        // Predicated region
        $region117: #{tpu_custom_call.1} parent=83 // pred_check
          %p3223 = pneg %p461
        $region118: #{tpu_custom_call.1} parent=83 // pred_check_branch
          %3225 = sbr.rel (%p3223) target = $region120
        $region119: #{tpu_custom_call.1} parent=83 // pred_region
          %s3227 = ssub.s32 32, 32
          %3228 = vsyncadd [#allocation5], %s3227
          %s3229 = smul.addr %s34, 32
          %s3230 = scalar_lea.hbm %s16, %s3229
          %s3232 = sshll.u32 [#allocation12], 4
          %s3233 = int_to_ptr.vmem [resolvable:$true] %s3232
          %3235 = dma.vmem_to_hbm [thread:$0]  %s3233, 32, %s3230, [#allocation5]
        $region120: #{tpu_custom_call.1} parent=83 // pred_fallthru
          _
        // Predicated region
        $region121: #{tpu_custom_call.1} parent=83 // pred_check
          %p3236 = pneg %p461
        $region122: #{tpu_custom_call.1} parent=83 // pred_check_branch
          %3238 = sbr.rel (%p3236) target = $region124
        $region123: #{tpu_custom_call.1} parent=83 // pred_region
          %3239 = dma.done [#allocation5], 32
        $region124: #{tpu_custom_call.1} parent=83 // pred_fallthru
          _
      $region84: #{tpu_custom_call.1} parent=5 // pred_fallthru
        _
      %p3240 = scmp.le.s32.totalorder 2, %s25
      // Predicated region
      $region125: #{tpu_custom_call.1} parent=5 // pred_check
        %p3241 = pneg %p3240
      $region126: #{tpu_custom_call.1} parent=5 // pred_check_branch
        %3243 = sbr.rel (%p3241) target = $region128
      $region127: #{tpu_custom_call.1} parent=5 // pred_region
        %s3244 = ssub.s32 %s25, 2
      $region128: #{tpu_custom_call.1} parent=5 // pred_fallthru
        _
    $region6: #{tpu_custom_call.1} parent=1 // loop_footer
      %s29 = sadd.s32 1, %s25
    $region7: #{tpu_custom_call.1} parent=1 // loop_footer_branch
      %24 = sbr.rel target = $region3
    $region8: #{tpu_custom_call.1} parent=1 // loop_exit
      _
    %3245 = vsyncpa [#allocation4], 1
    %s3246 = scalar_lea.sflag [#allocation4], 1
    %3247 = vsyncpa %s3246, 1
    %3248 = vsyncpa [#allocation7], 1
    %3249 = vsyncpa [#allocation5], 1
    %s3250 = scalar_lea.sflag [#allocation5], 1
    %3251 = vsyncpa %s3250, 1

// kernel: tpu_custom_call.1
$region0: #{tpu_custom_call.1}
  #allocation0 [shape = 'u32[]', space=smem, size = 0x4, offset = 0x4, fixed_abs, tag = 'smem constant byte address 0x4 - core index']
  #allocation1 [shape = 'u32[144,128]{1,0:T(1,128)}', space=vmem, size = 0x12000, scoped, tag = 'internal scratch']
  #allocation2 [shape = 'f32[2,8,32]{2,1,0:T(8,128)}', space=vmem, size = 0x2000, scoped, tag = 'scratch operand']
  %s0 = inlined_call_operand.hbm [shape: f32[2,8,32], index: 0, kind: input, shape index: {}]
  %s1 = inlined_call_operand.hbm [shape: f32[1,8,32], index: 1, kind: input, shape index: {}]
  %s2 = inlined_call_operand.vmem [shape: f32[2,32,96], index: 2, kind: input, shape index: {}]
  %s3 = inlined_call_operand.vmem [shape: f32[2,1,96], index: 3, kind: input, shape index: {}]
  %s4 = inlined_call_operand.vmem [shape: f32[2,4,8,32], index: 4, kind: input, shape index: {}]
  %s5 = inlined_call_operand.hbm [shape: f32[2,1,32], index: 5, kind: input, shape index: {}]
  %s6 = inlined_call_operand.hbm [shape: f32[2,1,32], index: 6, kind: input, shape index: {}]
  %s7 = inlined_call_operand.hbm [shape: f32[2,1,32], index: 7, kind: input, shape index: {}]
  %s8 = inlined_call_operand.vmem [shape: f32[2,32,64], index: 8, kind: input, shape index: {}]
  %s9 = inlined_call_operand.hbm [shape: f32[2,1,64], index: 9, kind: input, shape index: {}]
  %s10 = inlined_call_operand.vmem [shape: f32[2,64,32], index: 10, kind: input, shape index: {}]
  %s11 = inlined_call_operand.vmem [shape: f32[2,1,32], index: 11, kind: input, shape index: {}]
  %s12 = inlined_call_operand.vmem [shape: f32[2,1,32], index: 12, kind: input, shape index: {}]
  %s13 = inlined_call_operand.vmem [shape: f32[2,1,32], index: 13, kind: input, shape index: {}]
  %s14 = inlined_call_operand.vmem [shape: f32[32,128], index: 14, kind: input, shape index: {}]
  %s15 = inlined_call_operand.vmem [shape: f32[1,128], index: 15, kind: input, shape index: {}]
  %s16 = inlined_call_operand.hbm [shape: f32[1,2,128], index: 16, kind: output, shape index: {}]
  %s17 = sld [smem:[#allocation0]]
  $region129: #{tpu_custom_call.1} parent=0
    _
  %s19 = ssub.s32 1, %s17
  %s20 = scalar_select 0, %s19, %s17
  $region1: #{tpu_custom_call.1} parent=0
    #allocation3 [shape = 'u8[8192]{0}', space=vmem, size = 0x2000, scoped, tag = 'input window, operand 0, single buffered']
    #allocation4 [shape = 's32[2]{0}', space=sflag, size = 0x8, scoped, tag = 'scoped memory for tpu_custom_call.1']
    #allocation5 [shape = 's32[2]{0}', space=sflag, size = 0x8, scoped, tag = 'scoped memory for tpu_custom_call.1']
    #allocation6 [shape = 'u8[4096]{0}', space=vmem, size = 0x1000, scoped, tag = 'input window, operand 1, single buffered']
    #allocation7 [shape = 's32[1]{0}', space=sflag, size = 0x4, scoped, tag = 'scoped memory for tpu_custom_call.1']
    #allocation8 [shape = 'u8[1024]{0}', space=vmem, size = 0x400, scoped, tag = 'input window, operand 5']
    #allocation9 [shape = 'u8[1024]{0}', space=vmem, size = 0x400, scoped, tag = 'input window, operand 6']
    #allocation10 [shape = 'u8[1024]{0}', space=vmem, size = 0x400, scoped, tag = 'input window, operand 7']
    #allocation11 [shape = 'u8[1024]{0}', space=vmem, size = 0x400, scoped, tag = 'input window, operand 9']
    #allocation12 [shape = 'u8[1024]{0}', space=vmem, size = 0x400, scoped, tag = 'output window, operand 0, single buffered']
    %21 = vsyncpa [#allocation4], 0
    %22 = vsyncpa [#allocation7], 0
    %23 = vsyncpa [#allocation5], 0
    loop: start=0, step=1, limit=4
    $region2: #{tpu_custom_call.1} parent=1 // loop_pre_header
      _
    $region3: #{tpu_custom_call.1} parent=1 // loop_header
      %s25 = sphi 0, %s29
      %p26 = scmp.ge.s32.totalorder %s25, 4
      %s32 = sphi 0, %s44
      %s33 = sphi 0, %s40
      %s34 = sphi 0, %s32
      %s35 = sphi 0, %s33
      %s36 = sphi 0, %s34
      %s37 = sphi 0, %s35
      %s47 = sphi 0, %s49
      %s50 = sphi 0, %s47
      %s51 = sphi 0, %s50
      %s67 = sphi 0, %s51
      %s71 = sphi 0, %s71
      %s73 = sphi 0, %s71
      %s74 = sphi 0, %s73
      %s88 = sphi 0, %s74
      %s94 = sphi 0, %s96
      %s97 = sphi 0, %s94
      %s98 = sphi 0, %s97
      %s114 = sphi 0, %s98
      %s120 = sphi 0, %s122
      %s123 = sphi 0, %s120
      %s124 = sphi 0, %s123
      %s140 = sphi 0, %s124
      %s146 = sphi 0, %s148
      %s149 = sphi 0, %s146
      %s150 = sphi 0, %s149
      %s166 = sphi 0, %s150
      %s172 = sphi 0, %s174
      %s175 = sphi 0, %s172
      %s176 = sphi 0, %s175
      %s192 = sphi 0, %s176
      %s198 = sphi 0, %s200
      %s201 = sphi 0, %s198
      %s202 = sphi 0, %s201
      %s218 = sphi 0, %s202
      %s224 = sphi 0, %s226
      %s227 = sphi 0, %s224
      %s228 = sphi 0, %s227
      %s244 = sphi 0, %s228
      %s250 = sphi 0, %s252
      %s253 = sphi 0, %s250
      %s254 = sphi 0, %s253
      %s270 = sphi 0, %s254
      %s276 = sphi 0, %s278
      %s279 = sphi 0, %s276
      %s280 = sphi 0, %s279
      %s296 = sphi 0, %s280
      %s302 = sphi 0, %s304
      %s305 = sphi 0, %s302
      %s306 = sphi 0, %s305
      %s322 = sphi 0, %s306
      %s328 = sphi 0, %s330
      %s331 = sphi 0, %s328
      %s332 = sphi 0, %s331
      %s348 = sphi 0, %s332
      %s354 = sphi 0, %s356
      %s357 = sphi 0, %s354
      %s358 = sphi 0, %s357
      %s374 = sphi 0, %s358
      %s380 = sphi 0, %s382
      %s383 = sphi 0, %s380
      %s384 = sphi 0, %s383
      %s400 = sphi 0, %s384
      %s404 = sphi 0, %s404
      %s406 = sphi 0, %s404
      %s407 = sphi 0, %s406
      %s421 = sphi 0, %s407
      %s425 = sphi 0, %s425
      %s427 = sphi 0, %s425
      %s428 = sphi 0, %s427
      %s442 = sphi 0, %s428
      %s448 = sphi 0, %s450
      %s451 = sphi 0, %s448
      %s452 = sphi 0, %s451
      %s468 = sphi 0, %s452
    $region4: #{tpu_custom_call.1} parent=1 // loop_header_branch
      %28 = sbr.rel (%p26) target = $region8
    $region5: #{tpu_custom_call.1} parent=1 // loop_body
      %s30 = ssub.s32 %s25, 1
      %s31 = ssub.s32 %s25, 2
      %s38 = sadd.s32 1, %s33
      %p39 = scmp.ge.s32.totalorder %s38, 2
      %s40 = scalar_select %p39, 0, %s38
      %s41 = sadd.s32 1, %s32
      %s42 = scalar_select %p39, %s41, %s32
      %p43 = scmp.ge.s32.totalorder %s42, 1
      %s44 = scalar_select %p43, 0, %s42
      %s45 = ssub.s32 %s32, %s44
      %p46 = scmp.eq.s32.totalorder %s45, 0
      %s48 = sadd.s32 %s47, 1
      %s49 = scalar_select %p46, %s47, %s48
      %p52 = pneg %p46
      %p53 = scmp.eq.s32.totalorder %s25, 1
      %p54 = por %p52, %p53
      %p55 = scmp.ne.s32.totalorder %s47, %s50
      %p56 = scmp.eq.s32.totalorder %s25, 0
      %p57 = por %p55, %p56
      %p58 = scmp.ne.s32.totalorder %s47, %s50
      %p59 = scmp.eq.s32.totalorder %s30, 1
      %p60 = por %p58, %p59
      %p61 = scmp.ne.s32.totalorder %s50, %s51
      %p62 = scmp.eq.s32.totalorder %s30, 0
      %p63 = por %p61, %p62
      %p64 = scmp.ne.s32.totalorder %s50, %s51
      %p65 = scmp.eq.s32.totalorder %s31, 1
      %p66 = por %p64, %p65
      %p68 = scmp.ne.s32.totalorder %s51, %s67
      %p69 = scmp.eq.s32.totalorder %s31, 0
      %p70 = por %p68, %p69
      %s72 = sadd.s32 %s71, 1
      %p75 = scmp.eq.s32.totalorder %s25, 1
      %p76 = scmp.ne.s32.totalorder %s71, %s73
      %p77 = scmp.eq.s32.totalorder %s25, 0
      %p78 = por %p76, %p77
      %p79 = scmp.ne.s32.totalorder %s71, %s73
      %p80 = scmp.eq.s32.totalorder %s30, 1
      %p81 = por %p79, %p80
      %p82 = scmp.ne.s32.totalorder %s73, %s74
      %p83 = scmp.eq.s32.totalorder %s30, 0
      %p84 = por %p82, %p83
      %p85 = scmp.ne.s32.totalorder %s73, %s74
      %p86 = scmp.eq.s32.totalorder %s31, 1
      %p87 = por %p85, %p86
      %p89 = scmp.ne.s32.totalorder %s74, %s88
      %p90 = scmp.eq.s32.totalorder %s31, 0
      %p91 = por %p89, %p90
      %s92 = ssub.s32 %s33, %s40
      %p93 = scmp.eq.s32.totalorder %s92, 0
      %s95 = sadd.s32 %s94, 1
      %s96 = scalar_select %p93, %s94, %s95
      %p99 = pneg %p93
      %p100 = scmp.eq.s32.totalorder %s25, 1
      %p101 = por %p99, %p100
      %p102 = scmp.ne.s32.totalorder %s94, %s97
      %p103 = scmp.eq.s32.totalorder %s25, 0
      %p104 = por %p102, %p103
      %p105 = scmp.ne.s32.totalorder %s94, %s97
      %p106 = scmp.eq.s32.totalorder %s30, 1
      %p107 = por %p105, %p106
      %p108 = scmp.ne.s32.totalorder %s97, %s98
      %p109 = scmp.eq.s32.totalorder %s30, 0
      %p110 = por %p108, %p109
      %p111 = scmp.ne.s32.totalorder %s97, %s98
      %p112 = scmp.eq.s32.totalorder %s31, 1
      %p113 = por %p111, %p112
      %p115 = scmp.ne.s32.totalorder %s98, %s114
      %p116 = scmp.eq.s32.totalorder %s31, 0
      %p117 = por %p115, %p116
      %s118 = ssub.s32 %s33, %s40
      %p119 = scmp.eq.s32.totalorder %s118, 0
      %s121 = sadd.s32 %s120, 1
      %s122 = scalar_select %p119, %s120, %s121
      %p125 = pneg %p119
      %p126 = scmp.eq.s32.totalorder %s25, 1
      %p127 = por %p125, %p126
      %p128 = scmp.ne.s32.totalorder %s120, %s123
      %p129 = scmp.eq.s32.totalorder %s25, 0
      %p130 = por %p128, %p129
      %p131 = scmp.ne.s32.totalorder %s120, %s123
      %p132 = scmp.eq.s32.totalorder %s30, 1
      %p133 = por %p131, %p132
      %p134 = scmp.ne.s32.totalorder %s123, %s124
      %p135 = scmp.eq.s32.totalorder %s30, 0
      %p136 = por %p134, %p135
      %p137 = scmp.ne.s32.totalorder %s123, %s124
      %p138 = scmp.eq.s32.totalorder %s31, 1
      %p139 = por %p137, %p138
      %p141 = scmp.ne.s32.totalorder %s124, %s140
      %p142 = scmp.eq.s32.totalorder %s31, 0
      %p143 = por %p141, %p142
      %s144 = ssub.s32 %s33, %s40
      %p145 = scmp.eq.s32.totalorder %s144, 0
      %s147 = sadd.s32 %s146, 1
      %s148 = scalar_select %p145, %s146, %s147
      %p151 = pneg %p145
      %p152 = scmp.eq.s32.totalorder %s25, 1
      %p153 = por %p151, %p152
      %p154 = scmp.ne.s32.totalorder %s146, %s149
      %p155 = scmp.eq.s32.totalorder %s25, 0
      %p156 = por %p154, %p155
      %p157 = scmp.ne.s32.totalorder %s146, %s149
      %p158 = scmp.eq.s32.totalorder %s30, 1
      %p159 = por %p157, %p158
      %p160 = scmp.ne.s32.totalorder %s149, %s150
      %p161 = scmp.eq.s32.totalorder %s30, 0
      %p162 = por %p160, %p161
      %p163 = scmp.ne.s32.totalorder %s149, %s150
      %p164 = scmp.eq.s32.totalorder %s31, 1
      %p165 = por %p163, %p164
      %p167 = scmp.ne.s32.totalorder %s150, %s166
      %p168 = scmp.eq.s32.totalorder %s31, 0
      %p169 = por %p167, %p168
      %s170 = ssub.s32 %s33, %s40
      %p171 = scmp.eq.s32.totalorder %s170, 0
      %s173 = sadd.s32 %s172, 1
      %s174 = scalar_select %p171, %s172, %s173
      %p177 = pneg %p171
      %p178 = scmp.eq.s32.totalorder %s25, 1
      %p179 = por %p177, %p178
      %p180 = scmp.ne.s32.totalorder %s172, %s175
      %p181 = scmp.eq.s32.totalorder %s25, 0
      %p182 = por %p180, %p181
      %p183 = scmp.ne.s32.totalorder %s172, %s175
      %p184 = scmp.eq.s32.totalorder %s30, 1
      %p185 = por %p183, %p184
      %p186 = scmp.ne.s32.totalorder %s175, %s176
      %p187 = scmp.eq.s32.totalorder %s30, 0
      %p188 = por %p186, %p187
      %p189 = scmp.ne.s32.totalorder %s175, %s176
      %p190 = scmp.eq.s32.totalorder %s31, 1
      %p191 = por %p189, %p190
      %p193 = scmp.ne.s32.totalorder %s176, %s192
      %p194 = scmp.eq.s32.totalorder %s31, 0
      %p195 = por %p193, %p194
      %s196 = ssub.s32 %s33, %s40
      %p197 = scmp.eq.s32.totalorder %s196, 0
      %s199 = sadd.s32 %s198, 1
      %s200 = scalar_select %p197, %s198, %s199
      %p203 = pneg %p197
      %p204 = scmp.eq.s32.totalorder %s25, 1
      %p205 = por %p203, %p204
      %p206 = scmp.ne.s32.totalorder %s198, %s201
      %p207 = scmp.eq.s32.totalorder %s25, 0
      %p208 = por %p206, %p207
      %p209 = scmp.ne.s32.totalorder %s198, %s201
      %p210 = scmp.eq.s32.totalorder %s30, 1
      %p211 = por %p209, %p210
      %p212 = scmp.ne.s32.totalorder %s201, %s202
      %p213 = scmp.eq.s32.totalorder %s30, 0
      %p214 = por %p212, %p213
      %p215 = scmp.ne.s32.totalorder %s201, %s202
      %p216 = scmp.eq.s32.totalorder %s31, 1
      %p217 = por %p215, %p216
      %p219 = scmp.ne.s32.totalorder %s202, %s218
      %p220 = scmp.eq.s32.totalorder %s31, 0
      %p221 = por %p219, %p220
      %s222 = ssub.s32 %s33, %s40
      %p223 = scmp.eq.s32.totalorder %s222, 0
      %s225 = sadd.s32 %s224, 1
      %s226 = scalar_select %p223, %s224, %s225
      %p229 = pneg %p223
      %p230 = scmp.eq.s32.totalorder %s25, 1
      %p231 = por %p229, %p230
      %p232 = scmp.ne.s32.totalorder %s224, %s227
      %p233 = scmp.eq.s32.totalorder %s25, 0
      %p234 = por %p232, %p233
      %p235 = scmp.ne.s32.totalorder %s224, %s227
      %p236 = scmp.eq.s32.totalorder %s30, 1
      %p237 = por %p235, %p236
      %p238 = scmp.ne.s32.totalorder %s227, %s228
      %p239 = scmp.eq.s32.totalorder %s30, 0
      %p240 = por %p238, %p239
      %p241 = scmp.ne.s32.totalorder %s227, %s228
      %p242 = scmp.eq.s32.totalorder %s31, 1
      %p243 = por %p241, %p242
      %p245 = scmp.ne.s32.totalorder %s228, %s244
      %p246 = scmp.eq.s32.totalorder %s31, 0
      %p247 = por %p245, %p246
      %s248 = ssub.s32 %s33, %s40
      %p249 = scmp.eq.s32.totalorder %s248, 0
      %s251 = sadd.s32 %s250, 1
      %s252 = scalar_select %p249, %s250, %s251
      %p255 = pneg %p249
      %p256 = scmp.eq.s32.totalorder %s25, 1
      %p257 = por %p255, %p256
      %p258 = scmp.ne.s32.totalorder %s250, %s253
      %p259 = scmp.eq.s32.totalorder %s25, 0
      %p260 = por %p258, %p259
      %p261 = scmp.ne.s32.totalorder %s250, %s253
      %p262 = scmp.eq.s32.totalorder %s30, 1
      %p263 = por %p261, %p262
      %p264 = scmp.ne.s32.totalorder %s253, %s254
      %p265 = scmp.eq.s32.totalorder %s30, 0
      %p266 = por %p264, %p265
      %p267 = scmp.ne.s32.totalorder %s253, %s254
      %p268 = scmp.eq.s32.totalorder %s31, 1
      %p269 = por %p267, %p268
      %p271 = scmp.ne.s32.totalorder %s254, %s270
      %p272 = scmp.eq.s32.totalorder %s31, 0
      %p273 = por %p271, %p272
      %s274 = ssub.s32 %s33, %s40
      %p275 = scmp.eq.s32.totalorder %s274, 0
      %s277 = sadd.s32 %s276, 1
      %s278 = scalar_select %p275, %s276, %s277
      %p281 = pneg %p275
      %p282 = scmp.eq.s32.totalorder %s25, 1
      %p283 = por %p281, %p282
      %p284 = scmp.ne.s32.totalorder %s276, %s279
      %p285 = scmp.eq.s32.totalorder %s25, 0
      %p286 = por %p284, %p285
      %p287 = scmp.ne.s32.totalorder %s276, %s279
      %p288 = scmp.eq.s32.totalorder %s30, 1
      %p289 = por %p287, %p288
      %p290 = scmp.ne.s32.totalorder %s279, %s280
      %p291 = scmp.eq.s32.totalorder %s30, 0
      %p292 = por %p290, %p291
      %p293 = scmp.ne.s32.totalorder %s279, %s280
      %p294 = scmp.eq.s32.totalorder %s31, 1
      %p295 = por %p293, %p294
      %p297 = scmp.ne.s32.totalorder %s280, %s296
      %p298 = scmp.eq.s32.totalorder %s31, 0
      %p299 = por %p297, %p298
      %s300 = ssub.s32 %s33, %s40
      %p301 = scmp.eq.s32.totalorder %s300, 0
      %s303 = sadd.s32 %s302, 1
      %s304 = scalar_select %p301, %s302, %s303
      %p307 = pneg %p301
      %p308 = scmp.eq.s32.totalorder %s25, 1
      %p309 = por %p307, %p308
      %p310 = scmp.ne.s32.totalorder %s302, %s305
      %p311 = scmp.eq.s32.totalorder %s25, 0
      %p312 = por %p310, %p311
      %p313 = scmp.ne.s32.totalorder %s302, %s305
      %p314 = scmp.eq.s32.totalorder %s30, 1
      %p315 = por %p313, %p314
      %p316 = scmp.ne.s32.totalorder %s305, %s306
      %p317 = scmp.eq.s32.totalorder %s30, 0
      %p318 = por %p316, %p317
      %p319 = scmp.ne.s32.totalorder %s305, %s306
      %p320 = scmp.eq.s32.totalorder %s31, 1
      %p321 = por %p319, %p320
      %p323 = scmp.ne.s32.totalorder %s306, %s322
      %p324 = scmp.eq.s32.totalorder %s31, 0
      %p325 = por %p323, %p324
      %s326 = ssub.s32 %s33, %s40
      %p327 = scmp.eq.s32.totalorder %s326, 0
      %s329 = sadd.s32 %s328, 1
      %s330 = scalar_select %p327, %s328, %s329
      %p333 = pneg %p327
      %p334 = scmp.eq.s32.totalorder %s25, 1
      %p335 = por %p333, %p334
      %p336 = scmp.ne.s32.totalorder %s328, %s331
      %p337 = scmp.eq.s32.totalorder %s25, 0
      %p338 = por %p336, %p337
      %p339 = scmp.ne.s32.totalorder %s328, %s331
      %p340 = scmp.eq.s32.totalorder %s30, 1
      %p341 = por %p339, %p340
      %p342 = scmp.ne.s32.totalorder %s331, %s332
      %p343 = scmp.eq.s32.totalorder %s30, 0
      %p344 = por %p342, %p343
      %p345 = scmp.ne.s32.totalorder %s331, %s332
      %p346 = scmp.eq.s32.totalorder %s31, 1
      %p347 = por %p345, %p346
      %p349 = scmp.ne.s32.totalorder %s332, %s348
      %p350 = scmp.eq.s32.totalorder %s31, 0
      %p351 = por %p349, %p350
      %s352 = ssub.s32 %s33, %s40
      %p353 = scmp.eq.s32.totalorder %s352, 0
      %s355 = sadd.s32 %s354, 1
      %s356 = scalar_select %p353, %s354, %s355
      %p359 = pneg %p353
      %p360 = scmp.eq.s32.totalorder %s25, 1
      %p361 = por %p359, %p360
      %p362 = scmp.ne.s32.totalorder %s354, %s357
      %p363 = scmp.eq.s32.totalorder %s25, 0
      %p364 = por %p362, %p363
      %p365 = scmp.ne.s32.totalorder %s354, %s357
      %p366 = scmp.eq.s32.totalorder %s30, 1
      %p367 = por %p365, %p366
      %p368 = scmp.ne.s32.totalorder %s357, %s358
      %p369 = scmp.eq.s32.totalorder %s30, 0
      %p370 = por %p368, %p369
      %p371 = scmp.ne.s32.totalorder %s357, %s358
      %p372 = scmp.eq.s32.totalorder %s31, 1
      %p373 = por %p371, %p372
      %p375 = scmp.ne.s32.totalorder %s358, %s374
      %p376 = scmp.eq.s32.totalorder %s31, 0
      %p377 = por %p375, %p376
      %s378 = ssub.s32 %s33, %s40
      %p379 = scmp.eq.s32.totalorder %s378, 0
      %s381 = sadd.s32 %s380, 1
      %s382 = scalar_select %p379, %s380, %s381
      %p385 = pneg %p379
      %p386 = scmp.eq.s32.totalorder %s25, 1
      %p387 = por %p385, %p386
      %p388 = scmp.ne.s32.totalorder %s380, %s383
      %p389 = scmp.eq.s32.totalorder %s25, 0
      %p390 = por %p388, %p389
      %p391 = scmp.ne.s32.totalorder %s380, %s383
      %p392 = scmp.eq.s32.totalorder %s30, 1
      %p393 = por %p391, %p392
      %p394 = scmp.ne.s32.totalorder %s383, %s384
      %p395 = scmp.eq.s32.totalorder %s30, 0
      %p396 = por %p394, %p395
      %p397 = scmp.ne.s32.totalorder %s383, %s384
      %p398 = scmp.eq.s32.totalorder %s31, 1
      %p399 = por %p397, %p398
      %p401 = scmp.ne.s32.totalorder %s384, %s400
      %p402 = scmp.eq.s32.totalorder %s31, 0
      %p403 = por %p401, %p402
      %s405 = sadd.s32 %s404, 1
      %p408 = scmp.eq.s32.totalorder %s25, 1
      %p409 = scmp.ne.s32.totalorder %s404, %s406
      %p410 = scmp.eq.s32.totalorder %s25, 0
      %p411 = por %p409, %p410
      %p412 = scmp.ne.s32.totalorder %s404, %s406
      %p413 = scmp.eq.s32.totalorder %s30, 1
      %p414 = por %p412, %p413
      %p415 = scmp.ne.s32.totalorder %s406, %s407
      %p416 = scmp.eq.s32.totalorder %s30, 0
      %p417 = por %p415, %p416
      %p418 = scmp.ne.s32.totalorder %s406, %s407
      %p419 = scmp.eq.s32.totalorder %s31, 1
      %p420 = por %p418, %p419
      %p422 = scmp.ne.s32.totalorder %s407, %s421
      %p423 = scmp.eq.s32.totalorder %s31, 0
      %p424 = por %p422, %p423
      %s426 = sadd.s32 %s425, 1
      %p429 = scmp.eq.s32.totalorder %s25, 1
      %p430 = scmp.ne.s32.totalorder %s425, %s427
      %p431 = scmp.eq.s32.totalorder %s25, 0
      %p432 = por %p430, %p431
      %p433 = scmp.ne.s32.totalorder %s425, %s427
      %p434 = scmp.eq.s32.totalorder %s30, 1
      %p435 = por %p433, %p434
      %p436 = scmp.ne.s32.totalorder %s427, %s428
      %p437 = scmp.eq.s32.totalorder %s30, 0
      %p438 = por %p436, %p437
      %p439 = scmp.ne.s32.totalorder %s427, %s428
      %p440 = scmp.eq.s32.totalorder %s31, 1
      %p441 = por %p439, %p440
      %p443 = scmp.ne.s32.totalorder %s428, %s442
      %p444 = scmp.eq.s32.totalorder %s31, 0
      %p445 = por %p443, %p444
      %s446 = ssub.s32 %s32, %s44
      %p447 = scmp.eq.s32.totalorder %s446, 0
      %s449 = sadd.s32 %s448, 1
      %s450 = scalar_select %p447, %s448, %s449
      %p453 = pneg %p447
      %p454 = scmp.eq.s32.totalorder %s25, 1
      %p455 = por %p453, %p454
      %p456 = scmp.ne.s32.totalorder %s448, %s451
      %p457 = scmp.eq.s32.totalorder %s25, 0
      %p458 = por %p456, %p457
      %p459 = scmp.ne.s32.totalorder %s448, %s451
      %p460 = scmp.eq.s32.totalorder %s30, 1
      %p461 = por %p459, %p460
      %p462 = scmp.ne.s32.totalorder %s451, %s452
      %p463 = scmp.eq.s32.totalorder %s30, 0
      %p464 = por %p462, %p463
      %p465 = scmp.ne.s32.totalorder %s451, %s452
      %p466 = scmp.eq.s32.totalorder %s31, 1
      %p467 = por %p465, %p466
      %p469 = scmp.ne.s32.totalorder %s452, %s468
      %p470 = scmp.eq.s32.totalorder %s31, 0
      %p471 = por %p469, %p470
      %p472 = scmp.le.s32.totalorder 1, %s25
      %p473 = scmp.lt.s32.totalorder %s25, 3
      %p474 = pnand %p472, %p473
      %p475 = pneg %p474
      // Predicated region
      $region9: #{tpu_custom_call.1} parent=5 // pred_check
        _
      $region10: #{tpu_custom_call.1} parent=5 // pred_check_branch
        %477 = sbr.rel (%p474) target = $region12
      $region11: #{tpu_custom_call.1} parent=5 // pred_region
        %s478 = ssub.s32 %s25, 1
        // Predicated region
        $region13: #{tpu_custom_call.1} parent=11 // pred_check
          %p479 = pneg %p63
        $region14: #{tpu_custom_call.1} parent=11 // pred_check_branch
          %481 = sbr.rel (%p479) target = $region16
        $region15: #{tpu_custom_call.1} parent=11 // pred_region
          %s482 = smul.u32 2, %s34
          %s484 = ssub.s32 256, 256
          %485 = vsyncadd [#allocation4], %s484
          %s486 = smul.addr %s482, 128
          %s487 = scalar_lea.hbm %s0, %s486
          %s488 = sshll.u32 [#allocation3], 4
          %s489 = int_to_ptr.vmem [resolvable:$true] %s488
          %494 = dma.hbm_to_vmem [thread:$0]  %s487, 256, %s489, [#allocation4], 128, 128, 8
        $region16: #{tpu_custom_call.1} parent=11 // pred_fallthru
          _
        // Predicated region
        $region17: #{tpu_custom_call.1} parent=11 // pred_check
          %p495 = pneg %p84
        $region18: #{tpu_custom_call.1} parent=11 // pred_check_branch
          %497 = sbr.rel (%p495) target = $region20
        $region19: #{tpu_custom_call.1} parent=11 // pred_region
          %s499 = ssub.s32 128, 128
          %500 = vsyncadd [#allocation7], %s499
          %s502 = sshll.u32 [#allocation6], 4
          %s503 = int_to_ptr.vmem [resolvable:$true] %s502
          %505 = dma.hbm_to_vmem [thread:$0]  %s1, 128, %s503, [#allocation7]
        $region20: #{tpu_custom_call.1} parent=11 // pred_fallthru
          _
        // Predicated region
        $region21: #{tpu_custom_call.1} parent=11 // pred_check
          %p506 = pneg %p417
        $region22: #{tpu_custom_call.1} parent=11 // pred_check_branch
          %508 = sbr.rel (%p506) target = $region24
        $region23: #{tpu_custom_call.1} parent=11 // pred_region
          _
        $region24: #{tpu_custom_call.1} parent=11 // pred_fallthru
          _
        // Predicated region
        $region25: #{tpu_custom_call.1} parent=11 // pred_check
          %p509 = pneg %p438
        $region26: #{tpu_custom_call.1} parent=11 // pred_check_branch
          %511 = sbr.rel (%p509) target = $region28
        $region27: #{tpu_custom_call.1} parent=11 // pred_region
          _
        $region28: #{tpu_custom_call.1} parent=11 // pred_fallthru
          _
      $region12: #{tpu_custom_call.1} parent=5 // pred_fallthru
        _
      %p512 = scmp.lt.s32.totalorder %s25, 2
      // Predicated region
      $region29: #{tpu_custom_call.1} parent=5 // pred_check
        %p513 = pneg %p512
      $region30: #{tpu_custom_call.1} parent=5 // pred_check_branch
        %515 = sbr.rel (%p513) target = $region32
      $region31: #{tpu_custom_call.1} parent=5 // pred_region
        // Predicated region
        $region33: #{tpu_custom_call.1} parent=31 // pred_check
          %p516 = pneg %p104
        $region34: #{tpu_custom_call.1} parent=31 // pred_check_branch
          %518 = sbr.rel (%p516) target = $region36
        $region35: #{tpu_custom_call.1} parent=31 // pred_region
          %p519 = scmp.lt.s32.totalorder %s33, 1
          %s520 = scalar_select %p519, %s33, 1
          %s521 = smul.addr %s520, 4
          %s522 = smul.addr %s521, 8
          %s523 = scalar_lea.vmem %s2, %s522
        $region36: #{tpu_custom_call.1} parent=31 // pred_fallthru
          _
        // Predicated region
        $region37: #{tpu_custom_call.1} parent=31 // pred_check
          %p524 = pneg %p130
        $region38: #{tpu_custom_call.1} parent=31 // pred_check_branch
          %526 = sbr.rel (%p524) target = $region40
        $region39: #{tpu_custom_call.1} parent=31 // pred_region
          %p527 = scmp.lt.s32.totalorder %s33, 1
          %s528 = scalar_select %p527, %s33, 1
          %s529 = scalar_lea.vmem %s3, %s528
        $region40: #{tpu_custom_call.1} parent=31 // pred_fallthru
          _
        // Predicated region
        $region41: #{tpu_custom_call.1} parent=31 // pred_check
          %p530 = pneg %p156
        $region42: #{tpu_custom_call.1} parent=31 // pred_check_branch
          %532 = sbr.rel (%p530) target = $region44
        $region43: #{tpu_custom_call.1} parent=31 // pred_region
          %p533 = scmp.lt.s32.totalorder %s33, 1
          %s534 = scalar_select %p533, %s33, 1
          %s535 = smul.addr %s534, 4
          %s536 = smul.addr %s535, 8
          %s537 = scalar_lea.vmem %s4, %s536
        $region44: #{tpu_custom_call.1} parent=31 // pred_fallthru
          _
        // Predicated region
        $region45: #{tpu_custom_call.1} parent=31 // pred_check
          %p538 = pneg %p182
        $region46: #{tpu_custom_call.1} parent=31 // pred_check_branch
          %540 = sbr.rel (%p538) target = $region48
        $region47: #{tpu_custom_call.1} parent=31 // pred_region
          %s541 = sand.u32 %s25, 1
          %s542 = scalar_lea.sflag [#allocation4], %s541
          %s543 = sand.u32 %s172, 1
          %s544 = scalar_lea.vmem [#allocation8], %s543
          %s546 = ssub.s32 16, 16
          %547 = vsyncadd %s542, %s546
          %s548 = smul.addr %s33, 16
          %s549 = scalar_lea.hbm %s5, %s548
          %s551 = sshll.u32 %s544, 4
          %s552 = int_to_ptr.vmem [resolvable:$true] %s551
          %554 = dma.hbm_to_vmem [thread:$0]  %s549, 16, %s552, %s542
        $region48: #{tpu_custom_call.1} parent=31 // pred_fallthru
          _
        // Predicated region
        $region49: #{tpu_custom_call.1} parent=31 // pred_check
          %p555 = pneg %p208
        $region50: #{tpu_custom_call.1} parent=31 // pred_check_branch
          %557 = sbr.rel (%p555) target = $region52
        $region51: #{tpu_custom_call.1} parent=31 // pred_region
          %s558 = sand.u32 %s25, 1
          %s559 = scalar_lea.sflag [#allocation4], %s558
          %s560 = sand.u32 %s198, 1
          %s561 = scalar_lea.vmem [#allocation9], %s560
          %s563 = ssub.s32 16, 16
          %564 = vsyncadd %s559, %s563
          %s565 = smul.addr %s33, 16
          %s566 = scalar_lea.hbm %s6, %s565
          %s568 = sshll.u32 %s561, 4
          %s569 = int_to_ptr.vmem [resolvable:$true] %s568
          %571 = dma.hbm_to_vmem [thread:$0]  %s566, 16, %s569, %s559
        $region52: #{tpu_custom_call.1} parent=31 // pred_fallthru
          _
        // Predicated region
        $region53: #{tpu_custom_call.1} parent=31 // pred_check
          %p572 = pneg %p234
        $region54: #{tpu_custom_call.1} parent=31 // pred_check_branch
          %574 = sbr.rel (%p572) target = $region56
        $region55: #{tpu_custom_call.1} parent=31 // pred_region
          %s575 = sand.u32 %s25, 1
          %s576 = scalar_lea.sflag [#allocation4], %s575
          %s577 = sand.u32 %s224, 1
          %s578 = scalar_lea.vmem [#allocation10], %s577
          %s580 = ssub.s32 16, 16
          %581 = vsyncadd %s576, %s580
          %s582 = smul.addr %s33, 16
          %s583 = scalar_lea.hbm %s7, %s582
          %s585 = sshll.u32 %s578, 4
          %s586 = int_to_ptr.vmem [resolvable:$true] %s585
          %588 = dma.hbm_to_vmem [thread:$0]  %s583, 16, %s586, %s576
        $region56: #{tpu_custom_call.1} parent=31 // pred_fallthru
          _
        // Predicated region
        $region57: #{tpu_custom_call.1} parent=31 // pred_check
          %p589 = pneg %p260
        $region58: #{tpu_custom_call.1} parent=31 // pred_check_branch
          %591 = sbr.rel (%p589) target = $region60
        $region59: #{tpu_custom_call.1} parent=31 // pred_region
          %p592 = scmp.lt.s32.totalorder %s33, 1
          %s593 = scalar_select %p592, %s33, 1
          %s594 = smul.addr %s593, 4
          %s595 = smul.addr %s594, 8
          %s596 = scalar_lea.vmem %s8, %s595
        $region60: #{tpu_custom_call.1} parent=31 // pred_fallthru
          _
        // Predicated region
        $region61: #{tpu_custom_call.1} parent=31 // pred_check
          %p597 = pneg %p286
        $region62: #{tpu_custom_call.1} parent=31 // pred_check_branch
          %599 = sbr.rel (%p597) target = $region64
        $region63: #{tpu_custom_call.1} parent=31 // pred_region
          %s600 = sand.u32 %s25, 1
          %s601 = scalar_lea.sflag [#allocation4], %s600
          %s602 = sand.u32 %s276, 1
          %s603 = scalar_lea.vmem [#allocation11], %s602
          %s605 = ssub.s32 16, 16
          %606 = vsyncadd %s601, %s605
          %s607 = smul.addr %s33, 16
          %s608 = scalar_lea.hbm %s9, %s607
          %s610 = sshll.u32 %s603, 4
          %s611 = int_to_ptr.vmem [resolvable:$true] %s610
          %613 = dma.hbm_to_vmem [thread:$0]  %s608, 16, %s611, %s601
        $region64: #{tpu_custom_call.1} parent=31 // pred_fallthru
          _
        // Predicated region
        $region65: #{tpu_custom_call.1} parent=31 // pred_check
          %p614 = pneg %p312
        $region66: #{tpu_custom_call.1} parent=31 // pred_check_branch
          %616 = sbr.rel (%p614) target = $region68
        $region67: #{tpu_custom_call.1} parent=31 // pred_region
          %p617 = scmp.lt.s32.totalorder %s33, 1
          %s618 = scalar_select %p617, %s33, 1
          %s619 = smul.addr %s618, 8
          %s620 = smul.addr %s619, 8
          %s621 = scalar_lea.vmem %s10, %s620
        $region68: #{tpu_custom_call.1} parent=31 // pred_fallthru
          _
        // Predicated region
        $region69: #{tpu_custom_call.1} parent=31 // pred_check
          %p622 = pneg %p338
        $region70: #{tpu_custom_call.1} parent=31 // pred_check_branch
          %624 = sbr.rel (%p622) target = $region72
        $region71: #{tpu_custom_call.1} parent=31 // pred_region
          %p625 = scmp.lt.s32.totalorder %s33, 1
          %s626 = scalar_select %p625, %s33, 1
          %s627 = scalar_lea.vmem %s11, %s626
        $region72: #{tpu_custom_call.1} parent=31 // pred_fallthru
          _
        // Predicated region
        $region73: #{tpu_custom_call.1} parent=31 // pred_check
          %p628 = pneg %p364
        $region74: #{tpu_custom_call.1} parent=31 // pred_check_branch
          %630 = sbr.rel (%p628) target = $region76
        $region75: #{tpu_custom_call.1} parent=31 // pred_region
          %p631 = scmp.lt.s32.totalorder %s33, 1
          %s632 = scalar_select %p631, %s33, 1
          %s633 = scalar_lea.vmem %s12, %s632
        $region76: #{tpu_custom_call.1} parent=31 // pred_fallthru
          _
        // Predicated region
        $region77: #{tpu_custom_call.1} parent=31 // pred_check
          %p634 = pneg %p390
        $region78: #{tpu_custom_call.1} parent=31 // pred_check_branch
          %636 = sbr.rel (%p634) target = $region80
        $region79: #{tpu_custom_call.1} parent=31 // pred_region
          %p637 = scmp.lt.s32.totalorder %s33, 1
          %s638 = scalar_select %p637, %s33, 1
          %s639 = scalar_lea.vmem %s13, %s638
        $region80: #{tpu_custom_call.1} parent=31 // pred_fallthru
          _
      $region32: #{tpu_custom_call.1} parent=5 // pred_fallthru
        _
      %p640 = scmp.le.s32.totalorder 1, %s25
      %p641 = scmp.lt.s32.totalorder %s25, 3
      %p642 = pnand %p640, %p641
      %p643 = pneg %p642
      // Predicated region
      $region81: #{tpu_custom_call.1} parent=5 // pred_check
        _
      $region82: #{tpu_custom_call.1} parent=5 // pred_check_branch
        %645 = sbr.rel (%p642) target = $region84
      $region83: #{tpu_custom_call.1} parent=5 // pred_region
        %s646 = ssub.s32 %s25, 1
        // Predicated region
        $region85: #{tpu_custom_call.1} parent=83 // pred_check
          %p647 = pneg %p63
        $region86: #{tpu_custom_call.1} parent=83 // pred_check_branch
          %649 = sbr.rel (%p647) target = $region88
        $region87: #{tpu_custom_call.1} parent=83 // pred_region
          %650 = dma.done [#allocation4], 256
        $region88: #{tpu_custom_call.1} parent=83 // pred_fallthru
          _
        // Predicated region
        $region89: #{tpu_custom_call.1} parent=83 // pred_check
          %p651 = pneg %p84
        $region90: #{tpu_custom_call.1} parent=83 // pred_check_branch
          %653 = sbr.rel (%p651) target = $region92
        $region91: #{tpu_custom_call.1} parent=83 // pred_region
          %654 = dma.done [#allocation7], 128
        $region92: #{tpu_custom_call.1} parent=83 // pred_fallthru
          _
        %s655 = sand.u32 %s30, 1
        %s656 = scalar_lea.sflag [#allocation4], %s655
        %s657 = sand.u32 %s175, 1
        %s658 = scalar_lea.vmem [#allocation8], %s657
        // Predicated region
        $region93: #{tpu_custom_call.1} parent=83 // pred_check
          %p659 = pneg %p188
        $region94: #{tpu_custom_call.1} parent=83 // pred_check_branch
          %661 = sbr.rel (%p659) target = $region96
        $region95: #{tpu_custom_call.1} parent=83 // pred_region
          %662 = dma.done %s656, 16
        $region96: #{tpu_custom_call.1} parent=83 // pred_fallthru
          _
        %s663 = sand.u32 %s30, 1
        %s664 = scalar_lea.sflag [#allocation4], %s663
        %s665 = sand.u32 %s201, 1
        %s666 = scalar_lea.vmem [#allocation9], %s665
        // Predicated region
        $region97: #{tpu_custom_call.1} parent=83 // pred_check
          %p667 = pneg %p214
        $region98: #{tpu_custom_call.1} parent=83 // pred_check_branch
          %669 = sbr.rel (%p667) target = $region100
        $region99: #{tpu_custom_call.1} parent=83 // pred_region
          %670 = dma.done %s664, 16
        $region100: #{tpu_custom_call.1} parent=83 // pred_fallthru
          _
        %s671 = sand.u32 %s30, 1
        %s672 = scalar_lea.sflag [#allocation4], %s671
        %s673 = sand.u32 %s227, 1
        %s674 = scalar_lea.vmem [#allocation10], %s673
        // Predicated region
        $region101: #{tpu_custom_call.1} parent=83 // pred_check
          %p675 = pneg %p240
        $region102: #{tpu_custom_call.1} parent=83 // pred_check_branch
          %677 = sbr.rel (%p675) target = $region104
        $region103: #{tpu_custom_call.1} parent=83 // pred_region
          %678 = dma.done %s672, 16
        $region104: #{tpu_custom_call.1} parent=83 // pred_fallthru
          _
        %s679 = sand.u32 %s30, 1
        %s680 = scalar_lea.sflag [#allocation4], %s679
        %s681 = sand.u32 %s279, 1
        %s682 = scalar_lea.vmem [#allocation11], %s681
        // Predicated region
        $region105: #{tpu_custom_call.1} parent=83 // pred_check
          %p683 = pneg %p292
        $region106: #{tpu_custom_call.1} parent=83 // pred_check_branch
          %685 = sbr.rel (%p683) target = $region108
        $region107: #{tpu_custom_call.1} parent=83 // pred_region
          %686 = dma.done %s680, 16
        $region108: #{tpu_custom_call.1} parent=83 // pred_fallthru
          _
        %p687 = pneg %p63
        %p688 = pneg %p60
        %p689 = pneg %p84
        %p690 = pneg %p81
        %p691 = scmp.lt.s32.totalorder %s35, 1
        %s692 = scalar_select %p691, %s35, 1
        %s693 = smul.addr %s692, 4
        %s694 = smul.addr %s693, 8
        %s695 = scalar_lea.vmem %s2, %s694
        %p696 = pneg %p110
        %p697 = pneg %p107
        %p698 = scmp.lt.s32.totalorder %s35, 1
        %s699 = scalar_select %p698, %s35, 1
        %s700 = scalar_lea.vmem %s3, %s699
        %p701 = pneg %p136
        %p702 = pneg %p133
        %p703 = scmp.lt.s32.totalorder %s35, 1
        %s704 = scalar_select %p703, %s35, 1
        %s705 = smul.addr %s704, 4
        %s706 = smul.addr %s705, 8
        %s707 = scalar_lea.vmem %s4, %s706
        %p708 = pneg %p162
        %p709 = pneg %p159
        %s710 = sand.u32 %s30, 1
        %s711 = scalar_lea.sflag [#allocation4], %s710
        %s712 = sand.u32 %s175, 1
        %s713 = scalar_lea.vmem [#allocation8], %s712
        %p714 = pneg %p188
        %p715 = pneg %p185
        %s716 = sand.u32 %s30, 1
        %s717 = scalar_lea.sflag [#allocation4], %s716
        %s718 = sand.u32 %s201, 1
        %s719 = scalar_lea.vmem [#allocation9], %s718
        %p720 = pneg %p214
        %p721 = pneg %p211
        %s722 = sand.u32 %s30, 1
        %s723 = scalar_lea.sflag [#allocation4], %s722
        %s724 = sand.u32 %s227, 1
        %s725 = scalar_lea.vmem [#allocation10], %s724
        %p726 = pneg %p240
        %p727 = pneg %p237
        %p728 = scmp.lt.s32.totalorder %s35, 1
        %s729 = scalar_select %p728, %s35, 1
        %s730 = smul.addr %s729, 4
        %s731 = smul.addr %s730, 8
        %s732 = scalar_lea.vmem %s8, %s731
        %p733 = pneg %p266
        %p734 = pneg %p263
        %s735 = sand.u32 %s30, 1
        %s736 = scalar_lea.sflag [#allocation4], %s735
        %s737 = sand.u32 %s279, 1
        %s738 = scalar_lea.vmem [#allocation11], %s737
        %p739 = pneg %p292
        %p740 = pneg %p289
        %p741 = scmp.lt.s32.totalorder %s35, 1
        %s742 = scalar_select %p741, %s35, 1
        %s743 = smul.addr %s742, 8
        %s744 = smul.addr %s743, 8
        %s745 = scalar_lea.vmem %s10, %s744
        %p746 = pneg %p318
        %p747 = pneg %p315
        %p748 = scmp.lt.s32.totalorder %s35, 1
        %s749 = scalar_select %p748, %s35, 1
        %s750 = scalar_lea.vmem %s11, %s749
        %p751 = pneg %p344
        %p752 = pneg %p341
        %p753 = scmp.lt.s32.totalorder %s35, 1
        %s754 = scalar_select %p753, %s35, 1
        %s755 = scalar_lea.vmem %s12, %s754
        %p756 = pneg %p370
        %p757 = pneg %p367
        %p758 = scmp.lt.s32.totalorder %s35, 1
        %s759 = scalar_select %p758, %s35, 1
        %s760 = scalar_lea.vmem %s13, %s759
        %p761 = pneg %p396
        %p762 = pneg %p393
        %p763 = pneg %p417
        %p764 = pneg %p414
        %p765 = pneg %p438
        %p766 = pneg %p435
        %p767 = pneg %p464
        %p768 = pneg %p461
        %s769 = smul.u32 2, %s34
        %p770 = scmp.lt.s32.totalorder %s35, 1
        %s771 = scalar_select %p770, %s35, 1
        %s772 = smul.addr %s771, 4
        %s773 = smul.addr %s772, 8
        %s774 = scalar_lea.vmem %s2, %s773
        %p775 = scmp.lt.s32.totalorder %s35, 1
        %s776 = scalar_select %p775, %s35, 1
        %s777 = scalar_lea.vmem %s3, %s776
        %p778 = scmp.lt.s32.totalorder %s35, 1
        %s779 = scalar_select %p778, %s35, 1
        %s780 = smul.addr %s779, 4
        %s781 = smul.addr %s780, 8
        %s782 = scalar_lea.vmem %s4, %s781
        %p783 = scmp.lt.s32.totalorder %s35, 1
        %s784 = scalar_select %p783, %s35, 1
        %s785 = smul.addr %s784, 4
        %s786 = smul.addr %s785, 8
        %s787 = scalar_lea.vmem %s8, %s786
        %p788 = scmp.lt.s32.totalorder %s35, 1
        %s789 = scalar_select %p788, %s35, 1
        %s790 = smul.addr %s789, 8
        %s791 = smul.addr %s790, 8
        %s792 = scalar_lea.vmem %s10, %s791
        %p793 = scmp.lt.s32.totalorder %s35, 1
        %s794 = scalar_select %p793, %s35, 1
        %s795 = scalar_lea.vmem %s11, %s794
        %p796 = scmp.lt.s32.totalorder %s35, 1
        %s797 = scalar_select %p796, %s35, 1
        %s798 = scalar_lea.vmem %s12, %s797
        %p799 = scmp.lt.s32.totalorder %s35, 1
        %s800 = scalar_select %p799, %s35, 1
        %s801 = scalar_lea.vmem %s13, %s800
        %p802 = scmp.eq.s32.totalorder %s35, 0
        // Predicated region
        $region109: #{tpu_custom_call.1} parent=83 // pred_check
          %p803 = pneg %p802
        $region110: #{tpu_custom_call.1} parent=83 // pred_check_branch
          %805 = sbr.rel (%p803) target = $region112
        $region111: #{tpu_custom_call.1} parent=83 // pred_region
          %v806 = vld [vmem:[#allocation3] sm:$0xff]
          %v807 = vld [vmem:[#allocation3 + $0x8] sm:$0xff]
          %v808 = vld [vmem:[#allocation6] sm:$0xff]
          %v809 = vadd.f32 %v806, %v808
          %v810 = vadd.f32 %v807, %v808
          %vm811 = vcmask 261120
          %812 = vst.msk [vmem:[#allocation2] sm:$0xff] %vm811, %v809
          %813 = vst.msk [vmem:[#allocation2 + $0x8] sm:$0xff] %vm811, %v810
        $region112: #{tpu_custom_call.1} parent=83 // pred_fallthru
          _
        %v814 = vld [vmem:[#allocation2] sm:$0xff]
        %v815 = vld [vmem:[#allocation2 + $0x8] sm:$0xff]
        %v816 = vld [vmem:[%s774] sm:$0xff]
        %v817 = vld [vmem:[%s774 + $0x8] sm:$0xff]
        %v818 = vld [vmem:[%s774 + $0x10] sm:$0xff]
        %v819 = vld [vmem:[%s774 + $0x18] sm:$0xff]
        %v820 = vld [vmem:[%s777] sm:$0x1]
        %v822 = vlaneseq
        %v823 = vshrl.u32 %v822, 7
        %v824 = vsub.s32 0, %v823
        %v825 = vrot.slane %v820, %v824
        %vm827 = vcmask 261120
        %v829 = vsel %vm827, %v814, 0
        %v832 = vsel %vm827, %v815, 0
        %834 = vmatprep.subr.mxu0 0.0
        %835 = vmatpush1.msra.mxu0 %v816
        %836 = vmatprep.subr.mxu0 0.0
        %837 = vmatpush1.msra.mxu0 %v817
        %838 = vmatprep.subr.mxu0 0.0
        %839 = vmatpush1.msra.mxu0 %v818
        %840 = vmatprep.subr.mxu0 0.0
        %841 = vmatpush1.msra.mxu0 %v819
        %842 = vmatprep.subr.mxu0 0.0
        %843 = vmatpush1.msra.mxu0 0.0
        %844 = vmatprep.subr.mxu0 0.0
        %845 = vmatpush1.msra.mxu0 0.0
        %846 = vmatprep.subr.mxu0 0.0
        %847 = vmatpush1.msra.mxu0 0.0
        %848 = vmatprep.subr.mxu0 0.0
        %849 = vmatpush1.msra.mxu0 0.0
        %850 = vmatprep.subr.mxu0 0.0
        %851 = vmatpush1.msra.mxu0 0.0
        %852 = vmatprep.subr.mxu0 0.0
        %853 = vmatpush1.msra.mxu0 0.0
        %854 = vmatprep.subr.mxu0 0.0
        %855 = vmatpush1.msra.mxu0 0.0
        %856 = vmatprep.subr.mxu0 0.0
        %857 = vmatpush1.msra.mxu0 0.0
        %858 = vmatprep.subr.mxu0 0.0
        %859 = vmatpush1.msra.mxu0 0.0
        %860 = vmatprep.subr.mxu0 0.0
        %861 = vmatpush1.msra.mxu0 0.0
        %862 = vmatprep.subr.mxu0 0.0
        %863 = vmatpush1.msra.mxu0 0.0
        %864 = vmatprep.subr.mxu0 0.0
        %865 = vmatpush1.msra.mxu0 0.0
        %866 = vmatprep.subr.mxu0 0.0
        %867 = vmatpush1.msra.mxu0 0.0
        %868 = vmatprep.subr.mxu0 0.0
        %869 = vmatpush1.msra.mxu0 0.0
        %870 = vmatprep.subr.mxu0 0.0
        %871 = vmatpush1.msra.mxu0 0.0
        %872 = vmatprep.subr.mxu0 0.0
        %873 = vmatpush1.msra.mxu0 0.0
        %874 = vmatprep.subr.mxu0 0.0
        %875 = vmatpush1.msra.mxu0 0.0
        %876 = vmatprep.subr.mxu0 0.0
        %877 = vmatpush1.msra.mxu0 0.0
        %878 = vmatprep.subr.mxu0 0.0
        %879 = vmatpush1.msra.mxu0 0.0
        %880 = vmatprep.subr.mxu0 0.0
        %881 = vmatpush1.msra.mxu0 0.0
        %882 = vmatprep.subr.mxu0 0.0
        %883 = vmatpush1.msra.mxu0 0.0
        %884 = vmatprep.subr.mxu0 0.0
        %885 = vmatpush1.msra.mxu0 0.0
        %886 = vmatprep.subr.mxu0 0.0
        %887 = vmatpush1.msra.mxu0 0.0
        %888 = vmatprep.subr.mxu0 0.0
        %889 = vmatpush1.msra.mxu0 0.0
        %890 = vmatprep.subr.mxu0 0.0
        %891 = vmatpush1.msra.mxu0 0.0
        %892 = vmatprep.subr.mxu0 0.0
        %893 = vmatpush1.msra.mxu0 0.0
        %894 = vmatprep.subr.mxu0 0.0
        %895 = vmatpush1.msra.mxu0 0.0
        %896 = vmatprep.subr.mxu0 0.0
        %897 = vmatpush1.msra.mxu0 0.0
        %898 = vmatprep.mubr.f32.mxu0 0.0
        %899 = vmatmul.mubr.f32.gmra.mrb[0].mxu0 %v829
        %v900 = vpop.f32.mrb[0].mxu0
        %v901 = vadd.f32 %v825, %v900
        %v902 = vpop.f32.mrb[0].mxu0
        %903 = vmatprep.mubr.f32.mxu0 0.0
        %904 = vmatmul.mubr.f32.gmra.mrb[0].mxu0 %v832
        %v905 = vpop.f32.mrb[0].mxu0
        %v906 = vadd.f32 %v825, %v905
        %v907 = vpop.f32.mrb[0].mxu0
        %908 = vdwg.mxu0
        %v909 = vld [vmem:[%s782] sm:$0xff]
        %v910 = vld [vmem:[%s782 + $0x8] sm:$0xff]
        %v911 = vld [vmem:[%s782 + $0x10] sm:$0xff]
        %v912 = vld [vmem:[%s782 + $0x18] sm:$0xff]
        %914 = vrot.lane.b32.xlu0 %v901, 96
        %v915 = vpop.permute.xlu0 %914
        %vm916 = vcmask 64512
        %v917 = vsel %vm916, %v901, 0
        %v919 = vsel %vm916, %v915, 0
        %921 = vmatprep.subr.mxu0 0.0
        %922 = vmatpush1.xpose.msra.mxu0 %v919
        %923 = vmatprep.subr.mxu0 0.0
        %924 = vmatpush1.xpose.msra.mxu0 0.0
        %925 = vmatprep.subr.mxu0 0.0
        %926 = vmatpush1.xpose.msra.mxu0 0.0
        %927 = vmatprep.subr.mxu0 0.0
        %928 = vmatpush1.xpose.msra.mxu0 0.0
        %929 = vmatprep.subr.mxu0 0.0
        %930 = vmatpush1.xpose.msra.mxu0 0.0
        %931 = vmatprep.subr.mxu0 0.0
        %932 = vmatpush1.xpose.msra.mxu0 0.0
        %933 = vmatprep.subr.mxu0 0.0
        %934 = vmatpush1.xpose.msra.mxu0 0.0
        %935 = vmatprep.subr.mxu0 0.0
        %936 = vmatpush1.xpose.msra.mxu0 0.0
        %937 = vmatprep.subr.mxu0 0.0
        %938 = vmatpush1.xpose.msra.mxu0 0.0
        %939 = vmatprep.subr.mxu0 0.0
        %940 = vmatpush1.xpose.msra.mxu0 0.0
        %941 = vmatprep.subr.mxu0 0.0
        %942 = vmatpush1.xpose.msra.mxu0 0.0
        %943 = vmatprep.subr.mxu0 0.0
        %944 = vmatpush1.xpose.msra.mxu0 0.0
        %945 = vmatprep.subr.mxu0 0.0
        %946 = vmatpush1.xpose.msra.mxu0 0.0
        %947 = vmatprep.subr.mxu0 0.0
        %948 = vmatpush1.xpose.msra.mxu0 0.0
        %949 = vmatprep.subr.mxu0 0.0
        %950 = vmatpush1.xpose.msra.mxu0 0.0
        %951 = vmatprep.subr.mxu0 0.0
        %952 = vmatpush1.xpose.msra.mxu0 0.0
        %953 = vmatprep.subr.mxu0 0.0
        %954 = vmatpush1.xpose.msra.mxu0 0.0
        %955 = vmatprep.subr.mxu0 0.0
        %956 = vmatpush1.xpose.msra.mxu0 0.0
        %957 = vmatprep.subr.mxu0 0.0
        %958 = vmatpush1.xpose.msra.mxu0 0.0
        %959 = vmatprep.subr.mxu0 0.0
        %960 = vmatpush1.xpose.msra.mxu0 0.0
        %961 = vmatprep.subr.mxu0 0.0
        %962 = vmatpush1.xpose.msra.mxu0 0.0
        %963 = vmatprep.subr.mxu0 0.0
        %964 = vmatpush1.xpose.msra.mxu0 0.0
        %965 = vmatprep.subr.mxu0 0.0
        %966 = vmatpush1.xpose.msra.mxu0 0.0
        %967 = vmatprep.subr.mxu0 0.0
        %968 = vmatpush1.xpose.msra.mxu0 0.0
        %969 = vmatprep.subr.mxu0 0.0
        %970 = vmatpush1.xpose.msra.mxu0 0.0
        %971 = vmatprep.subr.mxu0 0.0
        %972 = vmatpush1.xpose.msra.mxu0 0.0
        %973 = vmatprep.subr.mxu0 0.0
        %974 = vmatpush1.xpose.msra.mxu0 0.0
        %975 = vmatprep.subr.mxu0 0.0
        %976 = vmatpush1.xpose.msra.mxu0 0.0
        %977 = vmatprep.subr.mxu0 0.0
        %978 = vmatpush1.xpose.msra.mxu0 0.0
        %979 = vmatprep.subr.mxu0 0.0
        %980 = vmatpush1.xpose.msra.mxu0 0.0
        %981 = vmatprep.subr.mxu0 0.0
        %982 = vmatpush1.xpose.msra.mxu0 0.0
        %983 = vmatprep.subr.mxu0 0.0
        %984 = vmatpush1.xpose.msra.mxu0 0.0
        %985 = vmatprep.mubr.f32.mxu0 0.0
        %986 = vmatmul.mubr.f32.gmra.mrb[0].mxu0 %v917
        %v987 = vpop.f32.mrb[0].mxu0
        %v988 = vadd.f32 0.0, %v987
        %v989 = vpop.f32.mrb[0].mxu0
        %990 = vdwg.mxu0
        %v991 = vsel %vm916, %v988, -inf
        %992 = vmax.xlane.f32.xlu0 %v991
        %v993 = vpop.xlane.xlu0 %992
        %v994 = vsub.f32 %v988, %v993
        %v995 = vmul.f32 %v994, 1.442695
        %v996 = vpow.pop %v995
        %v997 = vsel %vm916, %v996, 0.0
        %998 = vadd.xlane.f32.xlu0 %v997
        %v999 = vpop.xlane.xlu0 %998
        %v1000 = vrcp.pop %v999
        %v1001 = vmul.f32 %v996, %v1000
        %1002 = vrot.lane.b32.xlu0 %v901, 64
        %v1003 = vpop.permute.xlu0 %1002
        %v1006 = vsel %vm916, %v1001, 0
        %1008 = vmatprep.subr.mxu0 0.0
        %1009 = vmatpush1.msra.mxu0 %v1003
        %1010 = vmatprep.subr.mxu0 0.0
        %1011 = vmatpush1.msra.mxu0 0.0
        %1012 = vmatprep.subr.mxu0 0.0
        %1013 = vmatpush1.msra.mxu0 0.0
        %1014 = vmatprep.subr.mxu0 0.0
        %1015 = vmatpush1.msra.mxu0 0.0
        %1016 = vmatprep.subr.mxu0 0.0
        %1017 = vmatpush1.msra.mxu0 0.0
        %1018 = vmatprep.subr.mxu0 0.0
        %1019 = vmatpush1.msra.mxu0 0.0
        %1020 = vmatprep.subr.mxu0 0.0
        %1021 = vmatpush1.msra.mxu0 0.0
        %1022 = vmatprep.subr.mxu0 0.0
        %1023 = vmatpush1.msra.mxu0 0.0
        %1024 = vmatprep.subr.mxu0 0.0
        %1025 = vmatpush1.msra.mxu0 0.0
        %1026 = vmatprep.subr.mxu0 0.0
        %1027 = vmatpush1.msra.mxu0 0.0
        %1028 = vmatprep.subr.mxu0 0.0
        %1029 = vmatpush1.msra.mxu0 0.0
        %1030 = vmatprep.subr.mxu0 0.0
        %1031 = vmatpush1.msra.mxu0 0.0
        %1032 = vmatprep.subr.mxu0 0.0
        %1033 = vmatpush1.msra.mxu0 0.0
        %1034 = vmatprep.subr.mxu0 0.0
        %1035 = vmatpush1.msra.mxu0 0.0
        %1036 = vmatprep.subr.mxu0 0.0
        %1037 = vmatpush1.msra.mxu0 0.0
        %1038 = vmatprep.subr.mxu0 0.0
        %1039 = vmatpush1.msra.mxu0 0.0
        %1040 = vmatprep.subr.mxu0 0.0
        %1041 = vmatpush1.msra.mxu0 0.0
        %1042 = vmatprep.subr.mxu0 0.0
        %1043 = vmatpush1.msra.mxu0 0.0
        %1044 = vmatprep.subr.mxu0 0.0
        %1045 = vmatpush1.msra.mxu0 0.0
        %1046 = vmatprep.subr.mxu0 0.0
        %1047 = vmatpush1.msra.mxu0 0.0
        %1048 = vmatprep.subr.mxu0 0.0
        %1049 = vmatpush1.msra.mxu0 0.0
        %1050 = vmatprep.subr.mxu0 0.0
        %1051 = vmatpush1.msra.mxu0 0.0
        %1052 = vmatprep.subr.mxu0 0.0
        %1053 = vmatpush1.msra.mxu0 0.0
        %1054 = vmatprep.subr.mxu0 0.0
        %1055 = vmatpush1.msra.mxu0 0.0
        %1056 = vmatprep.subr.mxu0 0.0
        %1057 = vmatpush1.msra.mxu0 0.0
        %1058 = vmatprep.subr.mxu0 0.0
        %1059 = vmatpush1.msra.mxu0 0.0
        %1060 = vmatprep.subr.mxu0 0.0
        %1061 = vmatpush1.msra.mxu0 0.0
        %1062 = vmatprep.subr.mxu0 0.0
        %1063 = vmatpush1.msra.mxu0 0.0
        %1064 = vmatprep.subr.mxu0 0.0
        %1065 = vmatpush1.msra.mxu0 0.0
        %1066 = vmatprep.subr.mxu0 0.0
        %1067 = vmatpush1.msra.mxu0 0.0
        %1068 = vmatprep.subr.mxu0 0.0
        %1069 = vmatpush1.msra.mxu0 0.0
        %1070 = vmatprep.subr.mxu0 0.0
        %1071 = vmatpush1.msra.mxu0 0.0
        %1072 = vmatprep.mubr.f32.mxu0 0.0
        %1073 = vmatmul.mubr.f32.gmra.mrb[0].mxu0 %v1006
        %v1074 = vpop.f32.mrb[0].mxu0
        %v1075 = vadd.f32 0.0, %v1074
        %v1076 = vpop.f32.mrb[0].mxu0
        %1077 = vdwg.mxu0
        %1078 = vrot.lane.b32.xlu0 %v901, 120
        %v1079 = vpop.permute.xlu0 %1078
        %1080 = vrot.lane.b32.xlu0 %v901, 88
        %v1081 = vpop.permute.xlu0 %1080
        %v1082 = vsel %vm916, %v1079, 0
        %v1084 = vsel %vm916, %v1081, 0
        %1086 = vmatprep.subr.mxu0 0.0
        %1087 = vmatpush1.xpose.msra.mxu0 %v1084
        %1088 = vmatprep.subr.mxu0 0.0
        %1089 = vmatpush1.xpose.msra.mxu0 0.0
        %1090 = vmatprep.subr.mxu0 0.0
        %1091 = vmatpush1.xpose.msra.mxu0 0.0
        %1092 = vmatprep.subr.mxu0 0.0
        %1093 = vmatpush1.xpose.msra.mxu0 0.0
        %1094 = vmatprep.subr.mxu0 0.0
        %1095 = vmatpush1.xpose.msra.mxu0 0.0
        %1096 = vmatprep.subr.mxu0 0.0
        %1097 = vmatpush1.xpose.msra.mxu0 0.0
        %1098 = vmatprep.subr.mxu0 0.0
        %1099 = vmatpush1.xpose.msra.mxu0 0.0
        %1100 = vmatprep.subr.mxu0 0.0
        %1101 = vmatpush1.xpose.msra.mxu0 0.0
        %1102 = vmatprep.subr.mxu0 0.0
        %1103 = vmatpush1.xpose.msra.mxu0 0.0
        %1104 = vmatprep.subr.mxu0 0.0
        %1105 = vmatpush1.xpose.msra.mxu0 0.0
        %1106 = vmatprep.subr.mxu0 0.0
        %1107 = vmatpush1.xpose.msra.mxu0 0.0
        %1108 = vmatprep.subr.mxu0 0.0
        %1109 = vmatpush1.xpose.msra.mxu0 0.0
        %1110 = vmatprep.subr.mxu0 0.0
        %1111 = vmatpush1.xpose.msra.mxu0 0.0
        %1112 = vmatprep.subr.mxu0 0.0
        %1113 = vmatpush1.xpose.msra.mxu0 0.0
        %1114 = vmatprep.subr.mxu0 0.0
        %1115 = vmatpush1.xpose.msra.mxu0 0.0
        %1116 = vmatprep.subr.mxu0 0.0
        %1117 = vmatpush1.xpose.msra.mxu0 0.0
        %1118 = vmatprep.subr.mxu0 0.0
        %1119 = vmatpush1.xpose.msra.mxu0 0.0
        %1120 = vmatprep.subr.mxu0 0.0
        %1121 = vmatpush1.xpose.msra.mxu0 0.0
        %1122 = vmatprep.subr.mxu0 0.0
        %1123 = vmatpush1.xpose.msra.mxu0 0.0
        %1124 = vmatprep.subr.mxu0 0.0
        %1125 = vmatpush1.xpose.msra.mxu0 0.0
        %1126 = vmatprep.subr.mxu0 0.0
        %1127 = vmatpush1.xpose.msra.mxu0 0.0
        %1128 = vmatprep.subr.mxu0 0.0
        %1129 = vmatpush1.xpose.msra.mxu0 0.0
        %1130 = vmatprep.subr.mxu0 0.0
        %1131 = vmatpush1.xpose.msra.mxu0 0.0
        %1132 = vmatprep.subr.mxu0 0.0
        %1133 = vmatpush1.xpose.msra.mxu0 0.0
        %1134 = vmatprep.subr.mxu0 0.0
        %1135 = vmatpush1.xpose.msra.mxu0 0.0
        %1136 = vmatprep.subr.mxu0 0.0
        %1137 = vmatpush1.xpose.msra.mxu0 0.0
        %1138 = vmatprep.subr.mxu0 0.0
        %1139 = vmatpush1.xpose.msra.mxu0 0.0
        %1140 = vmatprep.subr.mxu0 0.0
        %1141 = vmatpush1.xpose.msra.mxu0 0.0
        %1142 = vmatprep.subr.mxu0 0.0
        %1143 = vmatpush1.xpose.msra.mxu0 0.0
        %1144 = vmatprep.subr.mxu0 0.0
        %1145 = vmatpush1.xpose.msra.mxu0 0.0
        %1146 = vmatprep.subr.mxu0 0.0
        %1147 = vmatpush1.xpose.msra.mxu0 0.0
        %1148 = vmatprep.subr.mxu0 0.0
        %1149 = vmatpush1.xpose.msra.mxu0 0.0
        %1150 = vmatprep.mubr.f32.mxu0 0.0
        %1151 = vmatmul.mubr.f32.gmra.mrb[0].mxu0 %v1082
        %v1152 = vpop.f32.mrb[0].mxu0
        %v1153 = vadd.f32 0.0, %v1152
        %v1154 = vpop.f32.mrb[0].mxu0
        %1155 = vdwg.mxu0
        %v1156 = vsel %vm916, %v1153, -inf
        %1157 = vmax.xlane.f32.xlu0 %v1156
        %v1158 = vpop.xlane.xlu0 %1157
        %v1159 = vsub.f32 %v1153, %v1158
        %v1160 = vmul.f32 %v1159, 1.442695
        %v1161 = vpow.pop %v1160
        %v1162 = vsel %vm916, %v1161, 0.0
        %1163 = vadd.xlane.f32.xlu0 %v1162
        %v1164 = vpop.xlane.xlu0 %1163
        %v1165 = vrcp.pop %v1164
        %v1166 = vmul.f32 %v1161, %v1165
        %1167 = vrot.lane.b32.xlu0 %v901, 56
        %v1168 = vpop.permute.xlu0 %1167
        %v1171 = vsel %vm916, %v1166, 0
        %1173 = vmatprep.subr.mxu0 0.0
        %1174 = vmatpush1.msra.mxu0 %v1168
        %1175 = vmatprep.subr.mxu0 0.0
        %1176 = vmatpush1.msra.mxu0 0.0
        %1177 = vmatprep.subr.mxu0 0.0
        %1178 = vmatpush1.msra.mxu0 0.0
        %1179 = vmatprep.subr.mxu0 0.0
        %1180 = vmatpush1.msra.mxu0 0.0
        %1181 = vmatprep.subr.mxu0 0.0
        %1182 = vmatpush1.msra.mxu0 0.0
        %1183 = vmatprep.subr.mxu0 0.0
        %1184 = vmatpush1.msra.mxu0 0.0
        %1185 = vmatprep.subr.mxu0 0.0
        %1186 = vmatpush1.msra.mxu0 0.0
        %1187 = vmatprep.subr.mxu0 0.0
        %1188 = vmatpush1.msra.mxu0 0.0
        %1189 = vmatprep.subr.mxu0 0.0
        %1190 = vmatpush1.msra.mxu0 0.0
        %1191 = vmatprep.subr.mxu0 0.0
        %1192 = vmatpush1.msra.mxu0 0.0
        %1193 = vmatprep.subr.mxu0 0.0
        %1194 = vmatpush1.msra.mxu0 0.0
        %1195 = vmatprep.subr.mxu0 0.0
        %1196 = vmatpush1.msra.mxu0 0.0
        %1197 = vmatprep.subr.mxu0 0.0
        %1198 = vmatpush1.msra.mxu0 0.0
        %1199 = vmatprep.subr.mxu0 0.0
        %1200 = vmatpush1.msra.mxu0 0.0
        %1201 = vmatprep.subr.mxu0 0.0
        %1202 = vmatpush1.msra.mxu0 0.0
        %1203 = vmatprep.subr.mxu0 0.0
        %1204 = vmatpush1.msra.mxu0 0.0
        %1205 = vmatprep.subr.mxu0 0.0
        %1206 = vmatpush1.msra.mxu0 0.0
        %1207 = vmatprep.subr.mxu0 0.0
        %1208 = vmatpush1.msra.mxu0 0.0
        %1209 = vmatprep.subr.mxu0 0.0
        %1210 = vmatpush1.msra.mxu0 0.0
        %1211 = vmatprep.subr.mxu0 0.0
        %1212 = vmatpush1.msra.mxu0 0.0
        %1213 = vmatprep.subr.mxu0 0.0
        %1214 = vmatpush1.msra.mxu0 0.0
        %1215 = vmatprep.subr.mxu0 0.0
        %1216 = vmatpush1.msra.mxu0 0.0
        %1217 = vmatprep.subr.mxu0 0.0
        %1218 = vmatpush1.msra.mxu0 0.0
        %1219 = vmatprep.subr.mxu0 0.0
        %1220 = vmatpush1.msra.mxu0 0.0
        %1221 = vmatprep.subr.mxu0 0.0
        %1222 = vmatpush1.msra.mxu0 0.0
        %1223 = vmatprep.subr.mxu0 0.0
        %1224 = vmatpush1.msra.mxu0 0.0
        %1225 = vmatprep.subr.mxu0 0.0
        %1226 = vmatpush1.msra.mxu0 0.0
        %1227 = vmatprep.subr.mxu0 0.0
        %1228 = vmatpush1.msra.mxu0 0.0
        %1229 = vmatprep.subr.mxu0 0.0
        %1230 = vmatpush1.msra.mxu0 0.0
        %1231 = vmatprep.subr.mxu0 0.0
        %1232 = vmatpush1.msra.mxu0 0.0
        %1233 = vmatprep.subr.mxu0 0.0
        %1234 = vmatpush1.msra.mxu0 0.0
        %1235 = vmatprep.subr.mxu0 0.0
        %1236 = vmatpush1.msra.mxu0 0.0
        %1237 = vmatprep.mubr.f32.mxu0 0.0
        %1238 = vmatmul.mubr.f32.gmra.mrb[0].mxu0 %v1171
        %v1239 = vpop.f32.mrb[0].mxu0
        %v1240 = vadd.f32 0.0, %v1239
        %v1241 = vpop.f32.mrb[0].mxu0
        %1242 = vdwg.mxu0
        %v1244 = vsel %vm916, %v1240, 0
        %1246 = vmatprep.subr.mxu0 0.0
        %1247 = vmatpush1.msra.mxu0 %v910
        %1248 = vmatprep.subr.mxu0 0.0
        %1249 = vmatpush1.msra.mxu0 0.0
        %1250 = vmatprep.subr.mxu0 0.0
        %1251 = vmatpush1.msra.mxu0 0.0
        %1252 = vmatprep.subr.mxu0 0.0
        %1253 = vmatpush1.msra.mxu0 0.0
        %1254 = vmatprep.subr.mxu0 0.0
        %1255 = vmatpush1.msra.mxu0 0.0
        %1256 = vmatprep.subr.mxu0 0.0
        %1257 = vmatpush1.msra.mxu0 0.0
        %1258 = vmatprep.subr.mxu0 0.0
        %1259 = vmatpush1.msra.mxu0 0.0
        %1260 = vmatprep.subr.mxu0 0.0
        %1261 = vmatpush1.msra.mxu0 0.0
        %1262 = vmatprep.subr.mxu0 0.0
        %1263 = vmatpush1.msra.mxu0 0.0
        %1264 = vmatprep.subr.mxu0 0.0
        %1265 = vmatpush1.msra.mxu0 0.0
        %1266 = vmatprep.subr.mxu0 0.0
        %1267 = vmatpush1.msra.mxu0 0.0
        %1268 = vmatprep.subr.mxu0 0.0
        %1269 = vmatpush1.msra.mxu0 0.0
        %1270 = vmatprep.subr.mxu0 0.0
        %1271 = vmatpush1.msra.mxu0 0.0
        %1272 = vmatprep.subr.mxu0 0.0
        %1273 = vmatpush1.msra.mxu0 0.0
        %1274 = vmatprep.subr.mxu0 0.0
        %1275 = vmatpush1.msra.mxu0 0.0
        %1276 = vmatprep.subr.mxu0 0.0
        %1277 = vmatpush1.msra.mxu0 0.0
        %1278 = vmatprep.subr.mxu0 0.0
        %1279 = vmatpush1.msra.mxu0 0.0
        %1280 = vmatprep.subr.mxu0 0.0
        %1281 = vmatpush1.msra.mxu0 0.0
        %1282 = vmatprep.subr.mxu0 0.0
        %1283 = vmatpush1.msra.mxu0 0.0
        %1284 = vmatprep.subr.mxu0 0.0
        %1285 = vmatpush1.msra.mxu0 0.0
        %1286 = vmatprep.subr.mxu0 0.0
        %1287 = vmatpush1.msra.mxu0 0.0
        %1288 = vmatprep.subr.mxu0 0.0
        %1289 = vmatpush1.msra.mxu0 0.0
        %1290 = vmatprep.subr.mxu0 0.0
        %1291 = vmatpush1.msra.mxu0 0.0
        %1292 = vmatprep.subr.mxu0 0.0
        %1293 = vmatpush1.msra.mxu0 0.0
        %1294 = vmatprep.subr.mxu0 0.0
        %1295 = vmatpush1.msra.mxu0 0.0
        %1296 = vmatprep.subr.mxu0 0.0
        %1297 = vmatpush1.msra.mxu0 0.0
        %1298 = vmatprep.subr.mxu0 0.0
        %1299 = vmatpush1.msra.mxu0 0.0
        %1300 = vmatprep.subr.mxu0 0.0
        %1301 = vmatpush1.msra.mxu0 0.0
        %1302 = vmatprep.subr.mxu0 0.0
        %1303 = vmatpush1.msra.mxu0 0.0
        %1304 = vmatprep.subr.mxu0 0.0
        %1305 = vmatpush1.msra.mxu0 0.0
        %1306 = vmatprep.subr.mxu0 0.0
        %1307 = vmatpush1.msra.mxu0 0.0
        %1308 = vmatprep.subr.mxu0 0.0
        %1309 = vmatpush1.msra.mxu0 0.0
        %1310 = vmatprep.mubr.f32.mxu0 0.0
        %1311 = vmatmul.mubr.f32.gmra.mrb[0].mxu0 %v1244
        %v1312 = vpop.f32.mrb[0].mxu0
        %v1313 = vadd.f32 0.0, %v1312
        %v1314 = vpop.f32.mrb[0].mxu0
        %1315 = vdwg.mxu0
        %v1317 = vsel %vm916, %v1075, 0
        %1319 = vmatprep.subr.mxu0 0.0
        %1320 = vmatpush1.msra.mxu0 %v909
        %1321 = vmatprep.subr.mxu0 0.0
        %1322 = vmatpush1.msra.mxu0 0.0
        %1323 = vmatprep.subr.mxu0 0.0
        %1324 = vmatpush1.msra.mxu0 0.0
        %1325 = vmatprep.subr.mxu0 0.0
        %1326 = vmatpush1.msra.mxu0 0.0
        %1327 = vmatprep.subr.mxu0 0.0
        %1328 = vmatpush1.msra.mxu0 0.0
        %1329 = vmatprep.subr.mxu0 0.0
        %1330 = vmatpush1.msra.mxu0 0.0
        %1331 = vmatprep.subr.mxu0 0.0
        %1332 = vmatpush1.msra.mxu0 0.0
        %1333 = vmatprep.subr.mxu0 0.0
        %1334 = vmatpush1.msra.mxu0 0.0
        %1335 = vmatprep.subr.mxu0 0.0
        %1336 = vmatpush1.msra.mxu0 0.0
        %1337 = vmatprep.subr.mxu0 0.0
        %1338 = vmatpush1.msra.mxu0 0.0
        %1339 = vmatprep.subr.mxu0 0.0
        %1340 = vmatpush1.msra.mxu0 0.0
        %1341 = vmatprep.subr.mxu0 0.0
        %1342 = vmatpush1.msra.mxu0 0.0
        %1343 = vmatprep.subr.mxu0 0.0
        %1344 = vmatpush1.msra.mxu0 0.0
        %1345 = vmatprep.subr.mxu0 0.0
        %1346 = vmatpush1.msra.mxu0 0.0
        %1347 = vmatprep.subr.mxu0 0.0
        %1348 = vmatpush1.msra.mxu0 0.0
        %1349 = vmatprep.subr.mxu0 0.0
        %1350 = vmatpush1.msra.mxu0 0.0
        %1351 = vmatprep.subr.mxu0 0.0
        %1352 = vmatpush1.msra.mxu0 0.0
        %1353 = vmatprep.subr.mxu0 0.0
        %1354 = vmatpush1.msra.mxu0 0.0
        %1355 = vmatprep.subr.mxu0 0.0
        %1356 = vmatpush1.msra.mxu0 0.0
        %1357 = vmatprep.subr.mxu0 0.0
        %1358 = vmatpush1.msra.mxu0 0.0
        %1359 = vmatprep.subr.mxu0 0.0
        %1360 = vmatpush1.msra.mxu0 0.0
        %1361 = vmatprep.subr.mxu0 0.0
        %1362 = vmatpush1.msra.mxu0 0.0
        %1363 = vmatprep.subr.mxu0 0.0
        %1364 = vmatpush1.msra.mxu0 0.0
        %1365 = vmatprep.subr.mxu0 0.0
        %1366 = vmatpush1.msra.mxu0 0.0
        %1367 = vmatprep.subr.mxu0 0.0
        %1368 = vmatpush1.msra.mxu0 0.0
        %1369 = vmatprep.subr.mxu0 0.0
        %1370 = vmatpush1.msra.mxu0 0.0
        %1371 = vmatprep.subr.mxu0 0.0
        %1372 = vmatpush1.msra.mxu0 0.0
        %1373 = vmatprep.subr.mxu0 0.0
        %1374 = vmatpush1.msra.mxu0 0.0
        %1375 = vmatprep.subr.mxu0 0.0
        %1376 = vmatpush1.msra.mxu0 0.0
        %1377 = vmatprep.subr.mxu0 0.0
        %1378 = vmatpush1.msra.mxu0 0.0
        %1379 = vmatprep.subr.mxu0 0.0
        %1380 = vmatpush1.msra.mxu0 0.0
        %1381 = vmatprep.subr.mxu0 0.0
        %1382 = vmatpush1.msra.mxu0 0.0
        %1383 = vmatprep.mubr.f32.mxu0 0.0
        %1384 = vmatmul.mubr.f32.gmra.mrb[0].mxu0 %v1317
        %v1385 = vpop.f32.mrb[0].mxu0
        %v1386 = vadd.f32 %v1313, %v1385
        %v1387 = vpop.f32.mrb[0].mxu0
        %1388 = vdwg.mxu0
        %1389 = vrot.lane.b32.xlu0 %v901, 112
        %v1390 = vpop.permute.xlu0 %1389
        %1391 = vrot.lane.b32.xlu0 %v901, 80
        %v1392 = vpop.permute.xlu0 %1391
        %v1393 = vsel %vm916, %v1390, 0
        %v1395 = vsel %vm916, %v1392, 0
        %1397 = vmatprep.subr.mxu0 0.0
        %1398 = vmatpush1.xpose.msra.mxu0 %v1395
        %1399 = vmatprep.subr.mxu0 0.0
        %1400 = vmatpush1.xpose.msra.mxu0 0.0
        %1401 = vmatprep.subr.mxu0 0.0
        %1402 = vmatpush1.xpose.msra.mxu0 0.0
        %1403 = vmatprep.subr.mxu0 0.0
        %1404 = vmatpush1.xpose.msra.mxu0 0.0
        %1405 = vmatprep.subr.mxu0 0.0
        %1406 = vmatpush1.xpose.msra.mxu0 0.0
        %1407 = vmatprep.subr.mxu0 0.0
        %1408 = vmatpush1.xpose.msra.mxu0 0.0
        %1409 = vmatprep.subr.mxu0 0.0
        %1410 = vmatpush1.xpose.msra.mxu0 0.0
        %1411 = vmatprep.subr.mxu0 0.0
        %1412 = vmatpush1.xpose.msra.mxu0 0.0
        %1413 = vmatprep.subr.mxu0 0.0
        %1414 = vmatpush1.xpose.msra.mxu0 0.0
        %1415 = vmatprep.subr.mxu0 0.0
        %1416 = vmatpush1.xpose.msra.mxu0 0.0
        %1417 = vmatprep.subr.mxu0 0.0
        %1418 = vmatpush1.xpose.msra.mxu0 0.0
        %1419 = vmatprep.subr.mxu0 0.0
        %1420 = vmatpush1.xpose.msra.mxu0 0.0
        %1421 = vmatprep.subr.mxu0 0.0
        %1422 = vmatpush1.xpose.msra.mxu0 0.0
        %1423 = vmatprep.subr.mxu0 0.0
        %1424 = vmatpush1.xpose.msra.mxu0 0.0
        %1425 = vmatprep.subr.mxu0 0.0
        %1426 = vmatpush1.xpose.msra.mxu0 0.0
        %1427 = vmatprep.subr.mxu0 0.0
        %1428 = vmatpush1.xpose.msra.mxu0 0.0
        %1429 = vmatprep.subr.mxu0 0.0
        %1430 = vmatpush1.xpose.msra.mxu0 0.0
        %1431 = vmatprep.subr.mxu0 0.0
        %1432 = vmatpush1.xpose.msra.mxu0 0.0
        %1433 = vmatprep.subr.mxu0 0.0
        %1434 = vmatpush1.xpose.msra.mxu0 0.0
        %1435 = vmatprep.subr.mxu0 0.0
        %1436 = vmatpush1.xpose.msra.mxu0 0.0
        %1437 = vmatprep.subr.mxu0 0.0
        %1438 = vmatpush1.xpose.msra.mxu0 0.0
        %1439 = vmatprep.subr.mxu0 0.0
        %1440 = vmatpush1.xpose.msra.mxu0 0.0
        %1441 = vmatprep.subr.mxu0 0.0
        %1442 = vmatpush1.xpose.msra.mxu0 0.0
        %1443 = vmatprep.subr.mxu0 0.0
        %1444 = vmatpush1.xpose.msra.mxu0 0.0
        %1445 = vmatprep.subr.mxu0 0.0
        %1446 = vmatpush1.xpose.msra.mxu0 0.0
        %1447 = vmatprep.subr.mxu0 0.0
        %1448 = vmatpush1.xpose.msra.mxu0 0.0
        %1449 = vmatprep.subr.mxu0 0.0
        %1450 = vmatpush1.xpose.msra.mxu0 0.0
        %1451 = vmatprep.subr.mxu0 0.0
        %1452 = vmatpush1.xpose.msra.mxu0 0.0
        %1453 = vmatprep.subr.mxu0 0.0
        %1454 = vmatpush1.xpose.msra.mxu0 0.0
        %1455 = vmatprep.subr.mxu0 0.0
        %1456 = vmatpush1.xpose.msra.mxu0 0.0
        %1457 = vmatprep.subr.mxu0 0.0
        %1458 = vmatpush1.xpose.msra.mxu0 0.0
        %1459 = vmatprep.subr.mxu0 0.0
        %1460 = vmatpush1.xpose.msra.mxu0 0.0
        %1461 = vmatprep.mubr.f32.mxu0 0.0
        %1462 = vmatmul.mubr.f32.gmra.mrb[0].mxu0 %v1393
        %v1463 = vpop.f32.mrb[0].mxu0
        %v1464 = vadd.f32 0.0, %v1463
        %v1465 = vpop.f32.mrb[0].mxu0
        %1466 = vdwg.mxu0
        %v1467 = vsel %vm916, %v1464, -inf
        %1468 = vmax.xlane.f32.xlu0 %v1467
        %v1469 = vpop.xlane.xlu0 %1468
        %v1470 = vsub.f32 %v1464, %v1469
        %v1471 = vmul.f32 %v1470, 1.442695
        %v1472 = vpow.pop %v1471
        %v1473 = vsel %vm916, %v1472, 0.0
        %1474 = vadd.xlane.f32.xlu0 %v1473
        %v1475 = vpop.xlane.xlu0 %1474
        %v1476 = vrcp.pop %v1475
        %v1477 = vmul.f32 %v1472, %v1476
        %1478 = vrot.lane.b32.xlu0 %v901, 48
        %v1479 = vpop.permute.xlu0 %1478
        %v1482 = vsel %vm916, %v1477, 0
        %1484 = vmatprep.subr.mxu0 0.0
        %1485 = vmatpush1.msra.mxu0 %v1479
        %1486 = vmatprep.subr.mxu0 0.0
        %1487 = vmatpush1.msra.mxu0 0.0
        %1488 = vmatprep.subr.mxu0 0.0
        %1489 = vmatpush1.msra.mxu0 0.0
        %1490 = vmatprep.subr.mxu0 0.0
        %1491 = vmatpush1.msra.mxu0 0.0
        %1492 = vmatprep.subr.mxu0 0.0
        %1493 = vmatpush1.msra.mxu0 0.0
        %1494 = vmatprep.subr.mxu0 0.0
        %1495 = vmatpush1.msra.mxu0 0.0
        %1496 = vmatprep.subr.mxu0 0.0
        %1497 = vmatpush1.msra.mxu0 0.0
        %1498 = vmatprep.subr.mxu0 0.0
        %1499 = vmatpush1.msra.mxu0 0.0
        %1500 = vmatprep.subr.mxu0 0.0
        %1501 = vmatpush1.msra.mxu0 0.0
        %1502 = vmatprep.subr.mxu0 0.0
        %1503 = vmatpush1.msra.mxu0 0.0
        %1504 = vmatprep.subr.mxu0 0.0
        %1505 = vmatpush1.msra.mxu0 0.0
        %1506 = vmatprep.subr.mxu0 0.0
        %1507 = vmatpush1.msra.mxu0 0.0
        %1508 = vmatprep.subr.mxu0 0.0
        %1509 = vmatpush1.msra.mxu0 0.0
        %1510 = vmatprep.subr.mxu0 0.0
        %1511 = vmatpush1.msra.mxu0 0.0
        %1512 = vmatprep.subr.mxu0 0.0
        %1513 = vmatpush1.msra.mxu0 0.0
        %1514 = vmatprep.subr.mxu0 0.0
        %1515 = vmatpush1.msra.mxu0 0.0
        %1516 = vmatprep.subr.mxu0 0.0
        %1517 = vmatpush1.msra.mxu0 0.0
        %1518 = vmatprep.subr.mxu0 0.0
        %1519 = vmatpush1.msra.mxu0 0.0
        %1520 = vmatprep.subr.mxu0 0.0
        %1521 = vmatpush1.msra.mxu0 0.0
        %1522 = vmatprep.subr.mxu0 0.0
        %1523 = vmatpush1.msra.mxu0 0.0
        %1524 = vmatprep.subr.mxu0 0.0
        %1525 = vmatpush1.msra.mxu0 0.0
        %1526 = vmatprep.subr.mxu0 0.0
        %1527 = vmatpush1.msra.mxu0 0.0
        %1528 = vmatprep.subr.mxu0 0.0
        %1529 = vmatpush1.msra.mxu0 0.0
        %1530 = vmatprep.subr.mxu0 0.0
        %1531 = vmatpush1.msra.mxu0 0.0
        %1532 = vmatprep.subr.mxu0 0.0
        %1533 = vmatpush1.msra.mxu0 0.0
        %1534 = vmatprep.subr.mxu0 0.0
        %1535 = vmatpush1.msra.mxu0 0.0
        %1536 = vmatprep.subr.mxu0 0.0
        %1537 = vmatpush1.msra.mxu0 0.0
        %1538 = vmatprep.subr.mxu0 0.0
        %1539 = vmatpush1.msra.mxu0 0.0
        %1540 = vmatprep.subr.mxu0 0.0
        %1541 = vmatpush1.msra.mxu0 0.0
        %1542 = vmatprep.subr.mxu0 0.0
        %1543 = vmatpush1.msra.mxu0 0.0
        %1544 = vmatprep.subr.mxu0 0.0
        %1545 = vmatpush1.msra.mxu0 0.0
        %1546 = vmatprep.subr.mxu0 0.0
        %1547 = vmatpush1.msra.mxu0 0.0
        %1548 = vmatprep.mubr.f32.mxu0 0.0
        %1549 = vmatmul.mubr.f32.gmra.mrb[0].mxu0 %v1482
        %v1550 = vpop.f32.mrb[0].mxu0
        %v1551 = vadd.f32 0.0, %v1550
        %v1552 = vpop.f32.mrb[0].mxu0
        %1553 = vdwg.mxu0
        %v1555 = vsel %vm916, %v1551, 0
        %1557 = vmatprep.subr.mxu0 0.0
        %1558 = vmatpush1.msra.mxu0 %v911
        %1559 = vmatprep.subr.mxu0 0.0
        %1560 = vmatpush1.msra.mxu0 0.0
        %1561 = vmatprep.subr.mxu0 0.0
        %1562 = vmatpush1.msra.mxu0 0.0
        %1563 = vmatprep.subr.mxu0 0.0
        %1564 = vmatpush1.msra.mxu0 0.0
        %1565 = vmatprep.subr.mxu0 0.0
        %1566 = vmatpush1.msra.mxu0 0.0
        %1567 = vmatprep.subr.mxu0 0.0
        %1568 = vmatpush1.msra.mxu0 0.0
        %1569 = vmatprep.subr.mxu0 0.0
        %1570 = vmatpush1.msra.mxu0 0.0
        %1571 = vmatprep.subr.mxu0 0.0
        %1572 = vmatpush1.msra.mxu0 0.0
        %1573 = vmatprep.subr.mxu0 0.0
        %1574 = vmatpush1.msra.mxu0 0.0
        %1575 = vmatprep.subr.mxu0 0.0
        %1576 = vmatpush1.msra.mxu0 0.0
        %1577 = vmatprep.subr.mxu0 0.0
        %1578 = vmatpush1.msra.mxu0 0.0
        %1579 = vmatprep.subr.mxu0 0.0
        %1580 = vmatpush1.msra.mxu0 0.0
        %1581 = vmatprep.subr.mxu0 0.0
        %1582 = vmatpush1.msra.mxu0 0.0
        %1583 = vmatprep.subr.mxu0 0.0
        %1584 = vmatpush1.msra.mxu0 0.0
        %1585 = vmatprep.subr.mxu0 0.0
        %1586 = vmatpush1.msra.mxu0 0.0
        %1587 = vmatprep.subr.mxu0 0.0
        %1588 = vmatpush1.msra.mxu0 0.0
        %1589 = vmatprep.subr.mxu0 0.0
        %1590 = vmatpush1.msra.mxu0 0.0
        %1591 = vmatprep.subr.mxu0 0.0
        %1592 = vmatpush1.msra.mxu0 0.0
        %1593 = vmatprep.subr.mxu0 0.0
        %1594 = vmatpush1.msra.mxu0 0.0
        %1595 = vmatprep.subr.mxu0 0.0
        %1596 = vmatpush1.msra.mxu0 0.0
        %1597 = vmatprep.subr.mxu0 0.0
        %1598 = vmatpush1.msra.mxu0 0.0
        %1599 = vmatprep.subr.mxu0 0.0
        %1600 = vmatpush1.msra.mxu0 0.0
        %1601 = vmatprep.subr.mxu0 0.0
        %1602 = vmatpush1.msra.mxu0 0.0
        %1603 = vmatprep.subr.mxu0 0.0
        %1604 = vmatpush1.msra.mxu0 0.0
        %1605 = vmatprep.subr.mxu0 0.0
        %1606 = vmatpush1.msra.mxu0 0.0
        %1607 = vmatprep.subr.mxu0 0.0
        %1608 = vmatpush1.msra.mxu0 0.0
        %1609 = vmatprep.subr.mxu0 0.0
        %1610 = vmatpush1.msra.mxu0 0.0
        %1611 = vmatprep.subr.mxu0 0.0
        %1612 = vmatpush1.msra.mxu0 0.0
        %1613 = vmatprep.subr.mxu0 0.0
        %1614 = vmatpush1.msra.mxu0 0.0
        %1615 = vmatprep.subr.mxu0 0.0
        %1616 = vmatpush1.msra.mxu0 0.0
        %1617 = vmatprep.subr.mxu0 0.0
        %1618 = vmatpush1.msra.mxu0 0.0
        %1619 = vmatprep.subr.mxu0 0.0
        %1620 = vmatpush1.msra.mxu0 0.0
        %1621 = vmatprep.mubr.f32.mxu0 0.0
        %1622 = vmatmul.mubr.f32.gmra.mrb[0].mxu0 %v1555
        %v1623 = vpop.f32.mrb[0].mxu0
        %v1624 = vadd.f32 0.0, %v1623
        %v1625 = vpop.f32.mrb[0].mxu0
        %1626 = vdwg.mxu0
        %v1627 = vadd.f32 %v1386, %v1624
        %1628 = vrot.lane.b32.xlu0 %v901, 104
        %v1629 = vpop.permute.xlu0 %1628
        %1630 = vrot.lane.b32.xlu0 %v901, 72
        %v1631 = vpop.permute.xlu0 %1630
        %v1632 = vsel %vm916, %v1629, 0
        %v1634 = vsel %vm916, %v1631, 0
        %1636 = vmatprep.subr.mxu0 0.0
        %1637 = vmatpush1.xpose.msra.mxu0 %v1634
        %1638 = vmatprep.subr.mxu0 0.0
        %1639 = vmatpush1.xpose.msra.mxu0 0.0
        %1640 = vmatprep.subr.mxu0 0.0
        %1641 = vmatpush1.xpose.msra.mxu0 0.0
        %1642 = vmatprep.subr.mxu0 0.0
        %1643 = vmatpush1.xpose.msra.mxu0 0.0
        %1644 = vmatprep.subr.mxu0 0.0
        %1645 = vmatpush1.xpose.msra.mxu0 0.0
        %1646 = vmatprep.subr.mxu0 0.0
        %1647 = vmatpush1.xpose.msra.mxu0 0.0
        %1648 = vmatprep.subr.mxu0 0.0
        %1649 = vmatpush1.xpose.msra.mxu0 0.0
        %1650 = vmatprep.subr.mxu0 0.0
        %1651 = vmatpush1.xpose.msra.mxu0 0.0
        %1652 = vmatprep.subr.mxu0 0.0
        %1653 = vmatpush1.xpose.msra.mxu0 0.0
        %1654 = vmatprep.subr.mxu0 0.0
        %1655 = vmatpush1.xpose.msra.mxu0 0.0
        %1656 = vmatprep.subr.mxu0 0.0
        %1657 = vmatpush1.xpose.msra.mxu0 0.0
        %1658 = vmatprep.subr.mxu0 0.0
        %1659 = vmatpush1.xpose.msra.mxu0 0.0
        %1660 = vmatprep.subr.mxu0 0.0
        %1661 = vmatpush1.xpose.msra.mxu0 0.0
        %1662 = vmatprep.subr.mxu0 0.0
        %1663 = vmatpush1.xpose.msra.mxu0 0.0
        %1664 = vmatprep.subr.mxu0 0.0
        %1665 = vmatpush1.xpose.msra.mxu0 0.0
        %1666 = vmatprep.subr.mxu0 0.0
        %1667 = vmatpush1.xpose.msra.mxu0 0.0
        %1668 = vmatprep.subr.mxu0 0.0
        %1669 = vmatpush1.xpose.msra.mxu0 0.0
        %1670 = vmatprep.subr.mxu0 0.0
        %1671 = vmatpush1.xpose.msra.mxu0 0.0
        %1672 = vmatprep.subr.mxu0 0.0
        %1673 = vmatpush1.xpose.msra.mxu0 0.0
        %1674 = vmatprep.subr.mxu0 0.0
        %1675 = vmatpush1.xpose.msra.mxu0 0.0
        %1676 = vmatprep.subr.mxu0 0.0
        %1677 = vmatpush1.xpose.msra.mxu0 0.0
        %1678 = vmatprep.subr.mxu0 0.0
        %1679 = vmatpush1.xpose.msra.mxu0 0.0
        %1680 = vmatprep.subr.mxu0 0.0
        %1681 = vmatpush1.xpose.msra.mxu0 0.0
        %1682 = vmatprep.subr.mxu0 0.0
        %1683 = vmatpush1.xpose.msra.mxu0 0.0
        %1684 = vmatprep.subr.mxu0 0.0
        %1685 = vmatpush1.xpose.msra.mxu0 0.0
        %1686 = vmatprep.subr.mxu0 0.0
        %1687 = vmatpush1.xpose.msra.mxu0 0.0
        %1688 = vmatprep.subr.mxu0 0.0
        %1689 = vmatpush1.xpose.msra.mxu0 0.0
        %1690 = vmatprep.subr.mxu0 0.0
        %1691 = vmatpush1.xpose.msra.mxu0 0.0
        %1692 = vmatprep.subr.mxu0 0.0
        %1693 = vmatpush1.xpose.msra.mxu0 0.0
        %1694 = vmatprep.subr.mxu0 0.0
        %1695 = vmatpush1.xpose.msra.mxu0 0.0
        %1696 = vmatprep.subr.mxu0 0.0
        %1697 = vmatpush1.xpose.msra.mxu0 0.0
        %1698 = vmatprep.subr.mxu0 0.0
        %1699 = vmatpush1.xpose.msra.mxu0 0.0
        %1700 = vmatprep.mubr.f32.mxu0 0.0
        %1701 = vmatmul.mubr.f32.gmra.mrb[0].mxu0 %v1632
        %v1702 = vpop.f32.mrb[0].mxu0
        %v1703 = vadd.f32 0.0, %v1702
        %v1704 = vpop.f32.mrb[0].mxu0
        %1705 = vdwg.mxu0
        %v1706 = vsel %vm916, %v1703, -inf
        %1707 = vmax.xlane.f32.xlu0 %v1706
        %v1708 = vpop.xlane.xlu0 %1707
        %v1709 = vsub.f32 %v1703, %v1708
        %v1710 = vmul.f32 %v1709, 1.442695
        %v1711 = vpow.pop %v1710
        %v1712 = vsel %vm916, %v1711, 0.0
        %1713 = vadd.xlane.f32.xlu0 %v1712
        %v1714 = vpop.xlane.xlu0 %1713
        %v1715 = vrcp.pop %v1714
        %v1716 = vmul.f32 %v1711, %v1715
        %1717 = vrot.lane.b32.xlu0 %v901, 40
        %v1718 = vpop.permute.xlu0 %1717
        %v1721 = vsel %vm916, %v1716, 0
        %1723 = vmatprep.subr.mxu0 0.0
        %1724 = vmatpush1.msra.mxu0 %v1718
        %1725 = vmatprep.subr.mxu0 0.0
        %1726 = vmatpush1.msra.mxu0 0.0
        %1727 = vmatprep.subr.mxu0 0.0
        %1728 = vmatpush1.msra.mxu0 0.0
        %1729 = vmatprep.subr.mxu0 0.0
        %1730 = vmatpush1.msra.mxu0 0.0
        %1731 = vmatprep.subr.mxu0 0.0
        %1732 = vmatpush1.msra.mxu0 0.0
        %1733 = vmatprep.subr.mxu0 0.0
        %1734 = vmatpush1.msra.mxu0 0.0
        %1735 = vmatprep.subr.mxu0 0.0
        %1736 = vmatpush1.msra.mxu0 0.0
        %1737 = vmatprep.subr.mxu0 0.0
        %1738 = vmatpush1.msra.mxu0 0.0
        %1739 = vmatprep.subr.mxu0 0.0
        %1740 = vmatpush1.msra.mxu0 0.0
        %1741 = vmatprep.subr.mxu0 0.0
        %1742 = vmatpush1.msra.mxu0 0.0
        %1743 = vmatprep.subr.mxu0 0.0
        %1744 = vmatpush1.msra.mxu0 0.0
        %1745 = vmatprep.subr.mxu0 0.0
        %1746 = vmatpush1.msra.mxu0 0.0
        %1747 = vmatprep.subr.mxu0 0.0
        %1748 = vmatpush1.msra.mxu0 0.0
        %1749 = vmatprep.subr.mxu0 0.0
        %1750 = vmatpush1.msra.mxu0 0.0
        %1751 = vmatprep.subr.mxu0 0.0
        %1752 = vmatpush1.msra.mxu0 0.0
        %1753 = vmatprep.subr.mxu0 0.0
        %1754 = vmatpush1.msra.mxu0 0.0
        %1755 = vmatprep.subr.mxu0 0.0
        %1756 = vmatpush1.msra.mxu0 0.0
        %1757 = vmatprep.subr.mxu0 0.0
        %1758 = vmatpush1.msra.mxu0 0.0
        %1759 = vmatprep.subr.mxu0 0.0
        %1760 = vmatpush1.msra.mxu0 0.0
        %1761 = vmatprep.subr.mxu0 0.0
        %1762 = vmatpush1.msra.mxu0 0.0
        %1763 = vmatprep.subr.mxu0 0.0
        %1764 = vmatpush1.msra.mxu0 0.0
        %1765 = vmatprep.subr.mxu0 0.0
        %1766 = vmatpush1.msra.mxu0 0.0
        %1767 = vmatprep.subr.mxu0 0.0
        %1768 = vmatpush1.msra.mxu0 0.0
        %1769 = vmatprep.subr.mxu0 0.0
        %1770 = vmatpush1.msra.mxu0 0.0
        %1771 = vmatprep.subr.mxu0 0.0
        %1772 = vmatpush1.msra.mxu0 0.0
        %1773 = vmatprep.subr.mxu0 0.0
        %1774 = vmatpush1.msra.mxu0 0.0
        %1775 = vmatprep.subr.mxu0 0.0
        %1776 = vmatpush1.msra.mxu0 0.0
        %1777 = vmatprep.subr.mxu0 0.0
        %1778 = vmatpush1.msra.mxu0 0.0
        %1779 = vmatprep.subr.mxu0 0.0
        %1780 = vmatpush1.msra.mxu0 0.0
        %1781 = vmatprep.subr.mxu0 0.0
        %1782 = vmatpush1.msra.mxu0 0.0
        %1783 = vmatprep.subr.mxu0 0.0
        %1784 = vmatpush1.msra.mxu0 0.0
        %1785 = vmatprep.subr.mxu0 0.0
        %1786 = vmatpush1.msra.mxu0 0.0
        %1787 = vmatprep.mubr.f32.mxu0 0.0
        %1788 = vmatmul.mubr.f32.gmra.mrb[0].mxu0 %v1721
        %v1789 = vpop.f32.mrb[0].mxu0
        %v1790 = vadd.f32 0.0, %v1789
        %v1791 = vpop.f32.mrb[0].mxu0
        %1792 = vdwg.mxu0
        %v1794 = vsel %vm916, %v1790, 0
        %1796 = vmatprep.subr.mxu0 0.0
        %1797 = vmatpush1.msra.mxu0 %v912
        %1798 = vmatprep.subr.mxu0 0.0
        %1799 = vmatpush1.msra.mxu0 0.0
        %1800 = vmatprep.subr.mxu0 0.0
        %1801 = vmatpush1.msra.mxu0 0.0
        %1802 = vmatprep.subr.mxu0 0.0
        %1803 = vmatpush1.msra.mxu0 0.0
        %1804 = vmatprep.subr.mxu0 0.0
        %1805 = vmatpush1.msra.mxu0 0.0
        %1806 = vmatprep.subr.mxu0 0.0
        %1807 = vmatpush1.msra.mxu0 0.0
        %1808 = vmatprep.subr.mxu0 0.0
        %1809 = vmatpush1.msra.mxu0 0.0
        %1810 = vmatprep.subr.mxu0 0.0
        %1811 = vmatpush1.msra.mxu0 0.0
        %1812 = vmatprep.subr.mxu0 0.0
        %1813 = vmatpush1.msra.mxu0 0.0
        %1814 = vmatprep.subr.mxu0 0.0
        %1815 = vmatpush1.msra.mxu0 0.0
        %1816 = vmatprep.subr.mxu0 0.0
        %1817 = vmatpush1.msra.mxu0 0.0
        %1818 = vmatprep.subr.mxu0 0.0
        %1819 = vmatpush1.msra.mxu0 0.0
        %1820 = vmatprep.subr.mxu0 0.0
        %1821 = vmatpush1.msra.mxu0 0.0
        %1822 = vmatprep.subr.mxu0 0.0
        %1823 = vmatpush1.msra.mxu0 0.0
        %1824 = vmatprep.subr.mxu0 0.0
        %1825 = vmatpush1.msra.mxu0 0.0
        %1826 = vmatprep.subr.mxu0 0.0
        %1827 = vmatpush1.msra.mxu0 0.0
        %1828 = vmatprep.subr.mxu0 0.0
        %1829 = vmatpush1.msra.mxu0 0.0
        %1830 = vmatprep.subr.mxu0 0.0
        %1831 = vmatpush1.msra.mxu0 0.0
        %1832 = vmatprep.subr.mxu0 0.0
        %1833 = vmatpush1.msra.mxu0 0.0
        %1834 = vmatprep.subr.mxu0 0.0
        %1835 = vmatpush1.msra.mxu0 0.0
        %1836 = vmatprep.subr.mxu0 0.0
        %1837 = vmatpush1.msra.mxu0 0.0
        %1838 = vmatprep.subr.mxu0 0.0
        %1839 = vmatpush1.msra.mxu0 0.0
        %1840 = vmatprep.subr.mxu0 0.0
        %1841 = vmatpush1.msra.mxu0 0.0
        %1842 = vmatprep.subr.mxu0 0.0
        %1843 = vmatpush1.msra.mxu0 0.0
        %1844 = vmatprep.subr.mxu0 0.0
        %1845 = vmatpush1.msra.mxu0 0.0
        %1846 = vmatprep.subr.mxu0 0.0
        %1847 = vmatpush1.msra.mxu0 0.0
        %1848 = vmatprep.subr.mxu0 0.0
        %1849 = vmatpush1.msra.mxu0 0.0
        %1850 = vmatprep.subr.mxu0 0.0
        %1851 = vmatpush1.msra.mxu0 0.0
        %1852 = vmatprep.subr.mxu0 0.0
        %1853 = vmatpush1.msra.mxu0 0.0
        %1854 = vmatprep.subr.mxu0 0.0
        %1855 = vmatpush1.msra.mxu0 0.0
        %1856 = vmatprep.subr.mxu0 0.0
        %1857 = vmatpush1.msra.mxu0 0.0
        %1858 = vmatprep.subr.mxu0 0.0
        %1859 = vmatpush1.msra.mxu0 0.0
        %1860 = vmatprep.mubr.f32.mxu0 0.0
        %1861 = vmatmul.mubr.f32.gmra.mrb[0].mxu0 %v1794
        %v1862 = vpop.f32.mrb[0].mxu0
        %v1863 = vadd.f32 0.0, %v1862
        %v1864 = vpop.f32.mrb[0].mxu0
        %1865 = vdwg.mxu0
        %v1866 = vadd.f32 %v1627, %v1863
        %1868 = vrot.lane.b32.xlu0 %v906, 96
        %v1869 = vpop.permute.xlu0 %1868
        %v1870 = vsel %vm916, %v906, 0
        %v1872 = vsel %vm916, %v1869, 0
        %1874 = vmatprep.subr.mxu0 0.0
        %1875 = vmatpush1.xpose.msra.mxu0 %v1872
        %1876 = vmatprep.subr.mxu0 0.0
        %1877 = vmatpush1.xpose.msra.mxu0 0.0
        %1878 = vmatprep.subr.mxu0 0.0
        %1879 = vmatpush1.xpose.msra.mxu0 0.0
        %1880 = vmatprep.subr.mxu0 0.0
        %1881 = vmatpush1.xpose.msra.mxu0 0.0
        %1882 = vmatprep.subr.mxu0 0.0
        %1883 = vmatpush1.xpose.msra.mxu0 0.0
        %1884 = vmatprep.subr.mxu0 0.0
        %1885 = vmatpush1.xpose.msra.mxu0 0.0
        %1886 = vmatprep.subr.mxu0 0.0
        %1887 = vmatpush1.xpose.msra.mxu0 0.0
        %1888 = vmatprep.subr.mxu0 0.0
        %1889 = vmatpush1.xpose.msra.mxu0 0.0
        %1890 = vmatprep.subr.mxu0 0.0
        %1891 = vmatpush1.xpose.msra.mxu0 0.0
        %1892 = vmatprep.subr.mxu0 0.0
        %1893 = vmatpush1.xpose.msra.mxu0 0.0
        %1894 = vmatprep.subr.mxu0 0.0
        %1895 = vmatpush1.xpose.msra.mxu0 0.0
        %1896 = vmatprep.subr.mxu0 0.0
        %1897 = vmatpush1.xpose.msra.mxu0 0.0
        %1898 = vmatprep.subr.mxu0 0.0
        %1899 = vmatpush1.xpose.msra.mxu0 0.0
        %1900 = vmatprep.subr.mxu0 0.0
        %1901 = vmatpush1.xpose.msra.mxu0 0.0
        %1902 = vmatprep.subr.mxu0 0.0
        %1903 = vmatpush1.xpose.msra.mxu0 0.0
        %1904 = vmatprep.subr.mxu0 0.0
        %1905 = vmatpush1.xpose.msra.mxu0 0.0
        %1906 = vmatprep.subr.mxu0 0.0
        %1907 = vmatpush1.xpose.msra.mxu0 0.0
        %1908 = vmatprep.subr.mxu0 0.0
        %1909 = vmatpush1.xpose.msra.mxu0 0.0
        %1910 = vmatprep.subr.mxu0 0.0
        %1911 = vmatpush1.xpose.msra.mxu0 0.0
        %1912 = vmatprep.subr.mxu0 0.0
        %1913 = vmatpush1.xpose.msra.mxu0 0.0
        %1914 = vmatprep.subr.mxu0 0.0
        %1915 = vmatpush1.xpose.msra.mxu0 0.0
        %1916 = vmatprep.subr.mxu0 0.0
        %1917 = vmatpush1.xpose.msra.mxu0 0.0
        %1918 = vmatprep.subr.mxu0 0.0
        %1919 = vmatpush1.xpose.msra.mxu0 0.0
        %1920 = vmatprep.subr.mxu0 0.0
        %1921 = vmatpush1.xpose.msra.mxu0 0.0
        %1922 = vmatprep.subr.mxu0 0.0
        %1923 = vmatpush1.xpose.msra.mxu0 0.0
        %1924 = vmatprep.subr.mxu0 0.0
        %1925 = vmatpush1.xpose.msra.mxu0 0.0
        %1926 = vmatprep.subr.mxu0 0.0
        %1927 = vmatpush1.xpose.msra.mxu0 0.0
        %1928 = vmatprep.subr.mxu0 0.0
        %1929 = vmatpush1.xpose.msra.mxu0 0.0
        %1930 = vmatprep.subr.mxu0 0.0
        %1931 = vmatpush1.xpose.msra.mxu0 0.0
        %1932 = vmatprep.subr.mxu0 0.0
        %1933 = vmatpush1.xpose.msra.mxu0 0.0
        %1934 = vmatprep.subr.mxu0 0.0
        %1935 = vmatpush1.xpose.msra.mxu0 0.0
        %1936 = vmatprep.subr.mxu0 0.0
        %1937 = vmatpush1.xpose.msra.mxu0 0.0
        %1938 = vmatprep.mubr.f32.mxu0 0.0
        %1939 = vmatmul.mubr.f32.gmra.mrb[0].mxu0 %v1870
        %v1940 = vpop.f32.mrb[0].mxu0
        %v1941 = vadd.f32 0.0, %v1940
        %v1942 = vpop.f32.mrb[0].mxu0
        %1943 = vdwg.mxu0
        %v1944 = vsel %vm916, %v1941, -inf
        %1945 = vmax.xlane.f32.xlu0 %v1944
        %v1946 = vpop.xlane.xlu0 %1945
        %v1947 = vsub.f32 %v1941, %v1946
        %v1948 = vmul.f32 %v1947, 1.442695
        %v1949 = vpow.pop %v1948
        %v1950 = vsel %vm916, %v1949, 0.0
        %1951 = vadd.xlane.f32.xlu0 %v1950
        %v1952 = vpop.xlane.xlu0 %1951
        %v1953 = vrcp.pop %v1952
        %v1954 = vmul.f32 %v1949, %v1953
        %1955 = vrot.lane.b32.xlu0 %v906, 64
        %v1956 = vpop.permute.xlu0 %1955
        %v1959 = vsel %vm916, %v1954, 0
        %1961 = vmatprep.subr.mxu0 0.0
        %1962 = vmatpush1.msra.mxu0 %v1956
        %1963 = vmatprep.subr.mxu0 0.0
        %1964 = vmatpush1.msra.mxu0 0.0
        %1965 = vmatprep.subr.mxu0 0.0
        %1966 = vmatpush1.msra.mxu0 0.0
        %1967 = vmatprep.subr.mxu0 0.0
        %1968 = vmatpush1.msra.mxu0 0.0
        %1969 = vmatprep.subr.mxu0 0.0
        %1970 = vmatpush1.msra.mxu0 0.0
        %1971 = vmatprep.subr.mxu0 0.0
        %1972 = vmatpush1.msra.mxu0 0.0
        %1973 = vmatprep.subr.mxu0 0.0
        %1974 = vmatpush1.msra.mxu0 0.0
        %1975 = vmatprep.subr.mxu0 0.0
        %1976 = vmatpush1.msra.mxu0 0.0
        %1977 = vmatprep.subr.mxu0 0.0
        %1978 = vmatpush1.msra.mxu0 0.0
        %1979 = vmatprep.subr.mxu0 0.0
        %1980 = vmatpush1.msra.mxu0 0.0
        %1981 = vmatprep.subr.mxu0 0.0
        %1982 = vmatpush1.msra.mxu0 0.0
        %1983 = vmatprep.subr.mxu0 0.0
        %1984 = vmatpush1.msra.mxu0 0.0
        %1985 = vmatprep.subr.mxu0 0.0
        %1986 = vmatpush1.msra.mxu0 0.0
        %1987 = vmatprep.subr.mxu0 0.0
        %1988 = vmatpush1.msra.mxu0 0.0
        %1989 = vmatprep.subr.mxu0 0.0
        %1990 = vmatpush1.msra.mxu0 0.0
        %1991 = vmatprep.subr.mxu0 0.0
        %1992 = vmatpush1.msra.mxu0 0.0
        %1993 = vmatprep.subr.mxu0 0.0
        %1994 = vmatpush1.msra.mxu0 0.0
        %1995 = vmatprep.subr.mxu0 0.0
        %1996 = vmatpush1.msra.mxu0 0.0
        %1997 = vmatprep.subr.mxu0 0.0
        %1998 = vmatpush1.msra.mxu0 0.0
        %1999 = vmatprep.subr.mxu0 0.0
        %2000 = vmatpush1.msra.mxu0 0.0
        %2001 = vmatprep.subr.mxu0 0.0
        %2002 = vmatpush1.msra.mxu0 0.0
        %2003 = vmatprep.subr.mxu0 0.0
        %2004 = vmatpush1.msra.mxu0 0.0
        %2005 = vmatprep.subr.mxu0 0.0
        %2006 = vmatpush1.msra.mxu0 0.0
        %2007 = vmatprep.subr.mxu0 0.0
        %2008 = vmatpush1.msra.mxu0 0.0
        %2009 = vmatprep.subr.mxu0 0.0
        %2010 = vmatpush1.msra.mxu0 0.0
        %2011 = vmatprep.subr.mxu0 0.0
        %2012 = vmatpush1.msra.mxu0 0.0
        %2013 = vmatprep.subr.mxu0 0.0
        %2014 = vmatpush1.msra.mxu0 0.0
        %2015 = vmatprep.subr.mxu0 0.0
        %2016 = vmatpush1.msra.mxu0 0.0
        %2017 = vmatprep.subr.mxu0 0.0
        %2018 = vmatpush1.msra.mxu0 0.0
        %2019 = vmatprep.subr.mxu0 0.0
        %2020 = vmatpush1.msra.mxu0 0.0
        %2021 = vmatprep.subr.mxu0 0.0
        %2022 = vmatpush1.msra.mxu0 0.0
        %2023 = vmatprep.subr.mxu0 0.0
        %2024 = vmatpush1.msra.mxu0 0.0
        %2025 = vmatprep.mubr.f32.mxu0 0.0
        %2026 = vmatmul.mubr.f32.gmra.mrb[0].mxu0 %v1959
        %v2027 = vpop.f32.mrb[0].mxu0
        %v2028 = vadd.f32 0.0, %v2027
        %v2029 = vpop.f32.mrb[0].mxu0
        %2030 = vdwg.mxu0
        %2031 = vrot.lane.b32.xlu0 %v906, 120
        %v2032 = vpop.permute.xlu0 %2031
        %2033 = vrot.lane.b32.xlu0 %v906, 88
        %v2034 = vpop.permute.xlu0 %2033
        %v2035 = vsel %vm916, %v2032, 0
        %v2037 = vsel %vm916, %v2034, 0
        %2039 = vmatprep.subr.mxu0 0.0
        %2040 = vmatpush1.xpose.msra.mxu0 %v2037
        %2041 = vmatprep.subr.mxu0 0.0
        %2042 = vmatpush1.xpose.msra.mxu0 0.0
        %2043 = vmatprep.subr.mxu0 0.0
        %2044 = vmatpush1.xpose.msra.mxu0 0.0
        %2045 = vmatprep.subr.mxu0 0.0
        %2046 = vmatpush1.xpose.msra.mxu0 0.0
        %2047 = vmatprep.subr.mxu0 0.0
        %2048 = vmatpush1.xpose.msra.mxu0 0.0
        %2049 = vmatprep.subr.mxu0 0.0
        %2050 = vmatpush1.xpose.msra.mxu0 0.0
        %2051 = vmatprep.subr.mxu0 0.0
        %2052 = vmatpush1.xpose.msra.mxu0 0.0
        %2053 = vmatprep.subr.mxu0 0.0
        %2054 = vmatpush1.xpose.msra.mxu0 0.0
        %2055 = vmatprep.subr.mxu0 0.0
        %2056 = vmatpush1.xpose.msra.mxu0 0.0
        %2057 = vmatprep.subr.mxu0 0.0
        %2058 = vmatpush1.xpose.msra.mxu0 0.0
        %2059 = vmatprep.subr.mxu0 0.0
        %2060 = vmatpush1.xpose.msra.mxu0 0.0
        %2061 = vmatprep.subr.mxu0 0.0
        %2062 = vmatpush1.xpose.msra.mxu0 0.0
        %2063 = vmatprep.subr.mxu0 0.0
        %2064 = vmatpush1.xpose.msra.mxu0 0.0
        %2065 = vmatprep.subr.mxu0 0.0
        %2066 = vmatpush1.xpose.msra.mxu0 0.0
        %2067 = vmatprep.subr.mxu0 0.0
        %2068 = vmatpush1.xpose.msra.mxu0 0.0
        %2069 = vmatprep.subr.mxu0 0.0
        %2070 = vmatpush1.xpose.msra.mxu0 0.0
        %2071 = vmatprep.subr.mxu0 0.0
        %2072 = vmatpush1.xpose.msra.mxu0 0.0
        %2073 = vmatprep.subr.mxu0 0.0
        %2074 = vmatpush1.xpose.msra.mxu0 0.0
        %2075 = vmatprep.subr.mxu0 0.0
        %2076 = vmatpush1.xpose.msra.mxu0 0.0
        %2077 = vmatprep.subr.mxu0 0.0
        %2078 = vmatpush1.xpose.msra.mxu0 0.0
        %2079 = vmatprep.subr.mxu0 0.0
        %2080 = vmatpush1.xpose.msra.mxu0 0.0
        %2081 = vmatprep.subr.mxu0 0.0
        %2082 = vmatpush1.xpose.msra.mxu0 0.0
        %2083 = vmatprep.subr.mxu0 0.0
        %2084 = vmatpush1.xpose.msra.mxu0 0.0
        %2085 = vmatprep.subr.mxu0 0.0
        %2086 = vmatpush1.xpose.msra.mxu0 0.0
        %2087 = vmatprep.subr.mxu0 0.0
        %2088 = vmatpush1.xpose.msra.mxu0 0.0
        %2089 = vmatprep.subr.mxu0 0.0
        %2090 = vmatpush1.xpose.msra.mxu0 0.0
        %2091 = vmatprep.subr.mxu0 0.0
        %2092 = vmatpush1.xpose.msra.mxu0 0.0
        %2093 = vmatprep.subr.mxu0 0.0
        %2094 = vmatpush1.xpose.msra.mxu0 0.0
        %2095 = vmatprep.subr.mxu0 0.0
        %2096 = vmatpush1.xpose.msra.mxu0 0.0
        %2097 = vmatprep.subr.mxu0 0.0
        %2098 = vmatpush1.xpose.msra.mxu0 0.0
        %2099 = vmatprep.subr.mxu0 0.0
        %2100 = vmatpush1.xpose.msra.mxu0 0.0
        %2101 = vmatprep.subr.mxu0 0.0
        %2102 = vmatpush1.xpose.msra.mxu0 0.0
        %2103 = vmatprep.mubr.f32.mxu0 0.0
        %2104 = vmatmul.mubr.f32.gmra.mrb[0].mxu0 %v2035
        %v2105 = vpop.f32.mrb[0].mxu0
        %v2106 = vadd.f32 0.0, %v2105
        %v2107 = vpop.f32.mrb[0].mxu0
        %2108 = vdwg.mxu0
        %v2109 = vsel %vm916, %v2106, -inf
        %2110 = vmax.xlane.f32.xlu0 %v2109
        %v2111 = vpop.xlane.xlu0 %2110
        %v2112 = vsub.f32 %v2106, %v2111
        %v2113 = vmul.f32 %v2112, 1.442695
        %v2114 = vpow.pop %v2113
        %v2115 = vsel %vm916, %v2114, 0.0
        %2116 = vadd.xlane.f32.xlu0 %v2115
        %v2117 = vpop.xlane.xlu0 %2116
        %v2118 = vrcp.pop %v2117
        %v2119 = vmul.f32 %v2114, %v2118
        %2120 = vrot.lane.b32.xlu0 %v906, 56
        %v2121 = vpop.permute.xlu0 %2120
        %v2124 = vsel %vm916, %v2119, 0
        %2126 = vmatprep.subr.mxu0 0.0
        %2127 = vmatpush1.msra.mxu0 %v2121
        %2128 = vmatprep.subr.mxu0 0.0
        %2129 = vmatpush1.msra.mxu0 0.0
        %2130 = vmatprep.subr.mxu0 0.0
        %2131 = vmatpush1.msra.mxu0 0.0
        %2132 = vmatprep.subr.mxu0 0.0
        %2133 = vmatpush1.msra.mxu0 0.0
        %2134 = vmatprep.subr.mxu0 0.0
        %2135 = vmatpush1.msra.mxu0 0.0
        %2136 = vmatprep.subr.mxu0 0.0
        %2137 = vmatpush1.msra.mxu0 0.0
        %2138 = vmatprep.subr.mxu0 0.0
        %2139 = vmatpush1.msra.mxu0 0.0
        %2140 = vmatprep.subr.mxu0 0.0
        %2141 = vmatpush1.msra.mxu0 0.0
        %2142 = vmatprep.subr.mxu0 0.0
        %2143 = vmatpush1.msra.mxu0 0.0
        %2144 = vmatprep.subr.mxu0 0.0
        %2145 = vmatpush1.msra.mxu0 0.0
        %2146 = vmatprep.subr.mxu0 0.0
        %2147 = vmatpush1.msra.mxu0 0.0
        %2148 = vmatprep.subr.mxu0 0.0
        %2149 = vmatpush1.msra.mxu0 0.0
        %2150 = vmatprep.subr.mxu0 0.0
        %2151 = vmatpush1.msra.mxu0 0.0
        %2152 = vmatprep.subr.mxu0 0.0
        %2153 = vmatpush1.msra.mxu0 0.0
        %2154 = vmatprep.subr.mxu0 0.0
        %2155 = vmatpush1.msra.mxu0 0.0
        %2156 = vmatprep.subr.mxu0 0.0
        %2157 = vmatpush1.msra.mxu0 0.0
        %2158 = vmatprep.subr.mxu0 0.0
        %2159 = vmatpush1.msra.mxu0 0.0
        %2160 = vmatprep.subr.mxu0 0.0
        %2161 = vmatpush1.msra.mxu0 0.0
        %2162 = vmatprep.subr.mxu0 0.0
        %2163 = vmatpush1.msra.mxu0 0.0
        %2164 = vmatprep.subr.mxu0 0.0
        %2165 = vmatpush1.msra.mxu0 0.0
        %2166 = vmatprep.subr.mxu0 0.0
        %2167 = vmatpush1.msra.mxu0 0.0
        %2168 = vmatprep.subr.mxu0 0.0
        %2169 = vmatpush1.msra.mxu0 0.0
        %2170 = vmatprep.subr.mxu0 0.0
        %2171 = vmatpush1.msra.mxu0 0.0
        %2172 = vmatprep.subr.mxu0 0.0
        %2173 = vmatpush1.msra.mxu0 0.0
        %2174 = vmatprep.subr.mxu0 0.0
        %2175 = vmatpush1.msra.mxu0 0.0
        %2176 = vmatprep.subr.mxu0 0.0
        %2177 = vmatpush1.msra.mxu0 0.0
        %2178 = vmatprep.subr.mxu0 0.0
        %2179 = vmatpush1.msra.mxu0 0.0
        %2180 = vmatprep.subr.mxu0 0.0
        %2181 = vmatpush1.msra.mxu0 0.0
        %2182 = vmatprep.subr.mxu0 0.0
        %2183 = vmatpush1.msra.mxu0 0.0
        %2184 = vmatprep.subr.mxu0 0.0
        %2185 = vmatpush1.msra.mxu0 0.0
        %2186 = vmatprep.subr.mxu0 0.0
        %2187 = vmatpush1.msra.mxu0 0.0
        %2188 = vmatprep.subr.mxu0 0.0
        %2189 = vmatpush1.msra.mxu0 0.0
        %2190 = vmatprep.mubr.f32.mxu0 0.0
        %2191 = vmatmul.mubr.f32.gmra.mrb[0].mxu0 %v2124
        %v2192 = vpop.f32.mrb[0].mxu0
        %v2193 = vadd.f32 0.0, %v2192
        %v2194 = vpop.f32.mrb[0].mxu0
        %2195 = vdwg.mxu0
        %v2197 = vsel %vm916, %v2193, 0
        %2199 = vmatprep.subr.mxu0 0.0
        %2200 = vmatpush1.msra.mxu0 %v910
        %2201 = vmatprep.subr.mxu0 0.0
        %2202 = vmatpush1.msra.mxu0 0.0
        %2203 = vmatprep.subr.mxu0 0.0
        %2204 = vmatpush1.msra.mxu0 0.0
        %2205 = vmatprep.subr.mxu0 0.0
        %2206 = vmatpush1.msra.mxu0 0.0
        %2207 = vmatprep.subr.mxu0 0.0
        %2208 = vmatpush1.msra.mxu0 0.0
        %2209 = vmatprep.subr.mxu0 0.0
        %2210 = vmatpush1.msra.mxu0 0.0
        %2211 = vmatprep.subr.mxu0 0.0
        %2212 = vmatpush1.msra.mxu0 0.0
        %2213 = vmatprep.subr.mxu0 0.0
        %2214 = vmatpush1.msra.mxu0 0.0
        %2215 = vmatprep.subr.mxu0 0.0
        %2216 = vmatpush1.msra.mxu0 0.0
        %2217 = vmatprep.subr.mxu0 0.0
        %2218 = vmatpush1.msra.mxu0 0.0
        %2219 = vmatprep.subr.mxu0 0.0
        %2220 = vmatpush1.msra.mxu0 0.0
        %2221 = vmatprep.subr.mxu0 0.0
        %2222 = vmatpush1.msra.mxu0 0.0
        %2223 = vmatprep.subr.mxu0 0.0
        %2224 = vmatpush1.msra.mxu0 0.0
        %2225 = vmatprep.subr.mxu0 0.0
        %2226 = vmatpush1.msra.mxu0 0.0
        %2227 = vmatprep.subr.mxu0 0.0
        %2228 = vmatpush1.msra.mxu0 0.0
        %2229 = vmatprep.subr.mxu0 0.0
        %2230 = vmatpush1.msra.mxu0 0.0
        %2231 = vmatprep.subr.mxu0 0.0
        %2232 = vmatpush1.msra.mxu0 0.0
        %2233 = vmatprep.subr.mxu0 0.0
        %2234 = vmatpush1.msra.mxu0 0.0
        %2235 = vmatprep.subr.mxu0 0.0
        %2236 = vmatpush1.msra.mxu0 0.0
        %2237 = vmatprep.subr.mxu0 0.0
        %2238 = vmatpush1.msra.mxu0 0.0
        %2239 = vmatprep.subr.mxu0 0.0
        %2240 = vmatpush1.msra.mxu0 0.0
        %2241 = vmatprep.subr.mxu0 0.0
        %2242 = vmatpush1.msra.mxu0 0.0
        %2243 = vmatprep.subr.mxu0 0.0
        %2244 = vmatpush1.msra.mxu0 0.0
        %2245 = vmatprep.subr.mxu0 0.0
        %2246 = vmatpush1.msra.mxu0 0.0
        %2247 = vmatprep.subr.mxu0 0.0
        %2248 = vmatpush1.msra.mxu0 0.0
        %2249 = vmatprep.subr.mxu0 0.0
        %2250 = vmatpush1.msra.mxu0 0.0
        %2251 = vmatprep.subr.mxu0 0.0
        %2252 = vmatpush1.msra.mxu0 0.0
        %2253 = vmatprep.subr.mxu0 0.0
        %2254 = vmatpush1.msra.mxu0 0.0
        %2255 = vmatprep.subr.mxu0 0.0
        %2256 = vmatpush1.msra.mxu0 0.0
        %2257 = vmatprep.subr.mxu0 0.0
        %2258 = vmatpush1.msra.mxu0 0.0
        %2259 = vmatprep.subr.mxu0 0.0
        %2260 = vmatpush1.msra.mxu0 0.0
        %2261 = vmatprep.subr.mxu0 0.0
        %2262 = vmatpush1.msra.mxu0 0.0
        %2263 = vmatprep.mubr.f32.mxu0 0.0
        %2264 = vmatmul.mubr.f32.gmra.mrb[0].mxu0 %v2197
        %v2265 = vpop.f32.mrb[0].mxu0
        %v2266 = vadd.f32 0.0, %v2265
        %v2267 = vpop.f32.mrb[0].mxu0
        %2268 = vdwg.mxu0
        %v2270 = vsel %vm916, %v2028, 0
        %2272 = vmatprep.subr.mxu0 0.0
        %2273 = vmatpush1.msra.mxu0 %v909
        %2274 = vmatprep.subr.mxu0 0.0
        %2275 = vmatpush1.msra.mxu0 0.0
        %2276 = vmatprep.subr.mxu0 0.0
        %2277 = vmatpush1.msra.mxu0 0.0
        %2278 = vmatprep.subr.mxu0 0.0
        %2279 = vmatpush1.msra.mxu0 0.0
        %2280 = vmatprep.subr.mxu0 0.0
        %2281 = vmatpush1.msra.mxu0 0.0
        %2282 = vmatprep.subr.mxu0 0.0
        %2283 = vmatpush1.msra.mxu0 0.0
        %2284 = vmatprep.subr.mxu0 0.0
        %2285 = vmatpush1.msra.mxu0 0.0
        %2286 = vmatprep.subr.mxu0 0.0
        %2287 = vmatpush1.msra.mxu0 0.0
        %2288 = vmatprep.subr.mxu0 0.0
        %2289 = vmatpush1.msra.mxu0 0.0
        %2290 = vmatprep.subr.mxu0 0.0
        %2291 = vmatpush1.msra.mxu0 0.0
        %2292 = vmatprep.subr.mxu0 0.0
        %2293 = vmatpush1.msra.mxu0 0.0
        %2294 = vmatprep.subr.mxu0 0.0
        %2295 = vmatpush1.msra.mxu0 0.0
        %2296 = vmatprep.subr.mxu0 0.0
        %2297 = vmatpush1.msra.mxu0 0.0
        %2298 = vmatprep.subr.mxu0 0.0
        %2299 = vmatpush1.msra.mxu0 0.0
        %2300 = vmatprep.subr.mxu0 0.0
        %2301 = vmatpush1.msra.mxu0 0.0
        %2302 = vmatprep.subr.mxu0 0.0
        %2303 = vmatpush1.msra.mxu0 0.0
        %2304 = vmatprep.subr.mxu0 0.0
        %2305 = vmatpush1.msra.mxu0 0.0
        %2306 = vmatprep.subr.mxu0 0.0
        %2307 = vmatpush1.msra.mxu0 0.0
        %2308 = vmatprep.subr.mxu0 0.0
        %2309 = vmatpush1.msra.mxu0 0.0
        %2310 = vmatprep.subr.mxu0 0.0
        %2311 = vmatpush1.msra.mxu0 0.0
        %2312 = vmatprep.subr.mxu0 0.0
        %2313 = vmatpush1.msra.mxu0 0.0
        %2314 = vmatprep.subr.mxu0 0.0
        %2315 = vmatpush1.msra.mxu0 0.0
        %2316 = vmatprep.subr.mxu0 0.0
        %2317 = vmatpush1.msra.mxu0 0.0
        %2318 = vmatprep.subr.mxu0 0.0
        %2319 = vmatpush1.msra.mxu0 0.0
        %2320 = vmatprep.subr.mxu0 0.0
        %2321 = vmatpush1.msra.mxu0 0.0
        %2322 = vmatprep.subr.mxu0 0.0
        %2323 = vmatpush1.msra.mxu0 0.0
        %2324 = vmatprep.subr.mxu0 0.0
        %2325 = vmatpush1.msra.mxu0 0.0
        %2326 = vmatprep.subr.mxu0 0.0
        %2327 = vmatpush1.msra.mxu0 0.0
        %2328 = vmatprep.subr.mxu0 0.0
        %2329 = vmatpush1.msra.mxu0 0.0
        %2330 = vmatprep.subr.mxu0 0.0
        %2331 = vmatpush1.msra.mxu0 0.0
        %2332 = vmatprep.subr.mxu0 0.0
        %2333 = vmatpush1.msra.mxu0 0.0
        %2334 = vmatprep.subr.mxu0 0.0
        %2335 = vmatpush1.msra.mxu0 0.0
        %2336 = vmatprep.mubr.f32.mxu0 0.0
        %2337 = vmatmul.mubr.f32.gmra.mrb[0].mxu0 %v2270
        %v2338 = vpop.f32.mrb[0].mxu0
        %v2339 = vadd.f32 %v2266, %v2338
        %v2340 = vpop.f32.mrb[0].mxu0
        %2341 = vdwg.mxu0
        %2342 = vrot.lane.b32.xlu0 %v906, 112
        %v2343 = vpop.permute.xlu0 %2342
        %2344 = vrot.lane.b32.xlu0 %v906, 80
        %v2345 = vpop.permute.xlu0 %2344
        %v2346 = vsel %vm916, %v2343, 0
        %v2348 = vsel %vm916, %v2345, 0
        %2350 = vmatprep.subr.mxu0 0.0
        %2351 = vmatpush1.xpose.msra.mxu0 %v2348
        %2352 = vmatprep.subr.mxu0 0.0
        %2353 = vmatpush1.xpose.msra.mxu0 0.0
        %2354 = vmatprep.subr.mxu0 0.0
        %2355 = vmatpush1.xpose.msra.mxu0 0.0
        %2356 = vmatprep.subr.mxu0 0.0
        %2357 = vmatpush1.xpose.msra.mxu0 0.0
        %2358 = vmatprep.subr.mxu0 0.0
        %2359 = vmatpush1.xpose.msra.mxu0 0.0
        %2360 = vmatprep.subr.mxu0 0.0
        %2361 = vmatpush1.xpose.msra.mxu0 0.0
        %2362 = vmatprep.subr.mxu0 0.0
        %2363 = vmatpush1.xpose.msra.mxu0 0.0
        %2364 = vmatprep.subr.mxu0 0.0
        %2365 = vmatpush1.xpose.msra.mxu0 0.0
        %2366 = vmatprep.subr.mxu0 0.0
        %2367 = vmatpush1.xpose.msra.mxu0 0.0
        %2368 = vmatprep.subr.mxu0 0.0
        %2369 = vmatpush1.xpose.msra.mxu0 0.0
        %2370 = vmatprep.subr.mxu0 0.0
        %2371 = vmatpush1.xpose.msra.mxu0 0.0
        %2372 = vmatprep.subr.mxu0 0.0
        %2373 = vmatpush1.xpose.msra.mxu0 0.0
        %2374 = vmatprep.subr.mxu0 0.0
        %2375 = vmatpush1.xpose.msra.mxu0 0.0
        %2376 = vmatprep.subr.mxu0 0.0
        %2377 = vmatpush1.xpose.msra.mxu0 0.0
        %2378 = vmatprep.subr.mxu0 0.0
        %2379 = vmatpush1.xpose.msra.mxu0 0.0
        %2380 = vmatprep.subr.mxu0 0.0
        %2381 = vmatpush1.xpose.msra.mxu0 0.0
        %2382 = vmatprep.subr.mxu0 0.0
        %2383 = vmatpush1.xpose.msra.mxu0 0.0
        %2384 = vmatprep.subr.mxu0 0.0
        %2385 = vmatpush1.xpose.msra.mxu0 0.0
        %2386 = vmatprep.subr.mxu0 0.0
        %2387 = vmatpush1.xpose.msra.mxu0 0.0
        %2388 = vmatprep.subr.mxu0 0.0
        %2389 = vmatpush1.xpose.msra.mxu0 0.0
        %2390 = vmatprep.subr.mxu0 0.0
        %2391 = vmatpush1.xpose.msra.mxu0 0.0
        %2392 = vmatprep.subr.mxu0 0.0
        %2393 = vmatpush1.xpose.msra.mxu0 0.0
        %2394 = vmatprep.subr.mxu0 0.0
        %2395 = vmatpush1.xpose.msra.mxu0 0.0
        %2396 = vmatprep.subr.mxu0 0.0
        %2397 = vmatpush1.xpose.msra.mxu0 0.0
        %2398 = vmatprep.subr.mxu0 0.0
        %2399 = vmatpush1.xpose.msra.mxu0 0.0
        %2400 = vmatprep.subr.mxu0 0.0
        %2401 = vmatpush1.xpose.msra.mxu0 0.0
        %2402 = vmatprep.subr.mxu0 0.0
        %2403 = vmatpush1.xpose.msra.mxu0 0.0
        %2404 = vmatprep.subr.mxu0 0.0
        %2405 = vmatpush1.xpose.msra.mxu0 0.0
        %2406 = vmatprep.subr.mxu0 0.0
        %2407 = vmatpush1.xpose.msra.mxu0 0.0
        %2408 = vmatprep.subr.mxu0 0.0
        %2409 = vmatpush1.xpose.msra.mxu0 0.0
        %2410 = vmatprep.subr.mxu0 0.0
        %2411 = vmatpush1.xpose.msra.mxu0 0.0
        %2412 = vmatprep.subr.mxu0 0.0
        %2413 = vmatpush1.xpose.msra.mxu0 0.0
        %2414 = vmatprep.mubr.f32.mxu0 0.0
        %2415 = vmatmul.mubr.f32.gmra.mrb[0].mxu0 %v2346
        %v2416 = vpop.f32.mrb[0].mxu0
        %v2417 = vadd.f32 0.0, %v2416
        %v2418 = vpop.f32.mrb[0].mxu0
        %2419 = vdwg.mxu0
        %v2420 = vsel %vm916, %v2417, -inf
        %2421 = vmax.xlane.f32.xlu0 %v2420
        %v2422 = vpop.xlane.xlu0 %2421
        %v2423 = vsub.f32 %v2417, %v2422
        %v2424 = vmul.f32 %v2423, 1.442695
        %v2425 = vpow.pop %v2424
        %v2426 = vsel %vm916, %v2425, 0.0
        %2427 = vadd.xlane.f32.xlu0 %v2426
        %v2428 = vpop.xlane.xlu0 %2427
        %v2429 = vrcp.pop %v2428
        %v2430 = vmul.f32 %v2425, %v2429
        %2431 = vrot.lane.b32.xlu0 %v906, 48
        %v2432 = vpop.permute.xlu0 %2431
        %v2435 = vsel %vm916, %v2430, 0
        %2437 = vmatprep.subr.mxu0 0.0
        %2438 = vmatpush1.msra.mxu0 %v2432
        %2439 = vmatprep.subr.mxu0 0.0
        %2440 = vmatpush1.msra.mxu0 0.0
        %2441 = vmatprep.subr.mxu0 0.0
        %2442 = vmatpush1.msra.mxu0 0.0
        %2443 = vmatprep.subr.mxu0 0.0
        %2444 = vmatpush1.msra.mxu0 0.0
        %2445 = vmatprep.subr.mxu0 0.0
        %2446 = vmatpush1.msra.mxu0 0.0
        %2447 = vmatprep.subr.mxu0 0.0
        %2448 = vmatpush1.msra.mxu0 0.0
        %2449 = vmatprep.subr.mxu0 0.0
        %2450 = vmatpush1.msra.mxu0 0.0
        %2451 = vmatprep.subr.mxu0 0.0
        %2452 = vmatpush1.msra.mxu0 0.0
        %2453 = vmatprep.subr.mxu0 0.0
        %2454 = vmatpush1.msra.mxu0 0.0
        %2455 = vmatprep.subr.mxu0 0.0
        %2456 = vmatpush1.msra.mxu0 0.0
        %2457 = vmatprep.subr.mxu0 0.0
        %2458 = vmatpush1.msra.mxu0 0.0
        %2459 = vmatprep.subr.mxu0 0.0
        %2460 = vmatpush1.msra.mxu0 0.0
        %2461 = vmatprep.subr.mxu0 0.0
        %2462 = vmatpush1.msra.mxu0 0.0
        %2463 = vmatprep.subr.mxu0 0.0
        %2464 = vmatpush1.msra.mxu0 0.0
        %2465 = vmatprep.subr.mxu0 0.0
        %2466 = vmatpush1.msra.mxu0 0.0
        %2467 = vmatprep.subr.mxu0 0.0
        %2468 = vmatpush1.msra.mxu0 0.0
        %2469 = vmatprep.subr.mxu0 0.0
        %2470 = vmatpush1.msra.mxu0 0.0
        %2471 = vmatprep.subr.mxu0 0.0
        %2472 = vmatpush1.msra.mxu0 0.0
        %2473 = vmatprep.subr.mxu0 0.0
        %2474 = vmatpush1.msra.mxu0 0.0
        %2475 = vmatprep.subr.mxu0 0.0
        %2476 = vmatpush1.msra.mxu0 0.0
        %2477 = vmatprep.subr.mxu0 0.0
        %2478 = vmatpush1.msra.mxu0 0.0
        %2479 = vmatprep.subr.mxu0 0.0
        %2480 = vmatpush1.msra.mxu0 0.0
        %2481 = vmatprep.subr.mxu0 0.0
        %2482 = vmatpush1.msra.mxu0 0.0
        %2483 = vmatprep.subr.mxu0 0.0
        %2484 = vmatpush1.msra.mxu0 0.0
        %2485 = vmatprep.subr.mxu0 0.0
        %2486 = vmatpush1.msra.mxu0 0.0
        %2487 = vmatprep.subr.mxu0 0.0
        %2488 = vmatpush1.msra.mxu0 0.0
        %2489 = vmatprep.subr.mxu0 0.0
        %2490 = vmatpush1.msra.mxu0 0.0
        %2491 = vmatprep.subr.mxu0 0.0
        %2492 = vmatpush1.msra.mxu0 0.0
        %2493 = vmatprep.subr.mxu0 0.0
        %2494 = vmatpush1.msra.mxu0 0.0
        %2495 = vmatprep.subr.mxu0 0.0
        %2496 = vmatpush1.msra.mxu0 0.0
        %2497 = vmatprep.subr.mxu0 0.0
        %2498 = vmatpush1.msra.mxu0 0.0
        %2499 = vmatprep.subr.mxu0 0.0
        %2500 = vmatpush1.msra.mxu0 0.0
        %2501 = vmatprep.mubr.f32.mxu0 0.0
        %2502 = vmatmul.mubr.f32.gmra.mrb[0].mxu0 %v2435
        %v2503 = vpop.f32.mrb[0].mxu0
        %v2504 = vadd.f32 0.0, %v2503
        %v2505 = vpop.f32.mrb[0].mxu0
        %2506 = vdwg.mxu0
        %v2508 = vsel %vm916, %v2504, 0
        %2510 = vmatprep.subr.mxu0 0.0
        %2511 = vmatpush1.msra.mxu0 %v911
        %2512 = vmatprep.subr.mxu0 0.0
        %2513 = vmatpush1.msra.mxu0 0.0
        %2514 = vmatprep.subr.mxu0 0.0
        %2515 = vmatpush1.msra.mxu0 0.0
        %2516 = vmatprep.subr.mxu0 0.0
        %2517 = vmatpush1.msra.mxu0 0.0
        %2518 = vmatprep.subr.mxu0 0.0
        %2519 = vmatpush1.msra.mxu0 0.0
        %2520 = vmatprep.subr.mxu0 0.0
        %2521 = vmatpush1.msra.mxu0 0.0
        %2522 = vmatprep.subr.mxu0 0.0
        %2523 = vmatpush1.msra.mxu0 0.0
        %2524 = vmatprep.subr.mxu0 0.0
        %2525 = vmatpush1.msra.mxu0 0.0
        %2526 = vmatprep.subr.mxu0 0.0
        %2527 = vmatpush1.msra.mxu0 0.0
        %2528 = vmatprep.subr.mxu0 0.0
        %2529 = vmatpush1.msra.mxu0 0.0
        %2530 = vmatprep.subr.mxu0 0.0
        %2531 = vmatpush1.msra.mxu0 0.0
        %2532 = vmatprep.subr.mxu0 0.0
        %2533 = vmatpush1.msra.mxu0 0.0
        %2534 = vmatprep.subr.mxu0 0.0
        %2535 = vmatpush1.msra.mxu0 0.0
        %2536 = vmatprep.subr.mxu0 0.0
        %2537 = vmatpush1.msra.mxu0 0.0
        %2538 = vmatprep.subr.mxu0 0.0
        %2539 = vmatpush1.msra.mxu0 0.0
        %2540 = vmatprep.subr.mxu0 0.0
        %2541 = vmatpush1.msra.mxu0 0.0
        %2542 = vmatprep.subr.mxu0 0.0
        %2543 = vmatpush1.msra.mxu0 0.0
        %2544 = vmatprep.subr.mxu0 0.0
        %2545 = vmatpush1.msra.mxu0 0.0
        %2546 = vmatprep.subr.mxu0 0.0
        %2547 = vmatpush1.msra.mxu0 0.0
        %2548 = vmatprep.subr.mxu0 0.0
        %2549 = vmatpush1.msra.mxu0 0.0
        %2550 = vmatprep.subr.mxu0 0.0
        %2551 = vmatpush1.msra.mxu0 0.0
        %2552 = vmatprep.subr.mxu0 0.0
        %2553 = vmatpush1.msra.mxu0 0.0
        %2554 = vmatprep.subr.mxu0 0.0
        %2555 = vmatpush1.msra.mxu0 0.0
        %2556 = vmatprep.subr.mxu0 0.0
        %2557 = vmatpush1.msra.mxu0 0.0
        %2558 = vmatprep.subr.mxu0 0.0
        %2559 = vmatpush1.msra.mxu0 0.0
        %2560 = vmatprep.subr.mxu0 0.0
        %2561 = vmatpush1.msra.mxu0 0.0
        %2562 = vmatprep.subr.mxu0 0.0
        %2563 = vmatpush1.msra.mxu0 0.0
        %2564 = vmatprep.subr.mxu0 0.0
        %2565 = vmatpush1.msra.mxu0 0.0
        %2566 = vmatprep.subr.mxu0 0.0
        %2567 = vmatpush1.msra.mxu0 0.0
        %2568 = vmatprep.subr.mxu0 0.0
        %2569 = vmatpush1.msra.mxu0 0.0
        %2570 = vmatprep.subr.mxu0 0.0
        %2571 = vmatpush1.msra.mxu0 0.0
        %2572 = vmatprep.subr.mxu0 0.0
        %2573 = vmatpush1.msra.mxu0 0.0
        %2574 = vmatprep.mubr.f32.mxu0 0.0
        %2575 = vmatmul.mubr.f32.gmra.mrb[0].mxu0 %v2508
        %v2576 = vpop.f32.mrb[0].mxu0
        %v2577 = vadd.f32 0.0, %v2576
        %v2578 = vpop.f32.mrb[0].mxu0
        %2579 = vdwg.mxu0
        %v2580 = vadd.f32 %v2339, %v2577
        %2581 = vrot.lane.b32.xlu0 %v906, 104
        %v2582 = vpop.permute.xlu0 %2581
        %2583 = vrot.lane.b32.xlu0 %v906, 72
        %v2584 = vpop.permute.xlu0 %2583
        %v2585 = vsel %vm916, %v2582, 0
        %v2587 = vsel %vm916, %v2584, 0
        %2589 = vmatprep.subr.mxu0 0.0
        %2590 = vmatpush1.xpose.msra.mxu0 %v2587
        %2591 = vmatprep.subr.mxu0 0.0
        %2592 = vmatpush1.xpose.msra.mxu0 0.0
        %2593 = vmatprep.subr.mxu0 0.0
        %2594 = vmatpush1.xpose.msra.mxu0 0.0
        %2595 = vmatprep.subr.mxu0 0.0
        %2596 = vmatpush1.xpose.msra.mxu0 0.0
        %2597 = vmatprep.subr.mxu0 0.0
        %2598 = vmatpush1.xpose.msra.mxu0 0.0
        %2599 = vmatprep.subr.mxu0 0.0
        %2600 = vmatpush1.xpose.msra.mxu0 0.0
        %2601 = vmatprep.subr.mxu0 0.0
        %2602 = vmatpush1.xpose.msra.mxu0 0.0
        %2603 = vmatprep.subr.mxu0 0.0
        %2604 = vmatpush1.xpose.msra.mxu0 0.0
        %2605 = vmatprep.subr.mxu0 0.0
        %2606 = vmatpush1.xpose.msra.mxu0 0.0
        %2607 = vmatprep.subr.mxu0 0.0
        %2608 = vmatpush1.xpose.msra.mxu0 0.0
        %2609 = vmatprep.subr.mxu0 0.0
        %2610 = vmatpush1.xpose.msra.mxu0 0.0
        %2611 = vmatprep.subr.mxu0 0.0
        %2612 = vmatpush1.xpose.msra.mxu0 0.0
        %2613 = vmatprep.subr.mxu0 0.0
        %2614 = vmatpush1.xpose.msra.mxu0 0.0
        %2615 = vmatprep.subr.mxu0 0.0
        %2616 = vmatpush1.xpose.msra.mxu0 0.0
        %2617 = vmatprep.subr.mxu0 0.0
        %2618 = vmatpush1.xpose.msra.mxu0 0.0
        %2619 = vmatprep.subr.mxu0 0.0
        %2620 = vmatpush1.xpose.msra.mxu0 0.0
        %2621 = vmatprep.subr.mxu0 0.0
        %2622 = vmatpush1.xpose.msra.mxu0 0.0
        %2623 = vmatprep.subr.mxu0 0.0
        %2624 = vmatpush1.xpose.msra.mxu0 0.0
        %2625 = vmatprep.subr.mxu0 0.0
        %2626 = vmatpush1.xpose.msra.mxu0 0.0
        %2627 = vmatprep.subr.mxu0 0.0
        %2628 = vmatpush1.xpose.msra.mxu0 0.0
        %2629 = vmatprep.subr.mxu0 0.0
        %2630 = vmatpush1.xpose.msra.mxu0 0.0
        %2631 = vmatprep.subr.mxu0 0.0
        %2632 = vmatpush1.xpose.msra.mxu0 0.0
        %2633 = vmatprep.subr.mxu0 0.0
        %2634 = vmatpush1.xpose.msra.mxu0 0.0
        %2635 = vmatprep.subr.mxu0 0.0
        %2636 = vmatpush1.xpose.msra.mxu0 0.0
        %2637 = vmatprep.subr.mxu0 0.0
        %2638 = vmatpush1.xpose.msra.mxu0 0.0
        %2639 = vmatprep.subr.mxu0 0.0
        %2640 = vmatpush1.xpose.msra.mxu0 0.0
        %2641 = vmatprep.subr.mxu0 0.0
        %2642 = vmatpush1.xpose.msra.mxu0 0.0
        %2643 = vmatprep.subr.mxu0 0.0
        %2644 = vmatpush1.xpose.msra.mxu0 0.0
        %2645 = vmatprep.subr.mxu0 0.0
        %2646 = vmatpush1.xpose.msra.mxu0 0.0
        %2647 = vmatprep.subr.mxu0 0.0
        %2648 = vmatpush1.xpose.msra.mxu0 0.0
        %2649 = vmatprep.subr.mxu0 0.0
        %2650 = vmatpush1.xpose.msra.mxu0 0.0
        %2651 = vmatprep.subr.mxu0 0.0
        %2652 = vmatpush1.xpose.msra.mxu0 0.0
        %2653 = vmatprep.mubr.f32.mxu0 0.0
        %2654 = vmatmul.mubr.f32.gmra.mrb[0].mxu0 %v2585
        %v2655 = vpop.f32.mrb[0].mxu0
        %v2656 = vadd.f32 0.0, %v2655
        %v2657 = vpop.f32.mrb[0].mxu0
        %2658 = vdwg.mxu0
        %v2659 = vsel %vm916, %v2656, -inf
        %2660 = vmax.xlane.f32.xlu0 %v2659
        %v2661 = vpop.xlane.xlu0 %2660
        %v2662 = vsub.f32 %v2656, %v2661
        %v2663 = vmul.f32 %v2662, 1.442695
        %v2664 = vpow.pop %v2663
        %v2665 = vsel %vm916, %v2664, 0.0
        %2666 = vadd.xlane.f32.xlu0 %v2665
        %v2667 = vpop.xlane.xlu0 %2666
        %v2668 = vrcp.pop %v2667
        %v2669 = vmul.f32 %v2664, %v2668
        %2670 = vrot.lane.b32.xlu0 %v906, 40
        %v2671 = vpop.permute.xlu0 %2670
        %v2674 = vsel %vm916, %v2669, 0
        %2676 = vmatprep.subr.mxu0 0.0
        %2677 = vmatpush1.msra.mxu0 %v2671
        %2678 = vmatprep.subr.mxu0 0.0
        %2679 = vmatpush1.msra.mxu0 0.0
        %2680 = vmatprep.subr.mxu0 0.0
        %2681 = vmatpush1.msra.mxu0 0.0
        %2682 = vmatprep.subr.mxu0 0.0
        %2683 = vmatpush1.msra.mxu0 0.0
        %2684 = vmatprep.subr.mxu0 0.0
        %2685 = vmatpush1.msra.mxu0 0.0
        %2686 = vmatprep.subr.mxu0 0.0
        %2687 = vmatpush1.msra.mxu0 0.0
        %2688 = vmatprep.subr.mxu0 0.0
        %2689 = vmatpush1.msra.mxu0 0.0
        %2690 = vmatprep.subr.mxu0 0.0
        %2691 = vmatpush1.msra.mxu0 0.0
        %2692 = vmatprep.subr.mxu0 0.0
        %2693 = vmatpush1.msra.mxu0 0.0
        %2694 = vmatprep.subr.mxu0 0.0
        %2695 = vmatpush1.msra.mxu0 0.0
        %2696 = vmatprep.subr.mxu0 0.0
        %2697 = vmatpush1.msra.mxu0 0.0
        %2698 = vmatprep.subr.mxu0 0.0
        %2699 = vmatpush1.msra.mxu0 0.0
        %2700 = vmatprep.subr.mxu0 0.0
        %2701 = vmatpush1.msra.mxu0 0.0
        %2702 = vmatprep.subr.mxu0 0.0
        %2703 = vmatpush1.msra.mxu0 0.0
        %2704 = vmatprep.subr.mxu0 0.0
        %2705 = vmatpush1.msra.mxu0 0.0
        %2706 = vmatprep.subr.mxu0 0.0
        %2707 = vmatpush1.msra.mxu0 0.0
        %2708 = vmatprep.subr.mxu0 0.0
        %2709 = vmatpush1.msra.mxu0 0.0
        %2710 = vmatprep.subr.mxu0 0.0
        %2711 = vmatpush1.msra.mxu0 0.0
        %2712 = vmatprep.subr.mxu0 0.0
        %2713 = vmatpush1.msra.mxu0 0.0
        %2714 = vmatprep.subr.mxu0 0.0
        %2715 = vmatpush1.msra.mxu0 0.0
        %2716 = vmatprep.subr.mxu0 0.0
        %2717 = vmatpush1.msra.mxu0 0.0
        %2718 = vmatprep.subr.mxu0 0.0
        %2719 = vmatpush1.msra.mxu0 0.0
        %2720 = vmatprep.subr.mxu0 0.0
        %2721 = vmatpush1.msra.mxu0 0.0
        %2722 = vmatprep.subr.mxu0 0.0
        %2723 = vmatpush1.msra.mxu0 0.0
        %2724 = vmatprep.subr.mxu0 0.0
        %2725 = vmatpush1.msra.mxu0 0.0
        %2726 = vmatprep.subr.mxu0 0.0
        %2727 = vmatpush1.msra.mxu0 0.0
        %2728 = vmatprep.subr.mxu0 0.0
        %2729 = vmatpush1.msra.mxu0 0.0
        %2730 = vmatprep.subr.mxu0 0.0
        %2731 = vmatpush1.msra.mxu0 0.0
        %2732 = vmatprep.subr.mxu0 0.0
        %2733 = vmatpush1.msra.mxu0 0.0
        %2734 = vmatprep.subr.mxu0 0.0
        %2735 = vmatpush1.msra.mxu0 0.0
        %2736 = vmatprep.subr.mxu0 0.0
        %2737 = vmatpush1.msra.mxu0 0.0
        %2738 = vmatprep.subr.mxu0 0.0
        %2739 = vmatpush1.msra.mxu0 0.0
        %2740 = vmatprep.mubr.f32.mxu0 0.0
        %2741 = vmatmul.mubr.f32.gmra.mrb[0].mxu0 %v2674
        %v2742 = vpop.f32.mrb[0].mxu0
        %v2743 = vadd.f32 0.0, %v2742
        %v2744 = vpop.f32.mrb[0].mxu0
        %2745 = vdwg.mxu0
        %v2747 = vsel %vm916, %v2743, 0
        %2749 = vmatprep.subr.mxu0 0.0
        %2750 = vmatpush1.msra.mxu0 %v912
        %2751 = vmatprep.subr.mxu0 0.0
        %2752 = vmatpush1.msra.mxu0 0.0
        %2753 = vmatprep.subr.mxu0 0.0
        %2754 = vmatpush1.msra.mxu0 0.0
        %2755 = vmatprep.subr.mxu0 0.0
        %2756 = vmatpush1.msra.mxu0 0.0
        %2757 = vmatprep.subr.mxu0 0.0
        %2758 = vmatpush1.msra.mxu0 0.0
        %2759 = vmatprep.subr.mxu0 0.0
        %2760 = vmatpush1.msra.mxu0 0.0
        %2761 = vmatprep.subr.mxu0 0.0
        %2762 = vmatpush1.msra.mxu0 0.0
        %2763 = vmatprep.subr.mxu0 0.0
        %2764 = vmatpush1.msra.mxu0 0.0
        %2765 = vmatprep.subr.mxu0 0.0
        %2766 = vmatpush1.msra.mxu0 0.0
        %2767 = vmatprep.subr.mxu0 0.0
        %2768 = vmatpush1.msra.mxu0 0.0
        %2769 = vmatprep.subr.mxu0 0.0
        %2770 = vmatpush1.msra.mxu0 0.0
        %2771 = vmatprep.subr.mxu0 0.0
        %2772 = vmatpush1.msra.mxu0 0.0
        %2773 = vmatprep.subr.mxu0 0.0
        %2774 = vmatpush1.msra.mxu0 0.0
        %2775 = vmatprep.subr.mxu0 0.0
        %2776 = vmatpush1.msra.mxu0 0.0
        %2777 = vmatprep.subr.mxu0 0.0
        %2778 = vmatpush1.msra.mxu0 0.0
        %2779 = vmatprep.subr.mxu0 0.0
        %2780 = vmatpush1.msra.mxu0 0.0
        %2781 = vmatprep.subr.mxu0 0.0
        %2782 = vmatpush1.msra.mxu0 0.0
        %2783 = vmatprep.subr.mxu0 0.0
        %2784 = vmatpush1.msra.mxu0 0.0
        %2785 = vmatprep.subr.mxu0 0.0
        %2786 = vmatpush1.msra.mxu0 0.0
        %2787 = vmatprep.subr.mxu0 0.0
        %2788 = vmatpush1.msra.mxu0 0.0
        %2789 = vmatprep.subr.mxu0 0.0
        %2790 = vmatpush1.msra.mxu0 0.0
        %2791 = vmatprep.subr.mxu0 0.0
        %2792 = vmatpush1.msra.mxu0 0.0
        %2793 = vmatprep.subr.mxu0 0.0
        %2794 = vmatpush1.msra.mxu0 0.0
        %2795 = vmatprep.subr.mxu0 0.0
        %2796 = vmatpush1.msra.mxu0 0.0
        %2797 = vmatprep.subr.mxu0 0.0
        %2798 = vmatpush1.msra.mxu0 0.0
        %2799 = vmatprep.subr.mxu0 0.0
        %2800 = vmatpush1.msra.mxu0 0.0
        %2801 = vmatprep.subr.mxu0 0.0
        %2802 = vmatpush1.msra.mxu0 0.0
        %2803 = vmatprep.subr.mxu0 0.0
        %2804 = vmatpush1.msra.mxu0 0.0
        %2805 = vmatprep.subr.mxu0 0.0
        %2806 = vmatpush1.msra.mxu0 0.0
        %2807 = vmatprep.subr.mxu0 0.0
        %2808 = vmatpush1.msra.mxu0 0.0
        %2809 = vmatprep.subr.mxu0 0.0
        %2810 = vmatpush1.msra.mxu0 0.0
        %2811 = vmatprep.subr.mxu0 0.0
        %2812 = vmatpush1.msra.mxu0 0.0
        %2813 = vmatprep.mubr.f32.mxu0 0.0
        %2814 = vmatmul.mubr.f32.gmra.mrb[0].mxu0 %v2747
        %v2815 = vpop.f32.mrb[0].mxu0
        %v2816 = vadd.f32 0.0, %v2815
        %v2817 = vpop.f32.mrb[0].mxu0
        %2818 = vdwg.mxu0
        %v2819 = vadd.f32 %v2580, %v2816
        %v2820 = vld [vmem:[%s658] sm:$0x1]
        %v2822 = vlaneseq
        %v2823 = vshrl.u32 %v2822, 7
        %v2824 = vsub.s32 0, %v2823
        %v2825 = vrot.slane %v2820, %v2824
        %v2827 = vadd.f32 %v1866, %v2825
        %v2828 = vadd.f32 %v2819, %v2825
        %v2829 = vadd.f32 %v814, %v2827
        %v2830 = vadd.f32 %v815, %v2828
        %v2831 = vld [vmem:[%s666] sm:$0x1]
        %v2832 = vld [vmem:[%s674] sm:$0x1]
        %v2833 = vsel %vm827, %v2829, 0.0
        %2834 = vadd.xlane.f32.xlu0 %v2833
        %v2835 = vpop.xlane.xlu0 %2834
        %v2836 = vsel %vm827, %v2830, 0.0
        %2837 = vadd.xlane.f32.xlu0 %v2836
        %v2838 = vpop.xlane.xlu0 %2837
        %v2839 = vrcp.pop 32.0
        %v2840 = vmul.f32 %v2835, %v2839
        %v2841 = vmul.f32 %v2838, %v2839
        %v2842 = vsub.f32 %v2829, %v2840
        %v2843 = vsub.f32 %v2830, %v2841
        %v2844 = vmul.f32 %v2842, %v2842
        %v2845 = vmul.f32 %v2843, %v2843
        %v2846 = vsel %vm827, %v2844, 0.0
        %2847 = vadd.xlane.f32.xlu0 %v2846
        %v2848 = vpop.xlane.xlu0 %2847
        %v2849 = vsel %vm827, %v2845, 0.0
        %2850 = vadd.xlane.f32.xlu0 %v2849
        %v2851 = vpop.xlane.xlu0 %2850
        %v2852 = vmul.f32 %v2848, %v2839
        %v2853 = vmul.f32 %v2851, %v2839
        %v2854 = vadd.f32 %v2852, 1e-05
        %v2855 = vadd.f32 %v2853, 1e-05
        %v2856 = vrsqrt.pop %v2854
        %v2857 = vrsqrt.pop %v2855
        %v2858 = vmul.f32 %v2842, %v2856
        %v2859 = vmul.f32 %v2843, %v2857
        %v2861 = vlaneseq
        %v2862 = vshrl.u32 %v2861, 7
        %v2863 = vsub.s32 0, %v2862
        %v2864 = vrot.slane %v2831, %v2863
        %v2866 = vmul.f32 %v2858, %v2864
        %v2867 = vmul.f32 %v2859, %v2864
        %v2869 = vlaneseq
        %v2870 = vshrl.u32 %v2869, 7
        %v2871 = vsub.s32 0, %v2870
        %v2872 = vrot.slane %v2832, %v2871
        %v2874 = vadd.f32 %v2866, %v2872
        %v2875 = vadd.f32 %v2867, %v2872
        %v2876 = vld [vmem:[%s787] sm:$0xff]
        %v2877 = vld [vmem:[%s787 + $0x8] sm:$0xff]
        %v2878 = vld [vmem:[%s787 + $0x10] sm:$0xff]
        %v2879 = vld [vmem:[%s787 + $0x18] sm:$0xff]
        %v2880 = vld [vmem:[%s682] sm:$0x1]
        %v2882 = vlaneseq
        %v2883 = vshrl.u32 %v2882, 7
        %v2884 = vsub.s32 0, %v2883
        %v2885 = vrot.slane %v2880, %v2884
        %v2888 = vsel %vm827, %v2874, 0
        %v2891 = vsel %vm827, %v2875, 0
        %2893 = vmatprep.subr.mxu0 0.0
        %2894 = vmatpush1.msra.mxu0 %v2876
        %2895 = vmatprep.subr.mxu0 0.0
        %2896 = vmatpush1.msra.mxu0 %v2877
        %2897 = vmatprep.subr.mxu0 0.0
        %2898 = vmatpush1.msra.mxu0 %v2878
        %2899 = vmatprep.subr.mxu0 0.0
        %2900 = vmatpush1.msra.mxu0 %v2879
        %2901 = vmatprep.subr.mxu0 0.0
        %2902 = vmatpush1.msra.mxu0 0.0
        %2903 = vmatprep.subr.mxu0 0.0
        %2904 = vmatpush1.msra.mxu0 0.0
        %2905 = vmatprep.subr.mxu0 0.0
        %2906 = vmatpush1.msra.mxu0 0.0
        %2907 = vmatprep.subr.mxu0 0.0
        %2908 = vmatpush1.msra.mxu0 0.0
        %2909 = vmatprep.subr.mxu0 0.0
        %2910 = vmatpush1.msra.mxu0 0.0
        %2911 = vmatprep.subr.mxu0 0.0
        %2912 = vmatpush1.msra.mxu0 0.0
        %2913 = vmatprep.subr.mxu0 0.0
        %2914 = vmatpush1.msra.mxu0 0.0
        %2915 = vmatprep.subr.mxu0 0.0
        %2916 = vmatpush1.msra.mxu0 0.0
        %2917 = vmatprep.subr.mxu0 0.0
        %2918 = vmatpush1.msra.mxu0 0.0
        %2919 = vmatprep.subr.mxu0 0.0
        %2920 = vmatpush1.msra.mxu0 0.0
        %2921 = vmatprep.subr.mxu0 0.0
        %2922 = vmatpush1.msra.mxu0 0.0
        %2923 = vmatprep.subr.mxu0 0.0
        %2924 = vmatpush1.msra.mxu0 0.0
        %2925 = vmatprep.subr.mxu0 0.0
        %2926 = vmatpush1.msra.mxu0 0.0
        %2927 = vmatprep.subr.mxu0 0.0
        %2928 = vmatpush1.msra.mxu0 0.0
        %2929 = vmatprep.subr.mxu0 0.0
        %2930 = vmatpush1.msra.mxu0 0.0
        %2931 = vmatprep.subr.mxu0 0.0
        %2932 = vmatpush1.msra.mxu0 0.0
        %2933 = vmatprep.subr.mxu0 0.0
        %2934 = vmatpush1.msra.mxu0 0.0
        %2935 = vmatprep.subr.mxu0 0.0
        %2936 = vmatpush1.msra.mxu0 0.0
        %2937 = vmatprep.subr.mxu0 0.0
        %2938 = vmatpush1.msra.mxu0 0.0
        %2939 = vmatprep.subr.mxu0 0.0
        %2940 = vmatpush1.msra.mxu0 0.0
        %2941 = vmatprep.subr.mxu0 0.0
        %2942 = vmatpush1.msra.mxu0 0.0
        %2943 = vmatprep.subr.mxu0 0.0
        %2944 = vmatpush1.msra.mxu0 0.0
        %2945 = vmatprep.subr.mxu0 0.0
        %2946 = vmatpush1.msra.mxu0 0.0
        %2947 = vmatprep.subr.mxu0 0.0
        %2948 = vmatpush1.msra.mxu0 0.0
        %2949 = vmatprep.subr.mxu0 0.0
        %2950 = vmatpush1.msra.mxu0 0.0
        %2951 = vmatprep.subr.mxu0 0.0
        %2952 = vmatpush1.msra.mxu0 0.0
        %2953 = vmatprep.subr.mxu0 0.0
        %2954 = vmatpush1.msra.mxu0 0.0
        %2955 = vmatprep.subr.mxu0 0.0
        %2956 = vmatpush1.msra.mxu0 0.0
        %2957 = vmatprep.mubr.f32.mxu0 0.0
        %2958 = vmatmul.mubr.f32.gmra.mrb[0].mxu0 %v2888
        %v2959 = vpop.f32.mrb[0].mxu0
        %v2960 = vadd.f32 %v2885, %v2959
        %v2961 = vpop.f32.mrb[0].mxu0
        %2962 = vmatprep.mubr.f32.mxu0 0.0
        %2963 = vmatmul.mubr.f32.gmra.mrb[0].mxu0 %v2891
        %v2964 = vpop.f32.mrb[0].mxu0
        %v2965 = vadd.f32 %v2885, %v2964
        %v2966 = vpop.f32.mrb[0].mxu0
        %2967 = vdwg.mxu0
        %v2968 = vmax.f32 %v2960, 0.0
        %v2969 = vmax.f32 %v2965, 0.0
        %v2970 = vld [vmem:[%s792] sm:$0xff]
        %v2971 = vld [vmem:[%s792 + $0x8] sm:$0xff]
        %v2972 = vld [vmem:[%s792 + $0x10] sm:$0xff]
        %v2973 = vld [vmem:[%s792 + $0x18] sm:$0xff]
        %v2974 = vld [vmem:[%s792 + $0x20] sm:$0xff]
        %v2975 = vld [vmem:[%s792 + $0x28] sm:$0xff]
        %v2976 = vld [vmem:[%s792 + $0x30] sm:$0xff]
        %v2977 = vld [vmem:[%s792 + $0x38] sm:$0xff]
        %v2978 = vld [vmem:[%s795] sm:$0x1]
        %v2980 = vlaneseq
        %v2981 = vshrl.u32 %v2980, 7
        %v2982 = vsub.s32 0, %v2981
        %v2983 = vrot.slane %v2978, %v2982
        %vm2985 = vcmask 523264
        %v2987 = vsel %vm2985, %v2968, 0
        %v2990 = vsel %vm2985, %v2969, 0
        %2992 = vmatprep.subr.mxu0 0.0
        %2993 = vmatpush1.msra.mxu0 %v2970
        %2994 = vmatprep.subr.mxu0 0.0
        %2995 = vmatpush1.msra.mxu0 %v2971
        %2996 = vmatprep.subr.mxu0 0.0
        %2997 = vmatpush1.msra.mxu0 %v2972
        %2998 = vmatprep.subr.mxu0 0.0
        %2999 = vmatpush1.msra.mxu0 %v2973
        %3000 = vmatprep.subr.mxu0 0.0
        %3001 = vmatpush1.msra.mxu0 %v2974
        %3002 = vmatprep.subr.mxu0 0.0
        %3003 = vmatpush1.msra.mxu0 %v2975
        %3004 = vmatprep.subr.mxu0 0.0
        %3005 = vmatpush1.msra.mxu0 %v2976
        %3006 = vmatprep.subr.mxu0 0.0
        %3007 = vmatpush1.msra.mxu0 %v2977
        %3008 = vmatprep.subr.mxu0 0.0
        %3009 = vmatpush1.msra.mxu0 0.0
        %3010 = vmatprep.subr.mxu0 0.0
        %3011 = vmatpush1.msra.mxu0 0.0
        %3012 = vmatprep.subr.mxu0 0.0
        %3013 = vmatpush1.msra.mxu0 0.0
        %3014 = vmatprep.subr.mxu0 0.0
        %3015 = vmatpush1.msra.mxu0 0.0
        %3016 = vmatprep.subr.mxu0 0.0
        %3017 = vmatpush1.msra.mxu0 0.0
        %3018 = vmatprep.subr.mxu0 0.0
        %3019 = vmatpush1.msra.mxu0 0.0
        %3020 = vmatprep.subr.mxu0 0.0
        %3021 = vmatpush1.msra.mxu0 0.0
        %3022 = vmatprep.subr.mxu0 0.0
        %3023 = vmatpush1.msra.mxu0 0.0
        %3024 = vmatprep.subr.mxu0 0.0
        %3025 = vmatpush1.msra.mxu0 0.0
        %3026 = vmatprep.subr.mxu0 0.0
        %3027 = vmatpush1.msra.mxu0 0.0
        %3028 = vmatprep.subr.mxu0 0.0
        %3029 = vmatpush1.msra.mxu0 0.0
        %3030 = vmatprep.subr.mxu0 0.0
        %3031 = vmatpush1.msra.mxu0 0.0
        %3032 = vmatprep.subr.mxu0 0.0
        %3033 = vmatpush1.msra.mxu0 0.0
        %3034 = vmatprep.subr.mxu0 0.0
        %3035 = vmatpush1.msra.mxu0 0.0
        %3036 = vmatprep.subr.mxu0 0.0
        %3037 = vmatpush1.msra.mxu0 0.0
        %3038 = vmatprep.subr.mxu0 0.0
        %3039 = vmatpush1.msra.mxu0 0.0
        %3040 = vmatprep.subr.mxu0 0.0
        %3041 = vmatpush1.msra.mxu0 0.0
        %3042 = vmatprep.subr.mxu0 0.0
        %3043 = vmatpush1.msra.mxu0 0.0
        %3044 = vmatprep.subr.mxu0 0.0
        %3045 = vmatpush1.msra.mxu0 0.0
        %3046 = vmatprep.subr.mxu0 0.0
        %3047 = vmatpush1.msra.mxu0 0.0
        %3048 = vmatprep.subr.mxu0 0.0
        %3049 = vmatpush1.msra.mxu0 0.0
        %3050 = vmatprep.subr.mxu0 0.0
        %3051 = vmatpush1.msra.mxu0 0.0
        %3052 = vmatprep.subr.mxu0 0.0
        %3053 = vmatpush1.msra.mxu0 0.0
        %3054 = vmatprep.subr.mxu0 0.0
        %3055 = vmatpush1.msra.mxu0 0.0
        %3056 = vmatprep.mubr.f32.mxu0 0.0
        %3057 = vmatmul.mubr.f32.gmra.mrb[0].mxu0 %v2987
        %v3058 = vpop.f32.mrb[0].mxu0
        %v3059 = vadd.f32 %v2983, %v3058
        %v3060 = vpop.f32.mrb[0].mxu0
        %3061 = vmatprep.mubr.f32.mxu0 0.0
        %3062 = vmatmul.mubr.f32.gmra.mrb[0].mxu0 %v2990
        %v3063 = vpop.f32.mrb[0].mxu0
        %v3064 = vadd.f32 %v2983, %v3063
        %v3065 = vpop.f32.mrb[0].mxu0
        %3066 = vdwg.mxu0
        %v3067 = vadd.f32 %v2874, %v3059
        %v3068 = vadd.f32 %v2875, %v3064
        %v3069 = vld [vmem:[%s798] sm:$0x1]
        %v3070 = vld [vmem:[%s801] sm:$0x1]
        %v3071 = vsel %vm827, %v3067, 0.0
        %3072 = vadd.xlane.f32.xlu0 %v3071
        %v3073 = vpop.xlane.xlu0 %3072
        %v3074 = vsel %vm827, %v3068, 0.0
        %3075 = vadd.xlane.f32.xlu0 %v3074
        %v3076 = vpop.xlane.xlu0 %3075
        %v3077 = vmul.f32 %v3073, %v2839
        %v3078 = vmul.f32 %v3076, %v2839
        %v3079 = vsub.f32 %v3067, %v3077
        %v3080 = vsub.f32 %v3068, %v3078
        %v3081 = vmul.f32 %v3079, %v3079
        %v3082 = vmul.f32 %v3080, %v3080
        %v3083 = vsel %vm827, %v3081, 0.0
        %3084 = vadd.xlane.f32.xlu0 %v3083
        %v3085 = vpop.xlane.xlu0 %3084
        %v3086 = vsel %vm827, %v3082, 0.0
        %3087 = vadd.xlane.f32.xlu0 %v3086
        %v3088 = vpop.xlane.xlu0 %3087
        %v3089 = vmul.f32 %v3085, %v2839
        %v3090 = vmul.f32 %v3088, %v2839
        %v3091 = vadd.f32 %v3089, 1e-05
        %v3092 = vadd.f32 %v3090, 1e-05
        %v3093 = vrsqrt.pop %v3091
        %v3094 = vrsqrt.pop %v3092
        %v3095 = vmul.f32 %v3079, %v3093
        %v3096 = vmul.f32 %v3080, %v3094
        %v3098 = vlaneseq
        %v3099 = vshrl.u32 %v3098, 7
        %v3100 = vsub.s32 0, %v3099
        %v3101 = vrot.slane %v3069, %v3100
        %v3103 = vmul.f32 %v3095, %v3101
        %v3104 = vmul.f32 %v3096, %v3101
        %v3106 = vlaneseq
        %v3107 = vshrl.u32 %v3106, 7
        %v3108 = vsub.s32 0, %v3107
        %v3109 = vrot.slane %v3070, %v3108
        %v3111 = vadd.f32 %v3103, %v3109
        %v3112 = vadd.f32 %v3104, %v3109
        %3113 = vst.msk [vmem:[#allocation2] sm:$0xff] %vm827, %v3111
        %3114 = vst.msk [vmem:[#allocation2 + $0x8] sm:$0xff] %vm827, %v3112
        %p3115 = scmp.eq.s32.totalorder %s35, 1
        // Predicated region
        $region113: #{tpu_custom_call.1} parent=83 // pred_check
          %p3116 = pneg %p3115
        $region114: #{tpu_custom_call.1} parent=83 // pred_check_branch
          %3118 = sbr.rel (%p3116) target = $region116
        $region115: #{tpu_custom_call.1} parent=83 // pred_region
          %v3119 = vsel %vm827, %v3111, 0.0
          %v3120 = vrot.slane %v3119, 4
          %v3121 = vadd.f32 %v3119, %v3120
          %v3122 = vrot.slane %v3121, 2
          %v3123 = vadd.f32 %v3121, %v3122
          %v3124 = vrot.slane %v3123, 1
          %v3125 = vadd.f32 %v3123, %v3124
          %v3126 = vrcp.pop 8.0
          %v3127 = vmul.f32 %v3125, %v3126
          %v3128 = vsel %vm827, %v3112, 0.0
          %v3129 = vrot.slane %v3128, 4
          %v3130 = vadd.f32 %v3128, %v3129
          %v3131 = vrot.slane %v3130, 2
          %v3132 = vadd.f32 %v3130, %v3131
          %v3133 = vrot.slane %v3132, 1
          %v3134 = vadd.f32 %v3132, %v3133
          %v3135 = vmul.f32 %v3134, %v3126
          %vm3136 = vcmask 1040384
          %v3137 = vsel %vm3136, %v3127, %v3135
          %v3138 = vld [vmem:[%s14] sm:$0xff]
          %v3139 = vld [vmem:[%s14 + $0x8] sm:$0xff]
          %v3140 = vld [vmem:[%s14 + $0x10] sm:$0xff]
          %v3141 = vld [vmem:[%s14 + $0x18] sm:$0xff]
          %v3142 = vld [vmem:[%s15] sm:$0x1]
          %v3144 = vlaneseq
          %v3145 = vshrl.u32 %v3144, 7
          %v3146 = vsub.s32 0, %v3145
          %v3147 = vrot.slane %v3142, %v3146
          %v3150 = vsel %vm827, %v3137, 0
          %3152 = vmatprep.subr.mxu0 0.0
          %3153 = vmatpush1.msra.mxu0 %v3138
          %3154 = vmatprep.subr.mxu0 0.0
          %3155 = vmatpush1.msra.mxu0 %v3139
          %3156 = vmatprep.subr.mxu0 0.0
          %3157 = vmatpush1.msra.mxu0 %v3140
          %3158 = vmatprep.subr.mxu0 0.0
          %3159 = vmatpush1.msra.mxu0 %v3141
          %3160 = vmatprep.subr.mxu0 0.0
          %3161 = vmatpush1.msra.mxu0 0.0
          %3162 = vmatprep.subr.mxu0 0.0
          %3163 = vmatpush1.msra.mxu0 0.0
          %3164 = vmatprep.subr.mxu0 0.0
          %3165 = vmatpush1.msra.mxu0 0.0
          %3166 = vmatprep.subr.mxu0 0.0
          %3167 = vmatpush1.msra.mxu0 0.0
          %3168 = vmatprep.subr.mxu0 0.0
          %3169 = vmatpush1.msra.mxu0 0.0
          %3170 = vmatprep.subr.mxu0 0.0
          %3171 = vmatpush1.msra.mxu0 0.0
          %3172 = vmatprep.subr.mxu0 0.0
          %3173 = vmatpush1.msra.mxu0 0.0
          %3174 = vmatprep.subr.mxu0 0.0
          %3175 = vmatpush1.msra.mxu0 0.0
          %3176 = vmatprep.subr.mxu0 0.0
          %3177 = vmatpush1.msra.mxu0 0.0
          %3178 = vmatprep.subr.mxu0 0.0
          %3179 = vmatpush1.msra.mxu0 0.0
          %3180 = vmatprep.subr.mxu0 0.0
          %3181 = vmatpush1.msra.mxu0 0.0
          %3182 = vmatprep.subr.mxu0 0.0
          %3183 = vmatpush1.msra.mxu0 0.0
          %3184 = vmatprep.subr.mxu0 0.0
          %3185 = vmatpush1.msra.mxu0 0.0
          %3186 = vmatprep.subr.mxu0 0.0
          %3187 = vmatpush1.msra.mxu0 0.0
          %3188 = vmatprep.subr.mxu0 0.0
          %3189 = vmatpush1.msra.mxu0 0.0
          %3190 = vmatprep.subr.mxu0 0.0
          %3191 = vmatpush1.msra.mxu0 0.0
          %3192 = vmatprep.subr.mxu0 0.0
          %3193 = vmatpush1.msra.mxu0 0.0
          %3194 = vmatprep.subr.mxu0 0.0
          %3195 = vmatpush1.msra.mxu0 0.0
          %3196 = vmatprep.subr.mxu0 0.0
          %3197 = vmatpush1.msra.mxu0 0.0
          %3198 = vmatprep.subr.mxu0 0.0
          %3199 = vmatpush1.msra.mxu0 0.0
          %3200 = vmatprep.subr.mxu0 0.0
          %3201 = vmatpush1.msra.mxu0 0.0
          %3202 = vmatprep.subr.mxu0 0.0
          %3203 = vmatpush1.msra.mxu0 0.0
          %3204 = vmatprep.subr.mxu0 0.0
          %3205 = vmatpush1.msra.mxu0 0.0
          %3206 = vmatprep.subr.mxu0 0.0
          %3207 = vmatpush1.msra.mxu0 0.0
          %3208 = vmatprep.subr.mxu0 0.0
          %3209 = vmatpush1.msra.mxu0 0.0
          %3210 = vmatprep.subr.mxu0 0.0
          %3211 = vmatpush1.msra.mxu0 0.0
          %3212 = vmatprep.subr.mxu0 0.0
          %3213 = vmatpush1.msra.mxu0 0.0
          %3214 = vmatprep.subr.mxu0 0.0
          %3215 = vmatpush1.msra.mxu0 0.0
          %3216 = vmatprep.mubr.f32.mxu0 0.0
          %3217 = vmatmul.mubr.f32.gmra.mrb[0].mxu0 %v3150
          %v3218 = vpop.f32.mrb[0].mxu0
          %v3219 = vadd.f32 %v3147, %v3218
          %v3220 = vpop.f32.mrb[0].mxu0
          %3221 = vdwg.mxu0
          %3222 = vst [vmem:[#allocation12] sm:$0x3] %v3219
        $region116: #{tpu_custom_call.1} parent=83 // pred_fallthru
          _
        // Predicated region
        $region117: #{tpu_custom_call.1} parent=83 // pred_check
          %p3223 = pneg %p461
        $region118: #{tpu_custom_call.1} parent=83 // pred_check_branch
          %3225 = sbr.rel (%p3223) target = $region120
        $region119: #{tpu_custom_call.1} parent=83 // pred_region
          %s3227 = ssub.s32 32, 32
          %3228 = vsyncadd [#allocation5], %s3227
          %s3229 = smul.addr %s34, 32
          %s3230 = scalar_lea.hbm %s16, %s3229
          %s3232 = sshll.u32 [#allocation12], 4
          %s3233 = int_to_ptr.vmem [resolvable:$true] %s3232
          %3235 = dma.vmem_to_hbm [thread:$0]  %s3233, 32, %s3230, [#allocation5]
        $region120: #{tpu_custom_call.1} parent=83 // pred_fallthru
          _
        // Predicated region
        $region121: #{tpu_custom_call.1} parent=83 // pred_check
          %p3236 = pneg %p461
        $region122: #{tpu_custom_call.1} parent=83 // pred_check_branch
          %3238 = sbr.rel (%p3236) target = $region124
        $region123: #{tpu_custom_call.1} parent=83 // pred_region
          %3239 = dma.done [#allocation5], 32
        $region124: #{tpu_custom_call.1} parent=83 // pred_fallthru
          _
      $region84: #{tpu_custom_call.1} parent=5 // pred_fallthru
        _
      %p3240 = scmp.le.s32.totalorder 2, %s25
      // Predicated region
      $region125: #{tpu_custom_call.1} parent=5 // pred_check
        %p3241 = pneg %p3240
      $region126: #{tpu_custom_call.1} parent=5 // pred_check_branch
        %3243 = sbr.rel (%p3241) target = $region128
      $region127: #{tpu_custom_call.1} parent=5 // pred_region
        %s3244 = ssub.s32 %s25, 2
      $region128: #{tpu_custom_call.1} parent=5 // pred_fallthru
        _
    $region6: #{tpu_custom_call.1} parent=1 // loop_footer
      %s29 = sadd.s32 1, %s25
    $region7: #{tpu_custom_call.1} parent=1 // loop_footer_branch
      %24 = sbr.rel target = $region3
    $region8: #{tpu_custom_call.1} parent=1 // loop_exit
      _
    %3245 = vsyncpa [#allocation4], 1
    %s3246 = scalar_lea.sflag [#allocation4], 1
    %3247 = vsyncpa %s3246, 1
    %3248 = vsyncpa [#allocation7], 1
    %3249 = vsyncpa [#allocation5], 1
    %s3250 = scalar_lea.sflag [#allocation5], 1
    %3251 = vsyncpa %s3250, 1

</llo_original>
